<compile_context>
chip_gen: v7x
topology: tpu7x:2x2x1
jax: 0.10.0
libtpu: 0.0.40
codegen_flags: <defaults>
</compile_context>

<pallas_src>
import functools
import math

import jax
import jax.numpy as jnp
from jax.experimental import pallas as pl
from jax.experimental.pallas import tpu as pltpu  # noqa: F401  (kept for TPU backend)


# ----------------------------------------------------------------------------
# Pallas kernel: whole-array GEMM + bias (+ReLU), bf16 operands, f32 accumulate
# ----------------------------------------------------------------------------
def _matmul_bias_kernel(a_ref, w_ref, b_ref, o_ref, *, relu):
    acc = jnp.dot(a_ref[...], w_ref[...], preferred_element_type=jnp.float32)
    acc = acc + b_ref[...]                 # bias (1, N) (or (1,1)) broadcasts over rows
    if relu:
        acc = jnp.maximum(acc, 0.0)
    o_ref[...] = acc.astype(o_ref.dtype)   # bf16 for intermediates, f32 for outputs


def linear_pallas(a, w, b_row, *, relu=False, out_dtype=jnp.bfloat16):
    """a: (M, K), w: (K, N) bf16, b_row: (1, N) f32 -> (M, N) out_dtype.

    Single whole-array block, no grid: every GEMM in this net is tiny, so one
    block avoids per-grid-step overhead and keeps all operands resident in VMEM.
    """
    M, K = a.shape
    N = w.shape[1]
    kernel = functools.partial(_matmul_bias_kernel, relu=relu)
    return pl.pallas_call(
        kernel,
        out_shape=jax.ShapeDtypeStruct((M, N), out_dtype),
    )(a.astype(jnp.bfloat16), w, b_row)


# ----------------------------------------------------------------------------
# Conv lowering: im2col glue (fused by XLA under jit) + Pallas GEMM
# ----------------------------------------------------------------------------
def _im2col(x, ksize, stride, pad):
    """x: (B,H,W,C) -> (B*Ho*Wo, ksize*ksize*C), (kh, kw, c) fastest-order."""
    B, H, W, C = x.shape
    xp = jnp.pad(x, ((0, 0), (pad, pad), (pad, pad), (0, 0)))
    Ho = (H + 2 * pad - ksize) // stride + 1
    Wo = (W + 2 * pad - ksize) // stride + 1
    cols = []
    for kh in range(ksize):
        for kw in range(ksize):
            cols.append(xp[:, kh:kh + stride * Ho:stride, kw:kw + stride * Wo:stride, :])
    col = jnp.concatenate(cols, axis=-1)                 # (B, Ho, Wo, k*k*C)
    return col.reshape(B * Ho * Wo, ksize * ksize * C), Ho, Wo


def conv2d_pallas(x, w_mat, b_row, ksize, stride, pad, relu=False):
    """x: (B,H,W,Cin) bf16 NHWC; w_mat: (k*k*Cin, Cout) bf16 (prepped); b_row: (1,Cout) f32."""
    B = x.shape[0]
    Cout = w_mat.shape[1]
    col, Ho, Wo = _im2col(x, ksize, stride, pad)
    out = linear_pallas(col, w_mat, b_row, relu=relu, out_dtype=jnp.bfloat16)
    return out.reshape(B, Ho, Wo, Cout)


# --- stride-2 transposed conv as sub-pixel GEMM (no zero-dilated MACs) -------
# For out[2i+r, 2j+s]: contributing taps (ky, di) where the source pixel is x[i+di]:
#   r == 0 -> (ky=1, di=0)
#   r == 1 -> (ky=2, di=0), (ky=0, di=1)
# (same mapping for columns with kx / dj).  Derived from the PyTorch
# ConvTranspose2d formula oy = 2*iy - padding + ky with padding=1, output_padding=1.
_TCONV_TAPS = {0: ((1, 0),), 1: ((2, 0), (0, 1))}


def _tconv_s2_subpixel_weight(w, b):
    """w: (Cin, Cout, 3, 3) torch ConvTranspose2d -> (4*Cin, 4*Cout), (4*Cout,)."""
    Cin, Cout = w.shape[0], w.shape[1]
    w_sub = jnp.zeros((2, 2, Cin, 2, 2, Cout), jnp.float32)
    for r in (0, 1):
        for s in (0, 1):
            for ky, di in _TCONV_TAPS[r]:
                for kx, dj in _TCONV_TAPS[s]:
                    w_sub = w_sub.at[di, dj, :, r, s, :].set(w[:, :, ky, kx])
    return w_sub.reshape(4 * Cin, 4 * Cout), jnp.tile(b, 4)


def conv_transpose2d_s2_pallas(x, w_mat, b_row, relu=False):
    """ConvTranspose2d k=3, stride=2, padding=1, output_padding=1 (NHWC in/out).

    x: (B,H,W,Cin) bf16; w_mat: (4*Cin, 4*Cout) bf16 (prepped); b_row: (1, 4*Cout) f32.
    """
    B, H, W, Cin = x.shape
    Cout = w_mat.shape[1] // 4
    xp = jnp.pad(x, ((0, 0), (0, 1), (0, 1), (0, 0)))
    cols = [xp[:, di:di + H, dj:dj + W, :] for di in (0, 1) for dj in (0, 1)]
    col = jnp.concatenate(cols, axis=-1).reshape(B * H * W, 4 * Cin)
    out = linear_pallas(col, w_mat, b_row, relu=relu, out_dtype=jnp.bfloat16)  # (B*H*W, 4*Cout)
    out = out.reshape(B, H, W, 2, 2, Cout)
    out = jnp.transpose(out, (0, 1, 3, 2, 4, 5)).reshape(B, 2 * H, 2 * W, Cout)
    return out


def conv_transpose2d_cout1_pallas(x, w_row, b_scalar):
    """ConvTranspose2d k=3, stride=1, padding=1, Cout=1, as a LANE-DENSE transposed GEMM.

    Instead of a (B*H*W, 1) output (masked 1-lane stores), compute
    out(1, B*H*W) = w_row(1, 9*Cin) @ colT(9*Cin, B*H*W) so the store is lane-dense.
    Returns NCHW (B, 1, H, W) f32 (final module output).
    """
    B, H, W, Cin = x.shape
    xp = jnp.pad(x, ((0, 0), (1, 1), (1, 1), (0, 0)))      # (B, H+2, W+2, Cin)
    xt = jnp.transpose(xp, (3, 0, 1, 2))                   # (Cin, B, H+2, W+2)
    rows = [xt[:, :, kh:kh + H, kw:kw + W].reshape(Cin, B * H * W)
            for kh in range(3) for kw in range(3)]
    colT = jnp.concatenate(rows, axis=0)                   # (9*Cin, B*H*W), row=(kh,kw,c)
    out = linear_pallas(w_row, colT, b_scalar, relu=False, out_dtype=jnp.float32)  # (1, B*H*W)
    return out.reshape(B, 1, H, W)


# ----------------------------------------------------------------------------
# One-time parameter preparation (all weight re-layouts hoisted out of forward)
# ----------------------------------------------------------------------------
def prepare_params(p):
    def conv_mat(w):
        # torch Conv2d (Cout, Cin, kH, kW) -> (kH*kW*Cin, Cout), (kh, kw, cin) row order
        Cout, Cin, kH, kW = w.shape
        return jnp.transpose(w, (2, 3, 1, 0)).reshape(kH * kW * Cin, Cout).astype(jnp.bfloat16)

    def row(b):
        return b.reshape(1, -1).astype(jnp.float32)

    prep = {}
    for name in ("conv1", "conv2", "conv3"):
        prep[name + "_wm"] = conv_mat(p[name + "_w"])
        prep[name + "_b"] = row(p[name + "_b"])

    # fc_mu + fc_logvar fused into one (4096, 2*latent) weight
    prep["fc_mulogvar_wm"] = jnp.concatenate(
        [p["fc_mu_w"].T, p["fc_logvar_w"].T], axis=1).astype(jnp.bfloat16)
    prep["fc_mulogvar_b"] = row(jnp.concatenate([p["fc_mu_b"], p["fc_logvar_b"]]))

    prep["fc_dec_wm"] = p["fc_dec_w"].T.astype(jnp.bfloat16)        # (26, 4096)
    prep["fc_dec_b"] = row(p["fc_dec_b"])

    for name in ("tconv1", "tconv2"):
        wm, bs = _tconv_s2_subpixel_weight(p[name + "_w"], p[name + "_b"])
        prep[name + "_wm"] = wm.astype(jnp.bfloat16)
        prep[name + "_b"] = row(bs)

    # tconv3 (Cin=16, Cout=1, k=3, s=1, p=1) == conv2d with flipped kernel;
    # stored as the row vector for the lane-dense transposed GEMM.
    w3 = p["tconv3_w"]                                              # (16, 1, 3, 3)
    w_conv = jnp.transpose(jnp.flip(w3, axis=(2, 3)), (1, 0, 2, 3))  # (1, 16, 3, 3)
    prep["tconv3_wrow"] = (
        jnp.transpose(w_conv, (2, 3, 1, 0)).reshape(1, -1).astype(jnp.bfloat16))  # (1, 144)
    prep["tconv3_b"] = p["tconv3_b"].reshape(1, 1).astype(jnp.float32)
    return prep


# ----------------------------------------------------------------------------
# AvalonGenerator forward (CVAE): encoder -> reparameterize -> decoder
# ----------------------------------------------------------------------------
def avalon_generator_forward(prep, x, size_mask, difficulty_map,
                             width_one_hot, height_one_hot, difficulty, eps):
    to_nhwc = lambda t: jnp.transpose(t, (0, 2, 3, 1))
    B = x.shape[0]

    # --- Encoder ---
    x_nhwc, m_nhwc, d_nhwc = to_nhwc(x), to_nhwc(size_mask), to_nhwc(difficulty_map)
    xc = jnp.concatenate([x_nhwc * m_nhwc, m_nhwc, d_nhwc], axis=-1).astype(jnp.bfloat16)
    h = conv2d_pallas(xc, prep["conv1_wm"], prep["conv1_b"], 3, 1, 1, relu=True)  # (B,32,32,16)
    h = conv2d_pallas(h, prep["conv2_wm"], prep["conv2_b"], 3, 2, 1, relu=True)   # (B,16,16,32)
    h = conv2d_pallas(h, prep["conv3_wm"], prep["conv3_b"], 3, 2, 1, relu=True)   # (B, 8, 8,64)
    h_flat = jnp.transpose(h, (0, 3, 1, 2)).reshape(B, -1)   # NCHW flatten like torch.view

    # --- fc_mu + fc_logvar: one K=4096 GEMM emitting a single (B, 2*latent) block ---
    mulogvar = linear_pallas(h_flat, prep["fc_mulogvar_wm"], prep["fc_mulogvar_b"],
                             relu=False, out_dtype=jnp.float32)
    latent = mulogvar.shape[1] // 2
    mu = mulogvar[:, :latent]
    logvar = mulogvar[:, latent:]
    z = mu + eps * jnp.exp(0.5 * logvar)                      # reparameterize (tiny XLA epilogue)

    # --- Decoder ---
    cond = jnp.concatenate(
        [z, width_one_hot, height_one_hot, difficulty[:, None]], axis=1)          # (B, 26)
    d = linear_pallas(cond, prep["fc_dec_wm"], prep["fc_dec_b"], relu=True)       # (B, 4096) bf16
    d = d.reshape(B, 64, 8, 8)               # NCHW, like x.view(B, 64, 8, 8)
    d = jnp.transpose(d, (0, 2, 3, 1))       # -> NHWC for conv path
    d = conv_transpose2d_s2_pallas(d, prep["tconv1_wm"], prep["tconv1_b"], relu=True)   # (B,16,16,32)
    d = conv_transpose2d_s2_pallas(d, prep["tconv2_wm"], prep["tconv2_b"], relu=True)   # (B,32,32,16)
    recon = conv_transpose2d_cout1_pallas(d, prep["tconv3_wrow"], prep["tconv3_b"])     # (B,1,32,32) NCHW
    return recon, mu, logvar


# ----------------------------------------------------------------------------
# Deterministic parameter init (PyTorch-like uniform(-1/sqrt(fan_in), ...))
# ----------------------------------------------------------------------------
def init_params(key):
    shapes = {
        "conv1_w": ((16, 3, 3, 3), 3 * 9),   "conv1_b": ((16,), 3 * 9),
        "conv2_w": ((32, 16, 3, 3), 16 * 9), "conv2_b": ((32,), 16 * 9),
        "conv3_w": ((64, 32, 3, 3), 32 * 9), "conv3_b": ((64,), 32 * 9),
        "fc_mu_w": ((5, 4096), 4096),        "fc_mu_b": ((5,), 4096),
        "fc_logvar_w": ((5, 4096), 4096),    "fc_logvar_b": ((5,), 4096),
        "fc_dec_w": ((4096, 26), 26),        "fc_dec_b": ((4096,), 26),
        "tconv1_w": ((64, 32, 3, 3), 32 * 9), "tconv1_b": ((32,), 32 * 9),
        "tconv2_w": ((32, 16, 3, 3), 16 * 9), "tconv2_b": ((16,), 16 * 9),
        "tconv3_w": ((16, 1, 3, 3), 1 * 9),   "tconv3_b": ((1,), 1 * 9),
    }
    keys = jax.random.split(key, len(shapes))
    params = {}
    for (name, (shape, fan_in)), k in zip(shapes.items(), keys):
        bound = 1.0 / math.sqrt(fan_in)
        params[name] = jax.random.uniform(k, shape, jnp.float32, -bound, bound)
    return params


if __name__ == "__main__":
    key = jax.random.PRNGKey(0)
    kp, kx, km, kd, kdiff, keps = jax.random.split(key, 6)

    B, H, W = 2, 32, 32                 # spatial must be 32x32 so encoder ends at 64*8*8
    latent_dim, max_width, max_height = 5, 9, 11

    raw_params = init_params(kp)
    prep = prepare_params(raw_params)   # one-time weight re-layout + bf16 cast (outside jit)

    x = jax.random.normal(kx, (B, 1, H, W), jnp.float32)
    size_mask = (jax.random.uniform(km, (B, 1, H, W)) > 0.5).astype(jnp.float32)
    difficulty_map = jax.random.uniform(kd, (B, 1, H, W), dtype=jnp.float32)
    width_one_hot = jax.nn.one_hot(jnp.array([3, 7]), max_width, dtype=jnp.float32)
    height_one_hot = jax.nn.one_hot(jnp.array([5, 9]), max_height, dtype=jnp.float32)
    difficulty = jax.random.uniform(kdiff, (B,), dtype=jnp.float32)
    # eps for reparameterize (torch.randn_like) drawn deterministically here:
    eps = jax.random.normal(keps, (B, latent_dim), jnp.float32)

    fwd = jax.jit(avalon_generator_forward)
    recon, mu, logvar = fwd(prep, x, size_mask, difficulty_map,
                            width_one_hot, height_one_hot, difficulty, eps)
    jax.block_until_ready((recon, mu, logvar))

    assert recon.shape == (B, 1, 32, 32), recon.shape
    assert mu.shape == (B, latent_dim), mu.shape
    assert logvar.shape == (B, latent_dim), logvar.shape
    print("KERNEL_OK")
</pallas_src>

<mosaic_0001>
module attributes {stable_mosaic.version = 11 : i64} {
  func.func @_matmul_bias_kernel(%arg0: memref<2048x27xbf16, #tpu.memory_space<vmem>>, %arg1: memref<27x16xbf16, #tpu.memory_space<vmem>>, %arg2: memref<1x16xf32, #tpu.memory_space<vmem>>, %arg3: memref<2048x16xbf16, #tpu.memory_space<vmem>>) attributes {dimension_semantics = [], scalar_prefetch = 0 : i64, scratch_operands = 0 : i64, tpu.core_type = #tpu.core_type<tc>} {
    %c0 = arith.constant 0 : index
    %c0_0 = arith.constant 0 : index
    %0 = vector.load %arg0[%c0, %c0_0] : memref<2048x27xbf16, #tpu.memory_space<vmem>>, vector<2048x27xbf16>
    %c0_1 = arith.constant 0 : index
    %c0_2 = arith.constant 0 : index
    %1 = vector.load %arg1[%c0_1, %c0_2] : memref<27x16xbf16, #tpu.memory_space<vmem>>, vector<27x16xbf16>
    %cst = arith.constant dense<0.000000e+00> : vector<2048x16xf32>
    %2 = tpu.matmul %0, %1, %cst {dimension_numbers = #tpu.dot_dimension_numbers<[1], [0], [0], [1], [0, 0, 1, 1], [], []>} : vector<2048x27xbf16>, vector<27x16xbf16>, vector<2048x16xf32> -> vector<2048x16xf32>
    %c0_3 = arith.constant 0 : index
    %c0_4 = arith.constant 0 : index
    %3 = vector.load %arg2[%c0_3, %c0_4] : memref<1x16xf32, #tpu.memory_space<vmem>>, vector<1x16xf32>
    %4 = vector.broadcast %3 : vector<1x16xf32> to vector<2048x16xf32>
    %5 = arith.addf %2, %4 : vector<2048x16xf32>
    %cst_5 = arith.constant 0.000000e+00 : f32
    %6 = vector.broadcast %cst_5 : f32 to vector<2048x16xf32>
    %7 = arith.maximumf %5, %6 : vector<2048x16xf32>
    %8 = arith.truncf %7 : vector<2048x16xf32> to vector<2048x16xbf16>
    %c0_6 = arith.constant 0 : index
    %c0_7 = arith.constant 0 : index
    %9 = vector.load %arg3[%c0_6, %c0_7] : memref<2048x16xbf16, #tpu.memory_space<vmem>>, vector<2048x16xbf16>
    tpu.vector_store %arg3[%c0_6, %c0_7], %8 {strides = array<i32>} : memref<2048x16xbf16, #tpu.memory_space<vmem>>, vector<2048x16xbf16>,
    return
  }
}

module attributes {stable_mosaic.version = 11 : i64} {
  func.func @_matmul_bias_kernel(%arg0: memref<512x144xbf16, #tpu.memory_space<vmem>>, %arg1: memref<144x32xbf16, #tpu.memory_space<vmem>>, %arg2: memref<1x32xf32, #tpu.memory_space<vmem>>, %arg3: memref<512x32xbf16, #tpu.memory_space<vmem>>) attributes {dimension_semantics = [], scalar_prefetch = 0 : i64, scratch_operands = 0 : i64, tpu.core_type = #tpu.core_type<tc>} {
    %c0 = arith.constant 0 : index
    %c0_0 = arith.constant 0 : index
    %0 = vector.load %arg0[%c0, %c0_0] : memref<512x144xbf16, #tpu.memory_space<vmem>>, vector<512x144xbf16>
    %c0_1 = arith.constant 0 : index
    %c0_2 = arith.constant 0 : index
    %1 = vector.load %arg1[%c0_1, %c0_2] : memref<144x32xbf16, #tpu.memory_space<vmem>>, vector<144x32xbf16>
    %cst = arith.constant dense<0.000000e+00> : vector<512x32xf32>
    %2 = tpu.matmul %0, %1, %cst {dimension_numbers = #tpu.dot_dimension_numbers<[1], [0], [0], [1], [0, 0, 1, 1], [], []>} : vector<512x144xbf16>, vector<144x32xbf16>, vector<512x32xf32> -> vector<512x32xf32>
    %c0_3 = arith.constant 0 : index
    %c0_4 = arith.constant 0 : index
    %3 = vector.load %arg2[%c0_3, %c0_4] : memref<1x32xf32, #tpu.memory_space<vmem>>, vector<1x32xf32>
    %4 = vector.broadcast %3 : vector<1x32xf32> to vector<512x32xf32>
    %5 = arith.addf %2, %4 : vector<512x32xf32>
    %cst_5 = arith.constant 0.000000e+00 : f32
    %6 = vector.broadcast %cst_5 : f32 to vector<512x32xf32>
    %7 = arith.maximumf %5, %6 : vector<512x32xf32>
    %8 = arith.truncf %7 : vector<512x32xf32> to vector<512x32xbf16>
    %c0_6 = arith.constant 0 : index
    %c0_7 = arith.constant 0 : index
    %9 = vector.load %arg3[%c0_6, %c0_7] : memref<512x32xbf16, #tpu.memory_space<vmem>>, vector<512x32xbf16>
    tpu.vector_store %arg3[%c0_6, %c0_7], %8 {strides = array<i32>} : memref<512x32xbf16, #tpu.memory_space<vmem>>, vector<512x32xbf16>,
    return
  }
}

module attributes {stable_mosaic.version = 11 : i64} {
  func.func @_matmul_bias_kernel(%arg0: memref<128x288xbf16, #tpu.memory_space<vmem>>, %arg1: memref<288x64xbf16, #tpu.memory_space<vmem>>, %arg2: memref<1x64xf32, #tpu.memory_space<vmem>>, %arg3: memref<128x64xbf16, #tpu.memory_space<vmem>>) attributes {dimension_semantics = [], scalar_prefetch = 0 : i64, scratch_operands = 0 : i64, tpu.core_type = #tpu.core_type<tc>} {
    %c0 = arith.constant 0 : index
    %c0_0 = arith.constant 0 : index
    %0 = vector.load %arg0[%c0, %c0_0] : memref<128x288xbf16, #tpu.memory_space<vmem>>, vector<128x288xbf16>
    %c0_1 = arith.constant 0 : index
    %c0_2 = arith.constant 0 : index
    %1 = vector.load %arg1[%c0_1, %c0_2] : memref<288x64xbf16, #tpu.memory_space<vmem>>, vector<288x64xbf16>
    %cst = arith.constant dense<0.000000e+00> : vector<128x64xf32>
    %2 = tpu.matmul %0, %1, %cst {dimension_numbers = #tpu.dot_dimension_numbers<[1], [0], [0], [1], [0, 0, 1, 1], [], []>} : vector<128x288xbf16>, vector<288x64xbf16>, vector<128x64xf32> -> vector<128x64xf32>
    %c0_3 = arith.constant 0 : index
    %c0_4 = arith.constant 0 : index
    %3 = vector.load %arg2[%c0_3, %c0_4] : memref<1x64xf32, #tpu.memory_space<vmem>>, vector<1x64xf32>
    %4 = vector.broadcast %3 : vector<1x64xf32> to vector<128x64xf32>
    %5 = arith.addf %2, %4 : vector<128x64xf32>
    %cst_5 = arith.constant 0.000000e+00 : f32
    %6 = vector.broadcast %cst_5 : f32 to vector<128x64xf32>
    %7 = arith.maximumf %5, %6 : vector<128x64xf32>
    %8 = arith.truncf %7 : vector<128x64xf32> to vector<128x64xbf16>
    %c0_6 = arith.constant 0 : index
    %c0_7 = arith.constant 0 : index
    %9 = vector.load %arg3[%c0_6, %c0_7] : memref<128x64xbf16, #tpu.memory_space<vmem>>, vector<128x64xbf16>
    tpu.vector_store %arg3[%c0_6, %c0_7], %8 {strides = array<i32>} : memref<128x64xbf16, #tpu.memory_space<vmem>>, vector<128x64xbf16>,
    return
  }
}

module attributes {stable_mosaic.version = 11 : i64} {
  func.func @_matmul_bias_kernel(%arg0: memref<2x4096xbf16, #tpu.memory_space<vmem>>, %arg1: memref<4096x10xbf16, #tpu.memory_space<vmem>>, %arg2: memref<1x10xf32, #tpu.memory_space<vmem>>, %arg3: memref<2x10xf32, #tpu.memory_space<vmem>>) attributes {dimension_semantics = [], scalar_prefetch = 0 : i64, scratch_operands = 0 : i64, tpu.core_type = #tpu.core_type<tc>} {
    %c0 = arith.constant 0 : index
    %c0_0 = arith.constant 0 : index
    %0 = vector.load %arg0[%c0, %c0_0] : memref<2x4096xbf16, #tpu.memory_space<vmem>>, vector<2x4096xbf16>
    %c0_1 = arith.constant 0 : index
    %c0_2 = arith.constant 0 : index
    %1 = vector.load %arg1[%c0_1, %c0_2] : memref<4096x10xbf16, #tpu.memory_space<vmem>>, vector<4096x10xbf16>
    %cst = arith.constant dense<0.000000e+00> : vector<2x10xf32>
    %2 = tpu.matmul %0, %1, %cst {dimension_numbers = #tpu.dot_dimension_numbers<[1], [0], [0], [1], [0, 0, 1, 1], [], []>} : vector<2x4096xbf16>, vector<4096x10xbf16>, vector<2x10xf32> -> vector<2x10xf32>
    %c0_3 = arith.constant 0 : index
    %c0_4 = arith.constant 0 : index
    %3 = vector.load %arg2[%c0_3, %c0_4] : memref<1x10xf32, #tpu.memory_space<vmem>>, vector<1x10xf32>
    %4 = vector.broadcast %3 : vector<1x10xf32> to vector<2x10xf32>
    %5 = arith.addf %2, %4 : vector<2x10xf32>
    %c0_5 = arith.constant 0 : index
    %c0_6 = arith.constant 0 : index
    %6 = vector.load %arg3[%c0_5, %c0_6] : memref<2x10xf32, #tpu.memory_space<vmem>>, vector<2x10xf32>
    tpu.vector_store %arg3[%c0_5, %c0_6], %5 {strides = array<i32>} : memref<2x10xf32, #tpu.memory_space<vmem>>, vector<2x10xf32>,
    return
  }
}

module attributes {stable_mosaic.version = 11 : i64} {
  func.func @_matmul_bias_kernel(%arg0: memref<2x26xbf16, #tpu.memory_space<vmem>>, %arg1: memref<26x4096xbf16, #tpu.memory_space<vmem>>, %arg2: memref<1x4096xf32, #tpu.memory_space<vmem>>, %arg3: memref<2x4096xbf16, #tpu.memory_space<vmem>>) attributes {dimension_semantics = [], scalar_prefetch = 0 : i64, scratch_operands = 0 : i64, tpu.core_type = #tpu.core_type<tc>} {
    %c0 = arith.constant 0 : index
    %c0_0 = arith.constant 0 : index
    %0 = vector.load %arg0[%c0, %c0_0] : memref<2x26xbf16, #tpu.memory_space<vmem>>, vector<2x26xbf16>
    %c0_1 = arith.constant 0 : index
    %c0_2 = arith.constant 0 : index
    %1 = vector.load %arg1[%c0_1, %c0_2] : memref<26x4096xbf16, #tpu.memory_space<vmem>>, vector<26x4096xbf16>
    %cst = arith.constant dense<0.000000e+00> : vector<2x4096xf32>
    %2 = tpu.matmul %0, %1, %cst {dimension_numbers = #tpu.dot_dimension_numbers<[1], [0], [0], [1], [0, 0, 1, 1], [], []>} : vector<2x26xbf16>, vector<26x4096xbf16>, vector<2x4096xf32> -> vector<2x4096xf32>
    %c0_3 = arith.constant 0 : index
    %c0_4 = arith.constant 0 : index
    %3 = vector.load %arg2[%c0_3, %c0_4] : memref<1x4096xf32, #tpu.memory_space<vmem>>, vector<1x4096xf32>
    %4 = vector.broadcast %3 : vector<1x4096xf32> to vector<2x4096xf32>
    %5 = arith.addf %2, %4 : vector<2x4096xf32>
    %cst_5 = arith.constant 0.000000e+00 : f32
    %6 = vector.broadcast %cst_5 : f32 to vector<2x4096xf32>
    %7 = arith.maximumf %5, %6 : vector<2x4096xf32>
    %8 = arith.truncf %7 : vector<2x4096xf32> to vector<2x4096xbf16>
    %c0_6 = arith.constant 0 : index
    %c0_7 = arith.constant 0 : index
    %9 = vector.load %arg3[%c0_6, %c0_7] : memref<2x4096xbf16, #tpu.memory_space<vmem>>, vector<2x4096xbf16>
    tpu.vector_store %arg3[%c0_6, %c0_7], %8 {strides = array<i32>} : memref<2x4096xbf16, #tpu.memory_space<vmem>>, vector<2x4096xbf16>,
    return
  }
}

module attributes {stable_mosaic.version = 11 : i64} {
  func.func @_matmul_bias_kernel(%arg0: memref<128x256xbf16, #tpu.memory_space<vmem>>, %arg1: memref<256x128xbf16, #tpu.memory_space<vmem>>, %arg2: memref<1x128xf32, #tpu.memory_space<vmem>>, %arg3: memref<128x128xbf16, #tpu.memory_space<vmem>>) attributes {dimension_semantics = [], scalar_prefetch = 0 : i64, scratch_operands = 0 : i64, tpu.core_type = #tpu.core_type<tc>} {
    %c0 = arith.constant 0 : index
    %c0_0 = arith.constant 0 : index
    %0 = vector.load %arg0[%c0, %c0_0] : memref<128x256xbf16, #tpu.memory_space<vmem>>, vector<128x256xbf16>
    %c0_1 = arith.constant 0 : index
    %c0_2 = arith.constant 0 : index
    %1 = vector.load %arg1[%c0_1, %c0_2] : memref<256x128xbf16, #tpu.memory_space<vmem>>, vector<256x128xbf16>
    %cst = arith.constant dense<0.000000e+00> : vector<128x128xf32>
    %2 = tpu.matmul %0, %1, %cst {dimension_numbers = #tpu.dot_dimension_numbers<[1], [0], [0], [1], [0, 0, 1, 1], [], []>} : vector<128x256xbf16>, vector<256x128xbf16>, vector<128x128xf32> -> vector<128x128xf32>
    %c0_3 = arith.constant 0 : index
    %c0_4 = arith.constant 0 : index
    %3 = vector.load %arg2[%c0_3, %c0_4] : memref<1x128xf32, #tpu.memory_space<vmem>>, vector<1x128xf32>
    %4 = vector.broadcast %3 : vector<1x128xf32> to vector<128x128xf32>
    %5 = arith.addf %2, %4 : vector<128x128xf32>
    %cst_5 = arith.constant 0.000000e+00 : f32
    %6 = vector.broadcast %cst_5 : f32 to vector<128x128xf32>
    %7 = arith.maximumf %5, %6 : vector<128x128xf32>
    %8 = arith.truncf %7 : vector<128x128xf32> to vector<128x128xbf16>
    %c0_6 = arith.constant 0 : index
    %c0_7 = arith.constant 0 : index
    %9 = vector.load %arg3[%c0_6, %c0_7] : memref<128x128xbf16, #tpu.memory_space<vmem>>, vector<128x128xbf16>
    tpu.vector_store %arg3[%c0_6, %c0_7], %8 {strides = array<i32>} : memref<128x128xbf16, #tpu.memory_space<vmem>>, vector<128x128xbf16>,
    return
  }
}

module attributes {stable_mosaic.version = 11 : i64} {
  func.func @_matmul_bias_kernel(%arg0: memref<512x128xbf16, #tpu.memory_space<vmem>>, %arg1: memref<128x64xbf16, #tpu.memory_space<vmem>>, %arg2: memref<1x64xf32, #tpu.memory_space<vmem>>, %arg3: memref<512x64xbf16, #tpu.memory_space<vmem>>) attributes {dimension_semantics = [], scalar_prefetch = 0 : i64, scratch_operands = 0 : i64, tpu.core_type = #tpu.core_type<tc>} {
    %c0 = arith.constant 0 : index
    %c0_0 = arith.constant 0 : index
    %0 = vector.load %arg0[%c0, %c0_0] : memref<512x128xbf16, #tpu.memory_space<vmem>>, vector<512x128xbf16>
    %c0_1 = arith.constant 0 : index
    %c0_2 = arith.constant 0 : index
    %1 = vector.load %arg1[%c0_1, %c0_2] : memref<128x64xbf16, #tpu.memory_space<vmem>>, vector<128x64xbf16>
    %cst = arith.constant dense<0.000000e+00> : vector<512x64xf32>
    %2 = tpu.matmul %0, %1, %cst {dimension_numbers = #tpu.dot_dimension_numbers<[1], [0], [0], [1], [0, 0, 1, 1], [], []>} : vector<512x128xbf16>, vector<128x64xbf16>, vector<512x64xf32> -> vector<512x64xf32>
    %c0_3 = arith.constant 0 : index
    %c0_4 = arith.constant 0 : index
    %3 = vector.load %arg2[%c0_3, %c0_4] : memref<1x64xf32, #tpu.memory_space<vmem>>, vector<1x64xf32>
    %4 = vector.broadcast %3 : vector<1x64xf32> to vector<512x64xf32>
    %5 = arith.addf %2, %4 : vector<512x64xf32>
    %cst_5 = arith.constant 0.000000e+00 : f32
    %6 = vector.broadcast %cst_5 : f32 to vector<512x64xf32>
    %7 = arith.maximumf %5, %6 : vector<512x64xf32>
    %8 = arith.truncf %7 : vector<512x64xf32> to vector<512x64xbf16>
    %c0_6 = arith.constant 0 : index
    %c0_7 = arith.constant 0 : index
    %9 = vector.load %arg3[%c0_6, %c0_7] : memref<512x64xbf16, #tpu.memory_space<vmem>>, vector<512x64xbf16>
    tpu.vector_store %arg3[%c0_6, %c0_7], %8 {strides = array<i32>} : memref<512x64xbf16, #tpu.memory_space<vmem>>, vector<512x64xbf16>,
    return
  }
}

module attributes {stable_mosaic.version = 11 : i64} {
  func.func @_matmul_bias_kernel(%arg0: memref<1x144xbf16, #tpu.memory_space<vmem>>, %arg1: memref<144x2048xbf16, #tpu.memory_space<vmem>>, %arg2: memref<1x1xf32, #tpu.memory_space<vmem>>, %arg3: memref<1x2048xf32, #tpu.memory_space<vmem>>) attributes {dimension_semantics = [], scalar_prefetch = 0 : i64, scratch_operands = 0 : i64, tpu.core_type = #tpu.core_type<tc>} {
    %c0 = arith.constant 0 : index
    %c0_0 = arith.constant 0 : index
    %0 = vector.load %arg0[%c0, %c0_0] : memref<1x144xbf16, #tpu.memory_space<vmem>>, vector<1x144xbf16>
    %c0_1 = arith.constant 0 : index
    %c0_2 = arith.constant 0 : index
    %1 = vector.load %arg1[%c0_1, %c0_2] : memref<144x2048xbf16, #tpu.memory_space<vmem>>, vector<144x2048xbf16>
    %cst = arith.constant dense<0.000000e+00> : vector<1x2048xf32>
    %2 = tpu.matmul %0, %1, %cst {dimension_numbers = #tpu.dot_dimension_numbers<[1], [0], [0], [1], [0, 0, 1, 1], [], []>} : vector<1x144xbf16>, vector<144x2048xbf16>, vector<1x2048xf32> -> vector<1x2048xf32>
    %c0_3 = arith.constant 0 : index
    %c0_4 = arith.constant 0 : index
    %3 = vector.load %arg2[%c0_3, %c0_4] : memref<1x1xf32, #tpu.memory_space<vmem>>, vector<1x1xf32>
    %4 = vector.broadcast %3 : vector<1x1xf32> to vector<1x2048xf32>
    %5 = arith.addf %2, %4 : vector<1x2048xf32>
    %c0_5 = arith.constant 0 : index
    %c0_6 = arith.constant 0 : index
    %6 = vector.load %arg3[%c0_5, %c0_6] : memref<1x2048xf32, #tpu.memory_space<vmem>>, vector<1x2048xf32>
    tpu.vector_store %arg3[%c0_5, %c0_6], %5 {strides = array<i32>} : memref<1x2048xf32, #tpu.memory_space<vmem>>, vector<1x2048xf32>,
    return
  }
}

</mosaic_0001>

<llo_original>
// kernel: avalon_generator_forward.9
$region0: #{avalon_generator_forward.9}
  #allocation0 [shape = 'u32[]', space=smem, size = 0x4, offset = 0x4, fixed_abs, tag = 'smem constant byte address 0x4 - core index']
  #allocation1 [shape = 'u32[144,128]{1,0:T(1,128)}', space=vmem, size = 0x12000, scoped, tag = 'internal scratch']
  %s0 = inlined_call_operand.vmem [shape: bf16[512,144], index: 0, kind: input, shape index: {}]
  %s1 = inlined_call_operand.vmem [shape: bf16[144,32], index: 1, kind: input, shape index: {}]
  %s2 = inlined_call_operand.vmem [shape: f32[1,32], index: 2, kind: input, shape index: {}]
  %s3 = inlined_call_operand.vmem [shape: bf16[512,32], index: 3, kind: output, shape index: {}]
  %s4 = sld [smem:[#allocation0]]
  $region22: #{avalon_generator_forward.9} parent=0
    _
  %s6 = ssub.s32 1, %s4
  %s7 = scalar_select 0, %s6, %s4
  // Predicated region
  $region2: #{avalon_generator_forward.9} parent=0 // pred_check
    _
  $region3: #{avalon_generator_forward.9} parent=0 // pred_check_branch
    %9 = sbr.rel (0) target = $region5
  $region4: #{avalon_generator_forward.9} parent=0 // pred_region
    _
  $region5: #{avalon_generator_forward.9} parent=0 // pred_fallthru
    _
  // Predicated region
  $region6: #{avalon_generator_forward.9} parent=0 // pred_check
    _
  $region7: #{avalon_generator_forward.9} parent=0 // pred_check_branch
    %11 = sbr.rel (0) target = $region9
  $region8: #{avalon_generator_forward.9} parent=0 // pred_region
    _
  $region9: #{avalon_generator_forward.9} parent=0 // pred_fallthru
    _
  // Predicated region
  $region10: #{avalon_generator_forward.9} parent=0 // pred_check
    _
  $region11: #{avalon_generator_forward.9} parent=0 // pred_check_branch
    %13 = sbr.rel (0) target = $region13
  $region12: #{avalon_generator_forward.9} parent=0 // pred_region
    _
  $region13: #{avalon_generator_forward.9} parent=0 // pred_fallthru
    _
  %v15 = vld [vmem:[%s0] sm:$0xff]
  %v16 = vld [vmem:[%s0 + $0x8] sm:$0xff]
  %v17 = vld [vmem:[%s0 + $0x10] sm:$0xff]
  %v18 = vld [vmem:[%s0 + $0x18] sm:$0xff]
  %v19 = vld [vmem:[%s0 + $0x20] sm:$0xff]
  %v20 = vld [vmem:[%s0 + $0x28] sm:$0xff]
  %v21 = vld [vmem:[%s0 + $0x30] sm:$0xff]
  %v22 = vld [vmem:[%s0 + $0x38] sm:$0xff]
  %v23 = vld [vmem:[%s0 + $0x40] sm:$0xff]
  %v24 = vld [vmem:[%s0 + $0x48] sm:$0xff]
  %v25 = vld [vmem:[%s0 + $0x50] sm:$0xff]
  %v26 = vld [vmem:[%s0 + $0x58] sm:$0xff]
  %v27 = vld [vmem:[%s0 + $0x60] sm:$0xff]
  %v28 = vld [vmem:[%s0 + $0x68] sm:$0xff]
  %v29 = vld [vmem:[%s0 + $0x70] sm:$0xff]
  %v30 = vld [vmem:[%s0 + $0x78] sm:$0xff]
  %v31 = vld [vmem:[%s0 + $0x80] sm:$0xff]
  %v32 = vld [vmem:[%s0 + $0x88] sm:$0xff]
  %v33 = vld [vmem:[%s0 + $0x90] sm:$0xff]
  %v34 = vld [vmem:[%s0 + $0x98] sm:$0xff]
  %v35 = vld [vmem:[%s0 + $0xa0] sm:$0xff]
  %v36 = vld [vmem:[%s0 + $0xa8] sm:$0xff]
  %v37 = vld [vmem:[%s0 + $0xb0] sm:$0xff]
  %v38 = vld [vmem:[%s0 + $0xb8] sm:$0xff]
  %v39 = vld [vmem:[%s0 + $0xc0] sm:$0xff]
  %v40 = vld [vmem:[%s0 + $0xc8] sm:$0xff]
  %v41 = vld [vmem:[%s0 + $0xd0] sm:$0xff]
  %v42 = vld [vmem:[%s0 + $0xd8] sm:$0xff]
  %v43 = vld [vmem:[%s0 + $0xe0] sm:$0xff]
  %v44 = vld [vmem:[%s0 + $0xe8] sm:$0xff]
  %v45 = vld [vmem:[%s0 + $0xf0] sm:$0xff]
  %v46 = vld [vmem:[%s0 + $0xf8] sm:$0xff]
  %v47 = vld [vmem:[%s0 + $0x100] sm:$0xff]
  %v48 = vld [vmem:[%s0 + $0x108] sm:$0xff]
  %v49 = vld [vmem:[%s0 + $0x110] sm:$0xff]
  %v50 = vld [vmem:[%s0 + $0x118] sm:$0xff]
  %v51 = vld [vmem:[%s0 + $0x120] sm:$0xff]
  %v52 = vld [vmem:[%s0 + $0x128] sm:$0xff]
  %v53 = vld [vmem:[%s0 + $0x130] sm:$0xff]
  %v54 = vld [vmem:[%s0 + $0x138] sm:$0xff]
  %v55 = vld [vmem:[%s0 + $0x140] sm:$0xff]
  %v56 = vld [vmem:[%s0 + $0x148] sm:$0xff]
  %v57 = vld [vmem:[%s0 + $0x150] sm:$0xff]
  %v58 = vld [vmem:[%s0 + $0x158] sm:$0xff]
  %v59 = vld [vmem:[%s0 + $0x160] sm:$0xff]
  %v60 = vld [vmem:[%s0 + $0x168] sm:$0xff]
  %v61 = vld [vmem:[%s0 + $0x170] sm:$0xff]
  %v62 = vld [vmem:[%s0 + $0x178] sm:$0xff]
  %v63 = vld [vmem:[%s0 + $0x180] sm:$0xff]
  %v64 = vld [vmem:[%s0 + $0x188] sm:$0xff]
  %v65 = vld [vmem:[%s0 + $0x190] sm:$0xff]
  %v66 = vld [vmem:[%s0 + $0x198] sm:$0xff]
  %v67 = vld [vmem:[%s0 + $0x1a0] sm:$0xff]
  %v68 = vld [vmem:[%s0 + $0x1a8] sm:$0xff]
  %v69 = vld [vmem:[%s0 + $0x1b0] sm:$0xff]
  %v70 = vld [vmem:[%s0 + $0x1b8] sm:$0xff]
  %v71 = vld [vmem:[%s0 + $0x1c0] sm:$0xff]
  %v72 = vld [vmem:[%s0 + $0x1c8] sm:$0xff]
  %v73 = vld [vmem:[%s0 + $0x1d0] sm:$0xff]
  %v74 = vld [vmem:[%s0 + $0x1d8] sm:$0xff]
  %v75 = vld [vmem:[%s0 + $0x1e0] sm:$0xff]
  %v76 = vld [vmem:[%s0 + $0x1e8] sm:$0xff]
  %v77 = vld [vmem:[%s0 + $0x1f0] sm:$0xff]
  %v78 = vld [vmem:[%s0 + $0x1f8] sm:$0xff]
  %v79 = vld [vmem:[%s1] sm:$0xf]
  %v80 = vld [vmem:[%s1 + $0x4] sm:$0xf]
  %v81 = vld [vmem:[%s1 + $0x8] sm:$0xf]
  %v82 = vld [vmem:[%s1 + $0xc] sm:$0xf]
  %v83 = vld [vmem:[%s1 + $0x10] sm:$0xf]
  %v84 = vld [vmem:[%s1 + $0x14] sm:$0xf]
  %v85 = vld [vmem:[%s1 + $0x18] sm:$0xf]
  %v86 = vld [vmem:[%s1 + $0x1c] sm:$0xf]
  %v87 = vld [vmem:[%s1 + $0x20] sm:$0xf]
  %v88 = vld [vmem:[%s1 + $0x24] sm:$0xf]
  %v89 = vld [vmem:[%s1 + $0x28] sm:$0xf]
  %v90 = vld [vmem:[%s1 + $0x2c] sm:$0xf]
  %v91 = vld [vmem:[%s1 + $0x30] sm:$0xf]
  %v92 = vld [vmem:[%s1 + $0x34] sm:$0xf]
  %v93 = vld [vmem:[%s1 + $0x38] sm:$0xf]
  %v94 = vld [vmem:[%s1 + $0x3c] sm:$0xf]
  %v95 = vld [vmem:[%s1 + $0x40] sm:$0xf]
  %v96 = vld [vmem:[%s1 + $0x44] sm:$0xf]
  %v97 = vld [vmem:[%s2] sm:$0x1]
  %v99 = vlaneseq
  %v100 = vshrl.u32 %v99, 7
  %v101 = vsub.s32 0, %v100
  %v102 = vrot.slane %v97, %v101
  %v168 = vunpack.c.l.b16 %v15
  %v169 = vunpack.c.h.b16 %v15
  %v170 = vunpack.c.l.b16 %v16
  %v171 = vunpack.c.h.b16 %v16
  %v172 = vunpack.c.l.b16 %v17
  %v173 = vunpack.c.h.b16 %v17
  %v174 = vunpack.c.l.b16 %v18
  %v175 = vunpack.c.h.b16 %v18
  %v176 = vunpack.c.l.b16 %v19
  %v177 = vunpack.c.h.b16 %v19
  %v178 = vunpack.c.l.b16 %v20
  %v179 = vunpack.c.h.b16 %v20
  %v180 = vunpack.c.l.b16 %v21
  %v181 = vunpack.c.h.b16 %v21
  %v182 = vunpack.c.l.b16 %v22
  %v183 = vunpack.c.h.b16 %v22
  %v184 = vunpack.c.l.b16 %v23
  %v185 = vunpack.c.h.b16 %v23
  %v186 = vunpack.c.l.b16 %v24
  %v187 = vunpack.c.h.b16 %v24
  %v188 = vunpack.c.l.b16 %v25
  %v189 = vunpack.c.h.b16 %v25
  %v190 = vunpack.c.l.b16 %v26
  %v191 = vunpack.c.h.b16 %v26
  %v192 = vunpack.c.l.b16 %v27
  %v193 = vunpack.c.h.b16 %v27
  %v194 = vunpack.c.l.b16 %v28
  %v195 = vunpack.c.h.b16 %v28
  %v196 = vunpack.c.l.b16 %v29
  %v197 = vunpack.c.h.b16 %v29
  %v198 = vunpack.c.l.b16 %v30
  %v199 = vunpack.c.h.b16 %v30
  %v200 = vunpack.c.l.b16 %v31
  %v201 = vunpack.c.h.b16 %v31
  %v202 = vunpack.c.l.b16 %v32
  %v203 = vunpack.c.h.b16 %v32
  %v204 = vunpack.c.l.b16 %v33
  %v205 = vunpack.c.h.b16 %v33
  %v206 = vunpack.c.l.b16 %v34
  %v207 = vunpack.c.h.b16 %v34
  %v208 = vunpack.c.l.b16 %v35
  %v209 = vunpack.c.h.b16 %v35
  %v210 = vunpack.c.l.b16 %v36
  %v211 = vunpack.c.h.b16 %v36
  %v212 = vunpack.c.l.b16 %v37
  %v213 = vunpack.c.h.b16 %v37
  %v214 = vunpack.c.l.b16 %v38
  %v215 = vunpack.c.h.b16 %v38
  %v216 = vunpack.c.l.b16 %v39
  %v217 = vunpack.c.h.b16 %v39
  %v218 = vunpack.c.l.b16 %v40
  %v219 = vunpack.c.h.b16 %v40
  %v220 = vunpack.c.l.b16 %v41
  %v221 = vunpack.c.h.b16 %v41
  %v222 = vunpack.c.l.b16 %v42
  %v223 = vunpack.c.h.b16 %v42
  %v224 = vunpack.c.l.b16 %v43
  %v225 = vunpack.c.h.b16 %v43
  %v226 = vunpack.c.l.b16 %v44
  %v227 = vunpack.c.h.b16 %v44
  %v228 = vunpack.c.l.b16 %v45
  %v229 = vunpack.c.h.b16 %v45
  %v230 = vunpack.c.l.b16 %v46
  %v231 = vunpack.c.h.b16 %v46
  %v232 = vunpack.c.l.b16 %v47
  %v233 = vunpack.c.h.b16 %v47
  %v234 = vunpack.c.l.b16 %v48
  %v235 = vunpack.c.h.b16 %v48
  %v236 = vunpack.c.l.b16 %v49
  %v237 = vunpack.c.h.b16 %v49
  %v238 = vunpack.c.l.b16 %v50
  %v239 = vunpack.c.h.b16 %v50
  %v240 = vunpack.c.l.b16 %v51
  %v241 = vunpack.c.h.b16 %v51
  %v242 = vunpack.c.l.b16 %v52
  %v243 = vunpack.c.h.b16 %v52
  %v244 = vunpack.c.l.b16 %v53
  %v245 = vunpack.c.h.b16 %v53
  %v246 = vunpack.c.l.b16 %v54
  %v247 = vunpack.c.h.b16 %v54
  %v248 = vunpack.c.l.b16 %v55
  %v249 = vunpack.c.h.b16 %v55
  %v250 = vunpack.c.l.b16 %v56
  %v251 = vunpack.c.h.b16 %v56
  %v252 = vunpack.c.l.b16 %v57
  %v253 = vunpack.c.h.b16 %v57
  %v254 = vunpack.c.l.b16 %v58
  %v255 = vunpack.c.h.b16 %v58
  %v256 = vunpack.c.l.b16 %v59
  %v257 = vunpack.c.h.b16 %v59
  %v258 = vunpack.c.l.b16 %v60
  %v259 = vunpack.c.h.b16 %v60
  %v260 = vunpack.c.l.b16 %v61
  %v261 = vunpack.c.h.b16 %v61
  %v262 = vunpack.c.l.b16 %v62
  %v263 = vunpack.c.h.b16 %v62
  %v264 = vunpack.c.l.b16 %v63
  %v265 = vunpack.c.h.b16 %v63
  %v266 = vunpack.c.l.b16 %v64
  %v267 = vunpack.c.h.b16 %v64
  %v268 = vunpack.c.l.b16 %v65
  %v269 = vunpack.c.h.b16 %v65
  %v270 = vunpack.c.l.b16 %v66
  %v271 = vunpack.c.h.b16 %v66
  %v272 = vunpack.c.l.b16 %v67
  %v273 = vunpack.c.h.b16 %v67
  %v274 = vunpack.c.l.b16 %v68
  %v275 = vunpack.c.h.b16 %v68
  %v276 = vunpack.c.l.b16 %v69
  %v277 = vunpack.c.h.b16 %v69
  %v278 = vunpack.c.l.b16 %v70
  %v279 = vunpack.c.h.b16 %v70
  %v280 = vunpack.c.l.b16 %v71
  %v281 = vunpack.c.h.b16 %v71
  %v282 = vunpack.c.l.b16 %v72
  %v283 = vunpack.c.h.b16 %v72
  %v284 = vunpack.c.l.b16 %v73
  %v285 = vunpack.c.h.b16 %v73
  %v286 = vunpack.c.l.b16 %v74
  %v287 = vunpack.c.h.b16 %v74
  %v288 = vunpack.c.l.b16 %v75
  %v289 = vunpack.c.h.b16 %v75
  %v290 = vunpack.c.l.b16 %v76
  %v291 = vunpack.c.h.b16 %v76
  %v292 = vunpack.c.l.b16 %v77
  %v293 = vunpack.c.h.b16 %v77
  %v294 = vunpack.c.l.b16 %v78
  %v295 = vunpack.c.h.b16 %v78
  %v296 = vpack.c.b16 %v170, %v168
  %v297 = vpack.c.b16 %v171, %v169
  %v298 = vpack.c.b16 %v174, %v172
  %v299 = vpack.c.b16 %v175, %v173
  %v300 = vpack.c.b16 %v178, %v176
  %v301 = vpack.c.b16 %v179, %v177
  %v302 = vpack.c.b16 %v182, %v180
  %v303 = vpack.c.b16 %v183, %v181
  %v304 = vpack.c.b16 %v186, %v184
  %v305 = vpack.c.b16 %v187, %v185
  %v306 = vpack.c.b16 %v190, %v188
  %v307 = vpack.c.b16 %v191, %v189
  %v308 = vpack.c.b16 %v194, %v192
  %v309 = vpack.c.b16 %v195, %v193
  %v310 = vpack.c.b16 %v198, %v196
  %v311 = vpack.c.b16 %v199, %v197
  %v312 = vpack.c.b16 %v202, %v200
  %v313 = vpack.c.b16 %v203, %v201
  %v314 = vpack.c.b16 %v206, %v204
  %v315 = vpack.c.b16 %v207, %v205
  %v316 = vpack.c.b16 %v210, %v208
  %v317 = vpack.c.b16 %v211, %v209
  %v318 = vpack.c.b16 %v214, %v212
  %v319 = vpack.c.b16 %v215, %v213
  %v320 = vpack.c.b16 %v218, %v216
  %v321 = vpack.c.b16 %v219, %v217
  %v322 = vpack.c.b16 %v222, %v220
  %v323 = vpack.c.b16 %v223, %v221
  %v324 = vpack.c.b16 %v226, %v224
  %v325 = vpack.c.b16 %v227, %v225
  %v326 = vpack.c.b16 %v230, %v228
  %v327 = vpack.c.b16 %v231, %v229
  %v328 = vpack.c.b16 %v234, %v232
  %v329 = vpack.c.b16 %v235, %v233
  %v330 = vpack.c.b16 %v238, %v236
  %v331 = vpack.c.b16 %v239, %v237
  %v332 = vpack.c.b16 %v242, %v240
  %v333 = vpack.c.b16 %v243, %v241
  %v334 = vpack.c.b16 %v246, %v244
  %v335 = vpack.c.b16 %v247, %v245
  %v336 = vpack.c.b16 %v250, %v248
  %v337 = vpack.c.b16 %v251, %v249
  %v338 = vpack.c.b16 %v254, %v252
  %v339 = vpack.c.b16 %v255, %v253
  %v340 = vpack.c.b16 %v258, %v256
  %v341 = vpack.c.b16 %v259, %v257
  %v342 = vpack.c.b16 %v262, %v260
  %v343 = vpack.c.b16 %v263, %v261
  %v344 = vpack.c.b16 %v266, %v264
  %v345 = vpack.c.b16 %v267, %v265
  %v346 = vpack.c.b16 %v270, %v268
  %v347 = vpack.c.b16 %v271, %v269
  %v348 = vpack.c.b16 %v274, %v272
  %v349 = vpack.c.b16 %v275, %v273
  %v350 = vpack.c.b16 %v278, %v276
  %v351 = vpack.c.b16 %v279, %v277
  %v352 = vpack.c.b16 %v282, %v280
  %v353 = vpack.c.b16 %v283, %v281
  %v354 = vpack.c.b16 %v286, %v284
  %v355 = vpack.c.b16 %v287, %v285
  %v356 = vpack.c.b16 %v290, %v288
  %v357 = vpack.c.b16 %v291, %v289
  %v358 = vpack.c.b16 %v294, %v292
  %v359 = vpack.c.b16 %v295, %v293
  %v410 = vunpack.c.l.b16 %v79
  %v411 = vunpack.c.l.b16 %v80
  %v412 = vunpack.c.l.b16 %v81
  %v413 = vunpack.c.l.b16 %v82
  %v414 = vunpack.c.l.b16 %v83
  %v415 = vunpack.c.l.b16 %v84
  %v416 = vunpack.c.l.b16 %v85
  %v417 = vunpack.c.l.b16 %v86
  %v418 = vunpack.c.l.b16 %v87
  %v419 = vunpack.c.l.b16 %v88
  %v420 = vunpack.c.l.b16 %v89
  %v421 = vunpack.c.l.b16 %v90
  %v422 = vunpack.c.l.b16 %v91
  %v423 = vunpack.c.l.b16 %v92
  %v424 = vunpack.c.l.b16 %v93
  %v425 = vunpack.c.l.b16 %v94
  %v426 = vunpack.c.l.b16 %v95
  %v427 = vunpack.c.l.b16 %v96
  %v428 = vpack.c.b16 %v411, %v410
  %v429 = vpack.c.b16 %v413, %v412
  %v430 = vpack.c.b16 %v415, %v414
  %v431 = vpack.c.b16 %v417, %v416
  %v432 = vpack.c.b16 %v419, %v418
  %v433 = vpack.c.b16 %v421, %v420
  %v434 = vpack.c.b16 %v423, %v422
  %v435 = vpack.c.b16 %v425, %v424
  %v436 = vpack.c.b16 %v427, %v426
  %vm446 = vcmask 130048
  %v448 = vsel %vm446, %v297, 0
  %v451 = vsel %vm446, %v299, 0
  %v454 = vsel %vm446, %v301, 0
  %v457 = vsel %vm446, %v303, 0
  %v460 = vsel %vm446, %v305, 0
  %v463 = vsel %vm446, %v307, 0
  %v466 = vsel %vm446, %v309, 0
  %v469 = vsel %vm446, %v311, 0
  %v472 = vsel %vm446, %v313, 0
  %v475 = vsel %vm446, %v315, 0
  %v478 = vsel %vm446, %v317, 0
  %v481 = vsel %vm446, %v319, 0
  %v484 = vsel %vm446, %v321, 0
  %v487 = vsel %vm446, %v323, 0
  %v490 = vsel %vm446, %v325, 0
  %v493 = vsel %vm446, %v327, 0
  %v496 = vsel %vm446, %v329, 0
  %v499 = vsel %vm446, %v331, 0
  %v502 = vsel %vm446, %v333, 0
  %v505 = vsel %vm446, %v335, 0
  %v508 = vsel %vm446, %v337, 0
  %v511 = vsel %vm446, %v339, 0
  %v514 = vsel %vm446, %v341, 0
  %v517 = vsel %vm446, %v343, 0
  %v520 = vsel %vm446, %v345, 0
  %v523 = vsel %vm446, %v347, 0
  %v526 = vsel %vm446, %v349, 0
  %v529 = vsel %vm446, %v351, 0
  %v532 = vsel %vm446, %v353, 0
  %v535 = vsel %vm446, %v355, 0
  %v538 = vsel %vm446, %v357, 0
  %v541 = vsel %vm446, %v359, 0
  %543 = vmatprep.subr.bf16.mxu0 0
  %544 = vmatpush1.bf16.msra.mxu0 %v428
  %545 = vmatprep.subr.bf16.mxu0 0
  %546 = vmatpush1.bf16.msra.mxu0 %v429
  %547 = vmatprep.subr.bf16.mxu0 0
  %548 = vmatpush1.bf16.msra.mxu0 %v430
  %549 = vmatprep.subr.bf16.mxu0 0
  %550 = vmatpush1.bf16.msra.mxu0 %v431
  %551 = vmatprep.subr.bf16.mxu0 0
  %552 = vmatpush1.bf16.msra.mxu0 %v432
  %553 = vmatprep.subr.bf16.mxu0 0
  %554 = vmatpush1.bf16.msra.mxu0 %v433
  %555 = vmatprep.subr.bf16.mxu0 0
  %556 = vmatpush1.bf16.msra.mxu0 %v434
  %557 = vmatprep.subr.bf16.mxu0 0
  %558 = vmatpush1.bf16.msra.mxu0 %v435
  %559 = vmatprep.subr.bf16.mxu0 0
  %560 = vmatpush1.bf16.msra.mxu0 %v436
  %561 = vmatprep.subr.bf16.mxu0 0
  %562 = vmatpush1.bf16.msra.mxu0 0
  %563 = vmatprep.subr.bf16.mxu0 0
  %564 = vmatpush1.bf16.msra.mxu0 0
  %565 = vmatprep.subr.bf16.mxu0 0
  %566 = vmatpush1.bf16.msra.mxu0 0
  %567 = vmatprep.subr.bf16.mxu0 0
  %568 = vmatpush1.bf16.msra.mxu0 0
  %569 = vmatprep.subr.bf16.mxu0 0
  %570 = vmatpush1.bf16.msra.mxu0 0
  %571 = vmatprep.subr.bf16.mxu0 0
  %572 = vmatpush1.bf16.msra.mxu0 0
  %573 = vmatprep.subr.bf16.mxu0 0
  %574 = vmatpush1.bf16.msra.mxu0 0
  %575 = vmatprep.mubr.bf16.mxu0 %v448
  %576 = vmatmul.mubr.bf16.gmra.mrb[0].mxu0 %v296
  %v577 = vpop.f32.mrb[0].mxu0
  %v578 = vadd.f32 %v102, %v577
  %v579 = vpop.f32.mrb[0].mxu0
  %v580 = vpop.f32.mrb[0].mxu0
  %v581 = vadd.f32 %v102, %v580
  %v582 = vpop.f32.mrb[0].mxu0
  %583 = vmatprep.mubr.bf16.mxu0 %v451
  %584 = vmatmul.mubr.bf16.gmra.mrb[0].mxu0 %v298
  %v585 = vpop.f32.mrb[0].mxu0
  %v586 = vadd.f32 %v102, %v585
  %v587 = vpop.f32.mrb[0].mxu0
  %v588 = vpop.f32.mrb[0].mxu0
  %v589 = vadd.f32 %v102, %v588
  %v590 = vpop.f32.mrb[0].mxu0
  %591 = vmatprep.mubr.bf16.mxu0 %v454
  %592 = vmatmul.mubr.bf16.gmra.mrb[0].mxu0 %v300
  %v593 = vpop.f32.mrb[0].mxu0
  %v594 = vadd.f32 %v102, %v593
  %v595 = vpop.f32.mrb[0].mxu0
  %v596 = vpop.f32.mrb[0].mxu0
  %v597 = vadd.f32 %v102, %v596
  %v598 = vpop.f32.mrb[0].mxu0
  %599 = vmatprep.mubr.bf16.mxu0 %v457
  %600 = vmatmul.mubr.bf16.gmra.mrb[0].mxu0 %v302
  %v601 = vpop.f32.mrb[0].mxu0
  %v602 = vadd.f32 %v102, %v601
  %v603 = vpop.f32.mrb[0].mxu0
  %v604 = vpop.f32.mrb[0].mxu0
  %v605 = vadd.f32 %v102, %v604
  %v606 = vpop.f32.mrb[0].mxu0
  %607 = vmatprep.mubr.bf16.mxu0 %v460
  %608 = vmatmul.mubr.bf16.gmra.mrb[0].mxu0 %v304
  %v609 = vpop.f32.mrb[0].mxu0
  %v610 = vadd.f32 %v102, %v609
  %v611 = vpop.f32.mrb[0].mxu0
  %v612 = vpop.f32.mrb[0].mxu0
  %v613 = vadd.f32 %v102, %v612
  %v614 = vpop.f32.mrb[0].mxu0
  %615 = vmatprep.mubr.bf16.mxu0 %v463
  %616 = vmatmul.mubr.bf16.gmra.mrb[0].mxu0 %v306
  %v617 = vpop.f32.mrb[0].mxu0
  %v618 = vadd.f32 %v102, %v617
  %v619 = vpop.f32.mrb[0].mxu0
  %v620 = vpop.f32.mrb[0].mxu0
  %v621 = vadd.f32 %v102, %v620
  %v622 = vpop.f32.mrb[0].mxu0
  %623 = vmatprep.mubr.bf16.mxu0 %v466
  %624 = vmatmul.mubr.bf16.gmra.mrb[0].mxu0 %v308
  %v625 = vpop.f32.mrb[0].mxu0
  %v626 = vadd.f32 %v102, %v625
  %v627 = vpop.f32.mrb[0].mxu0
  %v628 = vpop.f32.mrb[0].mxu0
  %v629 = vadd.f32 %v102, %v628
  %v630 = vpop.f32.mrb[0].mxu0
  %631 = vmatprep.mubr.bf16.mxu0 %v469
  %632 = vmatmul.mubr.bf16.gmra.mrb[0].mxu0 %v310
  %v633 = vpop.f32.mrb[0].mxu0
  %v634 = vadd.f32 %v102, %v633
  %v635 = vpop.f32.mrb[0].mxu0
  %v636 = vpop.f32.mrb[0].mxu0
  %v637 = vadd.f32 %v102, %v636
  %v638 = vpop.f32.mrb[0].mxu0
  %639 = vmatprep.mubr.bf16.mxu0 %v472
  %640 = vmatmul.mubr.bf16.gmra.mrb[0].mxu0 %v312
  %v641 = vpop.f32.mrb[0].mxu0
  %v642 = vadd.f32 %v102, %v641
  %v643 = vpop.f32.mrb[0].mxu0
  %v644 = vpop.f32.mrb[0].mxu0
  %v645 = vadd.f32 %v102, %v644
  %v646 = vpop.f32.mrb[0].mxu0
  %647 = vmatprep.mubr.bf16.mxu0 %v475
  %648 = vmatmul.mubr.bf16.gmra.mrb[0].mxu0 %v314
  %v649 = vpop.f32.mrb[0].mxu0
  %v650 = vadd.f32 %v102, %v649
  %v651 = vpop.f32.mrb[0].mxu0
  %v652 = vpop.f32.mrb[0].mxu0
  %v653 = vadd.f32 %v102, %v652
  %v654 = vpop.f32.mrb[0].mxu0
  %655 = vmatprep.mubr.bf16.mxu0 %v478
  %656 = vmatmul.mubr.bf16.gmra.mrb[0].mxu0 %v316
  %v657 = vpop.f32.mrb[0].mxu0
  %v658 = vadd.f32 %v102, %v657
  %v659 = vpop.f32.mrb[0].mxu0
  %v660 = vpop.f32.mrb[0].mxu0
  %v661 = vadd.f32 %v102, %v660
  %v662 = vpop.f32.mrb[0].mxu0
  %663 = vmatprep.mubr.bf16.mxu0 %v481
  %664 = vmatmul.mubr.bf16.gmra.mrb[0].mxu0 %v318
  %v665 = vpop.f32.mrb[0].mxu0
  %v666 = vadd.f32 %v102, %v665
  %v667 = vpop.f32.mrb[0].mxu0
  %v668 = vpop.f32.mrb[0].mxu0
  %v669 = vadd.f32 %v102, %v668
  %v670 = vpop.f32.mrb[0].mxu0
  %671 = vmatprep.mubr.bf16.mxu0 %v484
  %672 = vmatmul.mubr.bf16.gmra.mrb[0].mxu0 %v320
  %v673 = vpop.f32.mrb[0].mxu0
  %v674 = vadd.f32 %v102, %v673
  %v675 = vpop.f32.mrb[0].mxu0
  %v676 = vpop.f32.mrb[0].mxu0
  %v677 = vadd.f32 %v102, %v676
  %v678 = vpop.f32.mrb[0].mxu0
  %679 = vmatprep.mubr.bf16.mxu0 %v487
  %680 = vmatmul.mubr.bf16.gmra.mrb[0].mxu0 %v322
  %v681 = vpop.f32.mrb[0].mxu0
  %v682 = vadd.f32 %v102, %v681
  %v683 = vpop.f32.mrb[0].mxu0
  %v684 = vpop.f32.mrb[0].mxu0
  %v685 = vadd.f32 %v102, %v684
  %v686 = vpop.f32.mrb[0].mxu0
  %687 = vmatprep.mubr.bf16.mxu0 %v490
  %688 = vmatmul.mubr.bf16.gmra.mrb[0].mxu0 %v324
  %v689 = vpop.f32.mrb[0].mxu0
  %v690 = vadd.f32 %v102, %v689
  %v691 = vpop.f32.mrb[0].mxu0
  %v692 = vpop.f32.mrb[0].mxu0
  %v693 = vadd.f32 %v102, %v692
  %v694 = vpop.f32.mrb[0].mxu0
  %695 = vmatprep.mubr.bf16.mxu0 %v493
  %696 = vmatmul.mubr.bf16.gmra.mrb[0].mxu0 %v326
  %v697 = vpop.f32.mrb[0].mxu0
  %v698 = vadd.f32 %v102, %v697
  %v699 = vpop.f32.mrb[0].mxu0
  %v700 = vpop.f32.mrb[0].mxu0
  %v701 = vadd.f32 %v102, %v700
  %v702 = vpop.f32.mrb[0].mxu0
  %703 = vmatprep.mubr.bf16.mxu0 %v496
  %704 = vmatmul.mubr.bf16.gmra.mrb[0].mxu0 %v328
  %v705 = vpop.f32.mrb[0].mxu0
  %v706 = vadd.f32 %v102, %v705
  %v707 = vpop.f32.mrb[0].mxu0
  %v708 = vpop.f32.mrb[0].mxu0
  %v709 = vadd.f32 %v102, %v708
  %v710 = vpop.f32.mrb[0].mxu0
  %711 = vmatprep.mubr.bf16.mxu0 %v499
  %712 = vmatmul.mubr.bf16.gmra.mrb[0].mxu0 %v330
  %v713 = vpop.f32.mrb[0].mxu0
  %v714 = vadd.f32 %v102, %v713
  %v715 = vpop.f32.mrb[0].mxu0
  %v716 = vpop.f32.mrb[0].mxu0
  %v717 = vadd.f32 %v102, %v716
  %v718 = vpop.f32.mrb[0].mxu0
  %719 = vmatprep.mubr.bf16.mxu0 %v502
  %720 = vmatmul.mubr.bf16.gmra.mrb[0].mxu0 %v332
  %v721 = vpop.f32.mrb[0].mxu0
  %v722 = vadd.f32 %v102, %v721
  %v723 = vpop.f32.mrb[0].mxu0
  %v724 = vpop.f32.mrb[0].mxu0
  %v725 = vadd.f32 %v102, %v724
  %v726 = vpop.f32.mrb[0].mxu0
  %727 = vmatprep.mubr.bf16.mxu0 %v505
  %728 = vmatmul.mubr.bf16.gmra.mrb[0].mxu0 %v334
  %v729 = vpop.f32.mrb[0].mxu0
  %v730 = vadd.f32 %v102, %v729
  %v731 = vpop.f32.mrb[0].mxu0
  %v732 = vpop.f32.mrb[0].mxu0
  %v733 = vadd.f32 %v102, %v732
  %v734 = vpop.f32.mrb[0].mxu0
  %735 = vmatprep.mubr.bf16.mxu0 %v508
  %736 = vmatmul.mubr.bf16.gmra.mrb[0].mxu0 %v336
  %v737 = vpop.f32.mrb[0].mxu0
  %v738 = vadd.f32 %v102, %v737
  %v739 = vpop.f32.mrb[0].mxu0
  %v740 = vpop.f32.mrb[0].mxu0
  %v741 = vadd.f32 %v102, %v740
  %v742 = vpop.f32.mrb[0].mxu0
  %743 = vmatprep.mubr.bf16.mxu0 %v511
  %744 = vmatmul.mubr.bf16.gmra.mrb[0].mxu0 %v338
  %v745 = vpop.f32.mrb[0].mxu0
  %v746 = vadd.f32 %v102, %v745
  %v747 = vpop.f32.mrb[0].mxu0
  %v748 = vpop.f32.mrb[0].mxu0
  %v749 = vadd.f32 %v102, %v748
  %v750 = vpop.f32.mrb[0].mxu0
  %751 = vmatprep.mubr.bf16.mxu0 %v514
  %752 = vmatmul.mubr.bf16.gmra.mrb[0].mxu0 %v340
  %v753 = vpop.f32.mrb[0].mxu0
  %v754 = vadd.f32 %v102, %v753
  %v755 = vpop.f32.mrb[0].mxu0
  %v756 = vpop.f32.mrb[0].mxu0
  %v757 = vadd.f32 %v102, %v756
  %v758 = vpop.f32.mrb[0].mxu0
  %759 = vmatprep.mubr.bf16.mxu0 %v517
  %760 = vmatmul.mubr.bf16.gmra.mrb[0].mxu0 %v342
  %v761 = vpop.f32.mrb[0].mxu0
  %v762 = vadd.f32 %v102, %v761
  %v763 = vpop.f32.mrb[0].mxu0
  %v764 = vpop.f32.mrb[0].mxu0
  %v765 = vadd.f32 %v102, %v764
  %v766 = vpop.f32.mrb[0].mxu0
  %767 = vmatprep.mubr.bf16.mxu0 %v520
  %768 = vmatmul.mubr.bf16.gmra.mrb[0].mxu0 %v344
  %v769 = vpop.f32.mrb[0].mxu0
  %v770 = vadd.f32 %v102, %v769
  %v771 = vpop.f32.mrb[0].mxu0
  %v772 = vpop.f32.mrb[0].mxu0
  %v773 = vadd.f32 %v102, %v772
  %v774 = vpop.f32.mrb[0].mxu0
  %775 = vmatprep.mubr.bf16.mxu0 %v523
  %776 = vmatmul.mubr.bf16.gmra.mrb[0].mxu0 %v346
  %v777 = vpop.f32.mrb[0].mxu0
  %v778 = vadd.f32 %v102, %v777
  %v779 = vpop.f32.mrb[0].mxu0
  %v780 = vpop.f32.mrb[0].mxu0
  %v781 = vadd.f32 %v102, %v780
  %v782 = vpop.f32.mrb[0].mxu0
  %783 = vmatprep.mubr.bf16.mxu0 %v526
  %784 = vmatmul.mubr.bf16.gmra.mrb[0].mxu0 %v348
  %v785 = vpop.f32.mrb[0].mxu0
  %v786 = vadd.f32 %v102, %v785
  %v787 = vpop.f32.mrb[0].mxu0
  %v788 = vpop.f32.mrb[0].mxu0
  %v789 = vadd.f32 %v102, %v788
  %v790 = vpop.f32.mrb[0].mxu0
  %791 = vmatprep.mubr.bf16.mxu0 %v529
  %792 = vmatmul.mubr.bf16.gmra.mrb[0].mxu0 %v350
  %v793 = vpop.f32.mrb[0].mxu0
  %v794 = vadd.f32 %v102, %v793
  %v795 = vpop.f32.mrb[0].mxu0
  %v796 = vpop.f32.mrb[0].mxu0
  %v797 = vadd.f32 %v102, %v796
  %v798 = vpop.f32.mrb[0].mxu0
  %799 = vmatprep.mubr.bf16.mxu0 %v532
  %800 = vmatmul.mubr.bf16.gmra.mrb[0].mxu0 %v352
  %v801 = vpop.f32.mrb[0].mxu0
  %v802 = vadd.f32 %v102, %v801
  %v803 = vpop.f32.mrb[0].mxu0
  %v804 = vpop.f32.mrb[0].mxu0
  %v805 = vadd.f32 %v102, %v804
  %v806 = vpop.f32.mrb[0].mxu0
  %807 = vmatprep.mubr.bf16.mxu0 %v535
  %808 = vmatmul.mubr.bf16.gmra.mrb[0].mxu0 %v354
  %v809 = vpop.f32.mrb[0].mxu0
  %v810 = vadd.f32 %v102, %v809
  %v811 = vpop.f32.mrb[0].mxu0
  %v812 = vpop.f32.mrb[0].mxu0
  %v813 = vadd.f32 %v102, %v812
  %v814 = vpop.f32.mrb[0].mxu0
  %815 = vmatprep.mubr.bf16.mxu0 %v538
  %816 = vmatmul.mubr.bf16.gmra.mrb[0].mxu0 %v356
  %v817 = vpop.f32.mrb[0].mxu0
  %v818 = vadd.f32 %v102, %v817
  %v819 = vpop.f32.mrb[0].mxu0
  %v820 = vpop.f32.mrb[0].mxu0
  %v821 = vadd.f32 %v102, %v820
  %v822 = vpop.f32.mrb[0].mxu0
  %823 = vmatprep.mubr.bf16.mxu0 %v541
  %824 = vmatmul.mubr.bf16.gmra.mrb[0].mxu0 %v358
  %v825 = vpop.f32.mrb[0].mxu0
  %v826 = vadd.f32 %v102, %v825
  %v827 = vpop.f32.mrb[0].mxu0
  %v828 = vpop.f32.mrb[0].mxu0
  %v829 = vadd.f32 %v102, %v828
  %v830 = vpop.f32.mrb[0].mxu0
  %831 = vdwg.mxu0
  %v832 = vmax.f32 %v578, 0.0
  %v833 = vmax.f32 %v581, 0.0
  %v834 = vmax.f32 %v586, 0.0
  %v835 = vmax.f32 %v589, 0.0
  %v836 = vmax.f32 %v594, 0.0
  %v837 = vmax.f32 %v597, 0.0
  %v838 = vmax.f32 %v602, 0.0
  %v839 = vmax.f32 %v605, 0.0
  %v840 = vmax.f32 %v610, 0.0
  %v841 = vmax.f32 %v613, 0.0
  %v842 = vmax.f32 %v618, 0.0
  %v843 = vmax.f32 %v621, 0.0
  %v844 = vmax.f32 %v626, 0.0
  %v845 = vmax.f32 %v629, 0.0
  %v846 = vmax.f32 %v634, 0.0
  %v847 = vmax.f32 %v637, 0.0
  %v848 = vmax.f32 %v642, 0.0
  %v849 = vmax.f32 %v645, 0.0
  %v850 = vmax.f32 %v650, 0.0
  %v851 = vmax.f32 %v653, 0.0
  %v852 = vmax.f32 %v658, 0.0
  %v853 = vmax.f32 %v661, 0.0
  %v854 = vmax.f32 %v666, 0.0
  %v855 = vmax.f32 %v669, 0.0
  %v856 = vmax.f32 %v674, 0.0
  %v857 = vmax.f32 %v677, 0.0
  %v858 = vmax.f32 %v682, 0.0
  %v859 = vmax.f32 %v685, 0.0
  %v860 = vmax.f32 %v690, 0.0
  %v861 = vmax.f32 %v693, 0.0
  %v862 = vmax.f32 %v698, 0.0
  %v863 = vmax.f32 %v701, 0.0
  %v864 = vmax.f32 %v706, 0.0
  %v865 = vmax.f32 %v709, 0.0
  %v866 = vmax.f32 %v714, 0.0
  %v867 = vmax.f32 %v717, 0.0
  %v868 = vmax.f32 %v722, 0.0
  %v869 = vmax.f32 %v725, 0.0
  %v870 = vmax.f32 %v730, 0.0
  %v871 = vmax.f32 %v733, 0.0
  %v872 = vmax.f32 %v738, 0.0
  %v873 = vmax.f32 %v741, 0.0
  %v874 = vmax.f32 %v746, 0.0
  %v875 = vmax.f32 %v749, 0.0
  %v876 = vmax.f32 %v754, 0.0
  %v877 = vmax.f32 %v757, 0.0
  %v878 = vmax.f32 %v762, 0.0
  %v879 = vmax.f32 %v765, 0.0
  %v880 = vmax.f32 %v770, 0.0
  %v881 = vmax.f32 %v773, 0.0
  %v882 = vmax.f32 %v778, 0.0
  %v883 = vmax.f32 %v781, 0.0
  %v884 = vmax.f32 %v786, 0.0
  %v885 = vmax.f32 %v789, 0.0
  %v886 = vmax.f32 %v794, 0.0
  %v887 = vmax.f32 %v797, 0.0
  %v888 = vmax.f32 %v802, 0.0
  %v889 = vmax.f32 %v805, 0.0
  %v890 = vmax.f32 %v810, 0.0
  %v891 = vmax.f32 %v813, 0.0
  %v892 = vmax.f32 %v818, 0.0
  %v893 = vmax.f32 %v821, 0.0
  %v894 = vmax.f32 %v826, 0.0
  %v895 = vmax.f32 %v829, 0.0
  %v896 = vpack.c.bf16 %v833, %v832
  %v897 = vpack.c.bf16 %v835, %v834
  %v898 = vpack.c.bf16 %v837, %v836
  %v899 = vpack.c.bf16 %v839, %v838
  %v900 = vpack.c.bf16 %v841, %v840
  %v901 = vpack.c.bf16 %v843, %v842
  %v902 = vpack.c.bf16 %v845, %v844
  %v903 = vpack.c.bf16 %v847, %v846
  %v904 = vpack.c.bf16 %v849, %v848
  %v905 = vpack.c.bf16 %v851, %v850
  %v906 = vpack.c.bf16 %v853, %v852
  %v907 = vpack.c.bf16 %v855, %v854
  %v908 = vpack.c.bf16 %v857, %v856
  %v909 = vpack.c.bf16 %v859, %v858
  %v910 = vpack.c.bf16 %v861, %v860
  %v911 = vpack.c.bf16 %v863, %v862
  %v912 = vpack.c.bf16 %v865, %v864
  %v913 = vpack.c.bf16 %v867, %v866
  %v914 = vpack.c.bf16 %v869, %v868
  %v915 = vpack.c.bf16 %v871, %v870
  %v916 = vpack.c.bf16 %v873, %v872
  %v917 = vpack.c.bf16 %v875, %v874
  %v918 = vpack.c.bf16 %v877, %v876
  %v919 = vpack.c.bf16 %v879, %v878
  %v920 = vpack.c.bf16 %v881, %v880
  %v921 = vpack.c.bf16 %v883, %v882
  %v922 = vpack.c.bf16 %v885, %v884
  %v923 = vpack.c.bf16 %v887, %v886
  %v924 = vpack.c.bf16 %v889, %v888
  %v925 = vpack.c.bf16 %v891, %v890
  %v926 = vpack.c.bf16 %v893, %v892
  %v927 = vpack.c.bf16 %v895, %v894
  %v960 = vunpack.c.l.b16 %v896
  %v961 = vunpack.c.h.b16 %v896
  %v962 = vunpack.c.l.b16 %v897
  %v963 = vunpack.c.h.b16 %v897
  %v964 = vunpack.c.l.b16 %v898
  %v965 = vunpack.c.h.b16 %v898
  %v966 = vunpack.c.l.b16 %v899
  %v967 = vunpack.c.h.b16 %v899
  %v968 = vunpack.c.l.b16 %v900
  %v969 = vunpack.c.h.b16 %v900
  %v970 = vunpack.c.l.b16 %v901
  %v971 = vunpack.c.h.b16 %v901
  %v972 = vunpack.c.l.b16 %v902
  %v973 = vunpack.c.h.b16 %v902
  %v974 = vunpack.c.l.b16 %v903
  %v975 = vunpack.c.h.b16 %v903
  %v976 = vunpack.c.l.b16 %v904
  %v977 = vunpack.c.h.b16 %v904
  %v978 = vunpack.c.l.b16 %v905
  %v979 = vunpack.c.h.b16 %v905
  %v980 = vunpack.c.l.b16 %v906
  %v981 = vunpack.c.h.b16 %v906
  %v982 = vunpack.c.l.b16 %v907
  %v983 = vunpack.c.h.b16 %v907
  %v984 = vunpack.c.l.b16 %v908
  %v985 = vunpack.c.h.b16 %v908
  %v986 = vunpack.c.l.b16 %v909
  %v987 = vunpack.c.h.b16 %v909
  %v988 = vunpack.c.l.b16 %v910
  %v989 = vunpack.c.h.b16 %v910
  %v990 = vunpack.c.l.b16 %v911
  %v991 = vunpack.c.h.b16 %v911
  %v992 = vunpack.c.l.b16 %v912
  %v993 = vunpack.c.h.b16 %v912
  %v994 = vunpack.c.l.b16 %v913
  %v995 = vunpack.c.h.b16 %v913
  %v996 = vunpack.c.l.b16 %v914
  %v997 = vunpack.c.h.b16 %v914
  %v998 = vunpack.c.l.b16 %v915
  %v999 = vunpack.c.h.b16 %v915
  %v1000 = vunpack.c.l.b16 %v916
  %v1001 = vunpack.c.h.b16 %v916
  %v1002 = vunpack.c.l.b16 %v917
  %v1003 = vunpack.c.h.b16 %v917
  %v1004 = vunpack.c.l.b16 %v918
  %v1005 = vunpack.c.h.b16 %v918
  %v1006 = vunpack.c.l.b16 %v919
  %v1007 = vunpack.c.h.b16 %v919
  %v1008 = vunpack.c.l.b16 %v920
  %v1009 = vunpack.c.h.b16 %v920
  %v1010 = vunpack.c.l.b16 %v921
  %v1011 = vunpack.c.h.b16 %v921
  %v1012 = vunpack.c.l.b16 %v922
  %v1013 = vunpack.c.h.b16 %v922
  %v1014 = vunpack.c.l.b16 %v923
  %v1015 = vunpack.c.h.b16 %v923
  %v1016 = vunpack.c.l.b16 %v924
  %v1017 = vunpack.c.h.b16 %v924
  %v1018 = vunpack.c.l.b16 %v925
  %v1019 = vunpack.c.h.b16 %v925
  %v1020 = vunpack.c.l.b16 %v926
  %v1021 = vunpack.c.h.b16 %v926
  %v1022 = vunpack.c.l.b16 %v927
  %v1023 = vunpack.c.h.b16 %v927
  %v1024 = vpack.c.b16 %v960, %v960
  %v1025 = vpack.c.b16 %v961, %v961
  %v1026 = vpack.c.b16 %v962, %v962
  %v1027 = vpack.c.b16 %v963, %v963
  %v1028 = vpack.c.b16 %v964, %v964
  %v1029 = vpack.c.b16 %v965, %v965
  %v1030 = vpack.c.b16 %v966, %v966
  %v1031 = vpack.c.b16 %v967, %v967
  %v1032 = vpack.c.b16 %v968, %v968
  %v1033 = vpack.c.b16 %v969, %v969
  %v1034 = vpack.c.b16 %v970, %v970
  %v1035 = vpack.c.b16 %v971, %v971
  %v1036 = vpack.c.b16 %v972, %v972
  %v1037 = vpack.c.b16 %v973, %v973
  %v1038 = vpack.c.b16 %v974, %v974
  %v1039 = vpack.c.b16 %v975, %v975
  %v1040 = vpack.c.b16 %v976, %v976
  %v1041 = vpack.c.b16 %v977, %v977
  %v1042 = vpack.c.b16 %v978, %v978
  %v1043 = vpack.c.b16 %v979, %v979
  %v1044 = vpack.c.b16 %v980, %v980
  %v1045 = vpack.c.b16 %v981, %v981
  %v1046 = vpack.c.b16 %v982, %v982
  %v1047 = vpack.c.b16 %v983, %v983
  %v1048 = vpack.c.b16 %v984, %v984
  %v1049 = vpack.c.b16 %v985, %v985
  %v1050 = vpack.c.b16 %v986, %v986
  %v1051 = vpack.c.b16 %v987, %v987
  %v1052 = vpack.c.b16 %v988, %v988
  %v1053 = vpack.c.b16 %v989, %v989
  %v1054 = vpack.c.b16 %v990, %v990
  %v1055 = vpack.c.b16 %v991, %v991
  %v1056 = vpack.c.b16 %v992, %v992
  %v1057 = vpack.c.b16 %v993, %v993
  %v1058 = vpack.c.b16 %v994, %v994
  %v1059 = vpack.c.b16 %v995, %v995
  %v1060 = vpack.c.b16 %v996, %v996
  %v1061 = vpack.c.b16 %v997, %v997
  %v1062 = vpack.c.b16 %v998, %v998
  %v1063 = vpack.c.b16 %v999, %v999
  %v1064 = vpack.c.b16 %v1000, %v1000
  %v1065 = vpack.c.b16 %v1001, %v1001
  %v1066 = vpack.c.b16 %v1002, %v1002
  %v1067 = vpack.c.b16 %v1003, %v1003
  %v1068 = vpack.c.b16 %v1004, %v1004
  %v1069 = vpack.c.b16 %v1005, %v1005
  %v1070 = vpack.c.b16 %v1006, %v1006
  %v1071 = vpack.c.b16 %v1007, %v1007
  %v1072 = vpack.c.b16 %v1008, %v1008
  %v1073 = vpack.c.b16 %v1009, %v1009
  %v1074 = vpack.c.b16 %v1010, %v1010
  %v1075 = vpack.c.b16 %v1011, %v1011
  %v1076 = vpack.c.b16 %v1012, %v1012
  %v1077 = vpack.c.b16 %v1013, %v1013
  %v1078 = vpack.c.b16 %v1014, %v1014
  %v1079 = vpack.c.b16 %v1015, %v1015
  %v1080 = vpack.c.b16 %v1016, %v1016
  %v1081 = vpack.c.b16 %v1017, %v1017
  %v1082 = vpack.c.b16 %v1018, %v1018
  %v1083 = vpack.c.b16 %v1019, %v1019
  %v1084 = vpack.c.b16 %v1020, %v1020
  %v1085 = vpack.c.b16 %v1021, %v1021
  %v1086 = vpack.c.b16 %v1022, %v1022
  %v1087 = vpack.c.b16 %v1023, %v1023
  %vm1152 = vcmask 257024
  %1153 = vst.msk [vmem:[%s3] sm:$0xf] %vm1152, %v1024
  %1154 = vst.msk [vmem:[%s3 + $0x4] sm:$0xf] %vm1152, %v1025
  %1155 = vst.msk [vmem:[%s3 + $0x8] sm:$0xf] %vm1152, %v1026
  %1156 = vst.msk [vmem:[%s3 + $0xc] sm:$0xf] %vm1152, %v1027
  %1157 = vst.msk [vmem:[%s3 + $0x10] sm:$0xf] %vm1152, %v1028
  %1158 = vst.msk [vmem:[%s3 + $0x14] sm:$0xf] %vm1152, %v1029
  %1159 = vst.msk [vmem:[%s3 + $0x18] sm:$0xf] %vm1152, %v1030
  %1160 = vst.msk [vmem:[%s3 + $0x1c] sm:$0xf] %vm1152, %v1031
  %1161 = vst.msk [vmem:[%s3 + $0x20] sm:$0xf] %vm1152, %v1032
  %1162 = vst.msk [vmem:[%s3 + $0x24] sm:$0xf] %vm1152, %v1033
  %1163 = vst.msk [vmem:[%s3 + $0x28] sm:$0xf] %vm1152, %v1034
  %1164 = vst.msk [vmem:[%s3 + $0x2c] sm:$0xf] %vm1152, %v1035
  %1165 = vst.msk [vmem:[%s3 + $0x30] sm:$0xf] %vm1152, %v1036
  %1166 = vst.msk [vmem:[%s3 + $0x34] sm:$0xf] %vm1152, %v1037
  %1167 = vst.msk [vmem:[%s3 + $0x38] sm:$0xf] %vm1152, %v1038
  %1168 = vst.msk [vmem:[%s3 + $0x3c] sm:$0xf] %vm1152, %v1039
  %1169 = vst.msk [vmem:[%s3 + $0x40] sm:$0xf] %vm1152, %v1040
  %1170 = vst.msk [vmem:[%s3 + $0x44] sm:$0xf] %vm1152, %v1041
  %1171 = vst.msk [vmem:[%s3 + $0x48] sm:$0xf] %vm1152, %v1042
  %1172 = vst.msk [vmem:[%s3 + $0x4c] sm:$0xf] %vm1152, %v1043
  %1173 = vst.msk [vmem:[%s3 + $0x50] sm:$0xf] %vm1152, %v1044
  %1174 = vst.msk [vmem:[%s3 + $0x54] sm:$0xf] %vm1152, %v1045
  %1175 = vst.msk [vmem:[%s3 + $0x58] sm:$0xf] %vm1152, %v1046
  %1176 = vst.msk [vmem:[%s3 + $0x5c] sm:$0xf] %vm1152, %v1047
  %1177 = vst.msk [vmem:[%s3 + $0x60] sm:$0xf] %vm1152, %v1048
  %1178 = vst.msk [vmem:[%s3 + $0x64] sm:$0xf] %vm1152, %v1049
  %1179 = vst.msk [vmem:[%s3 + $0x68] sm:$0xf] %vm1152, %v1050
  %1180 = vst.msk [vmem:[%s3 + $0x6c] sm:$0xf] %vm1152, %v1051
  %1181 = vst.msk [vmem:[%s3 + $0x70] sm:$0xf] %vm1152, %v1052
  %1182 = vst.msk [vmem:[%s3 + $0x74] sm:$0xf] %vm1152, %v1053
  %1183 = vst.msk [vmem:[%s3 + $0x78] sm:$0xf] %vm1152, %v1054
  %1184 = vst.msk [vmem:[%s3 + $0x7c] sm:$0xf] %vm1152, %v1055
  %1185 = vst.msk [vmem:[%s3 + $0x80] sm:$0xf] %vm1152, %v1056
  %1186 = vst.msk [vmem:[%s3 + $0x84] sm:$0xf] %vm1152, %v1057
  %1187 = vst.msk [vmem:[%s3 + $0x88] sm:$0xf] %vm1152, %v1058
  %1188 = vst.msk [vmem:[%s3 + $0x8c] sm:$0xf] %vm1152, %v1059
  %1189 = vst.msk [vmem:[%s3 + $0x90] sm:$0xf] %vm1152, %v1060
  %1190 = vst.msk [vmem:[%s3 + $0x94] sm:$0xf] %vm1152, %v1061
  %1191 = vst.msk [vmem:[%s3 + $0x98] sm:$0xf] %vm1152, %v1062
  %1192 = vst.msk [vmem:[%s3 + $0x9c] sm:$0xf] %vm1152, %v1063
  %1193 = vst.msk [vmem:[%s3 + $0xa0] sm:$0xf] %vm1152, %v1064
  %1194 = vst.msk [vmem:[%s3 + $0xa4] sm:$0xf] %vm1152, %v1065
  %1195 = vst.msk [vmem:[%s3 + $0xa8] sm:$0xf] %vm1152, %v1066
  %1196 = vst.msk [vmem:[%s3 + $0xac] sm:$0xf] %vm1152, %v1067
  %1197 = vst.msk [vmem:[%s3 + $0xb0] sm:$0xf] %vm1152, %v1068
  %1198 = vst.msk [vmem:[%s3 + $0xb4] sm:$0xf] %vm1152, %v1069
  %1199 = vst.msk [vmem:[%s3 + $0xb8] sm:$0xf] %vm1152, %v1070
  %1200 = vst.msk [vmem:[%s3 + $0xbc] sm:$0xf] %vm1152, %v1071
  %1201 = vst.msk [vmem:[%s3 + $0xc0] sm:$0xf] %vm1152, %v1072
  %1202 = vst.msk [vmem:[%s3 + $0xc4] sm:$0xf] %vm1152, %v1073
  %1203 = vst.msk [vmem:[%s3 + $0xc8] sm:$0xf] %vm1152, %v1074
  %1204 = vst.msk [vmem:[%s3 + $0xcc] sm:$0xf] %vm1152, %v1075
  %1205 = vst.msk [vmem:[%s3 + $0xd0] sm:$0xf] %vm1152, %v1076
  %1206 = vst.msk [vmem:[%s3 + $0xd4] sm:$0xf] %vm1152, %v1077
  %1207 = vst.msk [vmem:[%s3 + $0xd8] sm:$0xf] %vm1152, %v1078
  %1208 = vst.msk [vmem:[%s3 + $0xdc] sm:$0xf] %vm1152, %v1079
  %1209 = vst.msk [vmem:[%s3 + $0xe0] sm:$0xf] %vm1152, %v1080
  %1210 = vst.msk [vmem:[%s3 + $0xe4] sm:$0xf] %vm1152, %v1081
  %1211 = vst.msk [vmem:[%s3 + $0xe8] sm:$0xf] %vm1152, %v1082
  %1212 = vst.msk [vmem:[%s3 + $0xec] sm:$0xf] %vm1152, %v1083
  %1213 = vst.msk [vmem:[%s3 + $0xf0] sm:$0xf] %vm1152, %v1084
  %1214 = vst.msk [vmem:[%s3 + $0xf4] sm:$0xf] %vm1152, %v1085
  %1215 = vst.msk [vmem:[%s3 + $0xf8] sm:$0xf] %vm1152, %v1086
  %1216 = vst.msk [vmem:[%s3 + $0xfc] sm:$0xf] %vm1152, %v1087
  // Predicated region
  $region14: #{avalon_generator_forward.9} parent=0 // pred_check
    _
  $region15: #{avalon_generator_forward.9} parent=0 // pred_check_branch
    %1218 = sbr.rel (0) target = $region17
  $region16: #{avalon_generator_forward.9} parent=0 // pred_region
    _
  $region17: #{avalon_generator_forward.9} parent=0 // pred_fallthru
    _
  // Predicated region
  $region18: #{avalon_generator_forward.9} parent=0 // pred_check
    _
  $region19: #{avalon_generator_forward.9} parent=0 // pred_check_branch
    %1220 = sbr.rel (0) target = $region21
  $region20: #{avalon_generator_forward.9} parent=0 // pred_region
    _
  $region21: #{avalon_generator_forward.9} parent=0 // pred_fallthru
    _

// kernel: avalon_generator_forward.8
$region0: #{avalon_generator_forward.8}
  #allocation0 [shape = 'u32[]', space=smem, size = 0x4, offset = 0x4, fixed_abs, tag = 'smem constant byte address 0x4 - core index']
  #allocation1 [shape = 'u32[144,128]{1,0:T(1,128)}', space=vmem, size = 0x12000, scoped, tag = 'internal scratch']
  %s0 = inlined_call_operand.vmem [shape: bf16[2048,27], index: 0, kind: input, shape index: {}]
  %s1 = inlined_call_operand.vmem [shape: bf16[27,16], index: 1, kind: input, shape index: {}]
  %s2 = inlined_call_operand.vmem [shape: f32[1,16], index: 2, kind: input, shape index: {}]
  %s3 = inlined_call_operand.vmem [shape: bf16[2048,16], index: 3, kind: output, shape index: {}]
  %s4 = sld [smem:[#allocation0]]
  $region22: #{avalon_generator_forward.8} parent=0
    _
  %s6 = ssub.s32 1, %s4
  %s7 = scalar_select 0, %s6, %s4
  // Predicated region
  $region2: #{avalon_generator_forward.8} parent=0 // pred_check
    _
  $region3: #{avalon_generator_forward.8} parent=0 // pred_check_branch
    %9 = sbr.rel (0) target = $region5
  $region4: #{avalon_generator_forward.8} parent=0 // pred_region
    _
  $region5: #{avalon_generator_forward.8} parent=0 // pred_fallthru
    _
  // Predicated region
  $region6: #{avalon_generator_forward.8} parent=0 // pred_check
    _
  $region7: #{avalon_generator_forward.8} parent=0 // pred_check_branch
    %11 = sbr.rel (0) target = $region9
  $region8: #{avalon_generator_forward.8} parent=0 // pred_region
    _
  $region9: #{avalon_generator_forward.8} parent=0 // pred_fallthru
    _
  // Predicated region
  $region10: #{avalon_generator_forward.8} parent=0 // pred_check
    _
  $region11: #{avalon_generator_forward.8} parent=0 // pred_check_branch
    %13 = sbr.rel (0) target = $region13
  $region12: #{avalon_generator_forward.8} parent=0 // pred_region
    _
  $region13: #{avalon_generator_forward.8} parent=0 // pred_fallthru
    _
  %v15 = vld [vmem:[%s0] sm:$0xf]
  %v16 = vld [vmem:[%s0 + $0x4] sm:$0xf]
  %v17 = vld [vmem:[%s0 + $0x8] sm:$0xf]
  %v18 = vld [vmem:[%s0 + $0xc] sm:$0xf]
  %v19 = vld [vmem:[%s0 + $0x10] sm:$0xf]
  %v20 = vld [vmem:[%s0 + $0x14] sm:$0xf]
  %v21 = vld [vmem:[%s0 + $0x18] sm:$0xf]
  %v22 = vld [vmem:[%s0 + $0x1c] sm:$0xf]
  %v23 = vld [vmem:[%s0 + $0x20] sm:$0xf]
  %v24 = vld [vmem:[%s0 + $0x24] sm:$0xf]
  %v25 = vld [vmem:[%s0 + $0x28] sm:$0xf]
  %v26 = vld [vmem:[%s0 + $0x2c] sm:$0xf]
  %v27 = vld [vmem:[%s0 + $0x30] sm:$0xf]
  %v28 = vld [vmem:[%s0 + $0x34] sm:$0xf]
  %v29 = vld [vmem:[%s0 + $0x38] sm:$0xf]
  %v30 = vld [vmem:[%s0 + $0x3c] sm:$0xf]
  %v31 = vld [vmem:[%s0 + $0x40] sm:$0xf]
  %v32 = vld [vmem:[%s0 + $0x44] sm:$0xf]
  %v33 = vld [vmem:[%s0 + $0x48] sm:$0xf]
  %v34 = vld [vmem:[%s0 + $0x4c] sm:$0xf]
  %v35 = vld [vmem:[%s0 + $0x50] sm:$0xf]
  %v36 = vld [vmem:[%s0 + $0x54] sm:$0xf]
  %v37 = vld [vmem:[%s0 + $0x58] sm:$0xf]
  %v38 = vld [vmem:[%s0 + $0x5c] sm:$0xf]
  %v39 = vld [vmem:[%s0 + $0x60] sm:$0xf]
  %v40 = vld [vmem:[%s0 + $0x64] sm:$0xf]
  %v41 = vld [vmem:[%s0 + $0x68] sm:$0xf]
  %v42 = vld [vmem:[%s0 + $0x6c] sm:$0xf]
  %v43 = vld [vmem:[%s0 + $0x70] sm:$0xf]
  %v44 = vld [vmem:[%s0 + $0x74] sm:$0xf]
  %v45 = vld [vmem:[%s0 + $0x78] sm:$0xf]
  %v46 = vld [vmem:[%s0 + $0x7c] sm:$0xf]
  %v47 = vld [vmem:[%s0 + $0x80] sm:$0xf]
  %v48 = vld [vmem:[%s0 + $0x84] sm:$0xf]
  %v49 = vld [vmem:[%s0 + $0x88] sm:$0xf]
  %v50 = vld [vmem:[%s0 + $0x8c] sm:$0xf]
  %v51 = vld [vmem:[%s0 + $0x90] sm:$0xf]
  %v52 = vld [vmem:[%s0 + $0x94] sm:$0xf]
  %v53 = vld [vmem:[%s0 + $0x98] sm:$0xf]
  %v54 = vld [vmem:[%s0 + $0x9c] sm:$0xf]
  %v55 = vld [vmem:[%s0 + $0xa0] sm:$0xf]
  %v56 = vld [vmem:[%s0 + $0xa4] sm:$0xf]
  %v57 = vld [vmem:[%s0 + $0xa8] sm:$0xf]
  %v58 = vld [vmem:[%s0 + $0xac] sm:$0xf]
  %v59 = vld [vmem:[%s0 + $0xb0] sm:$0xf]
  %v60 = vld [vmem:[%s0 + $0xb4] sm:$0xf]
  %v61 = vld [vmem:[%s0 + $0xb8] sm:$0xf]
  %v62 = vld [vmem:[%s0 + $0xbc] sm:$0xf]
  %v63 = vld [vmem:[%s0 + $0xc0] sm:$0xf]
  %v64 = vld [vmem:[%s0 + $0xc4] sm:$0xf]
  %v65 = vld [vmem:[%s0 + $0xc8] sm:$0xf]
  %v66 = vld [vmem:[%s0 + $0xcc] sm:$0xf]
  %v67 = vld [vmem:[%s0 + $0xd0] sm:$0xf]
  %v68 = vld [vmem:[%s0 + $0xd4] sm:$0xf]
  %v69 = vld [vmem:[%s0 + $0xd8] sm:$0xf]
  %v70 = vld [vmem:[%s0 + $0xdc] sm:$0xf]
  %v71 = vld [vmem:[%s0 + $0xe0] sm:$0xf]
  %v72 = vld [vmem:[%s0 + $0xe4] sm:$0xf]
  %v73 = vld [vmem:[%s0 + $0xe8] sm:$0xf]
  %v74 = vld [vmem:[%s0 + $0xec] sm:$0xf]
  %v75 = vld [vmem:[%s0 + $0xf0] sm:$0xf]
  %v76 = vld [vmem:[%s0 + $0xf4] sm:$0xf]
  %v77 = vld [vmem:[%s0 + $0xf8] sm:$0xf]
  %v78 = vld [vmem:[%s0 + $0xfc] sm:$0xf]
  %v79 = vld [vmem:[%s0 + $0x100] sm:$0xf]
  %v80 = vld [vmem:[%s0 + $0x104] sm:$0xf]
  %v81 = vld [vmem:[%s0 + $0x108] sm:$0xf]
  %v82 = vld [vmem:[%s0 + $0x10c] sm:$0xf]
  %v83 = vld [vmem:[%s0 + $0x110] sm:$0xf]
  %v84 = vld [vmem:[%s0 + $0x114] sm:$0xf]
  %v85 = vld [vmem:[%s0 + $0x118] sm:$0xf]
  %v86 = vld [vmem:[%s0 + $0x11c] sm:$0xf]
  %v87 = vld [vmem:[%s0 + $0x120] sm:$0xf]
  %v88 = vld [vmem:[%s0 + $0x124] sm:$0xf]
  %v89 = vld [vmem:[%s0 + $0x128] sm:$0xf]
  %v90 = vld [vmem:[%s0 + $0x12c] sm:$0xf]
  %v91 = vld [vmem:[%s0 + $0x130] sm:$0xf]
  %v92 = vld [vmem:[%s0 + $0x134] sm:$0xf]
  %v93 = vld [vmem:[%s0 + $0x138] sm:$0xf]
  %v94 = vld [vmem:[%s0 + $0x13c] sm:$0xf]
  %v95 = vld [vmem:[%s0 + $0x140] sm:$0xf]
  %v96 = vld [vmem:[%s0 + $0x144] sm:$0xf]
  %v97 = vld [vmem:[%s0 + $0x148] sm:$0xf]
  %v98 = vld [vmem:[%s0 + $0x14c] sm:$0xf]
  %v99 = vld [vmem:[%s0 + $0x150] sm:$0xf]
  %v100 = vld [vmem:[%s0 + $0x154] sm:$0xf]
  %v101 = vld [vmem:[%s0 + $0x158] sm:$0xf]
  %v102 = vld [vmem:[%s0 + $0x15c] sm:$0xf]
  %v103 = vld [vmem:[%s0 + $0x160] sm:$0xf]
  %v104 = vld [vmem:[%s0 + $0x164] sm:$0xf]
  %v105 = vld [vmem:[%s0 + $0x168] sm:$0xf]
  %v106 = vld [vmem:[%s0 + $0x16c] sm:$0xf]
  %v107 = vld [vmem:[%s0 + $0x170] sm:$0xf]
  %v108 = vld [vmem:[%s0 + $0x174] sm:$0xf]
  %v109 = vld [vmem:[%s0 + $0x178] sm:$0xf]
  %v110 = vld [vmem:[%s0 + $0x17c] sm:$0xf]
  %v111 = vld [vmem:[%s0 + $0x180] sm:$0xf]
  %v112 = vld [vmem:[%s0 + $0x184] sm:$0xf]
  %v113 = vld [vmem:[%s0 + $0x188] sm:$0xf]
  %v114 = vld [vmem:[%s0 + $0x18c] sm:$0xf]
  %v115 = vld [vmem:[%s0 + $0x190] sm:$0xf]
  %v116 = vld [vmem:[%s0 + $0x194] sm:$0xf]
  %v117 = vld [vmem:[%s0 + $0x198] sm:$0xf]
  %v118 = vld [vmem:[%s0 + $0x19c] sm:$0xf]
  %v119 = vld [vmem:[%s0 + $0x1a0] sm:$0xf]
  %v120 = vld [vmem:[%s0 + $0x1a4] sm:$0xf]
  %v121 = vld [vmem:[%s0 + $0x1a8] sm:$0xf]
  %v122 = vld [vmem:[%s0 + $0x1ac] sm:$0xf]
  %v123 = vld [vmem:[%s0 + $0x1b0] sm:$0xf]
  %v124 = vld [vmem:[%s0 + $0x1b4] sm:$0xf]
  %v125 = vld [vmem:[%s0 + $0x1b8] sm:$0xf]
  %v126 = vld [vmem:[%s0 + $0x1bc] sm:$0xf]
  %v127 = vld [vmem:[%s0 + $0x1c0] sm:$0xf]
  %v128 = vld [vmem:[%s0 + $0x1c4] sm:$0xf]
  %v129 = vld [vmem:[%s0 + $0x1c8] sm:$0xf]
  %v130 = vld [vmem:[%s0 + $0x1cc] sm:$0xf]
  %v131 = vld [vmem:[%s0 + $0x1d0] sm:$0xf]
  %v132 = vld [vmem:[%s0 + $0x1d4] sm:$0xf]
  %v133 = vld [vmem:[%s0 + $0x1d8] sm:$0xf]
  %v134 = vld [vmem:[%s0 + $0x1dc] sm:$0xf]
  %v135 = vld [vmem:[%s0 + $0x1e0] sm:$0xf]
  %v136 = vld [vmem:[%s0 + $0x1e4] sm:$0xf]
  %v137 = vld [vmem:[%s0 + $0x1e8] sm:$0xf]
  %v138 = vld [vmem:[%s0 + $0x1ec] sm:$0xf]
  %v139 = vld [vmem:[%s0 + $0x1f0] sm:$0xf]
  %v140 = vld [vmem:[%s0 + $0x1f4] sm:$0xf]
  %v141 = vld [vmem:[%s0 + $0x1f8] sm:$0xf]
  %v142 = vld [vmem:[%s0 + $0x1fc] sm:$0xf]
  %v143 = vld [vmem:[%s0 + $0x200] sm:$0xf]
  %v144 = vld [vmem:[%s0 + $0x204] sm:$0xf]
  %v145 = vld [vmem:[%s0 + $0x208] sm:$0xf]
  %v146 = vld [vmem:[%s0 + $0x20c] sm:$0xf]
  %v147 = vld [vmem:[%s0 + $0x210] sm:$0xf]
  %v148 = vld [vmem:[%s0 + $0x214] sm:$0xf]
  %v149 = vld [vmem:[%s0 + $0x218] sm:$0xf]
  %v150 = vld [vmem:[%s0 + $0x21c] sm:$0xf]
  %v151 = vld [vmem:[%s0 + $0x220] sm:$0xf]
  %v152 = vld [vmem:[%s0 + $0x224] sm:$0xf]
  %v153 = vld [vmem:[%s0 + $0x228] sm:$0xf]
  %v154 = vld [vmem:[%s0 + $0x22c] sm:$0xf]
  %v155 = vld [vmem:[%s0 + $0x230] sm:$0xf]
  %v156 = vld [vmem:[%s0 + $0x234] sm:$0xf]
  %v157 = vld [vmem:[%s0 + $0x238] sm:$0xf]
  %v158 = vld [vmem:[%s0 + $0x23c] sm:$0xf]
  %v159 = vld [vmem:[%s0 + $0x240] sm:$0xf]
  %v160 = vld [vmem:[%s0 + $0x244] sm:$0xf]
  %v161 = vld [vmem:[%s0 + $0x248] sm:$0xf]
  %v162 = vld [vmem:[%s0 + $0x24c] sm:$0xf]
  %v163 = vld [vmem:[%s0 + $0x250] sm:$0xf]
  %v164 = vld [vmem:[%s0 + $0x254] sm:$0xf]
  %v165 = vld [vmem:[%s0 + $0x258] sm:$0xf]
  %v166 = vld [vmem:[%s0 + $0x25c] sm:$0xf]
  %v167 = vld [vmem:[%s0 + $0x260] sm:$0xf]
  %v168 = vld [vmem:[%s0 + $0x264] sm:$0xf]
  %v169 = vld [vmem:[%s0 + $0x268] sm:$0xf]
  %v170 = vld [vmem:[%s0 + $0x26c] sm:$0xf]
  %v171 = vld [vmem:[%s0 + $0x270] sm:$0xf]
  %v172 = vld [vmem:[%s0 + $0x274] sm:$0xf]
  %v173 = vld [vmem:[%s0 + $0x278] sm:$0xf]
  %v174 = vld [vmem:[%s0 + $0x27c] sm:$0xf]
  %v175 = vld [vmem:[%s0 + $0x280] sm:$0xf]
  %v176 = vld [vmem:[%s0 + $0x284] sm:$0xf]
  %v177 = vld [vmem:[%s0 + $0x288] sm:$0xf]
  %v178 = vld [vmem:[%s0 + $0x28c] sm:$0xf]
  %v179 = vld [vmem:[%s0 + $0x290] sm:$0xf]
  %v180 = vld [vmem:[%s0 + $0x294] sm:$0xf]
  %v181 = vld [vmem:[%s0 + $0x298] sm:$0xf]
  %v182 = vld [vmem:[%s0 + $0x29c] sm:$0xf]
  %v183 = vld [vmem:[%s0 + $0x2a0] sm:$0xf]
  %v184 = vld [vmem:[%s0 + $0x2a4] sm:$0xf]
  %v185 = vld [vmem:[%s0 + $0x2a8] sm:$0xf]
  %v186 = vld [vmem:[%s0 + $0x2ac] sm:$0xf]
  %v187 = vld [vmem:[%s0 + $0x2b0] sm:$0xf]
  %v188 = vld [vmem:[%s0 + $0x2b4] sm:$0xf]
  %v189 = vld [vmem:[%s0 + $0x2b8] sm:$0xf]
  %v190 = vld [vmem:[%s0 + $0x2bc] sm:$0xf]
  %v191 = vld [vmem:[%s0 + $0x2c0] sm:$0xf]
  %v192 = vld [vmem:[%s0 + $0x2c4] sm:$0xf]
  %v193 = vld [vmem:[%s0 + $0x2c8] sm:$0xf]
  %v194 = vld [vmem:[%s0 + $0x2cc] sm:$0xf]
  %v195 = vld [vmem:[%s0 + $0x2d0] sm:$0xf]
  %v196 = vld [vmem:[%s0 + $0x2d4] sm:$0xf]
  %v197 = vld [vmem:[%s0 + $0x2d8] sm:$0xf]
  %v198 = vld [vmem:[%s0 + $0x2dc] sm:$0xf]
  %v199 = vld [vmem:[%s0 + $0x2e0] sm:$0xf]
  %v200 = vld [vmem:[%s0 + $0x2e4] sm:$0xf]
  %v201 = vld [vmem:[%s0 + $0x2e8] sm:$0xf]
  %v202 = vld [vmem:[%s0 + $0x2ec] sm:$0xf]
  %v203 = vld [vmem:[%s0 + $0x2f0] sm:$0xf]
  %v204 = vld [vmem:[%s0 + $0x2f4] sm:$0xf]
  %v205 = vld [vmem:[%s0 + $0x2f8] sm:$0xf]
  %v206 = vld [vmem:[%s0 + $0x2fc] sm:$0xf]
  %v207 = vld [vmem:[%s0 + $0x300] sm:$0xf]
  %v208 = vld [vmem:[%s0 + $0x304] sm:$0xf]
  %v209 = vld [vmem:[%s0 + $0x308] sm:$0xf]
  %v210 = vld [vmem:[%s0 + $0x30c] sm:$0xf]
  %v211 = vld [vmem:[%s0 + $0x310] sm:$0xf]
  %v212 = vld [vmem:[%s0 + $0x314] sm:$0xf]
  %v213 = vld [vmem:[%s0 + $0x318] sm:$0xf]
  %v214 = vld [vmem:[%s0 + $0x31c] sm:$0xf]
  %v215 = vld [vmem:[%s0 + $0x320] sm:$0xf]
  %v216 = vld [vmem:[%s0 + $0x324] sm:$0xf]
  %v217 = vld [vmem:[%s0 + $0x328] sm:$0xf]
  %v218 = vld [vmem:[%s0 + $0x32c] sm:$0xf]
  %v219 = vld [vmem:[%s0 + $0x330] sm:$0xf]
  %v220 = vld [vmem:[%s0 + $0x334] sm:$0xf]
  %v221 = vld [vmem:[%s0 + $0x338] sm:$0xf]
  %v222 = vld [vmem:[%s0 + $0x33c] sm:$0xf]
  %v223 = vld [vmem:[%s0 + $0x340] sm:$0xf]
  %v224 = vld [vmem:[%s0 + $0x344] sm:$0xf]
  %v225 = vld [vmem:[%s0 + $0x348] sm:$0xf]
  %v226 = vld [vmem:[%s0 + $0x34c] sm:$0xf]
  %v227 = vld [vmem:[%s0 + $0x350] sm:$0xf]
  %v228 = vld [vmem:[%s0 + $0x354] sm:$0xf]
  %v229 = vld [vmem:[%s0 + $0x358] sm:$0xf]
  %v230 = vld [vmem:[%s0 + $0x35c] sm:$0xf]
  %v231 = vld [vmem:[%s0 + $0x360] sm:$0xf]
  %v232 = vld [vmem:[%s0 + $0x364] sm:$0xf]
  %v233 = vld [vmem:[%s0 + $0x368] sm:$0xf]
  %v234 = vld [vmem:[%s0 + $0x36c] sm:$0xf]
  %v235 = vld [vmem:[%s0 + $0x370] sm:$0xf]
  %v236 = vld [vmem:[%s0 + $0x374] sm:$0xf]
  %v237 = vld [vmem:[%s0 + $0x378] sm:$0xf]
  %v238 = vld [vmem:[%s0 + $0x37c] sm:$0xf]
  %v239 = vld [vmem:[%s0 + $0x380] sm:$0xf]
  %v240 = vld [vmem:[%s0 + $0x384] sm:$0xf]
  %v241 = vld [vmem:[%s0 + $0x388] sm:$0xf]
  %v242 = vld [vmem:[%s0 + $0x38c] sm:$0xf]
  %v243 = vld [vmem:[%s0 + $0x390] sm:$0xf]
  %v244 = vld [vmem:[%s0 + $0x394] sm:$0xf]
  %v245 = vld [vmem:[%s0 + $0x398] sm:$0xf]
  %v246 = vld [vmem:[%s0 + $0x39c] sm:$0xf]
  %v247 = vld [vmem:[%s0 + $0x3a0] sm:$0xf]
  %v248 = vld [vmem:[%s0 + $0x3a4] sm:$0xf]
  %v249 = vld [vmem:[%s0 + $0x3a8] sm:$0xf]
  %v250 = vld [vmem:[%s0 + $0x3ac] sm:$0xf]
  %v251 = vld [vmem:[%s0 + $0x3b0] sm:$0xf]
  %v252 = vld [vmem:[%s0 + $0x3b4] sm:$0xf]
  %v253 = vld [vmem:[%s0 + $0x3b8] sm:$0xf]
  %v254 = vld [vmem:[%s0 + $0x3bc] sm:$0xf]
  %v255 = vld [vmem:[%s0 + $0x3c0] sm:$0xf]
  %v256 = vld [vmem:[%s0 + $0x3c4] sm:$0xf]
  %v257 = vld [vmem:[%s0 + $0x3c8] sm:$0xf]
  %v258 = vld [vmem:[%s0 + $0x3cc] sm:$0xf]
  %v259 = vld [vmem:[%s0 + $0x3d0] sm:$0xf]
  %v260 = vld [vmem:[%s0 + $0x3d4] sm:$0xf]
  %v261 = vld [vmem:[%s0 + $0x3d8] sm:$0xf]
  %v262 = vld [vmem:[%s0 + $0x3dc] sm:$0xf]
  %v263 = vld [vmem:[%s0 + $0x3e0] sm:$0xf]
  %v264 = vld [vmem:[%s0 + $0x3e4] sm:$0xf]
  %v265 = vld [vmem:[%s0 + $0x3e8] sm:$0xf]
  %v266 = vld [vmem:[%s0 + $0x3ec] sm:$0xf]
  %v267 = vld [vmem:[%s0 + $0x3f0] sm:$0xf]
  %v268 = vld [vmem:[%s0 + $0x3f4] sm:$0xf]
  %v269 = vld [vmem:[%s0 + $0x3f8] sm:$0xf]
  %v270 = vld [vmem:[%s0 + $0x3fc] sm:$0xf]
  %v271 = vld [vmem:[%s1] sm:$0xf]
  %v272 = vld [vmem:[%s1 + $0x4] sm:$0xf]
  %v273 = vld [vmem:[%s1 + $0x8] sm:$0xf]
  %v274 = vld [vmem:[%s1 + $0xc] sm:$0x3]
  %v275 = vld [vmem:[%s2] sm:$0x1]
  %v277 = vlaneseq
  %v278 = vshrl.u32 %v277, 7
  %v279 = vsub.s32 0, %v278
  %v280 = vrot.slane %v275, %v279
  %v538 = vunpack.c.l.b16 %v15
  %v539 = vunpack.c.l.b16 %v16
  %v540 = vunpack.c.l.b16 %v17
  %v541 = vunpack.c.l.b16 %v18
  %v542 = vunpack.c.l.b16 %v19
  %v543 = vunpack.c.l.b16 %v20
  %v544 = vunpack.c.l.b16 %v21
  %v545 = vunpack.c.l.b16 %v22
  %v546 = vunpack.c.l.b16 %v23
  %v547 = vunpack.c.l.b16 %v24
  %v548 = vunpack.c.l.b16 %v25
  %v549 = vunpack.c.l.b16 %v26
  %v550 = vunpack.c.l.b16 %v27
  %v551 = vunpack.c.l.b16 %v28
  %v552 = vunpack.c.l.b16 %v29
  %v553 = vunpack.c.l.b16 %v30
  %v554 = vunpack.c.l.b16 %v31
  %v555 = vunpack.c.l.b16 %v32
  %v556 = vunpack.c.l.b16 %v33
  %v557 = vunpack.c.l.b16 %v34
  %v558 = vunpack.c.l.b16 %v35
  %v559 = vunpack.c.l.b16 %v36
  %v560 = vunpack.c.l.b16 %v37
  %v561 = vunpack.c.l.b16 %v38
  %v562 = vunpack.c.l.b16 %v39
  %v563 = vunpack.c.l.b16 %v40
  %v564 = vunpack.c.l.b16 %v41
  %v565 = vunpack.c.l.b16 %v42
  %v566 = vunpack.c.l.b16 %v43
  %v567 = vunpack.c.l.b16 %v44
  %v568 = vunpack.c.l.b16 %v45
  %v569 = vunpack.c.l.b16 %v46
  %v570 = vunpack.c.l.b16 %v47
  %v571 = vunpack.c.l.b16 %v48
  %v572 = vunpack.c.l.b16 %v49
  %v573 = vunpack.c.l.b16 %v50
  %v574 = vunpack.c.l.b16 %v51
  %v575 = vunpack.c.l.b16 %v52
  %v576 = vunpack.c.l.b16 %v53
  %v577 = vunpack.c.l.b16 %v54
  %v578 = vunpack.c.l.b16 %v55
  %v579 = vunpack.c.l.b16 %v56
  %v580 = vunpack.c.l.b16 %v57
  %v581 = vunpack.c.l.b16 %v58
  %v582 = vunpack.c.l.b16 %v59
  %v583 = vunpack.c.l.b16 %v60
  %v584 = vunpack.c.l.b16 %v61
  %v585 = vunpack.c.l.b16 %v62
  %v586 = vunpack.c.l.b16 %v63
  %v587 = vunpack.c.l.b16 %v64
  %v588 = vunpack.c.l.b16 %v65
  %v589 = vunpack.c.l.b16 %v66
  %v590 = vunpack.c.l.b16 %v67
  %v591 = vunpack.c.l.b16 %v68
  %v592 = vunpack.c.l.b16 %v69
  %v593 = vunpack.c.l.b16 %v70
  %v594 = vunpack.c.l.b16 %v71
  %v595 = vunpack.c.l.b16 %v72
  %v596 = vunpack.c.l.b16 %v73
  %v597 = vunpack.c.l.b16 %v74
  %v598 = vunpack.c.l.b16 %v75
  %v599 = vunpack.c.l.b16 %v76
  %v600 = vunpack.c.l.b16 %v77
  %v601 = vunpack.c.l.b16 %v78
  %v602 = vunpack.c.l.b16 %v79
  %v603 = vunpack.c.l.b16 %v80
  %v604 = vunpack.c.l.b16 %v81
  %v605 = vunpack.c.l.b16 %v82
  %v606 = vunpack.c.l.b16 %v83
  %v607 = vunpack.c.l.b16 %v84
  %v608 = vunpack.c.l.b16 %v85
  %v609 = vunpack.c.l.b16 %v86
  %v610 = vunpack.c.l.b16 %v87
  %v611 = vunpack.c.l.b16 %v88
  %v612 = vunpack.c.l.b16 %v89
  %v613 = vunpack.c.l.b16 %v90
  %v614 = vunpack.c.l.b16 %v91
  %v615 = vunpack.c.l.b16 %v92
  %v616 = vunpack.c.l.b16 %v93
  %v617 = vunpack.c.l.b16 %v94
  %v618 = vunpack.c.l.b16 %v95
  %v619 = vunpack.c.l.b16 %v96
  %v620 = vunpack.c.l.b16 %v97
  %v621 = vunpack.c.l.b16 %v98
  %v622 = vunpack.c.l.b16 %v99
  %v623 = vunpack.c.l.b16 %v100
  %v624 = vunpack.c.l.b16 %v101
  %v625 = vunpack.c.l.b16 %v102
  %v626 = vunpack.c.l.b16 %v103
  %v627 = vunpack.c.l.b16 %v104
  %v628 = vunpack.c.l.b16 %v105
  %v629 = vunpack.c.l.b16 %v106
  %v630 = vunpack.c.l.b16 %v107
  %v631 = vunpack.c.l.b16 %v108
  %v632 = vunpack.c.l.b16 %v109
  %v633 = vunpack.c.l.b16 %v110
  %v634 = vunpack.c.l.b16 %v111
  %v635 = vunpack.c.l.b16 %v112
  %v636 = vunpack.c.l.b16 %v113
  %v637 = vunpack.c.l.b16 %v114
  %v638 = vunpack.c.l.b16 %v115
  %v639 = vunpack.c.l.b16 %v116
  %v640 = vunpack.c.l.b16 %v117
  %v641 = vunpack.c.l.b16 %v118
  %v642 = vunpack.c.l.b16 %v119
  %v643 = vunpack.c.l.b16 %v120
  %v644 = vunpack.c.l.b16 %v121
  %v645 = vunpack.c.l.b16 %v122
  %v646 = vunpack.c.l.b16 %v123
  %v647 = vunpack.c.l.b16 %v124
  %v648 = vunpack.c.l.b16 %v125
  %v649 = vunpack.c.l.b16 %v126
  %v650 = vunpack.c.l.b16 %v127
  %v651 = vunpack.c.l.b16 %v128
  %v652 = vunpack.c.l.b16 %v129
  %v653 = vunpack.c.l.b16 %v130
  %v654 = vunpack.c.l.b16 %v131
  %v655 = vunpack.c.l.b16 %v132
  %v656 = vunpack.c.l.b16 %v133
  %v657 = vunpack.c.l.b16 %v134
  %v658 = vunpack.c.l.b16 %v135
  %v659 = vunpack.c.l.b16 %v136
  %v660 = vunpack.c.l.b16 %v137
  %v661 = vunpack.c.l.b16 %v138
  %v662 = vunpack.c.l.b16 %v139
  %v663 = vunpack.c.l.b16 %v140
  %v664 = vunpack.c.l.b16 %v141
  %v665 = vunpack.c.l.b16 %v142
  %v666 = vunpack.c.l.b16 %v143
  %v667 = vunpack.c.l.b16 %v144
  %v668 = vunpack.c.l.b16 %v145
  %v669 = vunpack.c.l.b16 %v146
  %v670 = vunpack.c.l.b16 %v147
  %v671 = vunpack.c.l.b16 %v148
  %v672 = vunpack.c.l.b16 %v149
  %v673 = vunpack.c.l.b16 %v150
  %v674 = vunpack.c.l.b16 %v151
  %v675 = vunpack.c.l.b16 %v152
  %v676 = vunpack.c.l.b16 %v153
  %v677 = vunpack.c.l.b16 %v154
  %v678 = vunpack.c.l.b16 %v155
  %v679 = vunpack.c.l.b16 %v156
  %v680 = vunpack.c.l.b16 %v157
  %v681 = vunpack.c.l.b16 %v158
  %v682 = vunpack.c.l.b16 %v159
  %v683 = vunpack.c.l.b16 %v160
  %v684 = vunpack.c.l.b16 %v161
  %v685 = vunpack.c.l.b16 %v162
  %v686 = vunpack.c.l.b16 %v163
  %v687 = vunpack.c.l.b16 %v164
  %v688 = vunpack.c.l.b16 %v165
  %v689 = vunpack.c.l.b16 %v166
  %v690 = vunpack.c.l.b16 %v167
  %v691 = vunpack.c.l.b16 %v168
  %v692 = vunpack.c.l.b16 %v169
  %v693 = vunpack.c.l.b16 %v170
  %v694 = vunpack.c.l.b16 %v171
  %v695 = vunpack.c.l.b16 %v172
  %v696 = vunpack.c.l.b16 %v173
  %v697 = vunpack.c.l.b16 %v174
  %v698 = vunpack.c.l.b16 %v175
  %v699 = vunpack.c.l.b16 %v176
  %v700 = vunpack.c.l.b16 %v177
  %v701 = vunpack.c.l.b16 %v178
  %v702 = vunpack.c.l.b16 %v179
  %v703 = vunpack.c.l.b16 %v180
  %v704 = vunpack.c.l.b16 %v181
  %v705 = vunpack.c.l.b16 %v182
  %v706 = vunpack.c.l.b16 %v183
  %v707 = vunpack.c.l.b16 %v184
  %v708 = vunpack.c.l.b16 %v185
  %v709 = vunpack.c.l.b16 %v186
  %v710 = vunpack.c.l.b16 %v187
  %v711 = vunpack.c.l.b16 %v188
  %v712 = vunpack.c.l.b16 %v189
  %v713 = vunpack.c.l.b16 %v190
  %v714 = vunpack.c.l.b16 %v191
  %v715 = vunpack.c.l.b16 %v192
  %v716 = vunpack.c.l.b16 %v193
  %v717 = vunpack.c.l.b16 %v194
  %v718 = vunpack.c.l.b16 %v195
  %v719 = vunpack.c.l.b16 %v196
  %v720 = vunpack.c.l.b16 %v197
  %v721 = vunpack.c.l.b16 %v198
  %v722 = vunpack.c.l.b16 %v199
  %v723 = vunpack.c.l.b16 %v200
  %v724 = vunpack.c.l.b16 %v201
  %v725 = vunpack.c.l.b16 %v202
  %v726 = vunpack.c.l.b16 %v203
  %v727 = vunpack.c.l.b16 %v204
  %v728 = vunpack.c.l.b16 %v205
  %v729 = vunpack.c.l.b16 %v206
  %v730 = vunpack.c.l.b16 %v207
  %v731 = vunpack.c.l.b16 %v208
  %v732 = vunpack.c.l.b16 %v209
  %v733 = vunpack.c.l.b16 %v210
  %v734 = vunpack.c.l.b16 %v211
  %v735 = vunpack.c.l.b16 %v212
  %v736 = vunpack.c.l.b16 %v213
  %v737 = vunpack.c.l.b16 %v214
  %v738 = vunpack.c.l.b16 %v215
  %v739 = vunpack.c.l.b16 %v216
  %v740 = vunpack.c.l.b16 %v217
  %v741 = vunpack.c.l.b16 %v218
  %v742 = vunpack.c.l.b16 %v219
  %v743 = vunpack.c.l.b16 %v220
  %v744 = vunpack.c.l.b16 %v221
  %v745 = vunpack.c.l.b16 %v222
  %v746 = vunpack.c.l.b16 %v223
  %v747 = vunpack.c.l.b16 %v224
  %v748 = vunpack.c.l.b16 %v225
  %v749 = vunpack.c.l.b16 %v226
  %v750 = vunpack.c.l.b16 %v227
  %v751 = vunpack.c.l.b16 %v228
  %v752 = vunpack.c.l.b16 %v229
  %v753 = vunpack.c.l.b16 %v230
  %v754 = vunpack.c.l.b16 %v231
  %v755 = vunpack.c.l.b16 %v232
  %v756 = vunpack.c.l.b16 %v233
  %v757 = vunpack.c.l.b16 %v234
  %v758 = vunpack.c.l.b16 %v235
  %v759 = vunpack.c.l.b16 %v236
  %v760 = vunpack.c.l.b16 %v237
  %v761 = vunpack.c.l.b16 %v238
  %v762 = vunpack.c.l.b16 %v239
  %v763 = vunpack.c.l.b16 %v240
  %v764 = vunpack.c.l.b16 %v241
  %v765 = vunpack.c.l.b16 %v242
  %v766 = vunpack.c.l.b16 %v243
  %v767 = vunpack.c.l.b16 %v244
  %v768 = vunpack.c.l.b16 %v245
  %v769 = vunpack.c.l.b16 %v246
  %v770 = vunpack.c.l.b16 %v247
  %v771 = vunpack.c.l.b16 %v248
  %v772 = vunpack.c.l.b16 %v249
  %v773 = vunpack.c.l.b16 %v250
  %v774 = vunpack.c.l.b16 %v251
  %v775 = vunpack.c.l.b16 %v252
  %v776 = vunpack.c.l.b16 %v253
  %v777 = vunpack.c.l.b16 %v254
  %v778 = vunpack.c.l.b16 %v255
  %v779 = vunpack.c.l.b16 %v256
  %v780 = vunpack.c.l.b16 %v257
  %v781 = vunpack.c.l.b16 %v258
  %v782 = vunpack.c.l.b16 %v259
  %v783 = vunpack.c.l.b16 %v260
  %v784 = vunpack.c.l.b16 %v261
  %v785 = vunpack.c.l.b16 %v262
  %v786 = vunpack.c.l.b16 %v263
  %v787 = vunpack.c.l.b16 %v264
  %v788 = vunpack.c.l.b16 %v265
  %v789 = vunpack.c.l.b16 %v266
  %v790 = vunpack.c.l.b16 %v267
  %v791 = vunpack.c.l.b16 %v268
  %v792 = vunpack.c.l.b16 %v269
  %v793 = vunpack.c.l.b16 %v270
  %v794 = vpack.c.b16 %v539, %v538
  %v795 = vpack.c.b16 %v541, %v540
  %v796 = vpack.c.b16 %v543, %v542
  %v797 = vpack.c.b16 %v545, %v544
  %v798 = vpack.c.b16 %v547, %v546
  %v799 = vpack.c.b16 %v549, %v548
  %v800 = vpack.c.b16 %v551, %v550
  %v801 = vpack.c.b16 %v553, %v552
  %v802 = vpack.c.b16 %v555, %v554
  %v803 = vpack.c.b16 %v557, %v556
  %v804 = vpack.c.b16 %v559, %v558
  %v805 = vpack.c.b16 %v561, %v560
  %v806 = vpack.c.b16 %v563, %v562
  %v807 = vpack.c.b16 %v565, %v564
  %v808 = vpack.c.b16 %v567, %v566
  %v809 = vpack.c.b16 %v569, %v568
  %v810 = vpack.c.b16 %v571, %v570
  %v811 = vpack.c.b16 %v573, %v572
  %v812 = vpack.c.b16 %v575, %v574
  %v813 = vpack.c.b16 %v577, %v576
  %v814 = vpack.c.b16 %v579, %v578
  %v815 = vpack.c.b16 %v581, %v580
  %v816 = vpack.c.b16 %v583, %v582
  %v817 = vpack.c.b16 %v585, %v584
  %v818 = vpack.c.b16 %v587, %v586
  %v819 = vpack.c.b16 %v589, %v588
  %v820 = vpack.c.b16 %v591, %v590
  %v821 = vpack.c.b16 %v593, %v592
  %v822 = vpack.c.b16 %v595, %v594
  %v823 = vpack.c.b16 %v597, %v596
  %v824 = vpack.c.b16 %v599, %v598
  %v825 = vpack.c.b16 %v601, %v600
  %v826 = vpack.c.b16 %v603, %v602
  %v827 = vpack.c.b16 %v605, %v604
  %v828 = vpack.c.b16 %v607, %v606
  %v829 = vpack.c.b16 %v609, %v608
  %v830 = vpack.c.b16 %v611, %v610
  %v831 = vpack.c.b16 %v613, %v612
  %v832 = vpack.c.b16 %v615, %v614
  %v833 = vpack.c.b16 %v617, %v616
  %v834 = vpack.c.b16 %v619, %v618
  %v835 = vpack.c.b16 %v621, %v620
  %v836 = vpack.c.b16 %v623, %v622
  %v837 = vpack.c.b16 %v625, %v624
  %v838 = vpack.c.b16 %v627, %v626
  %v839 = vpack.c.b16 %v629, %v628
  %v840 = vpack.c.b16 %v631, %v630
  %v841 = vpack.c.b16 %v633, %v632
  %v842 = vpack.c.b16 %v635, %v634
  %v843 = vpack.c.b16 %v637, %v636
  %v844 = vpack.c.b16 %v639, %v638
  %v845 = vpack.c.b16 %v641, %v640
  %v846 = vpack.c.b16 %v643, %v642
  %v847 = vpack.c.b16 %v645, %v644
  %v848 = vpack.c.b16 %v647, %v646
  %v849 = vpack.c.b16 %v649, %v648
  %v850 = vpack.c.b16 %v651, %v650
  %v851 = vpack.c.b16 %v653, %v652
  %v852 = vpack.c.b16 %v655, %v654
  %v853 = vpack.c.b16 %v657, %v656
  %v854 = vpack.c.b16 %v659, %v658
  %v855 = vpack.c.b16 %v661, %v660
  %v856 = vpack.c.b16 %v663, %v662
  %v857 = vpack.c.b16 %v665, %v664
  %v858 = vpack.c.b16 %v667, %v666
  %v859 = vpack.c.b16 %v669, %v668
  %v860 = vpack.c.b16 %v671, %v670
  %v861 = vpack.c.b16 %v673, %v672
  %v862 = vpack.c.b16 %v675, %v674
  %v863 = vpack.c.b16 %v677, %v676
  %v864 = vpack.c.b16 %v679, %v678
  %v865 = vpack.c.b16 %v681, %v680
  %v866 = vpack.c.b16 %v683, %v682
  %v867 = vpack.c.b16 %v685, %v684
  %v868 = vpack.c.b16 %v687, %v686
  %v869 = vpack.c.b16 %v689, %v688
  %v870 = vpack.c.b16 %v691, %v690
  %v871 = vpack.c.b16 %v693, %v692
  %v872 = vpack.c.b16 %v695, %v694
  %v873 = vpack.c.b16 %v697, %v696
  %v874 = vpack.c.b16 %v699, %v698
  %v875 = vpack.c.b16 %v701, %v700
  %v876 = vpack.c.b16 %v703, %v702
  %v877 = vpack.c.b16 %v705, %v704
  %v878 = vpack.c.b16 %v707, %v706
  %v879 = vpack.c.b16 %v709, %v708
  %v880 = vpack.c.b16 %v711, %v710
  %v881 = vpack.c.b16 %v713, %v712
  %v882 = vpack.c.b16 %v715, %v714
  %v883 = vpack.c.b16 %v717, %v716
  %v884 = vpack.c.b16 %v719, %v718
  %v885 = vpack.c.b16 %v721, %v720
  %v886 = vpack.c.b16 %v723, %v722
  %v887 = vpack.c.b16 %v725, %v724
  %v888 = vpack.c.b16 %v727, %v726
  %v889 = vpack.c.b16 %v729, %v728
  %v890 = vpack.c.b16 %v731, %v730
  %v891 = vpack.c.b16 %v733, %v732
  %v892 = vpack.c.b16 %v735, %v734
  %v893 = vpack.c.b16 %v737, %v736
  %v894 = vpack.c.b16 %v739, %v738
  %v895 = vpack.c.b16 %v741, %v740
  %v896 = vpack.c.b16 %v743, %v742
  %v897 = vpack.c.b16 %v745, %v744
  %v898 = vpack.c.b16 %v747, %v746
  %v899 = vpack.c.b16 %v749, %v748
  %v900 = vpack.c.b16 %v751, %v750
  %v901 = vpack.c.b16 %v753, %v752
  %v902 = vpack.c.b16 %v755, %v754
  %v903 = vpack.c.b16 %v757, %v756
  %v904 = vpack.c.b16 %v759, %v758
  %v905 = vpack.c.b16 %v761, %v760
  %v906 = vpack.c.b16 %v763, %v762
  %v907 = vpack.c.b16 %v765, %v764
  %v908 = vpack.c.b16 %v767, %v766
  %v909 = vpack.c.b16 %v769, %v768
  %v910 = vpack.c.b16 %v771, %v770
  %v911 = vpack.c.b16 %v773, %v772
  %v912 = vpack.c.b16 %v775, %v774
  %v913 = vpack.c.b16 %v777, %v776
  %v914 = vpack.c.b16 %v779, %v778
  %v915 = vpack.c.b16 %v781, %v780
  %v916 = vpack.c.b16 %v783, %v782
  %v917 = vpack.c.b16 %v785, %v784
  %v918 = vpack.c.b16 %v787, %v786
  %v919 = vpack.c.b16 %v789, %v788
  %v920 = vpack.c.b16 %v791, %v790
  %v921 = vpack.c.b16 %v793, %v792
  %v926 = vunpack.c.l.b16 %v271
  %v927 = vunpack.c.l.b16 %v272
  %v928 = vunpack.c.l.b16 %v273
  %v929 = vunpack.c.l.b16 %v274
  %v930 = vpack.c.b16 %v927, %v926
  %v931 = vpack.c.b16 %v929, %v928
  %vm933 = vcmask 220160
  %v935 = vsel %vm933, %v794, 0
  %v938 = vsel %vm933, %v795, 0
  %v941 = vsel %vm933, %v796, 0
  %v944 = vsel %vm933, %v797, 0
  %v947 = vsel %vm933, %v798, 0
  %v950 = vsel %vm933, %v799, 0
  %v953 = vsel %vm933, %v800, 0
  %v956 = vsel %vm933, %v801, 0
  %v959 = vsel %vm933, %v802, 0
  %v962 = vsel %vm933, %v803, 0
  %v965 = vsel %vm933, %v804, 0
  %v968 = vsel %vm933, %v805, 0
  %v971 = vsel %vm933, %v806, 0
  %v974 = vsel %vm933, %v807, 0
  %v977 = vsel %vm933, %v808, 0
  %v980 = vsel %vm933, %v809, 0
  %v983 = vsel %vm933, %v810, 0
  %v986 = vsel %vm933, %v811, 0
  %v989 = vsel %vm933, %v812, 0
  %v992 = vsel %vm933, %v813, 0
  %v995 = vsel %vm933, %v814, 0
  %v998 = vsel %vm933, %v815, 0
  %v1001 = vsel %vm933, %v816, 0
  %v1004 = vsel %vm933, %v817, 0
  %v1007 = vsel %vm933, %v818, 0
  %v1010 = vsel %vm933, %v819, 0
  %v1013 = vsel %vm933, %v820, 0
  %v1016 = vsel %vm933, %v821, 0
  %v1019 = vsel %vm933, %v822, 0
  %v1022 = vsel %vm933, %v823, 0
  %v1025 = vsel %vm933, %v824, 0
  %v1028 = vsel %vm933, %v825, 0
  %v1031 = vsel %vm933, %v826, 0
  %v1034 = vsel %vm933, %v827, 0
  %v1037 = vsel %vm933, %v828, 0
  %v1040 = vsel %vm933, %v829, 0
  %v1043 = vsel %vm933, %v830, 0
  %v1046 = vsel %vm933, %v831, 0
  %v1049 = vsel %vm933, %v832, 0
  %v1052 = vsel %vm933, %v833, 0
  %v1055 = vsel %vm933, %v834, 0
  %v1058 = vsel %vm933, %v835, 0
  %v1061 = vsel %vm933, %v836, 0
  %v1064 = vsel %vm933, %v837, 0
  %v1067 = vsel %vm933, %v838, 0
  %v1070 = vsel %vm933, %v839, 0
  %v1073 = vsel %vm933, %v840, 0
  %v1076 = vsel %vm933, %v841, 0
  %v1079 = vsel %vm933, %v842, 0
  %v1082 = vsel %vm933, %v843, 0
  %v1085 = vsel %vm933, %v844, 0
  %v1088 = vsel %vm933, %v845, 0
  %v1091 = vsel %vm933, %v846, 0
  %v1094 = vsel %vm933, %v847, 0
  %v1097 = vsel %vm933, %v848, 0
  %v1100 = vsel %vm933, %v849, 0
  %v1103 = vsel %vm933, %v850, 0
  %v1106 = vsel %vm933, %v851, 0
  %v1109 = vsel %vm933, %v852, 0
  %v1112 = vsel %vm933, %v853, 0
  %v1115 = vsel %vm933, %v854, 0
  %v1118 = vsel %vm933, %v855, 0
  %v1121 = vsel %vm933, %v856, 0
  %v1124 = vsel %vm933, %v857, 0
  %v1127 = vsel %vm933, %v858, 0
  %v1130 = vsel %vm933, %v859, 0
  %v1133 = vsel %vm933, %v860, 0
  %v1136 = vsel %vm933, %v861, 0
  %v1139 = vsel %vm933, %v862, 0
  %v1142 = vsel %vm933, %v863, 0
  %v1145 = vsel %vm933, %v864, 0
  %v1148 = vsel %vm933, %v865, 0
  %v1151 = vsel %vm933, %v866, 0
  %v1154 = vsel %vm933, %v867, 0
  %v1157 = vsel %vm933, %v868, 0
  %v1160 = vsel %vm933, %v869, 0
  %v1163 = vsel %vm933, %v870, 0
  %v1166 = vsel %vm933, %v871, 0
  %v1169 = vsel %vm933, %v872, 0
  %v1172 = vsel %vm933, %v873, 0
  %v1175 = vsel %vm933, %v874, 0
  %v1178 = vsel %vm933, %v875, 0
  %v1181 = vsel %vm933, %v876, 0
  %v1184 = vsel %vm933, %v877, 0
  %v1187 = vsel %vm933, %v878, 0
  %v1190 = vsel %vm933, %v879, 0
  %v1193 = vsel %vm933, %v880, 0
  %v1196 = vsel %vm933, %v881, 0
  %v1199 = vsel %vm933, %v882, 0
  %v1202 = vsel %vm933, %v883, 0
  %v1205 = vsel %vm933, %v884, 0
  %v1208 = vsel %vm933, %v885, 0
  %v1211 = vsel %vm933, %v886, 0
  %v1214 = vsel %vm933, %v887, 0
  %v1217 = vsel %vm933, %v888, 0
  %v1220 = vsel %vm933, %v889, 0
  %v1223 = vsel %vm933, %v890, 0
  %v1226 = vsel %vm933, %v891, 0
  %v1229 = vsel %vm933, %v892, 0
  %v1232 = vsel %vm933, %v893, 0
  %v1235 = vsel %vm933, %v894, 0
  %v1238 = vsel %vm933, %v895, 0
  %v1241 = vsel %vm933, %v896, 0
  %v1244 = vsel %vm933, %v897, 0
  %v1247 = vsel %vm933, %v898, 0
  %v1250 = vsel %vm933, %v899, 0
  %v1253 = vsel %vm933, %v900, 0
  %v1256 = vsel %vm933, %v901, 0
  %v1259 = vsel %vm933, %v902, 0
  %v1262 = vsel %vm933, %v903, 0
  %v1265 = vsel %vm933, %v904, 0
  %v1268 = vsel %vm933, %v905, 0
  %v1271 = vsel %vm933, %v906, 0
  %v1274 = vsel %vm933, %v907, 0
  %v1277 = vsel %vm933, %v908, 0
  %v1280 = vsel %vm933, %v909, 0
  %v1283 = vsel %vm933, %v910, 0
  %v1286 = vsel %vm933, %v911, 0
  %v1289 = vsel %vm933, %v912, 0
  %v1292 = vsel %vm933, %v913, 0
  %v1295 = vsel %vm933, %v914, 0
  %v1298 = vsel %vm933, %v915, 0
  %v1301 = vsel %vm933, %v916, 0
  %v1304 = vsel %vm933, %v917, 0
  %v1307 = vsel %vm933, %v918, 0
  %v1310 = vsel %vm933, %v919, 0
  %v1313 = vsel %vm933, %v920, 0
  %v1316 = vsel %vm933, %v921, 0
  %vm1318 = vcmask 1044480
  %vm1319 = vcmask 1045504
  %v1320 = vsel %vm1318, 4294967295, 65535
  %v1321 = vsel %vm1319, %v1320, 0
  %v1323 = vand.u32 %v931, %v1321
  %1325 = vmatprep.subr.bf16.mxu0 0
  %1326 = vmatpush1.bf16.msra.mxu0 %v930
  %1327 = vmatprep.subr.bf16.mxu0 0
  %1328 = vmatpush1.bf16.msra.mxu0 %v1323
  %1329 = vmatprep.subr.bf16.mxu0 0
  %1330 = vmatpush1.bf16.msra.mxu0 0
  %1331 = vmatprep.subr.bf16.mxu0 0
  %1332 = vmatpush1.bf16.msra.mxu0 0
  %1333 = vmatprep.subr.bf16.mxu0 0
  %1334 = vmatpush1.bf16.msra.mxu0 0
  %1335 = vmatprep.subr.bf16.mxu0 0
  %1336 = vmatpush1.bf16.msra.mxu0 0
  %1337 = vmatprep.subr.bf16.mxu0 0
  %1338 = vmatpush1.bf16.msra.mxu0 0
  %1339 = vmatprep.subr.bf16.mxu0 0
  %1340 = vmatpush1.bf16.msra.mxu0 0
  %1341 = vmatprep.subr.bf16.mxu0 0
  %1342 = vmatpush1.bf16.msra.mxu0 0
  %1343 = vmatprep.subr.bf16.mxu0 0
  %1344 = vmatpush1.bf16.msra.mxu0 0
  %1345 = vmatprep.subr.bf16.mxu0 0
  %1346 = vmatpush1.bf16.msra.mxu0 0
  %1347 = vmatprep.subr.bf16.mxu0 0
  %1348 = vmatpush1.bf16.msra.mxu0 0
  %1349 = vmatprep.subr.bf16.mxu0 0
  %1350 = vmatpush1.bf16.msra.mxu0 0
  %1351 = vmatprep.subr.bf16.mxu0 0
  %1352 = vmatpush1.bf16.msra.mxu0 0
  %1353 = vmatprep.subr.bf16.mxu0 0
  %1354 = vmatpush1.bf16.msra.mxu0 0
  %1355 = vmatprep.subr.bf16.mxu0 0
  %1356 = vmatpush1.bf16.msra.mxu0 0
  %1357 = vmatprep.mubr.bf16.mxu0 0
  %1358 = vmatmul.mubr.bf16.gmra.mrb[0].mxu0 %v935
  %v1359 = vpop.f32.mrb[0].mxu0
  %v1360 = vadd.f32 %v280, %v1359
  %v1361 = vpop.f32.mrb[0].mxu0
  %v1362 = vpop.f32.mrb[0].mxu0
  %v1363 = vadd.f32 %v280, %v1362
  %v1364 = vpop.f32.mrb[0].mxu0
  %1365 = vmatprep.mubr.bf16.mxu0 0
  %1366 = vmatmul.mubr.bf16.gmra.mrb[0].mxu0 %v938
  %v1367 = vpop.f32.mrb[0].mxu0
  %v1368 = vadd.f32 %v280, %v1367
  %v1369 = vpop.f32.mrb[0].mxu0
  %v1370 = vpop.f32.mrb[0].mxu0
  %v1371 = vadd.f32 %v280, %v1370
  %v1372 = vpop.f32.mrb[0].mxu0
  %1373 = vmatprep.mubr.bf16.mxu0 0
  %1374 = vmatmul.mubr.bf16.gmra.mrb[0].mxu0 %v941
  %v1375 = vpop.f32.mrb[0].mxu0
  %v1376 = vadd.f32 %v280, %v1375
  %v1377 = vpop.f32.mrb[0].mxu0
  %v1378 = vpop.f32.mrb[0].mxu0
  %v1379 = vadd.f32 %v280, %v1378
  %v1380 = vpop.f32.mrb[0].mxu0
  %1381 = vmatprep.mubr.bf16.mxu0 0
  %1382 = vmatmul.mubr.bf16.gmra.mrb[0].mxu0 %v944
  %v1383 = vpop.f32.mrb[0].mxu0
  %v1384 = vadd.f32 %v280, %v1383
  %v1385 = vpop.f32.mrb[0].mxu0
  %v1386 = vpop.f32.mrb[0].mxu0
  %v1387 = vadd.f32 %v280, %v1386
  %v1388 = vpop.f32.mrb[0].mxu0
  %1389 = vmatprep.mubr.bf16.mxu0 0
  %1390 = vmatmul.mubr.bf16.gmra.mrb[0].mxu0 %v947
  %v1391 = vpop.f32.mrb[0].mxu0
  %v1392 = vadd.f32 %v280, %v1391
  %v1393 = vpop.f32.mrb[0].mxu0
  %v1394 = vpop.f32.mrb[0].mxu0
  %v1395 = vadd.f32 %v280, %v1394
  %v1396 = vpop.f32.mrb[0].mxu0
  %1397 = vmatprep.mubr.bf16.mxu0 0
  %1398 = vmatmul.mubr.bf16.gmra.mrb[0].mxu0 %v950
  %v1399 = vpop.f32.mrb[0].mxu0
  %v1400 = vadd.f32 %v280, %v1399
  %v1401 = vpop.f32.mrb[0].mxu0
  %v1402 = vpop.f32.mrb[0].mxu0
  %v1403 = vadd.f32 %v280, %v1402
  %v1404 = vpop.f32.mrb[0].mxu0
  %1405 = vmatprep.mubr.bf16.mxu0 0
  %1406 = vmatmul.mubr.bf16.gmra.mrb[0].mxu0 %v953
  %v1407 = vpop.f32.mrb[0].mxu0
  %v1408 = vadd.f32 %v280, %v1407
  %v1409 = vpop.f32.mrb[0].mxu0
  %v1410 = vpop.f32.mrb[0].mxu0
  %v1411 = vadd.f32 %v280, %v1410
  %v1412 = vpop.f32.mrb[0].mxu0
  %1413 = vmatprep.mubr.bf16.mxu0 0
  %1414 = vmatmul.mubr.bf16.gmra.mrb[0].mxu0 %v956
  %v1415 = vpop.f32.mrb[0].mxu0
  %v1416 = vadd.f32 %v280, %v1415
  %v1417 = vpop.f32.mrb[0].mxu0
  %v1418 = vpop.f32.mrb[0].mxu0
  %v1419 = vadd.f32 %v280, %v1418
  %v1420 = vpop.f32.mrb[0].mxu0
  %1421 = vmatprep.mubr.bf16.mxu0 0
  %1422 = vmatmul.mubr.bf16.gmra.mrb[0].mxu0 %v959
  %v1423 = vpop.f32.mrb[0].mxu0
  %v1424 = vadd.f32 %v280, %v1423
  %v1425 = vpop.f32.mrb[0].mxu0
  %v1426 = vpop.f32.mrb[0].mxu0
  %v1427 = vadd.f32 %v280, %v1426
  %v1428 = vpop.f32.mrb[0].mxu0
  %1429 = vmatprep.mubr.bf16.mxu0 0
  %1430 = vmatmul.mubr.bf16.gmra.mrb[0].mxu0 %v962
  %v1431 = vpop.f32.mrb[0].mxu0
  %v1432 = vadd.f32 %v280, %v1431
  %v1433 = vpop.f32.mrb[0].mxu0
  %v1434 = vpop.f32.mrb[0].mxu0
  %v1435 = vadd.f32 %v280, %v1434
  %v1436 = vpop.f32.mrb[0].mxu0
  %1437 = vmatprep.mubr.bf16.mxu0 0
  %1438 = vmatmul.mubr.bf16.gmra.mrb[0].mxu0 %v965
  %v1439 = vpop.f32.mrb[0].mxu0
  %v1440 = vadd.f32 %v280, %v1439
  %v1441 = vpop.f32.mrb[0].mxu0
  %v1442 = vpop.f32.mrb[0].mxu0
  %v1443 = vadd.f32 %v280, %v1442
  %v1444 = vpop.f32.mrb[0].mxu0
  %1445 = vmatprep.mubr.bf16.mxu0 0
  %1446 = vmatmul.mubr.bf16.gmra.mrb[0].mxu0 %v968
  %v1447 = vpop.f32.mrb[0].mxu0
  %v1448 = vadd.f32 %v280, %v1447
  %v1449 = vpop.f32.mrb[0].mxu0
  %v1450 = vpop.f32.mrb[0].mxu0
  %v1451 = vadd.f32 %v280, %v1450
  %v1452 = vpop.f32.mrb[0].mxu0
  %1453 = vmatprep.mubr.bf16.mxu0 0
  %1454 = vmatmul.mubr.bf16.gmra.mrb[0].mxu0 %v971
  %v1455 = vpop.f32.mrb[0].mxu0
  %v1456 = vadd.f32 %v280, %v1455
  %v1457 = vpop.f32.mrb[0].mxu0
  %v1458 = vpop.f32.mrb[0].mxu0
  %v1459 = vadd.f32 %v280, %v1458
  %v1460 = vpop.f32.mrb[0].mxu0
  %1461 = vmatprep.mubr.bf16.mxu0 0
  %1462 = vmatmul.mubr.bf16.gmra.mrb[0].mxu0 %v974
  %v1463 = vpop.f32.mrb[0].mxu0
  %v1464 = vadd.f32 %v280, %v1463
  %v1465 = vpop.f32.mrb[0].mxu0
  %v1466 = vpop.f32.mrb[0].mxu0
  %v1467 = vadd.f32 %v280, %v1466
  %v1468 = vpop.f32.mrb[0].mxu0
  %1469 = vmatprep.mubr.bf16.mxu0 0
  %1470 = vmatmul.mubr.bf16.gmra.mrb[0].mxu0 %v977
  %v1471 = vpop.f32.mrb[0].mxu0
  %v1472 = vadd.f32 %v280, %v1471
  %v1473 = vpop.f32.mrb[0].mxu0
  %v1474 = vpop.f32.mrb[0].mxu0
  %v1475 = vadd.f32 %v280, %v1474
  %v1476 = vpop.f32.mrb[0].mxu0
  %1477 = vmatprep.mubr.bf16.mxu0 0
  %1478 = vmatmul.mubr.bf16.gmra.mrb[0].mxu0 %v980
  %v1479 = vpop.f32.mrb[0].mxu0
  %v1480 = vadd.f32 %v280, %v1479
  %v1481 = vpop.f32.mrb[0].mxu0
  %v1482 = vpop.f32.mrb[0].mxu0
  %v1483 = vadd.f32 %v280, %v1482
  %v1484 = vpop.f32.mrb[0].mxu0
  %1485 = vmatprep.mubr.bf16.mxu0 0
  %1486 = vmatmul.mubr.bf16.gmra.mrb[0].mxu0 %v983
  %v1487 = vpop.f32.mrb[0].mxu0
  %v1488 = vadd.f32 %v280, %v1487
  %v1489 = vpop.f32.mrb[0].mxu0
  %v1490 = vpop.f32.mrb[0].mxu0
  %v1491 = vadd.f32 %v280, %v1490
  %v1492 = vpop.f32.mrb[0].mxu0
  %1493 = vmatprep.mubr.bf16.mxu0 0
  %1494 = vmatmul.mubr.bf16.gmra.mrb[0].mxu0 %v986
  %v1495 = vpop.f32.mrb[0].mxu0
  %v1496 = vadd.f32 %v280, %v1495
  %v1497 = vpop.f32.mrb[0].mxu0
  %v1498 = vpop.f32.mrb[0].mxu0
  %v1499 = vadd.f32 %v280, %v1498
  %v1500 = vpop.f32.mrb[0].mxu0
  %1501 = vmatprep.mubr.bf16.mxu0 0
  %1502 = vmatmul.mubr.bf16.gmra.mrb[0].mxu0 %v989
  %v1503 = vpop.f32.mrb[0].mxu0
  %v1504 = vadd.f32 %v280, %v1503
  %v1505 = vpop.f32.mrb[0].mxu0
  %v1506 = vpop.f32.mrb[0].mxu0
  %v1507 = vadd.f32 %v280, %v1506
  %v1508 = vpop.f32.mrb[0].mxu0
  %1509 = vmatprep.mubr.bf16.mxu0 0
  %1510 = vmatmul.mubr.bf16.gmra.mrb[0].mxu0 %v992
  %v1511 = vpop.f32.mrb[0].mxu0
  %v1512 = vadd.f32 %v280, %v1511
  %v1513 = vpop.f32.mrb[0].mxu0
  %v1514 = vpop.f32.mrb[0].mxu0
  %v1515 = vadd.f32 %v280, %v1514
  %v1516 = vpop.f32.mrb[0].mxu0
  %1517 = vmatprep.mubr.bf16.mxu0 0
  %1518 = vmatmul.mubr.bf16.gmra.mrb[0].mxu0 %v995
  %v1519 = vpop.f32.mrb[0].mxu0
  %v1520 = vadd.f32 %v280, %v1519
  %v1521 = vpop.f32.mrb[0].mxu0
  %v1522 = vpop.f32.mrb[0].mxu0
  %v1523 = vadd.f32 %v280, %v1522
  %v1524 = vpop.f32.mrb[0].mxu0
  %1525 = vmatprep.mubr.bf16.mxu0 0
  %1526 = vmatmul.mubr.bf16.gmra.mrb[0].mxu0 %v998
  %v1527 = vpop.f32.mrb[0].mxu0
  %v1528 = vadd.f32 %v280, %v1527
  %v1529 = vpop.f32.mrb[0].mxu0
  %v1530 = vpop.f32.mrb[0].mxu0
  %v1531 = vadd.f32 %v280, %v1530
  %v1532 = vpop.f32.mrb[0].mxu0
  %1533 = vmatprep.mubr.bf16.mxu0 0
  %1534 = vmatmul.mubr.bf16.gmra.mrb[0].mxu0 %v1001
  %v1535 = vpop.f32.mrb[0].mxu0
  %v1536 = vadd.f32 %v280, %v1535
  %v1537 = vpop.f32.mrb[0].mxu0
  %v1538 = vpop.f32.mrb[0].mxu0
  %v1539 = vadd.f32 %v280, %v1538
  %v1540 = vpop.f32.mrb[0].mxu0
  %1541 = vmatprep.mubr.bf16.mxu0 0
  %1542 = vmatmul.mubr.bf16.gmra.mrb[0].mxu0 %v1004
  %v1543 = vpop.f32.mrb[0].mxu0
  %v1544 = vadd.f32 %v280, %v1543
  %v1545 = vpop.f32.mrb[0].mxu0
  %v1546 = vpop.f32.mrb[0].mxu0
  %v1547 = vadd.f32 %v280, %v1546
  %v1548 = vpop.f32.mrb[0].mxu0
  %1549 = vmatprep.mubr.bf16.mxu0 0
  %1550 = vmatmul.mubr.bf16.gmra.mrb[0].mxu0 %v1007
  %v1551 = vpop.f32.mrb[0].mxu0
  %v1552 = vadd.f32 %v280, %v1551
  %v1553 = vpop.f32.mrb[0].mxu0
  %v1554 = vpop.f32.mrb[0].mxu0
  %v1555 = vadd.f32 %v280, %v1554
  %v1556 = vpop.f32.mrb[0].mxu0
  %1557 = vmatprep.mubr.bf16.mxu0 0
  %1558 = vmatmul.mubr.bf16.gmra.mrb[0].mxu0 %v1010
  %v1559 = vpop.f32.mrb[0].mxu0
  %v1560 = vadd.f32 %v280, %v1559
  %v1561 = vpop.f32.mrb[0].mxu0
  %v1562 = vpop.f32.mrb[0].mxu0
  %v1563 = vadd.f32 %v280, %v1562
  %v1564 = vpop.f32.mrb[0].mxu0
  %1565 = vmatprep.mubr.bf16.mxu0 0
  %1566 = vmatmul.mubr.bf16.gmra.mrb[0].mxu0 %v1013
  %v1567 = vpop.f32.mrb[0].mxu0
  %v1568 = vadd.f32 %v280, %v1567
  %v1569 = vpop.f32.mrb[0].mxu0
  %v1570 = vpop.f32.mrb[0].mxu0
  %v1571 = vadd.f32 %v280, %v1570
  %v1572 = vpop.f32.mrb[0].mxu0
  %1573 = vmatprep.mubr.bf16.mxu0 0
  %1574 = vmatmul.mubr.bf16.gmra.mrb[0].mxu0 %v1016
  %v1575 = vpop.f32.mrb[0].mxu0
  %v1576 = vadd.f32 %v280, %v1575
  %v1577 = vpop.f32.mrb[0].mxu0
  %v1578 = vpop.f32.mrb[0].mxu0
  %v1579 = vadd.f32 %v280, %v1578
  %v1580 = vpop.f32.mrb[0].mxu0
  %1581 = vmatprep.mubr.bf16.mxu0 0
  %1582 = vmatmul.mubr.bf16.gmra.mrb[0].mxu0 %v1019
  %v1583 = vpop.f32.mrb[0].mxu0
  %v1584 = vadd.f32 %v280, %v1583
  %v1585 = vpop.f32.mrb[0].mxu0
  %v1586 = vpop.f32.mrb[0].mxu0
  %v1587 = vadd.f32 %v280, %v1586
  %v1588 = vpop.f32.mrb[0].mxu0
  %1589 = vmatprep.mubr.bf16.mxu0 0
  %1590 = vmatmul.mubr.bf16.gmra.mrb[0].mxu0 %v1022
  %v1591 = vpop.f32.mrb[0].mxu0
  %v1592 = vadd.f32 %v280, %v1591
  %v1593 = vpop.f32.mrb[0].mxu0
  %v1594 = vpop.f32.mrb[0].mxu0
  %v1595 = vadd.f32 %v280, %v1594
  %v1596 = vpop.f32.mrb[0].mxu0
  %1597 = vmatprep.mubr.bf16.mxu0 0
  %1598 = vmatmul.mubr.bf16.gmra.mrb[0].mxu0 %v1025
  %v1599 = vpop.f32.mrb[0].mxu0
  %v1600 = vadd.f32 %v280, %v1599
  %v1601 = vpop.f32.mrb[0].mxu0
  %v1602 = vpop.f32.mrb[0].mxu0
  %v1603 = vadd.f32 %v280, %v1602
  %v1604 = vpop.f32.mrb[0].mxu0
  %1605 = vmatprep.mubr.bf16.mxu0 0
  %1606 = vmatmul.mubr.bf16.gmra.mrb[0].mxu0 %v1028
  %v1607 = vpop.f32.mrb[0].mxu0
  %v1608 = vadd.f32 %v280, %v1607
  %v1609 = vpop.f32.mrb[0].mxu0
  %v1610 = vpop.f32.mrb[0].mxu0
  %v1611 = vadd.f32 %v280, %v1610
  %v1612 = vpop.f32.mrb[0].mxu0
  %1613 = vmatprep.mubr.bf16.mxu0 0
  %1614 = vmatmul.mubr.bf16.gmra.mrb[0].mxu0 %v1031
  %v1615 = vpop.f32.mrb[0].mxu0
  %v1616 = vadd.f32 %v280, %v1615
  %v1617 = vpop.f32.mrb[0].mxu0
  %v1618 = vpop.f32.mrb[0].mxu0
  %v1619 = vadd.f32 %v280, %v1618
  %v1620 = vpop.f32.mrb[0].mxu0
  %1621 = vmatprep.mubr.bf16.mxu0 0
  %1622 = vmatmul.mubr.bf16.gmra.mrb[0].mxu0 %v1034
  %v1623 = vpop.f32.mrb[0].mxu0
  %v1624 = vadd.f32 %v280, %v1623
  %v1625 = vpop.f32.mrb[0].mxu0
  %v1626 = vpop.f32.mrb[0].mxu0
  %v1627 = vadd.f32 %v280, %v1626
  %v1628 = vpop.f32.mrb[0].mxu0
  %1629 = vmatprep.mubr.bf16.mxu0 0
  %1630 = vmatmul.mubr.bf16.gmra.mrb[0].mxu0 %v1037
  %v1631 = vpop.f32.mrb[0].mxu0
  %v1632 = vadd.f32 %v280, %v1631
  %v1633 = vpop.f32.mrb[0].mxu0
  %v1634 = vpop.f32.mrb[0].mxu0
  %v1635 = vadd.f32 %v280, %v1634
  %v1636 = vpop.f32.mrb[0].mxu0
  %1637 = vmatprep.mubr.bf16.mxu0 0
  %1638 = vmatmul.mubr.bf16.gmra.mrb[0].mxu0 %v1040
  %v1639 = vpop.f32.mrb[0].mxu0
  %v1640 = vadd.f32 %v280, %v1639
  %v1641 = vpop.f32.mrb[0].mxu0
  %v1642 = vpop.f32.mrb[0].mxu0
  %v1643 = vadd.f32 %v280, %v1642
  %v1644 = vpop.f32.mrb[0].mxu0
  %1645 = vmatprep.mubr.bf16.mxu0 0
  %1646 = vmatmul.mubr.bf16.gmra.mrb[0].mxu0 %v1043
  %v1647 = vpop.f32.mrb[0].mxu0
  %v1648 = vadd.f32 %v280, %v1647
  %v1649 = vpop.f32.mrb[0].mxu0
  %v1650 = vpop.f32.mrb[0].mxu0
  %v1651 = vadd.f32 %v280, %v1650
  %v1652 = vpop.f32.mrb[0].mxu0
  %1653 = vmatprep.mubr.bf16.mxu0 0
  %1654 = vmatmul.mubr.bf16.gmra.mrb[0].mxu0 %v1046
  %v1655 = vpop.f32.mrb[0].mxu0
  %v1656 = vadd.f32 %v280, %v1655
  %v1657 = vpop.f32.mrb[0].mxu0
  %v1658 = vpop.f32.mrb[0].mxu0
  %v1659 = vadd.f32 %v280, %v1658
  %v1660 = vpop.f32.mrb[0].mxu0
  %1661 = vmatprep.mubr.bf16.mxu0 0
  %1662 = vmatmul.mubr.bf16.gmra.mrb[0].mxu0 %v1049
  %v1663 = vpop.f32.mrb[0].mxu0
  %v1664 = vadd.f32 %v280, %v1663
  %v1665 = vpop.f32.mrb[0].mxu0
  %v1666 = vpop.f32.mrb[0].mxu0
  %v1667 = vadd.f32 %v280, %v1666
  %v1668 = vpop.f32.mrb[0].mxu0
  %1669 = vmatprep.mubr.bf16.mxu0 0
  %1670 = vmatmul.mubr.bf16.gmra.mrb[0].mxu0 %v1052
  %v1671 = vpop.f32.mrb[0].mxu0
  %v1672 = vadd.f32 %v280, %v1671
  %v1673 = vpop.f32.mrb[0].mxu0
  %v1674 = vpop.f32.mrb[0].mxu0
  %v1675 = vadd.f32 %v280, %v1674
  %v1676 = vpop.f32.mrb[0].mxu0
  %1677 = vmatprep.mubr.bf16.mxu0 0
  %1678 = vmatmul.mubr.bf16.gmra.mrb[0].mxu0 %v1055
  %v1679 = vpop.f32.mrb[0].mxu0
  %v1680 = vadd.f32 %v280, %v1679
  %v1681 = vpop.f32.mrb[0].mxu0
  %v1682 = vpop.f32.mrb[0].mxu0
  %v1683 = vadd.f32 %v280, %v1682
  %v1684 = vpop.f32.mrb[0].mxu0
  %1685 = vmatprep.mubr.bf16.mxu0 0
  %1686 = vmatmul.mubr.bf16.gmra.mrb[0].mxu0 %v1058
  %v1687 = vpop.f32.mrb[0].mxu0
  %v1688 = vadd.f32 %v280, %v1687
  %v1689 = vpop.f32.mrb[0].mxu0
  %v1690 = vpop.f32.mrb[0].mxu0
  %v1691 = vadd.f32 %v280, %v1690
  %v1692 = vpop.f32.mrb[0].mxu0
  %1693 = vmatprep.mubr.bf16.mxu0 0
  %1694 = vmatmul.mubr.bf16.gmra.mrb[0].mxu0 %v1061
  %v1695 = vpop.f32.mrb[0].mxu0
  %v1696 = vadd.f32 %v280, %v1695
  %v1697 = vpop.f32.mrb[0].mxu0
  %v1698 = vpop.f32.mrb[0].mxu0
  %v1699 = vadd.f32 %v280, %v1698
  %v1700 = vpop.f32.mrb[0].mxu0
  %1701 = vmatprep.mubr.bf16.mxu0 0
  %1702 = vmatmul.mubr.bf16.gmra.mrb[0].mxu0 %v1064
  %v1703 = vpop.f32.mrb[0].mxu0
  %v1704 = vadd.f32 %v280, %v1703
  %v1705 = vpop.f32.mrb[0].mxu0
  %v1706 = vpop.f32.mrb[0].mxu0
  %v1707 = vadd.f32 %v280, %v1706
  %v1708 = vpop.f32.mrb[0].mxu0
  %1709 = vmatprep.mubr.bf16.mxu0 0
  %1710 = vmatmul.mubr.bf16.gmra.mrb[0].mxu0 %v1067
  %v1711 = vpop.f32.mrb[0].mxu0
  %v1712 = vadd.f32 %v280, %v1711
  %v1713 = vpop.f32.mrb[0].mxu0
  %v1714 = vpop.f32.mrb[0].mxu0
  %v1715 = vadd.f32 %v280, %v1714
  %v1716 = vpop.f32.mrb[0].mxu0
  %1717 = vmatprep.mubr.bf16.mxu0 0
  %1718 = vmatmul.mubr.bf16.gmra.mrb[0].mxu0 %v1070
  %v1719 = vpop.f32.mrb[0].mxu0
  %v1720 = vadd.f32 %v280, %v1719
  %v1721 = vpop.f32.mrb[0].mxu0
  %v1722 = vpop.f32.mrb[0].mxu0
  %v1723 = vadd.f32 %v280, %v1722
  %v1724 = vpop.f32.mrb[0].mxu0
  %1725 = vmatprep.mubr.bf16.mxu0 0
  %1726 = vmatmul.mubr.bf16.gmra.mrb[0].mxu0 %v1073
  %v1727 = vpop.f32.mrb[0].mxu0
  %v1728 = vadd.f32 %v280, %v1727
  %v1729 = vpop.f32.mrb[0].mxu0
  %v1730 = vpop.f32.mrb[0].mxu0
  %v1731 = vadd.f32 %v280, %v1730
  %v1732 = vpop.f32.mrb[0].mxu0
  %1733 = vmatprep.mubr.bf16.mxu0 0
  %1734 = vmatmul.mubr.bf16.gmra.mrb[0].mxu0 %v1076
  %v1735 = vpop.f32.mrb[0].mxu0
  %v1736 = vadd.f32 %v280, %v1735
  %v1737 = vpop.f32.mrb[0].mxu0
  %v1738 = vpop.f32.mrb[0].mxu0
  %v1739 = vadd.f32 %v280, %v1738
  %v1740 = vpop.f32.mrb[0].mxu0
  %1741 = vmatprep.mubr.bf16.mxu0 0
  %1742 = vmatmul.mubr.bf16.gmra.mrb[0].mxu0 %v1079
  %v1743 = vpop.f32.mrb[0].mxu0
  %v1744 = vadd.f32 %v280, %v1743
  %v1745 = vpop.f32.mrb[0].mxu0
  %v1746 = vpop.f32.mrb[0].mxu0
  %v1747 = vadd.f32 %v280, %v1746
  %v1748 = vpop.f32.mrb[0].mxu0
  %1749 = vmatprep.mubr.bf16.mxu0 0
  %1750 = vmatmul.mubr.bf16.gmra.mrb[0].mxu0 %v1082
  %v1751 = vpop.f32.mrb[0].mxu0
  %v1752 = vadd.f32 %v280, %v1751
  %v1753 = vpop.f32.mrb[0].mxu0
  %v1754 = vpop.f32.mrb[0].mxu0
  %v1755 = vadd.f32 %v280, %v1754
  %v1756 = vpop.f32.mrb[0].mxu0
  %1757 = vmatprep.mubr.bf16.mxu0 0
  %1758 = vmatmul.mubr.bf16.gmra.mrb[0].mxu0 %v1085
  %v1759 = vpop.f32.mrb[0].mxu0
  %v1760 = vadd.f32 %v280, %v1759
  %v1761 = vpop.f32.mrb[0].mxu0
  %v1762 = vpop.f32.mrb[0].mxu0
  %v1763 = vadd.f32 %v280, %v1762
  %v1764 = vpop.f32.mrb[0].mxu0
  %1765 = vmatprep.mubr.bf16.mxu0 0
  %1766 = vmatmul.mubr.bf16.gmra.mrb[0].mxu0 %v1088
  %v1767 = vpop.f32.mrb[0].mxu0
  %v1768 = vadd.f32 %v280, %v1767
  %v1769 = vpop.f32.mrb[0].mxu0
  %v1770 = vpop.f32.mrb[0].mxu0
  %v1771 = vadd.f32 %v280, %v1770
  %v1772 = vpop.f32.mrb[0].mxu0
  %1773 = vmatprep.mubr.bf16.mxu0 0
  %1774 = vmatmul.mubr.bf16.gmra.mrb[0].mxu0 %v1091
  %v1775 = vpop.f32.mrb[0].mxu0
  %v1776 = vadd.f32 %v280, %v1775
  %v1777 = vpop.f32.mrb[0].mxu0
  %v1778 = vpop.f32.mrb[0].mxu0
  %v1779 = vadd.f32 %v280, %v1778
  %v1780 = vpop.f32.mrb[0].mxu0
  %1781 = vmatprep.mubr.bf16.mxu0 0
  %1782 = vmatmul.mubr.bf16.gmra.mrb[0].mxu0 %v1094
  %v1783 = vpop.f32.mrb[0].mxu0
  %v1784 = vadd.f32 %v280, %v1783
  %v1785 = vpop.f32.mrb[0].mxu0
  %v1786 = vpop.f32.mrb[0].mxu0
  %v1787 = vadd.f32 %v280, %v1786
  %v1788 = vpop.f32.mrb[0].mxu0
  %1789 = vmatprep.mubr.bf16.mxu0 0
  %1790 = vmatmul.mubr.bf16.gmra.mrb[0].mxu0 %v1097
  %v1791 = vpop.f32.mrb[0].mxu0
  %v1792 = vadd.f32 %v280, %v1791
  %v1793 = vpop.f32.mrb[0].mxu0
  %v1794 = vpop.f32.mrb[0].mxu0
  %v1795 = vadd.f32 %v280, %v1794
  %v1796 = vpop.f32.mrb[0].mxu0
  %1797 = vmatprep.mubr.bf16.mxu0 0
  %1798 = vmatmul.mubr.bf16.gmra.mrb[0].mxu0 %v1100
  %v1799 = vpop.f32.mrb[0].mxu0
  %v1800 = vadd.f32 %v280, %v1799
  %v1801 = vpop.f32.mrb[0].mxu0
  %v1802 = vpop.f32.mrb[0].mxu0
  %v1803 = vadd.f32 %v280, %v1802
  %v1804 = vpop.f32.mrb[0].mxu0
  %1805 = vmatprep.mubr.bf16.mxu0 0
  %1806 = vmatmul.mubr.bf16.gmra.mrb[0].mxu0 %v1103
  %v1807 = vpop.f32.mrb[0].mxu0
  %v1808 = vadd.f32 %v280, %v1807
  %v1809 = vpop.f32.mrb[0].mxu0
  %v1810 = vpop.f32.mrb[0].mxu0
  %v1811 = vadd.f32 %v280, %v1810
  %v1812 = vpop.f32.mrb[0].mxu0
  %1813 = vmatprep.mubr.bf16.mxu0 0
  %1814 = vmatmul.mubr.bf16.gmra.mrb[0].mxu0 %v1106
  %v1815 = vpop.f32.mrb[0].mxu0
  %v1816 = vadd.f32 %v280, %v1815
  %v1817 = vpop.f32.mrb[0].mxu0
  %v1818 = vpop.f32.mrb[0].mxu0
  %v1819 = vadd.f32 %v280, %v1818
  %v1820 = vpop.f32.mrb[0].mxu0
  %1821 = vmatprep.mubr.bf16.mxu0 0
  %1822 = vmatmul.mubr.bf16.gmra.mrb[0].mxu0 %v1109
  %v1823 = vpop.f32.mrb[0].mxu0
  %v1824 = vadd.f32 %v280, %v1823
  %v1825 = vpop.f32.mrb[0].mxu0
  %v1826 = vpop.f32.mrb[0].mxu0
  %v1827 = vadd.f32 %v280, %v1826
  %v1828 = vpop.f32.mrb[0].mxu0
  %1829 = vmatprep.mubr.bf16.mxu0 0
  %1830 = vmatmul.mubr.bf16.gmra.mrb[0].mxu0 %v1112
  %v1831 = vpop.f32.mrb[0].mxu0
  %v1832 = vadd.f32 %v280, %v1831
  %v1833 = vpop.f32.mrb[0].mxu0
  %v1834 = vpop.f32.mrb[0].mxu0
  %v1835 = vadd.f32 %v280, %v1834
  %v1836 = vpop.f32.mrb[0].mxu0
  %1837 = vmatprep.mubr.bf16.mxu0 0
  %1838 = vmatmul.mubr.bf16.gmra.mrb[0].mxu0 %v1115
  %v1839 = vpop.f32.mrb[0].mxu0
  %v1840 = vadd.f32 %v280, %v1839
  %v1841 = vpop.f32.mrb[0].mxu0
  %v1842 = vpop.f32.mrb[0].mxu0
  %v1843 = vadd.f32 %v280, %v1842
  %v1844 = vpop.f32.mrb[0].mxu0
  %1845 = vmatprep.mubr.bf16.mxu0 0
  %1846 = vmatmul.mubr.bf16.gmra.mrb[0].mxu0 %v1118
  %v1847 = vpop.f32.mrb[0].mxu0
  %v1848 = vadd.f32 %v280, %v1847
  %v1849 = vpop.f32.mrb[0].mxu0
  %v1850 = vpop.f32.mrb[0].mxu0
  %v1851 = vadd.f32 %v280, %v1850
  %v1852 = vpop.f32.mrb[0].mxu0
  %1853 = vmatprep.mubr.bf16.mxu0 0
  %1854 = vmatmul.mubr.bf16.gmra.mrb[0].mxu0 %v1121
  %v1855 = vpop.f32.mrb[0].mxu0
  %v1856 = vadd.f32 %v280, %v1855
  %v1857 = vpop.f32.mrb[0].mxu0
  %v1858 = vpop.f32.mrb[0].mxu0
  %v1859 = vadd.f32 %v280, %v1858
  %v1860 = vpop.f32.mrb[0].mxu0
  %1861 = vmatprep.mubr.bf16.mxu0 0
  %1862 = vmatmul.mubr.bf16.gmra.mrb[0].mxu0 %v1124
  %v1863 = vpop.f32.mrb[0].mxu0
  %v1864 = vadd.f32 %v280, %v1863
  %v1865 = vpop.f32.mrb[0].mxu0
  %v1866 = vpop.f32.mrb[0].mxu0
  %v1867 = vadd.f32 %v280, %v1866
  %v1868 = vpop.f32.mrb[0].mxu0
  %1869 = vmatprep.mubr.bf16.mxu0 0
  %1870 = vmatmul.mubr.bf16.gmra.mrb[0].mxu0 %v1127
  %v1871 = vpop.f32.mrb[0].mxu0
  %v1872 = vadd.f32 %v280, %v1871
  %v1873 = vpop.f32.mrb[0].mxu0
  %v1874 = vpop.f32.mrb[0].mxu0
  %v1875 = vadd.f32 %v280, %v1874
  %v1876 = vpop.f32.mrb[0].mxu0
  %1877 = vmatprep.mubr.bf16.mxu0 0
  %1878 = vmatmul.mubr.bf16.gmra.mrb[0].mxu0 %v1130
  %v1879 = vpop.f32.mrb[0].mxu0
  %v1880 = vadd.f32 %v280, %v1879
  %v1881 = vpop.f32.mrb[0].mxu0
  %v1882 = vpop.f32.mrb[0].mxu0
  %v1883 = vadd.f32 %v280, %v1882
  %v1884 = vpop.f32.mrb[0].mxu0
  %1885 = vmatprep.mubr.bf16.mxu0 0
  %1886 = vmatmul.mubr.bf16.gmra.mrb[0].mxu0 %v1133
  %v1887 = vpop.f32.mrb[0].mxu0
  %v1888 = vadd.f32 %v280, %v1887
  %v1889 = vpop.f32.mrb[0].mxu0
  %v1890 = vpop.f32.mrb[0].mxu0
  %v1891 = vadd.f32 %v280, %v1890
  %v1892 = vpop.f32.mrb[0].mxu0
  %1893 = vmatprep.mubr.bf16.mxu0 0
  %1894 = vmatmul.mubr.bf16.gmra.mrb[0].mxu0 %v1136
  %v1895 = vpop.f32.mrb[0].mxu0
  %v1896 = vadd.f32 %v280, %v1895
  %v1897 = vpop.f32.mrb[0].mxu0
  %v1898 = vpop.f32.mrb[0].mxu0
  %v1899 = vadd.f32 %v280, %v1898
  %v1900 = vpop.f32.mrb[0].mxu0
  %1901 = vmatprep.mubr.bf16.mxu0 0
  %1902 = vmatmul.mubr.bf16.gmra.mrb[0].mxu0 %v1139
  %v1903 = vpop.f32.mrb[0].mxu0
  %v1904 = vadd.f32 %v280, %v1903
  %v1905 = vpop.f32.mrb[0].mxu0
  %v1906 = vpop.f32.mrb[0].mxu0
  %v1907 = vadd.f32 %v280, %v1906
  %v1908 = vpop.f32.mrb[0].mxu0
  %1909 = vmatprep.mubr.bf16.mxu0 0
  %1910 = vmatmul.mubr.bf16.gmra.mrb[0].mxu0 %v1142
  %v1911 = vpop.f32.mrb[0].mxu0
  %v1912 = vadd.f32 %v280, %v1911
  %v1913 = vpop.f32.mrb[0].mxu0
  %v1914 = vpop.f32.mrb[0].mxu0
  %v1915 = vadd.f32 %v280, %v1914
  %v1916 = vpop.f32.mrb[0].mxu0
  %1917 = vmatprep.mubr.bf16.mxu0 0
  %1918 = vmatmul.mubr.bf16.gmra.mrb[0].mxu0 %v1145
  %v1919 = vpop.f32.mrb[0].mxu0
  %v1920 = vadd.f32 %v280, %v1919
  %v1921 = vpop.f32.mrb[0].mxu0
  %v1922 = vpop.f32.mrb[0].mxu0
  %v1923 = vadd.f32 %v280, %v1922
  %v1924 = vpop.f32.mrb[0].mxu0
  %1925 = vmatprep.mubr.bf16.mxu0 0
  %1926 = vmatmul.mubr.bf16.gmra.mrb[0].mxu0 %v1148
  %v1927 = vpop.f32.mrb[0].mxu0
  %v1928 = vadd.f32 %v280, %v1927
  %v1929 = vpop.f32.mrb[0].mxu0
  %v1930 = vpop.f32.mrb[0].mxu0
  %v1931 = vadd.f32 %v280, %v1930
  %v1932 = vpop.f32.mrb[0].mxu0
  %1933 = vmatprep.mubr.bf16.mxu0 0
  %1934 = vmatmul.mubr.bf16.gmra.mrb[0].mxu0 %v1151
  %v1935 = vpop.f32.mrb[0].mxu0
  %v1936 = vadd.f32 %v280, %v1935
  %v1937 = vpop.f32.mrb[0].mxu0
  %v1938 = vpop.f32.mrb[0].mxu0
  %v1939 = vadd.f32 %v280, %v1938
  %v1940 = vpop.f32.mrb[0].mxu0
  %1941 = vmatprep.mubr.bf16.mxu0 0
  %1942 = vmatmul.mubr.bf16.gmra.mrb[0].mxu0 %v1154
  %v1943 = vpop.f32.mrb[0].mxu0
  %v1944 = vadd.f32 %v280, %v1943
  %v1945 = vpop.f32.mrb[0].mxu0
  %v1946 = vpop.f32.mrb[0].mxu0
  %v1947 = vadd.f32 %v280, %v1946
  %v1948 = vpop.f32.mrb[0].mxu0
  %1949 = vmatprep.mubr.bf16.mxu0 0
  %1950 = vmatmul.mubr.bf16.gmra.mrb[0].mxu0 %v1157
  %v1951 = vpop.f32.mrb[0].mxu0
  %v1952 = vadd.f32 %v280, %v1951
  %v1953 = vpop.f32.mrb[0].mxu0
  %v1954 = vpop.f32.mrb[0].mxu0
  %v1955 = vadd.f32 %v280, %v1954
  %v1956 = vpop.f32.mrb[0].mxu0
  %1957 = vmatprep.mubr.bf16.mxu0 0
  %1958 = vmatmul.mubr.bf16.gmra.mrb[0].mxu0 %v1160
  %v1959 = vpop.f32.mrb[0].mxu0
  %v1960 = vadd.f32 %v280, %v1959
  %v1961 = vpop.f32.mrb[0].mxu0
  %v1962 = vpop.f32.mrb[0].mxu0
  %v1963 = vadd.f32 %v280, %v1962
  %v1964 = vpop.f32.mrb[0].mxu0
  %1965 = vmatprep.mubr.bf16.mxu0 0
  %1966 = vmatmul.mubr.bf16.gmra.mrb[0].mxu0 %v1163
  %v1967 = vpop.f32.mrb[0].mxu0
  %v1968 = vadd.f32 %v280, %v1967
  %v1969 = vpop.f32.mrb[0].mxu0
  %v1970 = vpop.f32.mrb[0].mxu0
  %v1971 = vadd.f32 %v280, %v1970
  %v1972 = vpop.f32.mrb[0].mxu0
  %1973 = vmatprep.mubr.bf16.mxu0 0
  %1974 = vmatmul.mubr.bf16.gmra.mrb[0].mxu0 %v1166
  %v1975 = vpop.f32.mrb[0].mxu0
  %v1976 = vadd.f32 %v280, %v1975
  %v1977 = vpop.f32.mrb[0].mxu0
  %v1978 = vpop.f32.mrb[0].mxu0
  %v1979 = vadd.f32 %v280, %v1978
  %v1980 = vpop.f32.mrb[0].mxu0
  %1981 = vmatprep.mubr.bf16.mxu0 0
  %1982 = vmatmul.mubr.bf16.gmra.mrb[0].mxu0 %v1169
  %v1983 = vpop.f32.mrb[0].mxu0
  %v1984 = vadd.f32 %v280, %v1983
  %v1985 = vpop.f32.mrb[0].mxu0
  %v1986 = vpop.f32.mrb[0].mxu0
  %v1987 = vadd.f32 %v280, %v1986
  %v1988 = vpop.f32.mrb[0].mxu0
  %1989 = vmatprep.mubr.bf16.mxu0 0
  %1990 = vmatmul.mubr.bf16.gmra.mrb[0].mxu0 %v1172
  %v1991 = vpop.f32.mrb[0].mxu0
  %v1992 = vadd.f32 %v280, %v1991
  %v1993 = vpop.f32.mrb[0].mxu0
  %v1994 = vpop.f32.mrb[0].mxu0
  %v1995 = vadd.f32 %v280, %v1994
  %v1996 = vpop.f32.mrb[0].mxu0
  %1997 = vmatprep.mubr.bf16.mxu0 0
  %1998 = vmatmul.mubr.bf16.gmra.mrb[0].mxu0 %v1175
  %v1999 = vpop.f32.mrb[0].mxu0
  %v2000 = vadd.f32 %v280, %v1999
  %v2001 = vpop.f32.mrb[0].mxu0
  %v2002 = vpop.f32.mrb[0].mxu0
  %v2003 = vadd.f32 %v280, %v2002
  %v2004 = vpop.f32.mrb[0].mxu0
  %2005 = vmatprep.mubr.bf16.mxu0 0
  %2006 = vmatmul.mubr.bf16.gmra.mrb[0].mxu0 %v1178
  %v2007 = vpop.f32.mrb[0].mxu0
  %v2008 = vadd.f32 %v280, %v2007
  %v2009 = vpop.f32.mrb[0].mxu0
  %v2010 = vpop.f32.mrb[0].mxu0
  %v2011 = vadd.f32 %v280, %v2010
  %v2012 = vpop.f32.mrb[0].mxu0
  %2013 = vmatprep.mubr.bf16.mxu0 0
  %2014 = vmatmul.mubr.bf16.gmra.mrb[0].mxu0 %v1181
  %v2015 = vpop.f32.mrb[0].mxu0
  %v2016 = vadd.f32 %v280, %v2015
  %v2017 = vpop.f32.mrb[0].mxu0
  %v2018 = vpop.f32.mrb[0].mxu0
  %v2019 = vadd.f32 %v280, %v2018
  %v2020 = vpop.f32.mrb[0].mxu0
  %2021 = vmatprep.mubr.bf16.mxu0 0
  %2022 = vmatmul.mubr.bf16.gmra.mrb[0].mxu0 %v1184
  %v2023 = vpop.f32.mrb[0].mxu0
  %v2024 = vadd.f32 %v280, %v2023
  %v2025 = vpop.f32.mrb[0].mxu0
  %v2026 = vpop.f32.mrb[0].mxu0
  %v2027 = vadd.f32 %v280, %v2026
  %v2028 = vpop.f32.mrb[0].mxu0
  %2029 = vmatprep.mubr.bf16.mxu0 0
  %2030 = vmatmul.mubr.bf16.gmra.mrb[0].mxu0 %v1187
  %v2031 = vpop.f32.mrb[0].mxu0
  %v2032 = vadd.f32 %v280, %v2031
  %v2033 = vpop.f32.mrb[0].mxu0
  %v2034 = vpop.f32.mrb[0].mxu0
  %v2035 = vadd.f32 %v280, %v2034
  %v2036 = vpop.f32.mrb[0].mxu0
  %2037 = vmatprep.mubr.bf16.mxu0 0
  %2038 = vmatmul.mubr.bf16.gmra.mrb[0].mxu0 %v1190
  %v2039 = vpop.f32.mrb[0].mxu0
  %v2040 = vadd.f32 %v280, %v2039
  %v2041 = vpop.f32.mrb[0].mxu0
  %v2042 = vpop.f32.mrb[0].mxu0
  %v2043 = vadd.f32 %v280, %v2042
  %v2044 = vpop.f32.mrb[0].mxu0
  %2045 = vmatprep.mubr.bf16.mxu0 0
  %2046 = vmatmul.mubr.bf16.gmra.mrb[0].mxu0 %v1193
  %v2047 = vpop.f32.mrb[0].mxu0
  %v2048 = vadd.f32 %v280, %v2047
  %v2049 = vpop.f32.mrb[0].mxu0
  %v2050 = vpop.f32.mrb[0].mxu0
  %v2051 = vadd.f32 %v280, %v2050
  %v2052 = vpop.f32.mrb[0].mxu0
  %2053 = vmatprep.mubr.bf16.mxu0 0
  %2054 = vmatmul.mubr.bf16.gmra.mrb[0].mxu0 %v1196
  %v2055 = vpop.f32.mrb[0].mxu0
  %v2056 = vadd.f32 %v280, %v2055
  %v2057 = vpop.f32.mrb[0].mxu0
  %v2058 = vpop.f32.mrb[0].mxu0
  %v2059 = vadd.f32 %v280, %v2058
  %v2060 = vpop.f32.mrb[0].mxu0
  %2061 = vmatprep.mubr.bf16.mxu0 0
  %2062 = vmatmul.mubr.bf16.gmra.mrb[0].mxu0 %v1199
  %v2063 = vpop.f32.mrb[0].mxu0
  %v2064 = vadd.f32 %v280, %v2063
  %v2065 = vpop.f32.mrb[0].mxu0
  %v2066 = vpop.f32.mrb[0].mxu0
  %v2067 = vadd.f32 %v280, %v2066
  %v2068 = vpop.f32.mrb[0].mxu0
  %2069 = vmatprep.mubr.bf16.mxu0 0
  %2070 = vmatmul.mubr.bf16.gmra.mrb[0].mxu0 %v1202
  %v2071 = vpop.f32.mrb[0].mxu0
  %v2072 = vadd.f32 %v280, %v2071
  %v2073 = vpop.f32.mrb[0].mxu0
  %v2074 = vpop.f32.mrb[0].mxu0
  %v2075 = vadd.f32 %v280, %v2074
  %v2076 = vpop.f32.mrb[0].mxu0
  %2077 = vmatprep.mubr.bf16.mxu0 0
  %2078 = vmatmul.mubr.bf16.gmra.mrb[0].mxu0 %v1205
  %v2079 = vpop.f32.mrb[0].mxu0
  %v2080 = vadd.f32 %v280, %v2079
  %v2081 = vpop.f32.mrb[0].mxu0
  %v2082 = vpop.f32.mrb[0].mxu0
  %v2083 = vadd.f32 %v280, %v2082
  %v2084 = vpop.f32.mrb[0].mxu0
  %2085 = vmatprep.mubr.bf16.mxu0 0
  %2086 = vmatmul.mubr.bf16.gmra.mrb[0].mxu0 %v1208
  %v2087 = vpop.f32.mrb[0].mxu0
  %v2088 = vadd.f32 %v280, %v2087
  %v2089 = vpop.f32.mrb[0].mxu0
  %v2090 = vpop.f32.mrb[0].mxu0
  %v2091 = vadd.f32 %v280, %v2090
  %v2092 = vpop.f32.mrb[0].mxu0
  %2093 = vmatprep.mubr.bf16.mxu0 0
  %2094 = vmatmul.mubr.bf16.gmra.mrb[0].mxu0 %v1211
  %v2095 = vpop.f32.mrb[0].mxu0
  %v2096 = vadd.f32 %v280, %v2095
  %v2097 = vpop.f32.mrb[0].mxu0
  %v2098 = vpop.f32.mrb[0].mxu0
  %v2099 = vadd.f32 %v280, %v2098
  %v2100 = vpop.f32.mrb[0].mxu0
  %2101 = vmatprep.mubr.bf16.mxu0 0
  %2102 = vmatmul.mubr.bf16.gmra.mrb[0].mxu0 %v1214
  %v2103 = vpop.f32.mrb[0].mxu0
  %v2104 = vadd.f32 %v280, %v2103
  %v2105 = vpop.f32.mrb[0].mxu0
  %v2106 = vpop.f32.mrb[0].mxu0
  %v2107 = vadd.f32 %v280, %v2106
  %v2108 = vpop.f32.mrb[0].mxu0
  %2109 = vmatprep.mubr.bf16.mxu0 0
  %2110 = vmatmul.mubr.bf16.gmra.mrb[0].mxu0 %v1217
  %v2111 = vpop.f32.mrb[0].mxu0
  %v2112 = vadd.f32 %v280, %v2111
  %v2113 = vpop.f32.mrb[0].mxu0
  %v2114 = vpop.f32.mrb[0].mxu0
  %v2115 = vadd.f32 %v280, %v2114
  %v2116 = vpop.f32.mrb[0].mxu0
  %2117 = vmatprep.mubr.bf16.mxu0 0
  %2118 = vmatmul.mubr.bf16.gmra.mrb[0].mxu0 %v1220
  %v2119 = vpop.f32.mrb[0].mxu0
  %v2120 = vadd.f32 %v280, %v2119
  %v2121 = vpop.f32.mrb[0].mxu0
  %v2122 = vpop.f32.mrb[0].mxu0
  %v2123 = vadd.f32 %v280, %v2122
  %v2124 = vpop.f32.mrb[0].mxu0
  %2125 = vmatprep.mubr.bf16.mxu0 0
  %2126 = vmatmul.mubr.bf16.gmra.mrb[0].mxu0 %v1223
  %v2127 = vpop.f32.mrb[0].mxu0
  %v2128 = vadd.f32 %v280, %v2127
  %v2129 = vpop.f32.mrb[0].mxu0
  %v2130 = vpop.f32.mrb[0].mxu0
  %v2131 = vadd.f32 %v280, %v2130
  %v2132 = vpop.f32.mrb[0].mxu0
  %2133 = vmatprep.mubr.bf16.mxu0 0
  %2134 = vmatmul.mubr.bf16.gmra.mrb[0].mxu0 %v1226
  %v2135 = vpop.f32.mrb[0].mxu0
  %v2136 = vadd.f32 %v280, %v2135
  %v2137 = vpop.f32.mrb[0].mxu0
  %v2138 = vpop.f32.mrb[0].mxu0
  %v2139 = vadd.f32 %v280, %v2138
  %v2140 = vpop.f32.mrb[0].mxu0
  %2141 = vmatprep.mubr.bf16.mxu0 0
  %2142 = vmatmul.mubr.bf16.gmra.mrb[0].mxu0 %v1229
  %v2143 = vpop.f32.mrb[0].mxu0
  %v2144 = vadd.f32 %v280, %v2143
  %v2145 = vpop.f32.mrb[0].mxu0
  %v2146 = vpop.f32.mrb[0].mxu0
  %v2147 = vadd.f32 %v280, %v2146
  %v2148 = vpop.f32.mrb[0].mxu0
  %2149 = vmatprep.mubr.bf16.mxu0 0
  %2150 = vmatmul.mubr.bf16.gmra.mrb[0].mxu0 %v1232
  %v2151 = vpop.f32.mrb[0].mxu0
  %v2152 = vadd.f32 %v280, %v2151
  %v2153 = vpop.f32.mrb[0].mxu0
  %v2154 = vpop.f32.mrb[0].mxu0
  %v2155 = vadd.f32 %v280, %v2154
  %v2156 = vpop.f32.mrb[0].mxu0
  %2157 = vmatprep.mubr.bf16.mxu0 0
  %2158 = vmatmul.mubr.bf16.gmra.mrb[0].mxu0 %v1235
  %v2159 = vpop.f32.mrb[0].mxu0
  %v2160 = vadd.f32 %v280, %v2159
  %v2161 = vpop.f32.mrb[0].mxu0
  %v2162 = vpop.f32.mrb[0].mxu0
  %v2163 = vadd.f32 %v280, %v2162
  %v2164 = vpop.f32.mrb[0].mxu0
  %2165 = vmatprep.mubr.bf16.mxu0 0
  %2166 = vmatmul.mubr.bf16.gmra.mrb[0].mxu0 %v1238
  %v2167 = vpop.f32.mrb[0].mxu0
  %v2168 = vadd.f32 %v280, %v2167
  %v2169 = vpop.f32.mrb[0].mxu0
  %v2170 = vpop.f32.mrb[0].mxu0
  %v2171 = vadd.f32 %v280, %v2170
  %v2172 = vpop.f32.mrb[0].mxu0
  %2173 = vmatprep.mubr.bf16.mxu0 0
  %2174 = vmatmul.mubr.bf16.gmra.mrb[0].mxu0 %v1241
  %v2175 = vpop.f32.mrb[0].mxu0
  %v2176 = vadd.f32 %v280, %v2175
  %v2177 = vpop.f32.mrb[0].mxu0
  %v2178 = vpop.f32.mrb[0].mxu0
  %v2179 = vadd.f32 %v280, %v2178
  %v2180 = vpop.f32.mrb[0].mxu0
  %2181 = vmatprep.mubr.bf16.mxu0 0
  %2182 = vmatmul.mubr.bf16.gmra.mrb[0].mxu0 %v1244
  %v2183 = vpop.f32.mrb[0].mxu0
  %v2184 = vadd.f32 %v280, %v2183
  %v2185 = vpop.f32.mrb[0].mxu0
  %v2186 = vpop.f32.mrb[0].mxu0
  %v2187 = vadd.f32 %v280, %v2186
  %v2188 = vpop.f32.mrb[0].mxu0
  %2189 = vmatprep.mubr.bf16.mxu0 0
  %2190 = vmatmul.mubr.bf16.gmra.mrb[0].mxu0 %v1247
  %v2191 = vpop.f32.mrb[0].mxu0
  %v2192 = vadd.f32 %v280, %v2191
  %v2193 = vpop.f32.mrb[0].mxu0
  %v2194 = vpop.f32.mrb[0].mxu0
  %v2195 = vadd.f32 %v280, %v2194
  %v2196 = vpop.f32.mrb[0].mxu0
  %2197 = vmatprep.mubr.bf16.mxu0 0
  %2198 = vmatmul.mubr.bf16.gmra.mrb[0].mxu0 %v1250
  %v2199 = vpop.f32.mrb[0].mxu0
  %v2200 = vadd.f32 %v280, %v2199
  %v2201 = vpop.f32.mrb[0].mxu0
  %v2202 = vpop.f32.mrb[0].mxu0
  %v2203 = vadd.f32 %v280, %v2202
  %v2204 = vpop.f32.mrb[0].mxu0
  %2205 = vmatprep.mubr.bf16.mxu0 0
  %2206 = vmatmul.mubr.bf16.gmra.mrb[0].mxu0 %v1253
  %v2207 = vpop.f32.mrb[0].mxu0
  %v2208 = vadd.f32 %v280, %v2207
  %v2209 = vpop.f32.mrb[0].mxu0
  %v2210 = vpop.f32.mrb[0].mxu0
  %v2211 = vadd.f32 %v280, %v2210
  %v2212 = vpop.f32.mrb[0].mxu0
  %2213 = vmatprep.mubr.bf16.mxu0 0
  %2214 = vmatmul.mubr.bf16.gmra.mrb[0].mxu0 %v1256
  %v2215 = vpop.f32.mrb[0].mxu0
  %v2216 = vadd.f32 %v280, %v2215
  %v2217 = vpop.f32.mrb[0].mxu0
  %v2218 = vpop.f32.mrb[0].mxu0
  %v2219 = vadd.f32 %v280, %v2218
  %v2220 = vpop.f32.mrb[0].mxu0
  %2221 = vmatprep.mubr.bf16.mxu0 0
  %2222 = vmatmul.mubr.bf16.gmra.mrb[0].mxu0 %v1259
  %v2223 = vpop.f32.mrb[0].mxu0
  %v2224 = vadd.f32 %v280, %v2223
  %v2225 = vpop.f32.mrb[0].mxu0
  %v2226 = vpop.f32.mrb[0].mxu0
  %v2227 = vadd.f32 %v280, %v2226
  %v2228 = vpop.f32.mrb[0].mxu0
  %2229 = vmatprep.mubr.bf16.mxu0 0
  %2230 = vmatmul.mubr.bf16.gmra.mrb[0].mxu0 %v1262
  %v2231 = vpop.f32.mrb[0].mxu0
  %v2232 = vadd.f32 %v280, %v2231
  %v2233 = vpop.f32.mrb[0].mxu0
  %v2234 = vpop.f32.mrb[0].mxu0
  %v2235 = vadd.f32 %v280, %v2234
  %v2236 = vpop.f32.mrb[0].mxu0
  %2237 = vmatprep.mubr.bf16.mxu0 0
  %2238 = vmatmul.mubr.bf16.gmra.mrb[0].mxu0 %v1265
  %v2239 = vpop.f32.mrb[0].mxu0
  %v2240 = vadd.f32 %v280, %v2239
  %v2241 = vpop.f32.mrb[0].mxu0
  %v2242 = vpop.f32.mrb[0].mxu0
  %v2243 = vadd.f32 %v280, %v2242
  %v2244 = vpop.f32.mrb[0].mxu0
  %2245 = vmatprep.mubr.bf16.mxu0 0
  %2246 = vmatmul.mubr.bf16.gmra.mrb[0].mxu0 %v1268
  %v2247 = vpop.f32.mrb[0].mxu0
  %v2248 = vadd.f32 %v280, %v2247
  %v2249 = vpop.f32.mrb[0].mxu0
  %v2250 = vpop.f32.mrb[0].mxu0
  %v2251 = vadd.f32 %v280, %v2250
  %v2252 = vpop.f32.mrb[0].mxu0
  %2253 = vmatprep.mubr.bf16.mxu0 0
  %2254 = vmatmul.mubr.bf16.gmra.mrb[0].mxu0 %v1271
  %v2255 = vpop.f32.mrb[0].mxu0
  %v2256 = vadd.f32 %v280, %v2255
  %v2257 = vpop.f32.mrb[0].mxu0
  %v2258 = vpop.f32.mrb[0].mxu0
  %v2259 = vadd.f32 %v280, %v2258
  %v2260 = vpop.f32.mrb[0].mxu0
  %2261 = vmatprep.mubr.bf16.mxu0 0
  %2262 = vmatmul.mubr.bf16.gmra.mrb[0].mxu0 %v1274
  %v2263 = vpop.f32.mrb[0].mxu0
  %v2264 = vadd.f32 %v280, %v2263
  %v2265 = vpop.f32.mrb[0].mxu0
  %v2266 = vpop.f32.mrb[0].mxu0
  %v2267 = vadd.f32 %v280, %v2266
  %v2268 = vpop.f32.mrb[0].mxu0
  %2269 = vmatprep.mubr.bf16.mxu0 0
  %2270 = vmatmul.mubr.bf16.gmra.mrb[0].mxu0 %v1277
  %v2271 = vpop.f32.mrb[0].mxu0
  %v2272 = vadd.f32 %v280, %v2271
  %v2273 = vpop.f32.mrb[0].mxu0
  %v2274 = vpop.f32.mrb[0].mxu0
  %v2275 = vadd.f32 %v280, %v2274
  %v2276 = vpop.f32.mrb[0].mxu0
  %2277 = vmatprep.mubr.bf16.mxu0 0
  %2278 = vmatmul.mubr.bf16.gmra.mrb[0].mxu0 %v1280
  %v2279 = vpop.f32.mrb[0].mxu0
  %v2280 = vadd.f32 %v280, %v2279
  %v2281 = vpop.f32.mrb[0].mxu0
  %v2282 = vpop.f32.mrb[0].mxu0
  %v2283 = vadd.f32 %v280, %v2282
  %v2284 = vpop.f32.mrb[0].mxu0
  %2285 = vmatprep.mubr.bf16.mxu0 0
  %2286 = vmatmul.mubr.bf16.gmra.mrb[0].mxu0 %v1283
  %v2287 = vpop.f32.mrb[0].mxu0
  %v2288 = vadd.f32 %v280, %v2287
  %v2289 = vpop.f32.mrb[0].mxu0
  %v2290 = vpop.f32.mrb[0].mxu0
  %v2291 = vadd.f32 %v280, %v2290
  %v2292 = vpop.f32.mrb[0].mxu0
  %2293 = vmatprep.mubr.bf16.mxu0 0
  %2294 = vmatmul.mubr.bf16.gmra.mrb[0].mxu0 %v1286
  %v2295 = vpop.f32.mrb[0].mxu0
  %v2296 = vadd.f32 %v280, %v2295
  %v2297 = vpop.f32.mrb[0].mxu0
  %v2298 = vpop.f32.mrb[0].mxu0
  %v2299 = vadd.f32 %v280, %v2298
  %v2300 = vpop.f32.mrb[0].mxu0
  %2301 = vmatprep.mubr.bf16.mxu0 0
  %2302 = vmatmul.mubr.bf16.gmra.mrb[0].mxu0 %v1289
  %v2303 = vpop.f32.mrb[0].mxu0
  %v2304 = vadd.f32 %v280, %v2303
  %v2305 = vpop.f32.mrb[0].mxu0
  %v2306 = vpop.f32.mrb[0].mxu0
  %v2307 = vadd.f32 %v280, %v2306
  %v2308 = vpop.f32.mrb[0].mxu0
  %2309 = vmatprep.mubr.bf16.mxu0 0
  %2310 = vmatmul.mubr.bf16.gmra.mrb[0].mxu0 %v1292
  %v2311 = vpop.f32.mrb[0].mxu0
  %v2312 = vadd.f32 %v280, %v2311
  %v2313 = vpop.f32.mrb[0].mxu0
  %v2314 = vpop.f32.mrb[0].mxu0
  %v2315 = vadd.f32 %v280, %v2314
  %v2316 = vpop.f32.mrb[0].mxu0
  %2317 = vmatprep.mubr.bf16.mxu0 0
  %2318 = vmatmul.mubr.bf16.gmra.mrb[0].mxu0 %v1295
  %v2319 = vpop.f32.mrb[0].mxu0
  %v2320 = vadd.f32 %v280, %v2319
  %v2321 = vpop.f32.mrb[0].mxu0
  %v2322 = vpop.f32.mrb[0].mxu0
  %v2323 = vadd.f32 %v280, %v2322
  %v2324 = vpop.f32.mrb[0].mxu0
  %2325 = vmatprep.mubr.bf16.mxu0 0
  %2326 = vmatmul.mubr.bf16.gmra.mrb[0].mxu0 %v1298
  %v2327 = vpop.f32.mrb[0].mxu0
  %v2328 = vadd.f32 %v280, %v2327
  %v2329 = vpop.f32.mrb[0].mxu0
  %v2330 = vpop.f32.mrb[0].mxu0
  %v2331 = vadd.f32 %v280, %v2330
  %v2332 = vpop.f32.mrb[0].mxu0
  %2333 = vmatprep.mubr.bf16.mxu0 0
  %2334 = vmatmul.mubr.bf16.gmra.mrb[0].mxu0 %v1301
  %v2335 = vpop.f32.mrb[0].mxu0
  %v2336 = vadd.f32 %v280, %v2335
  %v2337 = vpop.f32.mrb[0].mxu0
  %v2338 = vpop.f32.mrb[0].mxu0
  %v2339 = vadd.f32 %v280, %v2338
  %v2340 = vpop.f32.mrb[0].mxu0
  %2341 = vmatprep.mubr.bf16.mxu0 0
  %2342 = vmatmul.mubr.bf16.gmra.mrb[0].mxu0 %v1304
  %v2343 = vpop.f32.mrb[0].mxu0
  %v2344 = vadd.f32 %v280, %v2343
  %v2345 = vpop.f32.mrb[0].mxu0
  %v2346 = vpop.f32.mrb[0].mxu0
  %v2347 = vadd.f32 %v280, %v2346
  %v2348 = vpop.f32.mrb[0].mxu0
  %2349 = vmatprep.mubr.bf16.mxu0 0
  %2350 = vmatmul.mubr.bf16.gmra.mrb[0].mxu0 %v1307
  %v2351 = vpop.f32.mrb[0].mxu0
  %v2352 = vadd.f32 %v280, %v2351
  %v2353 = vpop.f32.mrb[0].mxu0
  %v2354 = vpop.f32.mrb[0].mxu0
  %v2355 = vadd.f32 %v280, %v2354
  %v2356 = vpop.f32.mrb[0].mxu0
  %2357 = vmatprep.mubr.bf16.mxu0 0
  %2358 = vmatmul.mubr.bf16.gmra.mrb[0].mxu0 %v1310
  %v2359 = vpop.f32.mrb[0].mxu0
  %v2360 = vadd.f32 %v280, %v2359
  %v2361 = vpop.f32.mrb[0].mxu0
  %v2362 = vpop.f32.mrb[0].mxu0
  %v2363 = vadd.f32 %v280, %v2362
  %v2364 = vpop.f32.mrb[0].mxu0
  %2365 = vmatprep.mubr.bf16.mxu0 0
  %2366 = vmatmul.mubr.bf16.gmra.mrb[0].mxu0 %v1313
  %v2367 = vpop.f32.mrb[0].mxu0
  %v2368 = vadd.f32 %v280, %v2367
  %v2369 = vpop.f32.mrb[0].mxu0
  %v2370 = vpop.f32.mrb[0].mxu0
  %v2371 = vadd.f32 %v280, %v2370
  %v2372 = vpop.f32.mrb[0].mxu0
  %2373 = vmatprep.mubr.bf16.mxu0 0
  %2374 = vmatmul.mubr.bf16.gmra.mrb[0].mxu0 %v1316
  %v2375 = vpop.f32.mrb[0].mxu0
  %v2376 = vadd.f32 %v280, %v2375
  %v2377 = vpop.f32.mrb[0].mxu0
  %v2378 = vpop.f32.mrb[0].mxu0
  %v2379 = vadd.f32 %v280, %v2378
  %v2380 = vpop.f32.mrb[0].mxu0
  %2381 = vdwg.mxu0
  %v2382 = vmax.f32 %v1360, 0.0
  %v2383 = vmax.f32 %v1363, 0.0
  %v2384 = vmax.f32 %v1368, 0.0
  %v2385 = vmax.f32 %v1371, 0.0
  %v2386 = vmax.f32 %v1376, 0.0
  %v2387 = vmax.f32 %v1379, 0.0
  %v2388 = vmax.f32 %v1384, 0.0
  %v2389 = vmax.f32 %v1387, 0.0
  %v2390 = vmax.f32 %v1392, 0.0
  %v2391 = vmax.f32 %v1395, 0.0
  %v2392 = vmax.f32 %v1400, 0.0
  %v2393 = vmax.f32 %v1403, 0.0
  %v2394 = vmax.f32 %v1408, 0.0
  %v2395 = vmax.f32 %v1411, 0.0
  %v2396 = vmax.f32 %v1416, 0.0
  %v2397 = vmax.f32 %v1419, 0.0
  %v2398 = vmax.f32 %v1424, 0.0
  %v2399 = vmax.f32 %v1427, 0.0
  %v2400 = vmax.f32 %v1432, 0.0
  %v2401 = vmax.f32 %v1435, 0.0
  %v2402 = vmax.f32 %v1440, 0.0
  %v2403 = vmax.f32 %v1443, 0.0
  %v2404 = vmax.f32 %v1448, 0.0
  %v2405 = vmax.f32 %v1451, 0.0
  %v2406 = vmax.f32 %v1456, 0.0
  %v2407 = vmax.f32 %v1459, 0.0
  %v2408 = vmax.f32 %v1464, 0.0
  %v2409 = vmax.f32 %v1467, 0.0
  %v2410 = vmax.f32 %v1472, 0.0
  %v2411 = vmax.f32 %v1475, 0.0
  %v2412 = vmax.f32 %v1480, 0.0
  %v2413 = vmax.f32 %v1483, 0.0
  %v2414 = vmax.f32 %v1488, 0.0
  %v2415 = vmax.f32 %v1491, 0.0
  %v2416 = vmax.f32 %v1496, 0.0
  %v2417 = vmax.f32 %v1499, 0.0
  %v2418 = vmax.f32 %v1504, 0.0
  %v2419 = vmax.f32 %v1507, 0.0
  %v2420 = vmax.f32 %v1512, 0.0
  %v2421 = vmax.f32 %v1515, 0.0
  %v2422 = vmax.f32 %v1520, 0.0
  %v2423 = vmax.f32 %v1523, 0.0
  %v2424 = vmax.f32 %v1528, 0.0
  %v2425 = vmax.f32 %v1531, 0.0
  %v2426 = vmax.f32 %v1536, 0.0
  %v2427 = vmax.f32 %v1539, 0.0
  %v2428 = vmax.f32 %v1544, 0.0
  %v2429 = vmax.f32 %v1547, 0.0
  %v2430 = vmax.f32 %v1552, 0.0
  %v2431 = vmax.f32 %v1555, 0.0
  %v2432 = vmax.f32 %v1560, 0.0
  %v2433 = vmax.f32 %v1563, 0.0
  %v2434 = vmax.f32 %v1568, 0.0
  %v2435 = vmax.f32 %v1571, 0.0
  %v2436 = vmax.f32 %v1576, 0.0
  %v2437 = vmax.f32 %v1579, 0.0
  %v2438 = vmax.f32 %v1584, 0.0
  %v2439 = vmax.f32 %v1587, 0.0
  %v2440 = vmax.f32 %v1592, 0.0
  %v2441 = vmax.f32 %v1595, 0.0
  %v2442 = vmax.f32 %v1600, 0.0
  %v2443 = vmax.f32 %v1603, 0.0
  %v2444 = vmax.f32 %v1608, 0.0
  %v2445 = vmax.f32 %v1611, 0.0
  %v2446 = vmax.f32 %v1616, 0.0
  %v2447 = vmax.f32 %v1619, 0.0
  %v2448 = vmax.f32 %v1624, 0.0
  %v2449 = vmax.f32 %v1627, 0.0
  %v2450 = vmax.f32 %v1632, 0.0
  %v2451 = vmax.f32 %v1635, 0.0
  %v2452 = vmax.f32 %v1640, 0.0
  %v2453 = vmax.f32 %v1643, 0.0
  %v2454 = vmax.f32 %v1648, 0.0
  %v2455 = vmax.f32 %v1651, 0.0
  %v2456 = vmax.f32 %v1656, 0.0
  %v2457 = vmax.f32 %v1659, 0.0
  %v2458 = vmax.f32 %v1664, 0.0
  %v2459 = vmax.f32 %v1667, 0.0
  %v2460 = vmax.f32 %v1672, 0.0
  %v2461 = vmax.f32 %v1675, 0.0
  %v2462 = vmax.f32 %v1680, 0.0
  %v2463 = vmax.f32 %v1683, 0.0
  %v2464 = vmax.f32 %v1688, 0.0
  %v2465 = vmax.f32 %v1691, 0.0
  %v2466 = vmax.f32 %v1696, 0.0
  %v2467 = vmax.f32 %v1699, 0.0
  %v2468 = vmax.f32 %v1704, 0.0
  %v2469 = vmax.f32 %v1707, 0.0
  %v2470 = vmax.f32 %v1712, 0.0
  %v2471 = vmax.f32 %v1715, 0.0
  %v2472 = vmax.f32 %v1720, 0.0
  %v2473 = vmax.f32 %v1723, 0.0
  %v2474 = vmax.f32 %v1728, 0.0
  %v2475 = vmax.f32 %v1731, 0.0
  %v2476 = vmax.f32 %v1736, 0.0
  %v2477 = vmax.f32 %v1739, 0.0
  %v2478 = vmax.f32 %v1744, 0.0
  %v2479 = vmax.f32 %v1747, 0.0
  %v2480 = vmax.f32 %v1752, 0.0
  %v2481 = vmax.f32 %v1755, 0.0
  %v2482 = vmax.f32 %v1760, 0.0
  %v2483 = vmax.f32 %v1763, 0.0
  %v2484 = vmax.f32 %v1768, 0.0
  %v2485 = vmax.f32 %v1771, 0.0
  %v2486 = vmax.f32 %v1776, 0.0
  %v2487 = vmax.f32 %v1779, 0.0
  %v2488 = vmax.f32 %v1784, 0.0
  %v2489 = vmax.f32 %v1787, 0.0
  %v2490 = vmax.f32 %v1792, 0.0
  %v2491 = vmax.f32 %v1795, 0.0
  %v2492 = vmax.f32 %v1800, 0.0
  %v2493 = vmax.f32 %v1803, 0.0
  %v2494 = vmax.f32 %v1808, 0.0
  %v2495 = vmax.f32 %v1811, 0.0
  %v2496 = vmax.f32 %v1816, 0.0
  %v2497 = vmax.f32 %v1819, 0.0
  %v2498 = vmax.f32 %v1824, 0.0
  %v2499 = vmax.f32 %v1827, 0.0
  %v2500 = vmax.f32 %v1832, 0.0
  %v2501 = vmax.f32 %v1835, 0.0
  %v2502 = vmax.f32 %v1840, 0.0
  %v2503 = vmax.f32 %v1843, 0.0
  %v2504 = vmax.f32 %v1848, 0.0
  %v2505 = vmax.f32 %v1851, 0.0
  %v2506 = vmax.f32 %v1856, 0.0
  %v2507 = vmax.f32 %v1859, 0.0
  %v2508 = vmax.f32 %v1864, 0.0
  %v2509 = vmax.f32 %v1867, 0.0
  %v2510 = vmax.f32 %v1872, 0.0
  %v2511 = vmax.f32 %v1875, 0.0
  %v2512 = vmax.f32 %v1880, 0.0
  %v2513 = vmax.f32 %v1883, 0.0
  %v2514 = vmax.f32 %v1888, 0.0
  %v2515 = vmax.f32 %v1891, 0.0
  %v2516 = vmax.f32 %v1896, 0.0
  %v2517 = vmax.f32 %v1899, 0.0
  %v2518 = vmax.f32 %v1904, 0.0
  %v2519 = vmax.f32 %v1907, 0.0
  %v2520 = vmax.f32 %v1912, 0.0
  %v2521 = vmax.f32 %v1915, 0.0
  %v2522 = vmax.f32 %v1920, 0.0
  %v2523 = vmax.f32 %v1923, 0.0
  %v2524 = vmax.f32 %v1928, 0.0
  %v2525 = vmax.f32 %v1931, 0.0
  %v2526 = vmax.f32 %v1936, 0.0
  %v2527 = vmax.f32 %v1939, 0.0
  %v2528 = vmax.f32 %v1944, 0.0
  %v2529 = vmax.f32 %v1947, 0.0
  %v2530 = vmax.f32 %v1952, 0.0
  %v2531 = vmax.f32 %v1955, 0.0
  %v2532 = vmax.f32 %v1960, 0.0
  %v2533 = vmax.f32 %v1963, 0.0
  %v2534 = vmax.f32 %v1968, 0.0
  %v2535 = vmax.f32 %v1971, 0.0
  %v2536 = vmax.f32 %v1976, 0.0
  %v2537 = vmax.f32 %v1979, 0.0
  %v2538 = vmax.f32 %v1984, 0.0
  %v2539 = vmax.f32 %v1987, 0.0
  %v2540 = vmax.f32 %v1992, 0.0
  %v2541 = vmax.f32 %v1995, 0.0
  %v2542 = vmax.f32 %v2000, 0.0
  %v2543 = vmax.f32 %v2003, 0.0
  %v2544 = vmax.f32 %v2008, 0.0
  %v2545 = vmax.f32 %v2011, 0.0
  %v2546 = vmax.f32 %v2016, 0.0
  %v2547 = vmax.f32 %v2019, 0.0
  %v2548 = vmax.f32 %v2024, 0.0
  %v2549 = vmax.f32 %v2027, 0.0
  %v2550 = vmax.f32 %v2032, 0.0
  %v2551 = vmax.f32 %v2035, 0.0
  %v2552 = vmax.f32 %v2040, 0.0
  %v2553 = vmax.f32 %v2043, 0.0
  %v2554 = vmax.f32 %v2048, 0.0
  %v2555 = vmax.f32 %v2051, 0.0
  %v2556 = vmax.f32 %v2056, 0.0
  %v2557 = vmax.f32 %v2059, 0.0
  %v2558 = vmax.f32 %v2064, 0.0
  %v2559 = vmax.f32 %v2067, 0.0
  %v2560 = vmax.f32 %v2072, 0.0
  %v2561 = vmax.f32 %v2075, 0.0
  %v2562 = vmax.f32 %v2080, 0.0
  %v2563 = vmax.f32 %v2083, 0.0
  %v2564 = vmax.f32 %v2088, 0.0
  %v2565 = vmax.f32 %v2091, 0.0
  %v2566 = vmax.f32 %v2096, 0.0
  %v2567 = vmax.f32 %v2099, 0.0
  %v2568 = vmax.f32 %v2104, 0.0
  %v2569 = vmax.f32 %v2107, 0.0
  %v2570 = vmax.f32 %v2112, 0.0
  %v2571 = vmax.f32 %v2115, 0.0
  %v2572 = vmax.f32 %v2120, 0.0
  %v2573 = vmax.f32 %v2123, 0.0
  %v2574 = vmax.f32 %v2128, 0.0
  %v2575 = vmax.f32 %v2131, 0.0
  %v2576 = vmax.f32 %v2136, 0.0
  %v2577 = vmax.f32 %v2139, 0.0
  %v2578 = vmax.f32 %v2144, 0.0
  %v2579 = vmax.f32 %v2147, 0.0
  %v2580 = vmax.f32 %v2152, 0.0
  %v2581 = vmax.f32 %v2155, 0.0
  %v2582 = vmax.f32 %v2160, 0.0
  %v2583 = vmax.f32 %v2163, 0.0
  %v2584 = vmax.f32 %v2168, 0.0
  %v2585 = vmax.f32 %v2171, 0.0
  %v2586 = vmax.f32 %v2176, 0.0
  %v2587 = vmax.f32 %v2179, 0.0
  %v2588 = vmax.f32 %v2184, 0.0
  %v2589 = vmax.f32 %v2187, 0.0
  %v2590 = vmax.f32 %v2192, 0.0
  %v2591 = vmax.f32 %v2195, 0.0
  %v2592 = vmax.f32 %v2200, 0.0
  %v2593 = vmax.f32 %v2203, 0.0
  %v2594 = vmax.f32 %v2208, 0.0
  %v2595 = vmax.f32 %v2211, 0.0
  %v2596 = vmax.f32 %v2216, 0.0
  %v2597 = vmax.f32 %v2219, 0.0
  %v2598 = vmax.f32 %v2224, 0.0
  %v2599 = vmax.f32 %v2227, 0.0
  %v2600 = vmax.f32 %v2232, 0.0
  %v2601 = vmax.f32 %v2235, 0.0
  %v2602 = vmax.f32 %v2240, 0.0
  %v2603 = vmax.f32 %v2243, 0.0
  %v2604 = vmax.f32 %v2248, 0.0
  %v2605 = vmax.f32 %v2251, 0.0
  %v2606 = vmax.f32 %v2256, 0.0
  %v2607 = vmax.f32 %v2259, 0.0
  %v2608 = vmax.f32 %v2264, 0.0
  %v2609 = vmax.f32 %v2267, 0.0
  %v2610 = vmax.f32 %v2272, 0.0
  %v2611 = vmax.f32 %v2275, 0.0
  %v2612 = vmax.f32 %v2280, 0.0
  %v2613 = vmax.f32 %v2283, 0.0
  %v2614 = vmax.f32 %v2288, 0.0
  %v2615 = vmax.f32 %v2291, 0.0
  %v2616 = vmax.f32 %v2296, 0.0
  %v2617 = vmax.f32 %v2299, 0.0
  %v2618 = vmax.f32 %v2304, 0.0
  %v2619 = vmax.f32 %v2307, 0.0
  %v2620 = vmax.f32 %v2312, 0.0
  %v2621 = vmax.f32 %v2315, 0.0
  %v2622 = vmax.f32 %v2320, 0.0
  %v2623 = vmax.f32 %v2323, 0.0
  %v2624 = vmax.f32 %v2328, 0.0
  %v2625 = vmax.f32 %v2331, 0.0
  %v2626 = vmax.f32 %v2336, 0.0
  %v2627 = vmax.f32 %v2339, 0.0
  %v2628 = vmax.f32 %v2344, 0.0
  %v2629 = vmax.f32 %v2347, 0.0
  %v2630 = vmax.f32 %v2352, 0.0
  %v2631 = vmax.f32 %v2355, 0.0
  %v2632 = vmax.f32 %v2360, 0.0
  %v2633 = vmax.f32 %v2363, 0.0
  %v2634 = vmax.f32 %v2368, 0.0
  %v2635 = vmax.f32 %v2371, 0.0
  %v2636 = vmax.f32 %v2376, 0.0
  %v2637 = vmax.f32 %v2379, 0.0
  %v2638 = vpack.c.bf16 %v2383, %v2382
  %v2639 = vpack.c.bf16 %v2385, %v2384
  %v2640 = vpack.c.bf16 %v2387, %v2386
  %v2641 = vpack.c.bf16 %v2389, %v2388
  %v2642 = vpack.c.bf16 %v2391, %v2390
  %v2643 = vpack.c.bf16 %v2393, %v2392
  %v2644 = vpack.c.bf16 %v2395, %v2394
  %v2645 = vpack.c.bf16 %v2397, %v2396
  %v2646 = vpack.c.bf16 %v2399, %v2398
  %v2647 = vpack.c.bf16 %v2401, %v2400
  %v2648 = vpack.c.bf16 %v2403, %v2402
  %v2649 = vpack.c.bf16 %v2405, %v2404
  %v2650 = vpack.c.bf16 %v2407, %v2406
  %v2651 = vpack.c.bf16 %v2409, %v2408
  %v2652 = vpack.c.bf16 %v2411, %v2410
  %v2653 = vpack.c.bf16 %v2413, %v2412
  %v2654 = vpack.c.bf16 %v2415, %v2414
  %v2655 = vpack.c.bf16 %v2417, %v2416
  %v2656 = vpack.c.bf16 %v2419, %v2418
  %v2657 = vpack.c.bf16 %v2421, %v2420
  %v2658 = vpack.c.bf16 %v2423, %v2422
  %v2659 = vpack.c.bf16 %v2425, %v2424
  %v2660 = vpack.c.bf16 %v2427, %v2426
  %v2661 = vpack.c.bf16 %v2429, %v2428
  %v2662 = vpack.c.bf16 %v2431, %v2430
  %v2663 = vpack.c.bf16 %v2433, %v2432
  %v2664 = vpack.c.bf16 %v2435, %v2434
  %v2665 = vpack.c.bf16 %v2437, %v2436
  %v2666 = vpack.c.bf16 %v2439, %v2438
  %v2667 = vpack.c.bf16 %v2441, %v2440
  %v2668 = vpack.c.bf16 %v2443, %v2442
  %v2669 = vpack.c.bf16 %v2445, %v2444
  %v2670 = vpack.c.bf16 %v2447, %v2446
  %v2671 = vpack.c.bf16 %v2449, %v2448
  %v2672 = vpack.c.bf16 %v2451, %v2450
  %v2673 = vpack.c.bf16 %v2453, %v2452
  %v2674 = vpack.c.bf16 %v2455, %v2454
  %v2675 = vpack.c.bf16 %v2457, %v2456
  %v2676 = vpack.c.bf16 %v2459, %v2458
  %v2677 = vpack.c.bf16 %v2461, %v2460
  %v2678 = vpack.c.bf16 %v2463, %v2462
  %v2679 = vpack.c.bf16 %v2465, %v2464
  %v2680 = vpack.c.bf16 %v2467, %v2466
  %v2681 = vpack.c.bf16 %v2469, %v2468
  %v2682 = vpack.c.bf16 %v2471, %v2470
  %v2683 = vpack.c.bf16 %v2473, %v2472
  %v2684 = vpack.c.bf16 %v2475, %v2474
  %v2685 = vpack.c.bf16 %v2477, %v2476
  %v2686 = vpack.c.bf16 %v2479, %v2478
  %v2687 = vpack.c.bf16 %v2481, %v2480
  %v2688 = vpack.c.bf16 %v2483, %v2482
  %v2689 = vpack.c.bf16 %v2485, %v2484
  %v2690 = vpack.c.bf16 %v2487, %v2486
  %v2691 = vpack.c.bf16 %v2489, %v2488
  %v2692 = vpack.c.bf16 %v2491, %v2490
  %v2693 = vpack.c.bf16 %v2493, %v2492
  %v2694 = vpack.c.bf16 %v2495, %v2494
  %v2695 = vpack.c.bf16 %v2497, %v2496
  %v2696 = vpack.c.bf16 %v2499, %v2498
  %v2697 = vpack.c.bf16 %v2501, %v2500
  %v2698 = vpack.c.bf16 %v2503, %v2502
  %v2699 = vpack.c.bf16 %v2505, %v2504
  %v2700 = vpack.c.bf16 %v2507, %v2506
  %v2701 = vpack.c.bf16 %v2509, %v2508
  %v2702 = vpack.c.bf16 %v2511, %v2510
  %v2703 = vpack.c.bf16 %v2513, %v2512
  %v2704 = vpack.c.bf16 %v2515, %v2514
  %v2705 = vpack.c.bf16 %v2517, %v2516
  %v2706 = vpack.c.bf16 %v2519, %v2518
  %v2707 = vpack.c.bf16 %v2521, %v2520
  %v2708 = vpack.c.bf16 %v2523, %v2522
  %v2709 = vpack.c.bf16 %v2525, %v2524
  %v2710 = vpack.c.bf16 %v2527, %v2526
  %v2711 = vpack.c.bf16 %v2529, %v2528
  %v2712 = vpack.c.bf16 %v2531, %v2530
  %v2713 = vpack.c.bf16 %v2533, %v2532
  %v2714 = vpack.c.bf16 %v2535, %v2534
  %v2715 = vpack.c.bf16 %v2537, %v2536
  %v2716 = vpack.c.bf16 %v2539, %v2538
  %v2717 = vpack.c.bf16 %v2541, %v2540
  %v2718 = vpack.c.bf16 %v2543, %v2542
  %v2719 = vpack.c.bf16 %v2545, %v2544
  %v2720 = vpack.c.bf16 %v2547, %v2546
  %v2721 = vpack.c.bf16 %v2549, %v2548
  %v2722 = vpack.c.bf16 %v2551, %v2550
  %v2723 = vpack.c.bf16 %v2553, %v2552
  %v2724 = vpack.c.bf16 %v2555, %v2554
  %v2725 = vpack.c.bf16 %v2557, %v2556
  %v2726 = vpack.c.bf16 %v2559, %v2558
  %v2727 = vpack.c.bf16 %v2561, %v2560
  %v2728 = vpack.c.bf16 %v2563, %v2562
  %v2729 = vpack.c.bf16 %v2565, %v2564
  %v2730 = vpack.c.bf16 %v2567, %v2566
  %v2731 = vpack.c.bf16 %v2569, %v2568
  %v2732 = vpack.c.bf16 %v2571, %v2570
  %v2733 = vpack.c.bf16 %v2573, %v2572
  %v2734 = vpack.c.bf16 %v2575, %v2574
  %v2735 = vpack.c.bf16 %v2577, %v2576
  %v2736 = vpack.c.bf16 %v2579, %v2578
  %v2737 = vpack.c.bf16 %v2581, %v2580
  %v2738 = vpack.c.bf16 %v2583, %v2582
  %v2739 = vpack.c.bf16 %v2585, %v2584
  %v2740 = vpack.c.bf16 %v2587, %v2586
  %v2741 = vpack.c.bf16 %v2589, %v2588
  %v2742 = vpack.c.bf16 %v2591, %v2590
  %v2743 = vpack.c.bf16 %v2593, %v2592
  %v2744 = vpack.c.bf16 %v2595, %v2594
  %v2745 = vpack.c.bf16 %v2597, %v2596
  %v2746 = vpack.c.bf16 %v2599, %v2598
  %v2747 = vpack.c.bf16 %v2601, %v2600
  %v2748 = vpack.c.bf16 %v2603, %v2602
  %v2749 = vpack.c.bf16 %v2605, %v2604
  %v2750 = vpack.c.bf16 %v2607, %v2606
  %v2751 = vpack.c.bf16 %v2609, %v2608
  %v2752 = vpack.c.bf16 %v2611, %v2610
  %v2753 = vpack.c.bf16 %v2613, %v2612
  %v2754 = vpack.c.bf16 %v2615, %v2614
  %v2755 = vpack.c.bf16 %v2617, %v2616
  %v2756 = vpack.c.bf16 %v2619, %v2618
  %v2757 = vpack.c.bf16 %v2621, %v2620
  %v2758 = vpack.c.bf16 %v2623, %v2622
  %v2759 = vpack.c.bf16 %v2625, %v2624
  %v2760 = vpack.c.bf16 %v2627, %v2626
  %v2761 = vpack.c.bf16 %v2629, %v2628
  %v2762 = vpack.c.bf16 %v2631, %v2630
  %v2763 = vpack.c.bf16 %v2633, %v2632
  %v2764 = vpack.c.bf16 %v2635, %v2634
  %v2765 = vpack.c.bf16 %v2637, %v2636
  %v2894 = vunpack.c.l.b16 %v2638
  %v2895 = vunpack.c.h.b16 %v2638
  %v2896 = vunpack.c.l.b16 %v2639
  %v2897 = vunpack.c.h.b16 %v2639
  %v2898 = vunpack.c.l.b16 %v2640
  %v2899 = vunpack.c.h.b16 %v2640
  %v2900 = vunpack.c.l.b16 %v2641
  %v2901 = vunpack.c.h.b16 %v2641
  %v2902 = vunpack.c.l.b16 %v2642
  %v2903 = vunpack.c.h.b16 %v2642
  %v2904 = vunpack.c.l.b16 %v2643
  %v2905 = vunpack.c.h.b16 %v2643
  %v2906 = vunpack.c.l.b16 %v2644
  %v2907 = vunpack.c.h.b16 %v2644
  %v2908 = vunpack.c.l.b16 %v2645
  %v2909 = vunpack.c.h.b16 %v2645
  %v2910 = vunpack.c.l.b16 %v2646
  %v2911 = vunpack.c.h.b16 %v2646
  %v2912 = vunpack.c.l.b16 %v2647
  %v2913 = vunpack.c.h.b16 %v2647
  %v2914 = vunpack.c.l.b16 %v2648
  %v2915 = vunpack.c.h.b16 %v2648
  %v2916 = vunpack.c.l.b16 %v2649
  %v2917 = vunpack.c.h.b16 %v2649
  %v2918 = vunpack.c.l.b16 %v2650
  %v2919 = vunpack.c.h.b16 %v2650
  %v2920 = vunpack.c.l.b16 %v2651
  %v2921 = vunpack.c.h.b16 %v2651
  %v2922 = vunpack.c.l.b16 %v2652
  %v2923 = vunpack.c.h.b16 %v2652
  %v2924 = vunpack.c.l.b16 %v2653
  %v2925 = vunpack.c.h.b16 %v2653
  %v2926 = vunpack.c.l.b16 %v2654
  %v2927 = vunpack.c.h.b16 %v2654
  %v2928 = vunpack.c.l.b16 %v2655
  %v2929 = vunpack.c.h.b16 %v2655
  %v2930 = vunpack.c.l.b16 %v2656
  %v2931 = vunpack.c.h.b16 %v2656
  %v2932 = vunpack.c.l.b16 %v2657
  %v2933 = vunpack.c.h.b16 %v2657
  %v2934 = vunpack.c.l.b16 %v2658
  %v2935 = vunpack.c.h.b16 %v2658
  %v2936 = vunpack.c.l.b16 %v2659
  %v2937 = vunpack.c.h.b16 %v2659
  %v2938 = vunpack.c.l.b16 %v2660
  %v2939 = vunpack.c.h.b16 %v2660
  %v2940 = vunpack.c.l.b16 %v2661
  %v2941 = vunpack.c.h.b16 %v2661
  %v2942 = vunpack.c.l.b16 %v2662
  %v2943 = vunpack.c.h.b16 %v2662
  %v2944 = vunpack.c.l.b16 %v2663
  %v2945 = vunpack.c.h.b16 %v2663
  %v2946 = vunpack.c.l.b16 %v2664
  %v2947 = vunpack.c.h.b16 %v2664
  %v2948 = vunpack.c.l.b16 %v2665
  %v2949 = vunpack.c.h.b16 %v2665
  %v2950 = vunpack.c.l.b16 %v2666
  %v2951 = vunpack.c.h.b16 %v2666
  %v2952 = vunpack.c.l.b16 %v2667
  %v2953 = vunpack.c.h.b16 %v2667
  %v2954 = vunpack.c.l.b16 %v2668
  %v2955 = vunpack.c.h.b16 %v2668
  %v2956 = vunpack.c.l.b16 %v2669
  %v2957 = vunpack.c.h.b16 %v2669
  %v2958 = vunpack.c.l.b16 %v2670
  %v2959 = vunpack.c.h.b16 %v2670
  %v2960 = vunpack.c.l.b16 %v2671
  %v2961 = vunpack.c.h.b16 %v2671
  %v2962 = vunpack.c.l.b16 %v2672
  %v2963 = vunpack.c.h.b16 %v2672
  %v2964 = vunpack.c.l.b16 %v2673
  %v2965 = vunpack.c.h.b16 %v2673
  %v2966 = vunpack.c.l.b16 %v2674
  %v2967 = vunpack.c.h.b16 %v2674
  %v2968 = vunpack.c.l.b16 %v2675
  %v2969 = vunpack.c.h.b16 %v2675
  %v2970 = vunpack.c.l.b16 %v2676
  %v2971 = vunpack.c.h.b16 %v2676
  %v2972 = vunpack.c.l.b16 %v2677
  %v2973 = vunpack.c.h.b16 %v2677
  %v2974 = vunpack.c.l.b16 %v2678
  %v2975 = vunpack.c.h.b16 %v2678
  %v2976 = vunpack.c.l.b16 %v2679
  %v2977 = vunpack.c.h.b16 %v2679
  %v2978 = vunpack.c.l.b16 %v2680
  %v2979 = vunpack.c.h.b16 %v2680
  %v2980 = vunpack.c.l.b16 %v2681
  %v2981 = vunpack.c.h.b16 %v2681
  %v2982 = vunpack.c.l.b16 %v2682
  %v2983 = vunpack.c.h.b16 %v2682
  %v2984 = vunpack.c.l.b16 %v2683
  %v2985 = vunpack.c.h.b16 %v2683
  %v2986 = vunpack.c.l.b16 %v2684
  %v2987 = vunpack.c.h.b16 %v2684
  %v2988 = vunpack.c.l.b16 %v2685
  %v2989 = vunpack.c.h.b16 %v2685
  %v2990 = vunpack.c.l.b16 %v2686
  %v2991 = vunpack.c.h.b16 %v2686
  %v2992 = vunpack.c.l.b16 %v2687
  %v2993 = vunpack.c.h.b16 %v2687
  %v2994 = vunpack.c.l.b16 %v2688
  %v2995 = vunpack.c.h.b16 %v2688
  %v2996 = vunpack.c.l.b16 %v2689
  %v2997 = vunpack.c.h.b16 %v2689
  %v2998 = vunpack.c.l.b16 %v2690
  %v2999 = vunpack.c.h.b16 %v2690
  %v3000 = vunpack.c.l.b16 %v2691
  %v3001 = vunpack.c.h.b16 %v2691
  %v3002 = vunpack.c.l.b16 %v2692
  %v3003 = vunpack.c.h.b16 %v2692
  %v3004 = vunpack.c.l.b16 %v2693
  %v3005 = vunpack.c.h.b16 %v2693
  %v3006 = vunpack.c.l.b16 %v2694
  %v3007 = vunpack.c.h.b16 %v2694
  %v3008 = vunpack.c.l.b16 %v2695
  %v3009 = vunpack.c.h.b16 %v2695
  %v3010 = vunpack.c.l.b16 %v2696
  %v3011 = vunpack.c.h.b16 %v2696
  %v3012 = vunpack.c.l.b16 %v2697
  %v3013 = vunpack.c.h.b16 %v2697
  %v3014 = vunpack.c.l.b16 %v2698
  %v3015 = vunpack.c.h.b16 %v2698
  %v3016 = vunpack.c.l.b16 %v2699
  %v3017 = vunpack.c.h.b16 %v2699
  %v3018 = vunpack.c.l.b16 %v2700
  %v3019 = vunpack.c.h.b16 %v2700
  %v3020 = vunpack.c.l.b16 %v2701
  %v3021 = vunpack.c.h.b16 %v2701
  %v3022 = vunpack.c.l.b16 %v2702
  %v3023 = vunpack.c.h.b16 %v2702
  %v3024 = vunpack.c.l.b16 %v2703
  %v3025 = vunpack.c.h.b16 %v2703
  %v3026 = vunpack.c.l.b16 %v2704
  %v3027 = vunpack.c.h.b16 %v2704
  %v3028 = vunpack.c.l.b16 %v2705
  %v3029 = vunpack.c.h.b16 %v2705
  %v3030 = vunpack.c.l.b16 %v2706
  %v3031 = vunpack.c.h.b16 %v2706
  %v3032 = vunpack.c.l.b16 %v2707
  %v3033 = vunpack.c.h.b16 %v2707
  %v3034 = vunpack.c.l.b16 %v2708
  %v3035 = vunpack.c.h.b16 %v2708
  %v3036 = vunpack.c.l.b16 %v2709
  %v3037 = vunpack.c.h.b16 %v2709
  %v3038 = vunpack.c.l.b16 %v2710
  %v3039 = vunpack.c.h.b16 %v2710
  %v3040 = vunpack.c.l.b16 %v2711
  %v3041 = vunpack.c.h.b16 %v2711
  %v3042 = vunpack.c.l.b16 %v2712
  %v3043 = vunpack.c.h.b16 %v2712
  %v3044 = vunpack.c.l.b16 %v2713
  %v3045 = vunpack.c.h.b16 %v2713
  %v3046 = vunpack.c.l.b16 %v2714
  %v3047 = vunpack.c.h.b16 %v2714
  %v3048 = vunpack.c.l.b16 %v2715
  %v3049 = vunpack.c.h.b16 %v2715
  %v3050 = vunpack.c.l.b16 %v2716
  %v3051 = vunpack.c.h.b16 %v2716
  %v3052 = vunpack.c.l.b16 %v2717
  %v3053 = vunpack.c.h.b16 %v2717
  %v3054 = vunpack.c.l.b16 %v2718
  %v3055 = vunpack.c.h.b16 %v2718
  %v3056 = vunpack.c.l.b16 %v2719
  %v3057 = vunpack.c.h.b16 %v2719
  %v3058 = vunpack.c.l.b16 %v2720
  %v3059 = vunpack.c.h.b16 %v2720
  %v3060 = vunpack.c.l.b16 %v2721
  %v3061 = vunpack.c.h.b16 %v2721
  %v3062 = vunpack.c.l.b16 %v2722
  %v3063 = vunpack.c.h.b16 %v2722
  %v3064 = vunpack.c.l.b16 %v2723
  %v3065 = vunpack.c.h.b16 %v2723
  %v3066 = vunpack.c.l.b16 %v2724
  %v3067 = vunpack.c.h.b16 %v2724
  %v3068 = vunpack.c.l.b16 %v2725
  %v3069 = vunpack.c.h.b16 %v2725
  %v3070 = vunpack.c.l.b16 %v2726
  %v3071 = vunpack.c.h.b16 %v2726
  %v3072 = vunpack.c.l.b16 %v2727
  %v3073 = vunpack.c.h.b16 %v2727
  %v3074 = vunpack.c.l.b16 %v2728
  %v3075 = vunpack.c.h.b16 %v2728
  %v3076 = vunpack.c.l.b16 %v2729
  %v3077 = vunpack.c.h.b16 %v2729
  %v3078 = vunpack.c.l.b16 %v2730
  %v3079 = vunpack.c.h.b16 %v2730
  %v3080 = vunpack.c.l.b16 %v2731
  %v3081 = vunpack.c.h.b16 %v2731
  %v3082 = vunpack.c.l.b16 %v2732
  %v3083 = vunpack.c.h.b16 %v2732
  %v3084 = vunpack.c.l.b16 %v2733
  %v3085 = vunpack.c.h.b16 %v2733
  %v3086 = vunpack.c.l.b16 %v2734
  %v3087 = vunpack.c.h.b16 %v2734
  %v3088 = vunpack.c.l.b16 %v2735
  %v3089 = vunpack.c.h.b16 %v2735
  %v3090 = vunpack.c.l.b16 %v2736
  %v3091 = vunpack.c.h.b16 %v2736
  %v3092 = vunpack.c.l.b16 %v2737
  %v3093 = vunpack.c.h.b16 %v2737
  %v3094 = vunpack.c.l.b16 %v2738
  %v3095 = vunpack.c.h.b16 %v2738
  %v3096 = vunpack.c.l.b16 %v2739
  %v3097 = vunpack.c.h.b16 %v2739
  %v3098 = vunpack.c.l.b16 %v2740
  %v3099 = vunpack.c.h.b16 %v2740
  %v3100 = vunpack.c.l.b16 %v2741
  %v3101 = vunpack.c.h.b16 %v2741
  %v3102 = vunpack.c.l.b16 %v2742
  %v3103 = vunpack.c.h.b16 %v2742
  %v3104 = vunpack.c.l.b16 %v2743
  %v3105 = vunpack.c.h.b16 %v2743
  %v3106 = vunpack.c.l.b16 %v2744
  %v3107 = vunpack.c.h.b16 %v2744
  %v3108 = vunpack.c.l.b16 %v2745
  %v3109 = vunpack.c.h.b16 %v2745
  %v3110 = vunpack.c.l.b16 %v2746
  %v3111 = vunpack.c.h.b16 %v2746
  %v3112 = vunpack.c.l.b16 %v2747
  %v3113 = vunpack.c.h.b16 %v2747
  %v3114 = vunpack.c.l.b16 %v2748
  %v3115 = vunpack.c.h.b16 %v2748
  %v3116 = vunpack.c.l.b16 %v2749
  %v3117 = vunpack.c.h.b16 %v2749
  %v3118 = vunpack.c.l.b16 %v2750
  %v3119 = vunpack.c.h.b16 %v2750
  %v3120 = vunpack.c.l.b16 %v2751
  %v3121 = vunpack.c.h.b16 %v2751
  %v3122 = vunpack.c.l.b16 %v2752
  %v3123 = vunpack.c.h.b16 %v2752
  %v3124 = vunpack.c.l.b16 %v2753
  %v3125 = vunpack.c.h.b16 %v2753
  %v3126 = vunpack.c.l.b16 %v2754
  %v3127 = vunpack.c.h.b16 %v2754
  %v3128 = vunpack.c.l.b16 %v2755
  %v3129 = vunpack.c.h.b16 %v2755
  %v3130 = vunpack.c.l.b16 %v2756
  %v3131 = vunpack.c.h.b16 %v2756
  %v3132 = vunpack.c.l.b16 %v2757
  %v3133 = vunpack.c.h.b16 %v2757
  %v3134 = vunpack.c.l.b16 %v2758
  %v3135 = vunpack.c.h.b16 %v2758
  %v3136 = vunpack.c.l.b16 %v2759
  %v3137 = vunpack.c.h.b16 %v2759
  %v3138 = vunpack.c.l.b16 %v2760
  %v3139 = vunpack.c.h.b16 %v2760
  %v3140 = vunpack.c.l.b16 %v2761
  %v3141 = vunpack.c.h.b16 %v2761
  %v3142 = vunpack.c.l.b16 %v2762
  %v3143 = vunpack.c.h.b16 %v2762
  %v3144 = vunpack.c.l.b16 %v2763
  %v3145 = vunpack.c.h.b16 %v2763
  %v3146 = vunpack.c.l.b16 %v2764
  %v3147 = vunpack.c.h.b16 %v2764
  %v3148 = vunpack.c.l.b16 %v2765
  %v3149 = vunpack.c.h.b16 %v2765
  %v3150 = vpack.c.b16 %v2894, %v2894
  %v3151 = vpack.c.b16 %v2895, %v2895
  %v3152 = vpack.c.b16 %v2896, %v2896
  %v3153 = vpack.c.b16 %v2897, %v2897
  %v3154 = vpack.c.b16 %v2898, %v2898
  %v3155 = vpack.c.b16 %v2899, %v2899
  %v3156 = vpack.c.b16 %v2900, %v2900
  %v3157 = vpack.c.b16 %v2901, %v2901
  %v3158 = vpack.c.b16 %v2902, %v2902
  %v3159 = vpack.c.b16 %v2903, %v2903
  %v3160 = vpack.c.b16 %v2904, %v2904
  %v3161 = vpack.c.b16 %v2905, %v2905
  %v3162 = vpack.c.b16 %v2906, %v2906
  %v3163 = vpack.c.b16 %v2907, %v2907
  %v3164 = vpack.c.b16 %v2908, %v2908
  %v3165 = vpack.c.b16 %v2909, %v2909
  %v3166 = vpack.c.b16 %v2910, %v2910
  %v3167 = vpack.c.b16 %v2911, %v2911
  %v3168 = vpack.c.b16 %v2912, %v2912
  %v3169 = vpack.c.b16 %v2913, %v2913
  %v3170 = vpack.c.b16 %v2914, %v2914
  %v3171 = vpack.c.b16 %v2915, %v2915
  %v3172 = vpack.c.b16 %v2916, %v2916
  %v3173 = vpack.c.b16 %v2917, %v2917
  %v3174 = vpack.c.b16 %v2918, %v2918
  %v3175 = vpack.c.b16 %v2919, %v2919
  %v3176 = vpack.c.b16 %v2920, %v2920
  %v3177 = vpack.c.b16 %v2921, %v2921
  %v3178 = vpack.c.b16 %v2922, %v2922
  %v3179 = vpack.c.b16 %v2923, %v2923
  %v3180 = vpack.c.b16 %v2924, %v2924
  %v3181 = vpack.c.b16 %v2925, %v2925
  %v3182 = vpack.c.b16 %v2926, %v2926
  %v3183 = vpack.c.b16 %v2927, %v2927
  %v3184 = vpack.c.b16 %v2928, %v2928
  %v3185 = vpack.c.b16 %v2929, %v2929
  %v3186 = vpack.c.b16 %v2930, %v2930
  %v3187 = vpack.c.b16 %v2931, %v2931
  %v3188 = vpack.c.b16 %v2932, %v2932
  %v3189 = vpack.c.b16 %v2933, %v2933
  %v3190 = vpack.c.b16 %v2934, %v2934
  %v3191 = vpack.c.b16 %v2935, %v2935
  %v3192 = vpack.c.b16 %v2936, %v2936
  %v3193 = vpack.c.b16 %v2937, %v2937
  %v3194 = vpack.c.b16 %v2938, %v2938
  %v3195 = vpack.c.b16 %v2939, %v2939
  %v3196 = vpack.c.b16 %v2940, %v2940
  %v3197 = vpack.c.b16 %v2941, %v2941
  %v3198 = vpack.c.b16 %v2942, %v2942
  %v3199 = vpack.c.b16 %v2943, %v2943
  %v3200 = vpack.c.b16 %v2944, %v2944
  %v3201 = vpack.c.b16 %v2945, %v2945
  %v3202 = vpack.c.b16 %v2946, %v2946
  %v3203 = vpack.c.b16 %v2947, %v2947
  %v3204 = vpack.c.b16 %v2948, %v2948
  %v3205 = vpack.c.b16 %v2949, %v2949
  %v3206 = vpack.c.b16 %v2950, %v2950
  %v3207 = vpack.c.b16 %v2951, %v2951
  %v3208 = vpack.c.b16 %v2952, %v2952
  %v3209 = vpack.c.b16 %v2953, %v2953
  %v3210 = vpack.c.b16 %v2954, %v2954
  %v3211 = vpack.c.b16 %v2955, %v2955
  %v3212 = vpack.c.b16 %v2956, %v2956
  %v3213 = vpack.c.b16 %v2957, %v2957
  %v3214 = vpack.c.b16 %v2958, %v2958
  %v3215 = vpack.c.b16 %v2959, %v2959
  %v3216 = vpack.c.b16 %v2960, %v2960
  %v3217 = vpack.c.b16 %v2961, %v2961
  %v3218 = vpack.c.b16 %v2962, %v2962
  %v3219 = vpack.c.b16 %v2963, %v2963
  %v3220 = vpack.c.b16 %v2964, %v2964
  %v3221 = vpack.c.b16 %v2965, %v2965
  %v3222 = vpack.c.b16 %v2966, %v2966
  %v3223 = vpack.c.b16 %v2967, %v2967
  %v3224 = vpack.c.b16 %v2968, %v2968
  %v3225 = vpack.c.b16 %v2969, %v2969
  %v3226 = vpack.c.b16 %v2970, %v2970
  %v3227 = vpack.c.b16 %v2971, %v2971
  %v3228 = vpack.c.b16 %v2972, %v2972
  %v3229 = vpack.c.b16 %v2973, %v2973
  %v3230 = vpack.c.b16 %v2974, %v2974
  %v3231 = vpack.c.b16 %v2975, %v2975
  %v3232 = vpack.c.b16 %v2976, %v2976
  %v3233 = vpack.c.b16 %v2977, %v2977
  %v3234 = vpack.c.b16 %v2978, %v2978
  %v3235 = vpack.c.b16 %v2979, %v2979
  %v3236 = vpack.c.b16 %v2980, %v2980
  %v3237 = vpack.c.b16 %v2981, %v2981
  %v3238 = vpack.c.b16 %v2982, %v2982
  %v3239 = vpack.c.b16 %v2983, %v2983
  %v3240 = vpack.c.b16 %v2984, %v2984
  %v3241 = vpack.c.b16 %v2985, %v2985
  %v3242 = vpack.c.b16 %v2986, %v2986
  %v3243 = vpack.c.b16 %v2987, %v2987
  %v3244 = vpack.c.b16 %v2988, %v2988
  %v3245 = vpack.c.b16 %v2989, %v2989
  %v3246 = vpack.c.b16 %v2990, %v2990
  %v3247 = vpack.c.b16 %v2991, %v2991
  %v3248 = vpack.c.b16 %v2992, %v2992
  %v3249 = vpack.c.b16 %v2993, %v2993
  %v3250 = vpack.c.b16 %v2994, %v2994
  %v3251 = vpack.c.b16 %v2995, %v2995
  %v3252 = vpack.c.b16 %v2996, %v2996
  %v3253 = vpack.c.b16 %v2997, %v2997
  %v3254 = vpack.c.b16 %v2998, %v2998
  %v3255 = vpack.c.b16 %v2999, %v2999
  %v3256 = vpack.c.b16 %v3000, %v3000
  %v3257 = vpack.c.b16 %v3001, %v3001
  %v3258 = vpack.c.b16 %v3002, %v3002
  %v3259 = vpack.c.b16 %v3003, %v3003
  %v3260 = vpack.c.b16 %v3004, %v3004
  %v3261 = vpack.c.b16 %v3005, %v3005
  %v3262 = vpack.c.b16 %v3006, %v3006
  %v3263 = vpack.c.b16 %v3007, %v3007
  %v3264 = vpack.c.b16 %v3008, %v3008
  %v3265 = vpack.c.b16 %v3009, %v3009
  %v3266 = vpack.c.b16 %v3010, %v3010
  %v3267 = vpack.c.b16 %v3011, %v3011
  %v3268 = vpack.c.b16 %v3012, %v3012
  %v3269 = vpack.c.b16 %v3013, %v3013
  %v3270 = vpack.c.b16 %v3014, %v3014
  %v3271 = vpack.c.b16 %v3015, %v3015
  %v3272 = vpack.c.b16 %v3016, %v3016
  %v3273 = vpack.c.b16 %v3017, %v3017
  %v3274 = vpack.c.b16 %v3018, %v3018
  %v3275 = vpack.c.b16 %v3019, %v3019
  %v3276 = vpack.c.b16 %v3020, %v3020
  %v3277 = vpack.c.b16 %v3021, %v3021
  %v3278 = vpack.c.b16 %v3022, %v3022
  %v3279 = vpack.c.b16 %v3023, %v3023
  %v3280 = vpack.c.b16 %v3024, %v3024
  %v3281 = vpack.c.b16 %v3025, %v3025
  %v3282 = vpack.c.b16 %v3026, %v3026
  %v3283 = vpack.c.b16 %v3027, %v3027
  %v3284 = vpack.c.b16 %v3028, %v3028
  %v3285 = vpack.c.b16 %v3029, %v3029
  %v3286 = vpack.c.b16 %v3030, %v3030
  %v3287 = vpack.c.b16 %v3031, %v3031
  %v3288 = vpack.c.b16 %v3032, %v3032
  %v3289 = vpack.c.b16 %v3033, %v3033
  %v3290 = vpack.c.b16 %v3034, %v3034
  %v3291 = vpack.c.b16 %v3035, %v3035
  %v3292 = vpack.c.b16 %v3036, %v3036
  %v3293 = vpack.c.b16 %v3037, %v3037
  %v3294 = vpack.c.b16 %v3038, %v3038
  %v3295 = vpack.c.b16 %v3039, %v3039
  %v3296 = vpack.c.b16 %v3040, %v3040
  %v3297 = vpack.c.b16 %v3041, %v3041
  %v3298 = vpack.c.b16 %v3042, %v3042
  %v3299 = vpack.c.b16 %v3043, %v3043
  %v3300 = vpack.c.b16 %v3044, %v3044
  %v3301 = vpack.c.b16 %v3045, %v3045
  %v3302 = vpack.c.b16 %v3046, %v3046
  %v3303 = vpack.c.b16 %v3047, %v3047
  %v3304 = vpack.c.b16 %v3048, %v3048
  %v3305 = vpack.c.b16 %v3049, %v3049
  %v3306 = vpack.c.b16 %v3050, %v3050
  %v3307 = vpack.c.b16 %v3051, %v3051
  %v3308 = vpack.c.b16 %v3052, %v3052
  %v3309 = vpack.c.b16 %v3053, %v3053
  %v3310 = vpack.c.b16 %v3054, %v3054
  %v3311 = vpack.c.b16 %v3055, %v3055
  %v3312 = vpack.c.b16 %v3056, %v3056
  %v3313 = vpack.c.b16 %v3057, %v3057
  %v3314 = vpack.c.b16 %v3058, %v3058
  %v3315 = vpack.c.b16 %v3059, %v3059
  %v3316 = vpack.c.b16 %v3060, %v3060
  %v3317 = vpack.c.b16 %v3061, %v3061
  %v3318 = vpack.c.b16 %v3062, %v3062
  %v3319 = vpack.c.b16 %v3063, %v3063
  %v3320 = vpack.c.b16 %v3064, %v3064
  %v3321 = vpack.c.b16 %v3065, %v3065
  %v3322 = vpack.c.b16 %v3066, %v3066
  %v3323 = vpack.c.b16 %v3067, %v3067
  %v3324 = vpack.c.b16 %v3068, %v3068
  %v3325 = vpack.c.b16 %v3069, %v3069
  %v3326 = vpack.c.b16 %v3070, %v3070
  %v3327 = vpack.c.b16 %v3071, %v3071
  %v3328 = vpack.c.b16 %v3072, %v3072
  %v3329 = vpack.c.b16 %v3073, %v3073
  %v3330 = vpack.c.b16 %v3074, %v3074
  %v3331 = vpack.c.b16 %v3075, %v3075
  %v3332 = vpack.c.b16 %v3076, %v3076
  %v3333 = vpack.c.b16 %v3077, %v3077
  %v3334 = vpack.c.b16 %v3078, %v3078
  %v3335 = vpack.c.b16 %v3079, %v3079
  %v3336 = vpack.c.b16 %v3080, %v3080
  %v3337 = vpack.c.b16 %v3081, %v3081
  %v3338 = vpack.c.b16 %v3082, %v3082
  %v3339 = vpack.c.b16 %v3083, %v3083
  %v3340 = vpack.c.b16 %v3084, %v3084
  %v3341 = vpack.c.b16 %v3085, %v3085
  %v3342 = vpack.c.b16 %v3086, %v3086
  %v3343 = vpack.c.b16 %v3087, %v3087
  %v3344 = vpack.c.b16 %v3088, %v3088
  %v3345 = vpack.c.b16 %v3089, %v3089
  %v3346 = vpack.c.b16 %v3090, %v3090
  %v3347 = vpack.c.b16 %v3091, %v3091
  %v3348 = vpack.c.b16 %v3092, %v3092
  %v3349 = vpack.c.b16 %v3093, %v3093
  %v3350 = vpack.c.b16 %v3094, %v3094
  %v3351 = vpack.c.b16 %v3095, %v3095
  %v3352 = vpack.c.b16 %v3096, %v3096
  %v3353 = vpack.c.b16 %v3097, %v3097
  %v3354 = vpack.c.b16 %v3098, %v3098
  %v3355 = vpack.c.b16 %v3099, %v3099
  %v3356 = vpack.c.b16 %v3100, %v3100
  %v3357 = vpack.c.b16 %v3101, %v3101
  %v3358 = vpack.c.b16 %v3102, %v3102
  %v3359 = vpack.c.b16 %v3103, %v3103
  %v3360 = vpack.c.b16 %v3104, %v3104
  %v3361 = vpack.c.b16 %v3105, %v3105
  %v3362 = vpack.c.b16 %v3106, %v3106
  %v3363 = vpack.c.b16 %v3107, %v3107
  %v3364 = vpack.c.b16 %v3108, %v3108
  %v3365 = vpack.c.b16 %v3109, %v3109
  %v3366 = vpack.c.b16 %v3110, %v3110
  %v3367 = vpack.c.b16 %v3111, %v3111
  %v3368 = vpack.c.b16 %v3112, %v3112
  %v3369 = vpack.c.b16 %v3113, %v3113
  %v3370 = vpack.c.b16 %v3114, %v3114
  %v3371 = vpack.c.b16 %v3115, %v3115
  %v3372 = vpack.c.b16 %v3116, %v3116
  %v3373 = vpack.c.b16 %v3117, %v3117
  %v3374 = vpack.c.b16 %v3118, %v3118
  %v3375 = vpack.c.b16 %v3119, %v3119
  %v3376 = vpack.c.b16 %v3120, %v3120
  %v3377 = vpack.c.b16 %v3121, %v3121
  %v3378 = vpack.c.b16 %v3122, %v3122
  %v3379 = vpack.c.b16 %v3123, %v3123
  %v3380 = vpack.c.b16 %v3124, %v3124
  %v3381 = vpack.c.b16 %v3125, %v3125
  %v3382 = vpack.c.b16 %v3126, %v3126
  %v3383 = vpack.c.b16 %v3127, %v3127
  %v3384 = vpack.c.b16 %v3128, %v3128
  %v3385 = vpack.c.b16 %v3129, %v3129
  %v3386 = vpack.c.b16 %v3130, %v3130
  %v3387 = vpack.c.b16 %v3131, %v3131
  %v3388 = vpack.c.b16 %v3132, %v3132
  %v3389 = vpack.c.b16 %v3133, %v3133
  %v3390 = vpack.c.b16 %v3134, %v3134
  %v3391 = vpack.c.b16 %v3135, %v3135
  %v3392 = vpack.c.b16 %v3136, %v3136
  %v3393 = vpack.c.b16 %v3137, %v3137
  %v3394 = vpack.c.b16 %v3138, %v3138
  %v3395 = vpack.c.b16 %v3139, %v3139
  %v3396 = vpack.c.b16 %v3140, %v3140
  %v3397 = vpack.c.b16 %v3141, %v3141
  %v3398 = vpack.c.b16 %v3142, %v3142
  %v3399 = vpack.c.b16 %v3143, %v3143
  %v3400 = vpack.c.b16 %v3144, %v3144
  %v3401 = vpack.c.b16 %v3145, %v3145
  %v3402 = vpack.c.b16 %v3146, %v3146
  %v3403 = vpack.c.b16 %v3147, %v3147
  %v3404 = vpack.c.b16 %v3148, %v3148
  %v3405 = vpack.c.b16 %v3149, %v3149
  %vm3662 = vcmask 125952
  %3663 = vst.msk [vmem:[%s3] sm:$0xf] %vm3662, %v3150
  %3664 = vst.msk [vmem:[%s3 + $0x4] sm:$0xf] %vm3662, %v3151
  %3665 = vst.msk [vmem:[%s3 + $0x8] sm:$0xf] %vm3662, %v3152
  %3666 = vst.msk [vmem:[%s3 + $0xc] sm:$0xf] %vm3662, %v3153
  %3667 = vst.msk [vmem:[%s3 + $0x10] sm:$0xf] %vm3662, %v3154
  %3668 = vst.msk [vmem:[%s3 + $0x14] sm:$0xf] %vm3662, %v3155
  %3669 = vst.msk [vmem:[%s3 + $0x18] sm:$0xf] %vm3662, %v3156
  %3670 = vst.msk [vmem:[%s3 + $0x1c] sm:$0xf] %vm3662, %v3157
  %3671 = vst.msk [vmem:[%s3 + $0x20] sm:$0xf] %vm3662, %v3158
  %3672 = vst.msk [vmem:[%s3 + $0x24] sm:$0xf] %vm3662, %v3159
  %3673 = vst.msk [vmem:[%s3 + $0x28] sm:$0xf] %vm3662, %v3160
  %3674 = vst.msk [vmem:[%s3 + $0x2c] sm:$0xf] %vm3662, %v3161
  %3675 = vst.msk [vmem:[%s3 + $0x30] sm:$0xf] %vm3662, %v3162
  %3676 = vst.msk [vmem:[%s3 + $0x34] sm:$0xf] %vm3662, %v3163
  %3677 = vst.msk [vmem:[%s3 + $0x38] sm:$0xf] %vm3662, %v3164
  %3678 = vst.msk [vmem:[%s3 + $0x3c] sm:$0xf] %vm3662, %v3165
  %3679 = vst.msk [vmem:[%s3 + $0x40] sm:$0xf] %vm3662, %v3166
  %3680 = vst.msk [vmem:[%s3 + $0x44] sm:$0xf] %vm3662, %v3167
  %3681 = vst.msk [vmem:[%s3 + $0x48] sm:$0xf] %vm3662, %v3168
  %3682 = vst.msk [vmem:[%s3 + $0x4c] sm:$0xf] %vm3662, %v3169
  %3683 = vst.msk [vmem:[%s3 + $0x50] sm:$0xf] %vm3662, %v3170
  %3684 = vst.msk [vmem:[%s3 + $0x54] sm:$0xf] %vm3662, %v3171
  %3685 = vst.msk [vmem:[%s3 + $0x58] sm:$0xf] %vm3662, %v3172
  %3686 = vst.msk [vmem:[%s3 + $0x5c] sm:$0xf] %vm3662, %v3173
  %3687 = vst.msk [vmem:[%s3 + $0x60] sm:$0xf] %vm3662, %v3174
  %3688 = vst.msk [vmem:[%s3 + $0x64] sm:$0xf] %vm3662, %v3175
  %3689 = vst.msk [vmem:[%s3 + $0x68] sm:$0xf] %vm3662, %v3176
  %3690 = vst.msk [vmem:[%s3 + $0x6c] sm:$0xf] %vm3662, %v3177
  %3691 = vst.msk [vmem:[%s3 + $0x70] sm:$0xf] %vm3662, %v3178
  %3692 = vst.msk [vmem:[%s3 + $0x74] sm:$0xf] %vm3662, %v3179
  %3693 = vst.msk [vmem:[%s3 + $0x78] sm:$0xf] %vm3662, %v3180
  %3694 = vst.msk [vmem:[%s3 + $0x7c] sm:$0xf] %vm3662, %v3181
  %3695 = vst.msk [vmem:[%s3 + $0x80] sm:$0xf] %vm3662, %v3182
  %3696 = vst.msk [vmem:[%s3 + $0x84] sm:$0xf] %vm3662, %v3183
  %3697 = vst.msk [vmem:[%s3 + $0x88] sm:$0xf] %vm3662, %v3184
  %3698 = vst.msk [vmem:[%s3 + $0x8c] sm:$0xf] %vm3662, %v3185
  %3699 = vst.msk [vmem:[%s3 + $0x90] sm:$0xf] %vm3662, %v3186
  %3700 = vst.msk [vmem:[%s3 + $0x94] sm:$0xf] %vm3662, %v3187
  %3701 = vst.msk [vmem:[%s3 + $0x98] sm:$0xf] %vm3662, %v3188
  %3702 = vst.msk [vmem:[%s3 + $0x9c] sm:$0xf] %vm3662, %v3189
  %3703 = vst.msk [vmem:[%s3 + $0xa0] sm:$0xf] %vm3662, %v3190
  %3704 = vst.msk [vmem:[%s3 + $0xa4] sm:$0xf] %vm3662, %v3191
  %3705 = vst.msk [vmem:[%s3 + $0xa8] sm:$0xf] %vm3662, %v3192
  %3706 = vst.msk [vmem:[%s3 + $0xac] sm:$0xf] %vm3662, %v3193
  %3707 = vst.msk [vmem:[%s3 + $0xb0] sm:$0xf] %vm3662, %v3194
  %3708 = vst.msk [vmem:[%s3 + $0xb4] sm:$0xf] %vm3662, %v3195
  %3709 = vst.msk [vmem:[%s3 + $0xb8] sm:$0xf] %vm3662, %v3196
  %3710 = vst.msk [vmem:[%s3 + $0xbc] sm:$0xf] %vm3662, %v3197
  %3711 = vst.msk [vmem:[%s3 + $0xc0] sm:$0xf] %vm3662, %v3198
  %3712 = vst.msk [vmem:[%s3 + $0xc4] sm:$0xf] %vm3662, %v3199
  %3713 = vst.msk [vmem:[%s3 + $0xc8] sm:$0xf] %vm3662, %v3200
  %3714 = vst.msk [vmem:[%s3 + $0xcc] sm:$0xf] %vm3662, %v3201
  %3715 = vst.msk [vmem:[%s3 + $0xd0] sm:$0xf] %vm3662, %v3202
  %3716 = vst.msk [vmem:[%s3 + $0xd4] sm:$0xf] %vm3662, %v3203
  %3717 = vst.msk [vmem:[%s3 + $0xd8] sm:$0xf] %vm3662, %v3204
  %3718 = vst.msk [vmem:[%s3 + $0xdc] sm:$0xf] %vm3662, %v3205
  %3719 = vst.msk [vmem:[%s3 + $0xe0] sm:$0xf] %vm3662, %v3206
  %3720 = vst.msk [vmem:[%s3 + $0xe4] sm:$0xf] %vm3662, %v3207
  %3721 = vst.msk [vmem:[%s3 + $0xe8] sm:$0xf] %vm3662, %v3208
  %3722 = vst.msk [vmem:[%s3 + $0xec] sm:$0xf] %vm3662, %v3209
  %3723 = vst.msk [vmem:[%s3 + $0xf0] sm:$0xf] %vm3662, %v3210
  %3724 = vst.msk [vmem:[%s3 + $0xf4] sm:$0xf] %vm3662, %v3211
  %3725 = vst.msk [vmem:[%s3 + $0xf8] sm:$0xf] %vm3662, %v3212
  %3726 = vst.msk [vmem:[%s3 + $0xfc] sm:$0xf] %vm3662, %v3213
  %3727 = vst.msk [vmem:[%s3 + $0x100] sm:$0xf] %vm3662, %v3214
  %3728 = vst.msk [vmem:[%s3 + $0x104] sm:$0xf] %vm3662, %v3215
  %3729 = vst.msk [vmem:[%s3 + $0x108] sm:$0xf] %vm3662, %v3216
  %3730 = vst.msk [vmem:[%s3 + $0x10c] sm:$0xf] %vm3662, %v3217
  %3731 = vst.msk [vmem:[%s3 + $0x110] sm:$0xf] %vm3662, %v3218
  %3732 = vst.msk [vmem:[%s3 + $0x114] sm:$0xf] %vm3662, %v3219
  %3733 = vst.msk [vmem:[%s3 + $0x118] sm:$0xf] %vm3662, %v3220
  %3734 = vst.msk [vmem:[%s3 + $0x11c] sm:$0xf] %vm3662, %v3221
  %3735 = vst.msk [vmem:[%s3 + $0x120] sm:$0xf] %vm3662, %v3222
  %3736 = vst.msk [vmem:[%s3 + $0x124] sm:$0xf] %vm3662, %v3223
  %3737 = vst.msk [vmem:[%s3 + $0x128] sm:$0xf] %vm3662, %v3224
  %3738 = vst.msk [vmem:[%s3 + $0x12c] sm:$0xf] %vm3662, %v3225
  %3739 = vst.msk [vmem:[%s3 + $0x130] sm:$0xf] %vm3662, %v3226
  %3740 = vst.msk [vmem:[%s3 + $0x134] sm:$0xf] %vm3662, %v3227
  %3741 = vst.msk [vmem:[%s3 + $0x138] sm:$0xf] %vm3662, %v3228
  %3742 = vst.msk [vmem:[%s3 + $0x13c] sm:$0xf] %vm3662, %v3229
  %3743 = vst.msk [vmem:[%s3 + $0x140] sm:$0xf] %vm3662, %v3230
  %3744 = vst.msk [vmem:[%s3 + $0x144] sm:$0xf] %vm3662, %v3231
  %3745 = vst.msk [vmem:[%s3 + $0x148] sm:$0xf] %vm3662, %v3232
  %3746 = vst.msk [vmem:[%s3 + $0x14c] sm:$0xf] %vm3662, %v3233
  %3747 = vst.msk [vmem:[%s3 + $0x150] sm:$0xf] %vm3662, %v3234
  %3748 = vst.msk [vmem:[%s3 + $0x154] sm:$0xf] %vm3662, %v3235
  %3749 = vst.msk [vmem:[%s3 + $0x158] sm:$0xf] %vm3662, %v3236
  %3750 = vst.msk [vmem:[%s3 + $0x15c] sm:$0xf] %vm3662, %v3237
  %3751 = vst.msk [vmem:[%s3 + $0x160] sm:$0xf] %vm3662, %v3238
  %3752 = vst.msk [vmem:[%s3 + $0x164] sm:$0xf] %vm3662, %v3239
  %3753 = vst.msk [vmem:[%s3 + $0x168] sm:$0xf] %vm3662, %v3240
  %3754 = vst.msk [vmem:[%s3 + $0x16c] sm:$0xf] %vm3662, %v3241
  %3755 = vst.msk [vmem:[%s3 + $0x170] sm:$0xf] %vm3662, %v3242
  %3756 = vst.msk [vmem:[%s3 + $0x174] sm:$0xf] %vm3662, %v3243
  %3757 = vst.msk [vmem:[%s3 + $0x178] sm:$0xf] %vm3662, %v3244
  %3758 = vst.msk [vmem:[%s3 + $0x17c] sm:$0xf] %vm3662, %v3245
  %3759 = vst.msk [vmem:[%s3 + $0x180] sm:$0xf] %vm3662, %v3246
  %3760 = vst.msk [vmem:[%s3 + $0x184] sm:$0xf] %vm3662, %v3247
  %3761 = vst.msk [vmem:[%s3 + $0x188] sm:$0xf] %vm3662, %v3248
  %3762 = vst.msk [vmem:[%s3 + $0x18c] sm:$0xf] %vm3662, %v3249
  %3763 = vst.msk [vmem:[%s3 + $0x190] sm:$0xf] %vm3662, %v3250
  %3764 = vst.msk [vmem:[%s3 + $0x194] sm:$0xf] %vm3662, %v3251
  %3765 = vst.msk [vmem:[%s3 + $0x198] sm:$0xf] %vm3662, %v3252
  %3766 = vst.msk [vmem:[%s3 + $0x19c] sm:$0xf] %vm3662, %v3253
  %3767 = vst.msk [vmem:[%s3 + $0x1a0] sm:$0xf] %vm3662, %v3254
  %3768 = vst.msk [vmem:[%s3 + $0x1a4] sm:$0xf] %vm3662, %v3255
  %3769 = vst.msk [vmem:[%s3 + $0x1a8] sm:$0xf] %vm3662, %v3256
  %3770 = vst.msk [vmem:[%s3 + $0x1ac] sm:$0xf] %vm3662, %v3257
  %3771 = vst.msk [vmem:[%s3 + $0x1b0] sm:$0xf] %vm3662, %v3258
  %3772 = vst.msk [vmem:[%s3 + $0x1b4] sm:$0xf] %vm3662, %v3259
  %3773 = vst.msk [vmem:[%s3 + $0x1b8] sm:$0xf] %vm3662, %v3260
  %3774 = vst.msk [vmem:[%s3 + $0x1bc] sm:$0xf] %vm3662, %v3261
  %3775 = vst.msk [vmem:[%s3 + $0x1c0] sm:$0xf] %vm3662, %v3262
  %3776 = vst.msk [vmem:[%s3 + $0x1c4] sm:$0xf] %vm3662, %v3263
  %3777 = vst.msk [vmem:[%s3 + $0x1c8] sm:$0xf] %vm3662, %v3264
  %3778 = vst.msk [vmem:[%s3 + $0x1cc] sm:$0xf] %vm3662, %v3265
  %3779 = vst.msk [vmem:[%s3 + $0x1d0] sm:$0xf] %vm3662, %v3266
  %3780 = vst.msk [vmem:[%s3 + $0x1d4] sm:$0xf] %vm3662, %v3267
  %3781 = vst.msk [vmem:[%s3 + $0x1d8] sm:$0xf] %vm3662, %v3268
  %3782 = vst.msk [vmem:[%s3 + $0x1dc] sm:$0xf] %vm3662, %v3269
  %3783 = vst.msk [vmem:[%s3 + $0x1e0] sm:$0xf] %vm3662, %v3270
  %3784 = vst.msk [vmem:[%s3 + $0x1e4] sm:$0xf] %vm3662, %v3271
  %3785 = vst.msk [vmem:[%s3 + $0x1e8] sm:$0xf] %vm3662, %v3272
  %3786 = vst.msk [vmem:[%s3 + $0x1ec] sm:$0xf] %vm3662, %v3273
  %3787 = vst.msk [vmem:[%s3 + $0x1f0] sm:$0xf] %vm3662, %v3274
  %3788 = vst.msk [vmem:[%s3 + $0x1f4] sm:$0xf] %vm3662, %v3275
  %3789 = vst.msk [vmem:[%s3 + $0x1f8] sm:$0xf] %vm3662, %v3276
  %3790 = vst.msk [vmem:[%s3 + $0x1fc] sm:$0xf] %vm3662, %v3277
  %3791 = vst.msk [vmem:[%s3 + $0x200] sm:$0xf] %vm3662, %v3278
  %3792 = vst.msk [vmem:[%s3 + $0x204] sm:$0xf] %vm3662, %v3279
  %3793 = vst.msk [vmem:[%s3 + $0x208] sm:$0xf] %vm3662, %v3280
  %3794 = vst.msk [vmem:[%s3 + $0x20c] sm:$0xf] %vm3662, %v3281
  %3795 = vst.msk [vmem:[%s3 + $0x210] sm:$0xf] %vm3662, %v3282
  %3796 = vst.msk [vmem:[%s3 + $0x214] sm:$0xf] %vm3662, %v3283
  %3797 = vst.msk [vmem:[%s3 + $0x218] sm:$0xf] %vm3662, %v3284
  %3798 = vst.msk [vmem:[%s3 + $0x21c] sm:$0xf] %vm3662, %v3285
  %3799 = vst.msk [vmem:[%s3 + $0x220] sm:$0xf] %vm3662, %v3286
  %3800 = vst.msk [vmem:[%s3 + $0x224] sm:$0xf] %vm3662, %v3287
  %3801 = vst.msk [vmem:[%s3 + $0x228] sm:$0xf] %vm3662, %v3288
  %3802 = vst.msk [vmem:[%s3 + $0x22c] sm:$0xf] %vm3662, %v3289
  %3803 = vst.msk [vmem:[%s3 + $0x230] sm:$0xf] %vm3662, %v3290
  %3804 = vst.msk [vmem:[%s3 + $0x234] sm:$0xf] %vm3662, %v3291
  %3805 = vst.msk [vmem:[%s3 + $0x238] sm:$0xf] %vm3662, %v3292
  %3806 = vst.msk [vmem:[%s3 + $0x23c] sm:$0xf] %vm3662, %v3293
  %3807 = vst.msk [vmem:[%s3 + $0x240] sm:$0xf] %vm3662, %v3294
  %3808 = vst.msk [vmem:[%s3 + $0x244] sm:$0xf] %vm3662, %v3295
  %3809 = vst.msk [vmem:[%s3 + $0x248] sm:$0xf] %vm3662, %v3296
  %3810 = vst.msk [vmem:[%s3 + $0x24c] sm:$0xf] %vm3662, %v3297
  %3811 = vst.msk [vmem:[%s3 + $0x250] sm:$0xf] %vm3662, %v3298
  %3812 = vst.msk [vmem:[%s3 + $0x254] sm:$0xf] %vm3662, %v3299
  %3813 = vst.msk [vmem:[%s3 + $0x258] sm:$0xf] %vm3662, %v3300
  %3814 = vst.msk [vmem:[%s3 + $0x25c] sm:$0xf] %vm3662, %v3301
  %3815 = vst.msk [vmem:[%s3 + $0x260] sm:$0xf] %vm3662, %v3302
  %3816 = vst.msk [vmem:[%s3 + $0x264] sm:$0xf] %vm3662, %v3303
  %3817 = vst.msk [vmem:[%s3 + $0x268] sm:$0xf] %vm3662, %v3304
  %3818 = vst.msk [vmem:[%s3 + $0x26c] sm:$0xf] %vm3662, %v3305
  %3819 = vst.msk [vmem:[%s3 + $0x270] sm:$0xf] %vm3662, %v3306
  %3820 = vst.msk [vmem:[%s3 + $0x274] sm:$0xf] %vm3662, %v3307
  %3821 = vst.msk [vmem:[%s3 + $0x278] sm:$0xf] %vm3662, %v3308
  %3822 = vst.msk [vmem:[%s3 + $0x27c] sm:$0xf] %vm3662, %v3309
  %3823 = vst.msk [vmem:[%s3 + $0x280] sm:$0xf] %vm3662, %v3310
  %3824 = vst.msk [vmem:[%s3 + $0x284] sm:$0xf] %vm3662, %v3311
  %3825 = vst.msk [vmem:[%s3 + $0x288] sm:$0xf] %vm3662, %v3312
  %3826 = vst.msk [vmem:[%s3 + $0x28c] sm:$0xf] %vm3662, %v3313
  %3827 = vst.msk [vmem:[%s3 + $0x290] sm:$0xf] %vm3662, %v3314
  %3828 = vst.msk [vmem:[%s3 + $0x294] sm:$0xf] %vm3662, %v3315
  %3829 = vst.msk [vmem:[%s3 + $0x298] sm:$0xf] %vm3662, %v3316
  %3830 = vst.msk [vmem:[%s3 + $0x29c] sm:$0xf] %vm3662, %v3317
  %3831 = vst.msk [vmem:[%s3 + $0x2a0] sm:$0xf] %vm3662, %v3318
  %3832 = vst.msk [vmem:[%s3 + $0x2a4] sm:$0xf] %vm3662, %v3319
  %3833 = vst.msk [vmem:[%s3 + $0x2a8] sm:$0xf] %vm3662, %v3320
  %3834 = vst.msk [vmem:[%s3 + $0x2ac] sm:$0xf] %vm3662, %v3321
  %3835 = vst.msk [vmem:[%s3 + $0x2b0] sm:$0xf] %vm3662, %v3322
  %3836 = vst.msk [vmem:[%s3 + $0x2b4] sm:$0xf] %vm3662, %v3323
  %3837 = vst.msk [vmem:[%s3 + $0x2b8] sm:$0xf] %vm3662, %v3324
  %3838 = vst.msk [vmem:[%s3 + $0x2bc] sm:$0xf] %vm3662, %v3325
  %3839 = vst.msk [vmem:[%s3 + $0x2c0] sm:$0xf] %vm3662, %v3326
  %3840 = vst.msk [vmem:[%s3 + $0x2c4] sm:$0xf] %vm3662, %v3327
  %3841 = vst.msk [vmem:[%s3 + $0x2c8] sm:$0xf] %vm3662, %v3328
  %3842 = vst.msk [vmem:[%s3 + $0x2cc] sm:$0xf] %vm3662, %v3329
  %3843 = vst.msk [vmem:[%s3 + $0x2d0] sm:$0xf] %vm3662, %v3330
  %3844 = vst.msk [vmem:[%s3 + $0x2d4] sm:$0xf] %vm3662, %v3331
  %3845 = vst.msk [vmem:[%s3 + $0x2d8] sm:$0xf] %vm3662, %v3332
  %3846 = vst.msk [vmem:[%s3 + $0x2dc] sm:$0xf] %vm3662, %v3333
  %3847 = vst.msk [vmem:[%s3 + $0x2e0] sm:$0xf] %vm3662, %v3334
  %3848 = vst.msk [vmem:[%s3 + $0x2e4] sm:$0xf] %vm3662, %v3335
  %3849 = vst.msk [vmem:[%s3 + $0x2e8] sm:$0xf] %vm3662, %v3336
  %3850 = vst.msk [vmem:[%s3 + $0x2ec] sm:$0xf] %vm3662, %v3337
  %3851 = vst.msk [vmem:[%s3 + $0x2f0] sm:$0xf] %vm3662, %v3338
  %3852 = vst.msk [vmem:[%s3 + $0x2f4] sm:$0xf] %vm3662, %v3339
  %3853 = vst.msk [vmem:[%s3 + $0x2f8] sm:$0xf] %vm3662, %v3340
  %3854 = vst.msk [vmem:[%s3 + $0x2fc] sm:$0xf] %vm3662, %v3341
  %3855 = vst.msk [vmem:[%s3 + $0x300] sm:$0xf] %vm3662, %v3342
  %3856 = vst.msk [vmem:[%s3 + $0x304] sm:$0xf] %vm3662, %v3343
  %3857 = vst.msk [vmem:[%s3 + $0x308] sm:$0xf] %vm3662, %v3344
  %3858 = vst.msk [vmem:[%s3 + $0x30c] sm:$0xf] %vm3662, %v3345
  %3859 = vst.msk [vmem:[%s3 + $0x310] sm:$0xf] %vm3662, %v3346
  %3860 = vst.msk [vmem:[%s3 + $0x314] sm:$0xf] %vm3662, %v3347
  %3861 = vst.msk [vmem:[%s3 + $0x318] sm:$0xf] %vm3662, %v3348
  %3862 = vst.msk [vmem:[%s3 + $0x31c] sm:$0xf] %vm3662, %v3349
  %3863 = vst.msk [vmem:[%s3 + $0x320] sm:$0xf] %vm3662, %v3350
  %3864 = vst.msk [vmem:[%s3 + $0x324] sm:$0xf] %vm3662, %v3351
  %3865 = vst.msk [vmem:[%s3 + $0x328] sm:$0xf] %vm3662, %v3352
  %3866 = vst.msk [vmem:[%s3 + $0x32c] sm:$0xf] %vm3662, %v3353
  %3867 = vst.msk [vmem:[%s3 + $0x330] sm:$0xf] %vm3662, %v3354
  %3868 = vst.msk [vmem:[%s3 + $0x334] sm:$0xf] %vm3662, %v3355
  %3869 = vst.msk [vmem:[%s3 + $0x338] sm:$0xf] %vm3662, %v3356
  %3870 = vst.msk [vmem:[%s3 + $0x33c] sm:$0xf] %vm3662, %v3357
  %3871 = vst.msk [vmem:[%s3 + $0x340] sm:$0xf] %vm3662, %v3358
  %3872 = vst.msk [vmem:[%s3 + $0x344] sm:$0xf] %vm3662, %v3359
  %3873 = vst.msk [vmem:[%s3 + $0x348] sm:$0xf] %vm3662, %v3360
  %3874 = vst.msk [vmem:[%s3 + $0x34c] sm:$0xf] %vm3662, %v3361
  %3875 = vst.msk [vmem:[%s3 + $0x350] sm:$0xf] %vm3662, %v3362
  %3876 = vst.msk [vmem:[%s3 + $0x354] sm:$0xf] %vm3662, %v3363
  %3877 = vst.msk [vmem:[%s3 + $0x358] sm:$0xf] %vm3662, %v3364
  %3878 = vst.msk [vmem:[%s3 + $0x35c] sm:$0xf] %vm3662, %v3365
  %3879 = vst.msk [vmem:[%s3 + $0x360] sm:$0xf] %vm3662, %v3366
  %3880 = vst.msk [vmem:[%s3 + $0x364] sm:$0xf] %vm3662, %v3367
  %3881 = vst.msk [vmem:[%s3 + $0x368] sm:$0xf] %vm3662, %v3368
  %3882 = vst.msk [vmem:[%s3 + $0x36c] sm:$0xf] %vm3662, %v3369
  %3883 = vst.msk [vmem:[%s3 + $0x370] sm:$0xf] %vm3662, %v3370
  %3884 = vst.msk [vmem:[%s3 + $0x374] sm:$0xf] %vm3662, %v3371
  %3885 = vst.msk [vmem:[%s3 + $0x378] sm:$0xf] %vm3662, %v3372
  %3886 = vst.msk [vmem:[%s3 + $0x37c] sm:$0xf] %vm3662, %v3373
  %3887 = vst.msk [vmem:[%s3 + $0x380] sm:$0xf] %vm3662, %v3374
  %3888 = vst.msk [vmem:[%s3 + $0x384] sm:$0xf] %vm3662, %v3375
  %3889 = vst.msk [vmem:[%s3 + $0x388] sm:$0xf] %vm3662, %v3376
  %3890 = vst.msk [vmem:[%s3 + $0x38c] sm:$0xf] %vm3662, %v3377
  %3891 = vst.msk [vmem:[%s3 + $0x390] sm:$0xf] %vm3662, %v3378
  %3892 = vst.msk [vmem:[%s3 + $0x394] sm:$0xf] %vm3662, %v3379
  %3893 = vst.msk [vmem:[%s3 + $0x398] sm:$0xf] %vm3662, %v3380
  %3894 = vst.msk [vmem:[%s3 + $0x39c] sm:$0xf] %vm3662, %v3381
  %3895 = vst.msk [vmem:[%s3 + $0x3a0] sm:$0xf] %vm3662, %v3382
  %3896 = vst.msk [vmem:[%s3 + $0x3a4] sm:$0xf] %vm3662, %v3383
  %3897 = vst.msk [vmem:[%s3 + $0x3a8] sm:$0xf] %vm3662, %v3384
  %3898 = vst.msk [vmem:[%s3 + $0x3ac] sm:$0xf] %vm3662, %v3385
  %3899 = vst.msk [vmem:[%s3 + $0x3b0] sm:$0xf] %vm3662, %v3386
  %3900 = vst.msk [vmem:[%s3 + $0x3b4] sm:$0xf] %vm3662, %v3387
  %3901 = vst.msk [vmem:[%s3 + $0x3b8] sm:$0xf] %vm3662, %v3388
  %3902 = vst.msk [vmem:[%s3 + $0x3bc] sm:$0xf] %vm3662, %v3389
  %3903 = vst.msk [vmem:[%s3 + $0x3c0] sm:$0xf] %vm3662, %v3390
  %3904 = vst.msk [vmem:[%s3 + $0x3c4] sm:$0xf] %vm3662, %v3391
  %3905 = vst.msk [vmem:[%s3 + $0x3c8] sm:$0xf] %vm3662, %v3392
  %3906 = vst.msk [vmem:[%s3 + $0x3cc] sm:$0xf] %vm3662, %v3393
  %3907 = vst.msk [vmem:[%s3 + $0x3d0] sm:$0xf] %vm3662, %v3394
  %3908 = vst.msk [vmem:[%s3 + $0x3d4] sm:$0xf] %vm3662, %v3395
  %3909 = vst.msk [vmem:[%s3 + $0x3d8] sm:$0xf] %vm3662, %v3396
  %3910 = vst.msk [vmem:[%s3 + $0x3dc] sm:$0xf] %vm3662, %v3397
  %3911 = vst.msk [vmem:[%s3 + $0x3e0] sm:$0xf] %vm3662, %v3398
  %3912 = vst.msk [vmem:[%s3 + $0x3e4] sm:$0xf] %vm3662, %v3399
  %3913 = vst.msk [vmem:[%s3 + $0x3e8] sm:$0xf] %vm3662, %v3400
  %3914 = vst.msk [vmem:[%s3 + $0x3ec] sm:$0xf] %vm3662, %v3401
  %3915 = vst.msk [vmem:[%s3 + $0x3f0] sm:$0xf] %vm3662, %v3402
  %3916 = vst.msk [vmem:[%s3 + $0x3f4] sm:$0xf] %vm3662, %v3403
  %3917 = vst.msk [vmem:[%s3 + $0x3f8] sm:$0xf] %vm3662, %v3404
  %3918 = vst.msk [vmem:[%s3 + $0x3fc] sm:$0xf] %vm3662, %v3405
  // Predicated region
  $region14: #{avalon_generator_forward.8} parent=0 // pred_check
    _
  $region15: #{avalon_generator_forward.8} parent=0 // pred_check_branch
    %3920 = sbr.rel (0) target = $region17
  $region16: #{avalon_generator_forward.8} parent=0 // pred_region
    _
  $region17: #{avalon_generator_forward.8} parent=0 // pred_fallthru
    _
  // Predicated region
  $region18: #{avalon_generator_forward.8} parent=0 // pred_check
    _
  $region19: #{avalon_generator_forward.8} parent=0 // pred_check_branch
    %3922 = sbr.rel (0) target = $region21
  $region20: #{avalon_generator_forward.8} parent=0 // pred_region
    _
  $region21: #{avalon_generator_forward.8} parent=0 // pred_fallthru
    _

// kernel: avalon_generator_forward.10
$region0: #{avalon_generator_forward.10}
  #allocation0 [shape = 'u32[]', space=smem, size = 0x4, offset = 0x4, fixed_abs, tag = 'smem constant byte address 0x4 - core index']
  #allocation1 [shape = 'u32[144,128]{1,0:T(1,128)}', space=vmem, size = 0x12000, scoped, tag = 'internal scratch']
  %s0 = inlined_call_operand.vmem [shape: bf16[128,288], index: 0, kind: input, shape index: {}]
  %s1 = inlined_call_operand.vmem [shape: bf16[288,64], index: 1, kind: input, shape index: {}]
  %s2 = inlined_call_operand.vmem [shape: f32[1,64], index: 2, kind: input, shape index: {}]
  %s3 = inlined_call_operand.vmem [shape: bf16[128,64], index: 3, kind: output, shape index: {}]
  %s4 = sld [smem:[#allocation0]]
  $region22: #{avalon_generator_forward.10} parent=0
    _
  %s6 = ssub.s32 1, %s4
  %s7 = scalar_select 0, %s6, %s4
  // Predicated region
  $region2: #{avalon_generator_forward.10} parent=0 // pred_check
    _
  $region3: #{avalon_generator_forward.10} parent=0 // pred_check_branch
    %9 = sbr.rel (0) target = $region5
  $region4: #{avalon_generator_forward.10} parent=0 // pred_region
    _
  $region5: #{avalon_generator_forward.10} parent=0 // pred_fallthru
    _
  // Predicated region
  $region6: #{avalon_generator_forward.10} parent=0 // pred_check
    _
  $region7: #{avalon_generator_forward.10} parent=0 // pred_check_branch
    %11 = sbr.rel (0) target = $region9
  $region8: #{avalon_generator_forward.10} parent=0 // pred_region
    _
  $region9: #{avalon_generator_forward.10} parent=0 // pred_fallthru
    _
  // Predicated region
  $region10: #{avalon_generator_forward.10} parent=0 // pred_check
    _
  $region11: #{avalon_generator_forward.10} parent=0 // pred_check_branch
    %13 = sbr.rel (0) target = $region13
  $region12: #{avalon_generator_forward.10} parent=0 // pred_region
    _
  $region13: #{avalon_generator_forward.10} parent=0 // pred_fallthru
    _
  %v15 = vld [vmem:[%s0] sm:$0xff]
  %v16 = vld [vmem:[%s0 + $0x8] sm:$0xf]
  %v17 = vld [vmem:[%s0 + $0xc] sm:$0xff]
  %v18 = vld [vmem:[%s0 + $0x14] sm:$0xf]
  %v19 = vld [vmem:[%s0 + $0x18] sm:$0xff]
  %v20 = vld [vmem:[%s0 + $0x20] sm:$0xf]
  %v21 = vld [vmem:[%s0 + $0x24] sm:$0xff]
  %v22 = vld [vmem:[%s0 + $0x2c] sm:$0xf]
  %v23 = vld [vmem:[%s0 + $0x30] sm:$0xff]
  %v24 = vld [vmem:[%s0 + $0x38] sm:$0xf]
  %v25 = vld [vmem:[%s0 + $0x3c] sm:$0xff]
  %v26 = vld [vmem:[%s0 + $0x44] sm:$0xf]
  %v27 = vld [vmem:[%s0 + $0x48] sm:$0xff]
  %v28 = vld [vmem:[%s0 + $0x50] sm:$0xf]
  %v29 = vld [vmem:[%s0 + $0x54] sm:$0xff]
  %v30 = vld [vmem:[%s0 + $0x5c] sm:$0xf]
  %v31 = vld [vmem:[%s0 + $0x60] sm:$0xff]
  %v32 = vld [vmem:[%s0 + $0x68] sm:$0xf]
  %v33 = vld [vmem:[%s0 + $0x6c] sm:$0xff]
  %v34 = vld [vmem:[%s0 + $0x74] sm:$0xf]
  %v35 = vld [vmem:[%s0 + $0x78] sm:$0xff]
  %v36 = vld [vmem:[%s0 + $0x80] sm:$0xf]
  %v37 = vld [vmem:[%s0 + $0x84] sm:$0xff]
  %v38 = vld [vmem:[%s0 + $0x8c] sm:$0xf]
  %v39 = vld [vmem:[%s0 + $0x90] sm:$0xff]
  %v40 = vld [vmem:[%s0 + $0x98] sm:$0xf]
  %v41 = vld [vmem:[%s0 + $0x9c] sm:$0xff]
  %v42 = vld [vmem:[%s0 + $0xa4] sm:$0xf]
  %v43 = vld [vmem:[%s0 + $0xa8] sm:$0xff]
  %v44 = vld [vmem:[%s0 + $0xb0] sm:$0xf]
  %v45 = vld [vmem:[%s0 + $0xb4] sm:$0xff]
  %v46 = vld [vmem:[%s0 + $0xbc] sm:$0xf]
  %v47 = vld [vmem:[%s1] sm:$0xf]
  %v48 = vld [vmem:[%s1 + $0x4] sm:$0xf]
  %v49 = vld [vmem:[%s1 + $0x8] sm:$0xf]
  %v50 = vld [vmem:[%s1 + $0xc] sm:$0xf]
  %v51 = vld [vmem:[%s1 + $0x10] sm:$0xf]
  %v52 = vld [vmem:[%s1 + $0x14] sm:$0xf]
  %v53 = vld [vmem:[%s1 + $0x18] sm:$0xf]
  %v54 = vld [vmem:[%s1 + $0x1c] sm:$0xf]
  %v55 = vld [vmem:[%s1 + $0x20] sm:$0xf]
  %v56 = vld [vmem:[%s1 + $0x24] sm:$0xf]
  %v57 = vld [vmem:[%s1 + $0x28] sm:$0xf]
  %v58 = vld [vmem:[%s1 + $0x2c] sm:$0xf]
  %v59 = vld [vmem:[%s1 + $0x30] sm:$0xf]
  %v60 = vld [vmem:[%s1 + $0x34] sm:$0xf]
  %v61 = vld [vmem:[%s1 + $0x38] sm:$0xf]
  %v62 = vld [vmem:[%s1 + $0x3c] sm:$0xf]
  %v63 = vld [vmem:[%s1 + $0x40] sm:$0xf]
  %v64 = vld [vmem:[%s1 + $0x44] sm:$0xf]
  %v65 = vld [vmem:[%s1 + $0x48] sm:$0xf]
  %v66 = vld [vmem:[%s1 + $0x4c] sm:$0xf]
  %v67 = vld [vmem:[%s1 + $0x50] sm:$0xf]
  %v68 = vld [vmem:[%s1 + $0x54] sm:$0xf]
  %v69 = vld [vmem:[%s1 + $0x58] sm:$0xf]
  %v70 = vld [vmem:[%s1 + $0x5c] sm:$0xf]
  %v71 = vld [vmem:[%s1 + $0x60] sm:$0xf]
  %v72 = vld [vmem:[%s1 + $0x64] sm:$0xf]
  %v73 = vld [vmem:[%s1 + $0x68] sm:$0xf]
  %v74 = vld [vmem:[%s1 + $0x6c] sm:$0xf]
  %v75 = vld [vmem:[%s1 + $0x70] sm:$0xf]
  %v76 = vld [vmem:[%s1 + $0x74] sm:$0xf]
  %v77 = vld [vmem:[%s1 + $0x78] sm:$0xf]
  %v78 = vld [vmem:[%s1 + $0x7c] sm:$0xf]
  %v79 = vld [vmem:[%s1 + $0x80] sm:$0xf]
  %v80 = vld [vmem:[%s1 + $0x84] sm:$0xf]
  %v81 = vld [vmem:[%s1 + $0x88] sm:$0xf]
  %v82 = vld [vmem:[%s1 + $0x8c] sm:$0xf]
  %v83 = vld [vmem:[%s2] sm:$0x1]
  %v85 = vlaneseq
  %v86 = vshrl.u32 %v85, 7
  %v87 = vsub.s32 0, %v86
  %v88 = vrot.slane %v83, %v87
  %v122 = vunpack.c.l.b16 %v15
  %v123 = vunpack.c.h.b16 %v15
  %v124 = vunpack.c.l.b16 %v16
  %v125 = vunpack.c.l.b16 %v17
  %v126 = vunpack.c.h.b16 %v17
  %v127 = vunpack.c.l.b16 %v18
  %v128 = vunpack.c.l.b16 %v19
  %v129 = vunpack.c.h.b16 %v19
  %v130 = vunpack.c.l.b16 %v20
  %v131 = vunpack.c.l.b16 %v21
  %v132 = vunpack.c.h.b16 %v21
  %v133 = vunpack.c.l.b16 %v22
  %v134 = vunpack.c.l.b16 %v23
  %v135 = vunpack.c.h.b16 %v23
  %v136 = vunpack.c.l.b16 %v24
  %v137 = vunpack.c.l.b16 %v25
  %v138 = vunpack.c.h.b16 %v25
  %v139 = vunpack.c.l.b16 %v26
  %v140 = vunpack.c.l.b16 %v27
  %v141 = vunpack.c.h.b16 %v27
  %v142 = vunpack.c.l.b16 %v28
  %v143 = vunpack.c.l.b16 %v29
  %v144 = vunpack.c.h.b16 %v29
  %v145 = vunpack.c.l.b16 %v30
  %v146 = vunpack.c.l.b16 %v31
  %v147 = vunpack.c.h.b16 %v31
  %v148 = vunpack.c.l.b16 %v32
  %v149 = vunpack.c.l.b16 %v33
  %v150 = vunpack.c.h.b16 %v33
  %v151 = vunpack.c.l.b16 %v34
  %v152 = vunpack.c.l.b16 %v35
  %v153 = vunpack.c.h.b16 %v35
  %v154 = vunpack.c.l.b16 %v36
  %v155 = vunpack.c.l.b16 %v37
  %v156 = vunpack.c.h.b16 %v37
  %v157 = vunpack.c.l.b16 %v38
  %v158 = vunpack.c.l.b16 %v39
  %v159 = vunpack.c.h.b16 %v39
  %v160 = vunpack.c.l.b16 %v40
  %v161 = vunpack.c.l.b16 %v41
  %v162 = vunpack.c.h.b16 %v41
  %v163 = vunpack.c.l.b16 %v42
  %v164 = vunpack.c.l.b16 %v43
  %v165 = vunpack.c.h.b16 %v43
  %v166 = vunpack.c.l.b16 %v44
  %v167 = vunpack.c.l.b16 %v45
  %v168 = vunpack.c.h.b16 %v45
  %v169 = vunpack.c.l.b16 %v46
  %v170 = vpack.c.b16 %v125, %v122
  %v171 = vpack.c.b16 %v126, %v123
  %v172 = vpack.c.b16 %v127, %v124
  %v173 = vpack.c.b16 %v131, %v128
  %v174 = vpack.c.b16 %v132, %v129
  %v175 = vpack.c.b16 %v133, %v130
  %v176 = vpack.c.b16 %v137, %v134
  %v177 = vpack.c.b16 %v138, %v135
  %v178 = vpack.c.b16 %v139, %v136
  %v179 = vpack.c.b16 %v143, %v140
  %v180 = vpack.c.b16 %v144, %v141
  %v181 = vpack.c.b16 %v145, %v142
  %v182 = vpack.c.b16 %v149, %v146
  %v183 = vpack.c.b16 %v150, %v147
  %v184 = vpack.c.b16 %v151, %v148
  %v185 = vpack.c.b16 %v155, %v152
  %v186 = vpack.c.b16 %v156, %v153
  %v187 = vpack.c.b16 %v157, %v154
  %v188 = vpack.c.b16 %v161, %v158
  %v189 = vpack.c.b16 %v162, %v159
  %v190 = vpack.c.b16 %v163, %v160
  %v191 = vpack.c.b16 %v167, %v164
  %v192 = vpack.c.b16 %v168, %v165
  %v193 = vpack.c.b16 %v169, %v166
  %v246 = vunpack.c.l.b16 %v47
  %v247 = vunpack.c.l.b16 %v48
  %v248 = vunpack.c.l.b16 %v49
  %v249 = vunpack.c.l.b16 %v50
  %v250 = vunpack.c.l.b16 %v51
  %v251 = vunpack.c.l.b16 %v52
  %v252 = vunpack.c.l.b16 %v53
  %v253 = vunpack.c.l.b16 %v54
  %v254 = vunpack.c.l.b16 %v55
  %v255 = vunpack.c.l.b16 %v56
  %v256 = vunpack.c.l.b16 %v57
  %v257 = vunpack.c.l.b16 %v58
  %v258 = vunpack.c.l.b16 %v59
  %v259 = vunpack.c.l.b16 %v60
  %v260 = vunpack.c.l.b16 %v61
  %v261 = vunpack.c.l.b16 %v62
  %v262 = vunpack.c.l.b16 %v63
  %v263 = vunpack.c.l.b16 %v64
  %v264 = vunpack.c.l.b16 %v65
  %v265 = vunpack.c.l.b16 %v66
  %v266 = vunpack.c.l.b16 %v67
  %v267 = vunpack.c.l.b16 %v68
  %v268 = vunpack.c.l.b16 %v69
  %v269 = vunpack.c.l.b16 %v70
  %v270 = vunpack.c.l.b16 %v71
  %v271 = vunpack.c.l.b16 %v72
  %v272 = vunpack.c.l.b16 %v73
  %v273 = vunpack.c.l.b16 %v74
  %v274 = vunpack.c.l.b16 %v75
  %v275 = vunpack.c.l.b16 %v76
  %v276 = vunpack.c.l.b16 %v77
  %v277 = vunpack.c.l.b16 %v78
  %v278 = vunpack.c.l.b16 %v79
  %v279 = vunpack.c.l.b16 %v80
  %v280 = vunpack.c.l.b16 %v81
  %v281 = vunpack.c.l.b16 %v82
  %v282 = vpack.c.b16 %v247, %v246
  %v283 = vpack.c.b16 %v249, %v248
  %v284 = vpack.c.b16 %v251, %v250
  %v285 = vpack.c.b16 %v253, %v252
  %v286 = vpack.c.b16 %v255, %v254
  %v287 = vpack.c.b16 %v257, %v256
  %v288 = vpack.c.b16 %v259, %v258
  %v289 = vpack.c.b16 %v261, %v260
  %v290 = vpack.c.b16 %v263, %v262
  %v291 = vpack.c.b16 %v265, %v264
  %v292 = vpack.c.b16 %v267, %v266
  %v293 = vpack.c.b16 %v269, %v268
  %v294 = vpack.c.b16 %v271, %v270
  %v295 = vpack.c.b16 %v273, %v272
  %v296 = vpack.c.b16 %v275, %v274
  %v297 = vpack.c.b16 %v277, %v276
  %v298 = vpack.c.b16 %v279, %v278
  %v299 = vpack.c.b16 %v281, %v280
  %vm318 = vcmask 261120
  %v320 = vsel %vm318, %v172, 0
  %v323 = vsel %vm318, %v175, 0
  %v326 = vsel %vm318, %v178, 0
  %v329 = vsel %vm318, %v181, 0
  %v332 = vsel %vm318, %v184, 0
  %v335 = vsel %vm318, %v187, 0
  %v338 = vsel %vm318, %v190, 0
  %v341 = vsel %vm318, %v193, 0
  %343 = vmatprep.subr.bf16.mxu0 0
  %344 = vmatpush1.bf16.msra.mxu0 %v282
  %345 = vmatprep.subr.bf16.mxu0 0
  %346 = vmatpush1.bf16.msra.mxu0 %v283
  %347 = vmatprep.subr.bf16.mxu0 0
  %348 = vmatpush1.bf16.msra.mxu0 %v284
  %349 = vmatprep.subr.bf16.mxu0 0
  %350 = vmatpush1.bf16.msra.mxu0 %v285
  %351 = vmatprep.subr.bf16.mxu0 0
  %352 = vmatpush1.bf16.msra.mxu0 %v286
  %353 = vmatprep.subr.bf16.mxu0 0
  %354 = vmatpush1.bf16.msra.mxu0 %v287
  %355 = vmatprep.subr.bf16.mxu0 0
  %356 = vmatpush1.bf16.msra.mxu0 %v288
  %357 = vmatprep.subr.bf16.mxu0 0
  %358 = vmatpush1.bf16.msra.mxu0 %v289
  %359 = vmatprep.subr.bf16.mxu0 0
  %360 = vmatpush1.bf16.msra.mxu0 %v290
  %361 = vmatprep.subr.bf16.mxu0 0
  %362 = vmatpush1.bf16.msra.mxu0 %v291
  %363 = vmatprep.subr.bf16.mxu0 0
  %364 = vmatpush1.bf16.msra.mxu0 %v292
  %365 = vmatprep.subr.bf16.mxu0 0
  %366 = vmatpush1.bf16.msra.mxu0 %v293
  %367 = vmatprep.subr.bf16.mxu0 0
  %368 = vmatpush1.bf16.msra.mxu0 %v294
  %369 = vmatprep.subr.bf16.mxu0 0
  %370 = vmatpush1.bf16.msra.mxu0 %v295
  %371 = vmatprep.subr.bf16.mxu0 0
  %372 = vmatpush1.bf16.msra.mxu0 %v296
  %373 = vmatprep.subr.bf16.mxu0 0
  %374 = vmatpush1.bf16.msra.mxu0 %v297
  %375 = vmatprep.mubr.bf16.mxu0 %v171
  %376 = vmatmul.mubr.bf16.gmra.mrb[0].mxu0 %v170
  %v377 = vpop.f32.mrb[0].mxu0
  %v378 = vadd.f32 %v88, %v377
  %v379 = vpop.f32.mrb[0].mxu0
  %v380 = vpop.f32.mrb[0].mxu0
  %v381 = vadd.f32 %v88, %v380
  %v382 = vpop.f32.mrb[0].mxu0
  %383 = vmatprep.mubr.bf16.mxu0 %v174
  %384 = vmatmul.mubr.bf16.gmra.mrb[0].mxu0 %v173
  %v385 = vpop.f32.mrb[0].mxu0
  %v386 = vadd.f32 %v88, %v385
  %v387 = vpop.f32.mrb[0].mxu0
  %v388 = vpop.f32.mrb[0].mxu0
  %v389 = vadd.f32 %v88, %v388
  %v390 = vpop.f32.mrb[0].mxu0
  %391 = vmatprep.mubr.bf16.mxu0 %v177
  %392 = vmatmul.mubr.bf16.gmra.mrb[0].mxu0 %v176
  %v393 = vpop.f32.mrb[0].mxu0
  %v394 = vadd.f32 %v88, %v393
  %v395 = vpop.f32.mrb[0].mxu0
  %v396 = vpop.f32.mrb[0].mxu0
  %v397 = vadd.f32 %v88, %v396
  %v398 = vpop.f32.mrb[0].mxu0
  %399 = vmatprep.mubr.bf16.mxu0 %v180
  %400 = vmatmul.mubr.bf16.gmra.mrb[0].mxu0 %v179
  %v401 = vpop.f32.mrb[0].mxu0
  %v402 = vadd.f32 %v88, %v401
  %v403 = vpop.f32.mrb[0].mxu0
  %v404 = vpop.f32.mrb[0].mxu0
  %v405 = vadd.f32 %v88, %v404
  %v406 = vpop.f32.mrb[0].mxu0
  %407 = vmatprep.mubr.bf16.mxu0 %v183
  %408 = vmatmul.mubr.bf16.gmra.mrb[0].mxu0 %v182
  %v409 = vpop.f32.mrb[0].mxu0
  %v410 = vadd.f32 %v88, %v409
  %v411 = vpop.f32.mrb[0].mxu0
  %v412 = vpop.f32.mrb[0].mxu0
  %v413 = vadd.f32 %v88, %v412
  %v414 = vpop.f32.mrb[0].mxu0
  %415 = vmatprep.mubr.bf16.mxu0 %v186
  %416 = vmatmul.mubr.bf16.gmra.mrb[0].mxu0 %v185
  %v417 = vpop.f32.mrb[0].mxu0
  %v418 = vadd.f32 %v88, %v417
  %v419 = vpop.f32.mrb[0].mxu0
  %v420 = vpop.f32.mrb[0].mxu0
  %v421 = vadd.f32 %v88, %v420
  %v422 = vpop.f32.mrb[0].mxu0
  %423 = vmatprep.mubr.bf16.mxu0 %v189
  %424 = vmatmul.mubr.bf16.gmra.mrb[0].mxu0 %v188
  %v425 = vpop.f32.mrb[0].mxu0
  %v426 = vadd.f32 %v88, %v425
  %v427 = vpop.f32.mrb[0].mxu0
  %v428 = vpop.f32.mrb[0].mxu0
  %v429 = vadd.f32 %v88, %v428
  %v430 = vpop.f32.mrb[0].mxu0
  %431 = vmatprep.mubr.bf16.mxu0 %v192
  %432 = vmatmul.mubr.bf16.gmra.mrb[0].mxu0 %v191
  %v433 = vpop.f32.mrb[0].mxu0
  %v434 = vadd.f32 %v88, %v433
  %v435 = vpop.f32.mrb[0].mxu0
  %v436 = vpop.f32.mrb[0].mxu0
  %v437 = vadd.f32 %v88, %v436
  %v438 = vpop.f32.mrb[0].mxu0
  %439 = vdwg.mxu0
  %440 = vmatprep.subr.bf16.mxu0 0
  %441 = vmatpush1.bf16.msra.mxu0 %v298
  %442 = vmatprep.subr.bf16.mxu0 0
  %443 = vmatpush1.bf16.msra.mxu0 %v299
  %444 = vmatprep.subr.bf16.mxu0 0
  %445 = vmatpush1.bf16.msra.mxu0 0
  %446 = vmatprep.subr.bf16.mxu0 0
  %447 = vmatpush1.bf16.msra.mxu0 0
  %448 = vmatprep.subr.bf16.mxu0 0
  %449 = vmatpush1.bf16.msra.mxu0 0
  %450 = vmatprep.subr.bf16.mxu0 0
  %451 = vmatpush1.bf16.msra.mxu0 0
  %452 = vmatprep.subr.bf16.mxu0 0
  %453 = vmatpush1.bf16.msra.mxu0 0
  %454 = vmatprep.subr.bf16.mxu0 0
  %455 = vmatpush1.bf16.msra.mxu0 0
  %456 = vmatprep.subr.bf16.mxu0 0
  %457 = vmatpush1.bf16.msra.mxu0 0
  %458 = vmatprep.subr.bf16.mxu0 0
  %459 = vmatpush1.bf16.msra.mxu0 0
  %460 = vmatprep.subr.bf16.mxu0 0
  %461 = vmatpush1.bf16.msra.mxu0 0
  %462 = vmatprep.subr.bf16.mxu0 0
  %463 = vmatpush1.bf16.msra.mxu0 0
  %464 = vmatprep.subr.bf16.mxu0 0
  %465 = vmatpush1.bf16.msra.mxu0 0
  %466 = vmatprep.subr.bf16.mxu0 0
  %467 = vmatpush1.bf16.msra.mxu0 0
  %468 = vmatprep.subr.bf16.mxu0 0
  %469 = vmatpush1.bf16.msra.mxu0 0
  %470 = vmatprep.subr.bf16.mxu0 0
  %471 = vmatpush1.bf16.msra.mxu0 0
  %472 = vmatprep.mubr.bf16.mxu0 0
  %473 = vmatmul.mubr.bf16.gmra.mrb[0].mxu0 %v320
  %v474 = vpop.f32.mrb[0].mxu0
  %v475 = vadd.f32 %v378, %v474
  %v476 = vpop.f32.mrb[0].mxu0
  %v477 = vpop.f32.mrb[0].mxu0
  %v478 = vadd.f32 %v381, %v477
  %v479 = vpop.f32.mrb[0].mxu0
  %480 = vmatprep.mubr.bf16.mxu0 0
  %481 = vmatmul.mubr.bf16.gmra.mrb[0].mxu0 %v323
  %v482 = vpop.f32.mrb[0].mxu0
  %v483 = vadd.f32 %v386, %v482
  %v484 = vpop.f32.mrb[0].mxu0
  %v485 = vpop.f32.mrb[0].mxu0
  %v486 = vadd.f32 %v389, %v485
  %v487 = vpop.f32.mrb[0].mxu0
  %488 = vmatprep.mubr.bf16.mxu0 0
  %489 = vmatmul.mubr.bf16.gmra.mrb[0].mxu0 %v326
  %v490 = vpop.f32.mrb[0].mxu0
  %v491 = vadd.f32 %v394, %v490
  %v492 = vpop.f32.mrb[0].mxu0
  %v493 = vpop.f32.mrb[0].mxu0
  %v494 = vadd.f32 %v397, %v493
  %v495 = vpop.f32.mrb[0].mxu0
  %496 = vmatprep.mubr.bf16.mxu0 0
  %497 = vmatmul.mubr.bf16.gmra.mrb[0].mxu0 %v329
  %v498 = vpop.f32.mrb[0].mxu0
  %v499 = vadd.f32 %v402, %v498
  %v500 = vpop.f32.mrb[0].mxu0
  %v501 = vpop.f32.mrb[0].mxu0
  %v502 = vadd.f32 %v405, %v501
  %v503 = vpop.f32.mrb[0].mxu0
  %504 = vmatprep.mubr.bf16.mxu0 0
  %505 = vmatmul.mubr.bf16.gmra.mrb[0].mxu0 %v332
  %v506 = vpop.f32.mrb[0].mxu0
  %v507 = vadd.f32 %v410, %v506
  %v508 = vpop.f32.mrb[0].mxu0
  %v509 = vpop.f32.mrb[0].mxu0
  %v510 = vadd.f32 %v413, %v509
  %v511 = vpop.f32.mrb[0].mxu0
  %512 = vmatprep.mubr.bf16.mxu0 0
  %513 = vmatmul.mubr.bf16.gmra.mrb[0].mxu0 %v335
  %v514 = vpop.f32.mrb[0].mxu0
  %v515 = vadd.f32 %v418, %v514
  %v516 = vpop.f32.mrb[0].mxu0
  %v517 = vpop.f32.mrb[0].mxu0
  %v518 = vadd.f32 %v421, %v517
  %v519 = vpop.f32.mrb[0].mxu0
  %520 = vmatprep.mubr.bf16.mxu0 0
  %521 = vmatmul.mubr.bf16.gmra.mrb[0].mxu0 %v338
  %v522 = vpop.f32.mrb[0].mxu0
  %v523 = vadd.f32 %v426, %v522
  %v524 = vpop.f32.mrb[0].mxu0
  %v525 = vpop.f32.mrb[0].mxu0
  %v526 = vadd.f32 %v429, %v525
  %v527 = vpop.f32.mrb[0].mxu0
  %528 = vmatprep.mubr.bf16.mxu0 0
  %529 = vmatmul.mubr.bf16.gmra.mrb[0].mxu0 %v341
  %v530 = vpop.f32.mrb[0].mxu0
  %v531 = vadd.f32 %v434, %v530
  %v532 = vpop.f32.mrb[0].mxu0
  %v533 = vpop.f32.mrb[0].mxu0
  %v534 = vadd.f32 %v437, %v533
  %v535 = vpop.f32.mrb[0].mxu0
  %536 = vdwg.mxu0
  %v537 = vmax.f32 %v475, 0.0
  %v538 = vmax.f32 %v478, 0.0
  %v539 = vmax.f32 %v483, 0.0
  %v540 = vmax.f32 %v486, 0.0
  %v541 = vmax.f32 %v491, 0.0
  %v542 = vmax.f32 %v494, 0.0
  %v543 = vmax.f32 %v499, 0.0
  %v544 = vmax.f32 %v502, 0.0
  %v545 = vmax.f32 %v507, 0.0
  %v546 = vmax.f32 %v510, 0.0
  %v547 = vmax.f32 %v515, 0.0
  %v548 = vmax.f32 %v518, 0.0
  %v549 = vmax.f32 %v523, 0.0
  %v550 = vmax.f32 %v526, 0.0
  %v551 = vmax.f32 %v531, 0.0
  %v552 = vmax.f32 %v534, 0.0
  %v553 = vpack.c.bf16 %v538, %v537
  %v554 = vpack.c.bf16 %v540, %v539
  %v555 = vpack.c.bf16 %v542, %v541
  %v556 = vpack.c.bf16 %v544, %v543
  %v557 = vpack.c.bf16 %v546, %v545
  %v558 = vpack.c.bf16 %v548, %v547
  %v559 = vpack.c.bf16 %v550, %v549
  %v560 = vpack.c.bf16 %v552, %v551
  %v569 = vunpack.c.l.b16 %v553
  %v570 = vunpack.c.h.b16 %v553
  %v571 = vunpack.c.l.b16 %v554
  %v572 = vunpack.c.h.b16 %v554
  %v573 = vunpack.c.l.b16 %v555
  %v574 = vunpack.c.h.b16 %v555
  %v575 = vunpack.c.l.b16 %v556
  %v576 = vunpack.c.h.b16 %v556
  %v577 = vunpack.c.l.b16 %v557
  %v578 = vunpack.c.h.b16 %v557
  %v579 = vunpack.c.l.b16 %v558
  %v580 = vunpack.c.h.b16 %v558
  %v581 = vunpack.c.l.b16 %v559
  %v582 = vunpack.c.h.b16 %v559
  %v583 = vunpack.c.l.b16 %v560
  %v584 = vunpack.c.h.b16 %v560
  %v585 = vpack.c.b16 %v569, %v569
  %v586 = vpack.c.b16 %v570, %v570
  %v587 = vpack.c.b16 %v571, %v571
  %v588 = vpack.c.b16 %v572, %v572
  %v589 = vpack.c.b16 %v573, %v573
  %v590 = vpack.c.b16 %v574, %v574
  %v591 = vpack.c.b16 %v575, %v575
  %v592 = vpack.c.b16 %v576, %v576
  %v593 = vpack.c.b16 %v577, %v577
  %v594 = vpack.c.b16 %v578, %v578
  %v595 = vpack.c.b16 %v579, %v579
  %v596 = vpack.c.b16 %v580, %v580
  %v597 = vpack.c.b16 %v581, %v581
  %v598 = vpack.c.b16 %v582, %v582
  %v599 = vpack.c.b16 %v583, %v583
  %v600 = vpack.c.b16 %v584, %v584
  %vm617 = vcmask 519168
  %618 = vst.msk [vmem:[%s3] sm:$0xf] %vm617, %v585
  %619 = vst.msk [vmem:[%s3 + $0x4] sm:$0xf] %vm617, %v586
  %620 = vst.msk [vmem:[%s3 + $0x8] sm:$0xf] %vm617, %v587
  %621 = vst.msk [vmem:[%s3 + $0xc] sm:$0xf] %vm617, %v588
  %622 = vst.msk [vmem:[%s3 + $0x10] sm:$0xf] %vm617, %v589
  %623 = vst.msk [vmem:[%s3 + $0x14] sm:$0xf] %vm617, %v590
  %624 = vst.msk [vmem:[%s3 + $0x18] sm:$0xf] %vm617, %v591
  %625 = vst.msk [vmem:[%s3 + $0x1c] sm:$0xf] %vm617, %v592
  %626 = vst.msk [vmem:[%s3 + $0x20] sm:$0xf] %vm617, %v593
  %627 = vst.msk [vmem:[%s3 + $0x24] sm:$0xf] %vm617, %v594
  %628 = vst.msk [vmem:[%s3 + $0x28] sm:$0xf] %vm617, %v595
  %629 = vst.msk [vmem:[%s3 + $0x2c] sm:$0xf] %vm617, %v596
  %630 = vst.msk [vmem:[%s3 + $0x30] sm:$0xf] %vm617, %v597
  %631 = vst.msk [vmem:[%s3 + $0x34] sm:$0xf] %vm617, %v598
  %632 = vst.msk [vmem:[%s3 + $0x38] sm:$0xf] %vm617, %v599
  %633 = vst.msk [vmem:[%s3 + $0x3c] sm:$0xf] %vm617, %v600
  // Predicated region
  $region14: #{avalon_generator_forward.10} parent=0 // pred_check
    _
  $region15: #{avalon_generator_forward.10} parent=0 // pred_check_branch
    %635 = sbr.rel (0) target = $region17
  $region16: #{avalon_generator_forward.10} parent=0 // pred_region
    _
  $region17: #{avalon_generator_forward.10} parent=0 // pred_fallthru
    _
  // Predicated region
  $region18: #{avalon_generator_forward.10} parent=0 // pred_check
    _
  $region19: #{avalon_generator_forward.10} parent=0 // pred_check_branch
    %637 = sbr.rel (0) target = $region21
  $region20: #{avalon_generator_forward.10} parent=0 // pred_region
    _
  $region21: #{avalon_generator_forward.10} parent=0 // pred_fallthru
    _

// kernel: avalon_generator_forward.11
$region0: #{avalon_generator_forward.11}
  #allocation0 [shape = 'u32[]', space=smem, size = 0x4, offset = 0x4, fixed_abs, tag = 'smem constant byte address 0x4 - core index']
  #allocation1 [shape = 'u32[144,128]{1,0:T(1,128)}', space=vmem, size = 0x12000, scoped, tag = 'internal scratch']
  %s0 = inlined_call_operand.vmem [shape: bf16[2,4096], index: 0, kind: input, shape index: {}]
  %s1 = inlined_call_operand.vmem [shape: bf16[4096,10], index: 1, kind: input, shape index: {}]
  %s2 = inlined_call_operand.vmem [shape: f32[1,10], index: 2, kind: input, shape index: {}]
  %s3 = inlined_call_operand.vmem [shape: f32[2,10], index: 3, kind: output, shape index: {}]
  %s4 = sld [smem:[#allocation0]]
  $region22: #{avalon_generator_forward.11} parent=0
    _
  %s6 = ssub.s32 1, %s4
  %s7 = scalar_select 0, %s6, %s4
  // Predicated region
  $region2: #{avalon_generator_forward.11} parent=0 // pred_check
    _
  $region3: #{avalon_generator_forward.11} parent=0 // pred_check_branch
    %9 = sbr.rel (0) target = $region5
  $region4: #{avalon_generator_forward.11} parent=0 // pred_region
    _
  $region5: #{avalon_generator_forward.11} parent=0 // pred_fallthru
    _
  // Predicated region
  $region6: #{avalon_generator_forward.11} parent=0 // pred_check
    _
  $region7: #{avalon_generator_forward.11} parent=0 // pred_check_branch
    %11 = sbr.rel (0) target = $region9
  $region8: #{avalon_generator_forward.11} parent=0 // pred_region
    _
  $region9: #{avalon_generator_forward.11} parent=0 // pred_fallthru
    _
  // Predicated region
  $region10: #{avalon_generator_forward.11} parent=0 // pred_check
    _
  $region11: #{avalon_generator_forward.11} parent=0 // pred_check_branch
    %13 = sbr.rel (0) target = $region13
  $region12: #{avalon_generator_forward.11} parent=0 // pred_region
    _
  $region13: #{avalon_generator_forward.11} parent=0 // pred_fallthru
    _
  %v15 = vld [vmem:[%s0] sm:$0xff]
  %v16 = vld [vmem:[%s0 + $0x8] sm:$0xff]
  %v17 = vld [vmem:[%s0 + $0x10] sm:$0xff]
  %v18 = vld [vmem:[%s0 + $0x18] sm:$0xff]
  %v19 = vld [vmem:[%s1] sm:$0xf]
  %v20 = vld [vmem:[%s1 + $0x4] sm:$0xf]
  %v21 = vld [vmem:[%s1 + $0x8] sm:$0xf]
  %v22 = vld [vmem:[%s1 + $0xc] sm:$0xf]
  %v23 = vld [vmem:[%s1 + $0x10] sm:$0xf]
  %v24 = vld [vmem:[%s1 + $0x14] sm:$0xf]
  %v25 = vld [vmem:[%s1 + $0x18] sm:$0xf]
  %v26 = vld [vmem:[%s1 + $0x1c] sm:$0xf]
  %v27 = vld [vmem:[%s1 + $0x20] sm:$0xf]
  %v28 = vld [vmem:[%s1 + $0x24] sm:$0xf]
  %v29 = vld [vmem:[%s1 + $0x28] sm:$0xf]
  %v30 = vld [vmem:[%s1 + $0x2c] sm:$0xf]
  %v31 = vld [vmem:[%s1 + $0x30] sm:$0xf]
  %v32 = vld [vmem:[%s1 + $0x34] sm:$0xf]
  %v33 = vld [vmem:[%s1 + $0x38] sm:$0xf]
  %v34 = vld [vmem:[%s1 + $0x3c] sm:$0xf]
  %v35 = vld [vmem:[%s1 + $0x40] sm:$0xf]
  %v36 = vld [vmem:[%s1 + $0x44] sm:$0xf]
  %v37 = vld [vmem:[%s1 + $0x48] sm:$0xf]
  %v38 = vld [vmem:[%s1 + $0x4c] sm:$0xf]
  %v39 = vld [vmem:[%s1 + $0x50] sm:$0xf]
  %v40 = vld [vmem:[%s1 + $0x54] sm:$0xf]
  %v41 = vld [vmem:[%s1 + $0x58] sm:$0xf]
  %v42 = vld [vmem:[%s1 + $0x5c] sm:$0xf]
  %v43 = vld [vmem:[%s1 + $0x60] sm:$0xf]
  %v44 = vld [vmem:[%s1 + $0x64] sm:$0xf]
  %v45 = vld [vmem:[%s1 + $0x68] sm:$0xf]
  %v46 = vld [vmem:[%s1 + $0x6c] sm:$0xf]
  %v47 = vld [vmem:[%s1 + $0x70] sm:$0xf]
  %v48 = vld [vmem:[%s1 + $0x74] sm:$0xf]
  %v49 = vld [vmem:[%s1 + $0x78] sm:$0xf]
  %v50 = vld [vmem:[%s1 + $0x7c] sm:$0xf]
  %v51 = vld [vmem:[%s1 + $0x80] sm:$0xf]
  %v52 = vld [vmem:[%s1 + $0x84] sm:$0xf]
  %v53 = vld [vmem:[%s1 + $0x88] sm:$0xf]
  %v54 = vld [vmem:[%s1 + $0x8c] sm:$0xf]
  %v55 = vld [vmem:[%s1 + $0x90] sm:$0xf]
  %v56 = vld [vmem:[%s1 + $0x94] sm:$0xf]
  %v57 = vld [vmem:[%s1 + $0x98] sm:$0xf]
  %v58 = vld [vmem:[%s1 + $0x9c] sm:$0xf]
  %v59 = vld [vmem:[%s1 + $0xa0] sm:$0xf]
  %v60 = vld [vmem:[%s1 + $0xa4] sm:$0xf]
  %v61 = vld [vmem:[%s1 + $0xa8] sm:$0xf]
  %v62 = vld [vmem:[%s1 + $0xac] sm:$0xf]
  %v63 = vld [vmem:[%s1 + $0xb0] sm:$0xf]
  %v64 = vld [vmem:[%s1 + $0xb4] sm:$0xf]
  %v65 = vld [vmem:[%s1 + $0xb8] sm:$0xf]
  %v66 = vld [vmem:[%s1 + $0xbc] sm:$0xf]
  %v67 = vld [vmem:[%s1 + $0xc0] sm:$0xf]
  %v68 = vld [vmem:[%s1 + $0xc4] sm:$0xf]
  %v69 = vld [vmem:[%s1 + $0xc8] sm:$0xf]
  %v70 = vld [vmem:[%s1 + $0xcc] sm:$0xf]
  %v71 = vld [vmem:[%s1 + $0xd0] sm:$0xf]
  %v72 = vld [vmem:[%s1 + $0xd4] sm:$0xf]
  %v73 = vld [vmem:[%s1 + $0xd8] sm:$0xf]
  %v74 = vld [vmem:[%s1 + $0xdc] sm:$0xf]
  %v75 = vld [vmem:[%s1 + $0xe0] sm:$0xf]
  %v76 = vld [vmem:[%s1 + $0xe4] sm:$0xf]
  %v77 = vld [vmem:[%s1 + $0xe8] sm:$0xf]
  %v78 = vld [vmem:[%s1 + $0xec] sm:$0xf]
  %v79 = vld [vmem:[%s1 + $0xf0] sm:$0xf]
  %v80 = vld [vmem:[%s1 + $0xf4] sm:$0xf]
  %v81 = vld [vmem:[%s1 + $0xf8] sm:$0xf]
  %v82 = vld [vmem:[%s1 + $0xfc] sm:$0xf]
  %v83 = vld [vmem:[%s1 + $0x100] sm:$0xf]
  %v84 = vld [vmem:[%s1 + $0x104] sm:$0xf]
  %v85 = vld [vmem:[%s1 + $0x108] sm:$0xf]
  %v86 = vld [vmem:[%s1 + $0x10c] sm:$0xf]
  %v87 = vld [vmem:[%s1 + $0x110] sm:$0xf]
  %v88 = vld [vmem:[%s1 + $0x114] sm:$0xf]
  %v89 = vld [vmem:[%s1 + $0x118] sm:$0xf]
  %v90 = vld [vmem:[%s1 + $0x11c] sm:$0xf]
  %v91 = vld [vmem:[%s1 + $0x120] sm:$0xf]
  %v92 = vld [vmem:[%s1 + $0x124] sm:$0xf]
  %v93 = vld [vmem:[%s1 + $0x128] sm:$0xf]
  %v94 = vld [vmem:[%s1 + $0x12c] sm:$0xf]
  %v95 = vld [vmem:[%s1 + $0x130] sm:$0xf]
  %v96 = vld [vmem:[%s1 + $0x134] sm:$0xf]
  %v97 = vld [vmem:[%s1 + $0x138] sm:$0xf]
  %v98 = vld [vmem:[%s1 + $0x13c] sm:$0xf]
  %v99 = vld [vmem:[%s1 + $0x140] sm:$0xf]
  %v100 = vld [vmem:[%s1 + $0x144] sm:$0xf]
  %v101 = vld [vmem:[%s1 + $0x148] sm:$0xf]
  %v102 = vld [vmem:[%s1 + $0x14c] sm:$0xf]
  %v103 = vld [vmem:[%s1 + $0x150] sm:$0xf]
  %v104 = vld [vmem:[%s1 + $0x154] sm:$0xf]
  %v105 = vld [vmem:[%s1 + $0x158] sm:$0xf]
  %v106 = vld [vmem:[%s1 + $0x15c] sm:$0xf]
  %v107 = vld [vmem:[%s1 + $0x160] sm:$0xf]
  %v108 = vld [vmem:[%s1 + $0x164] sm:$0xf]
  %v109 = vld [vmem:[%s1 + $0x168] sm:$0xf]
  %v110 = vld [vmem:[%s1 + $0x16c] sm:$0xf]
  %v111 = vld [vmem:[%s1 + $0x170] sm:$0xf]
  %v112 = vld [vmem:[%s1 + $0x174] sm:$0xf]
  %v113 = vld [vmem:[%s1 + $0x178] sm:$0xf]
  %v114 = vld [vmem:[%s1 + $0x17c] sm:$0xf]
  %v115 = vld [vmem:[%s1 + $0x180] sm:$0xf]
  %v116 = vld [vmem:[%s1 + $0x184] sm:$0xf]
  %v117 = vld [vmem:[%s1 + $0x188] sm:$0xf]
  %v118 = vld [vmem:[%s1 + $0x18c] sm:$0xf]
  %v119 = vld [vmem:[%s1 + $0x190] sm:$0xf]
  %v120 = vld [vmem:[%s1 + $0x194] sm:$0xf]
  %v121 = vld [vmem:[%s1 + $0x198] sm:$0xf]
  %v122 = vld [vmem:[%s1 + $0x19c] sm:$0xf]
  %v123 = vld [vmem:[%s1 + $0x1a0] sm:$0xf]
  %v124 = vld [vmem:[%s1 + $0x1a4] sm:$0xf]
  %v125 = vld [vmem:[%s1 + $0x1a8] sm:$0xf]
  %v126 = vld [vmem:[%s1 + $0x1ac] sm:$0xf]
  %v127 = vld [vmem:[%s1 + $0x1b0] sm:$0xf]
  %v128 = vld [vmem:[%s1 + $0x1b4] sm:$0xf]
  %v129 = vld [vmem:[%s1 + $0x1b8] sm:$0xf]
  %v130 = vld [vmem:[%s1 + $0x1bc] sm:$0xf]
  %v131 = vld [vmem:[%s1 + $0x1c0] sm:$0xf]
  %v132 = vld [vmem:[%s1 + $0x1c4] sm:$0xf]
  %v133 = vld [vmem:[%s1 + $0x1c8] sm:$0xf]
  %v134 = vld [vmem:[%s1 + $0x1cc] sm:$0xf]
  %v135 = vld [vmem:[%s1 + $0x1d0] sm:$0xf]
  %v136 = vld [vmem:[%s1 + $0x1d4] sm:$0xf]
  %v137 = vld [vmem:[%s1 + $0x1d8] sm:$0xf]
  %v138 = vld [vmem:[%s1 + $0x1dc] sm:$0xf]
  %v139 = vld [vmem:[%s1 + $0x1e0] sm:$0xf]
  %v140 = vld [vmem:[%s1 + $0x1e4] sm:$0xf]
  %v141 = vld [vmem:[%s1 + $0x1e8] sm:$0xf]
  %v142 = vld [vmem:[%s1 + $0x1ec] sm:$0xf]
  %v143 = vld [vmem:[%s1 + $0x1f0] sm:$0xf]
  %v144 = vld [vmem:[%s1 + $0x1f4] sm:$0xf]
  %v145 = vld [vmem:[%s1 + $0x1f8] sm:$0xf]
  %v146 = vld [vmem:[%s1 + $0x1fc] sm:$0xf]
  %v147 = vld [vmem:[%s1 + $0x200] sm:$0xf]
  %v148 = vld [vmem:[%s1 + $0x204] sm:$0xf]
  %v149 = vld [vmem:[%s1 + $0x208] sm:$0xf]
  %v150 = vld [vmem:[%s1 + $0x20c] sm:$0xf]
  %v151 = vld [vmem:[%s1 + $0x210] sm:$0xf]
  %v152 = vld [vmem:[%s1 + $0x214] sm:$0xf]
  %v153 = vld [vmem:[%s1 + $0x218] sm:$0xf]
  %v154 = vld [vmem:[%s1 + $0x21c] sm:$0xf]
  %v155 = vld [vmem:[%s1 + $0x220] sm:$0xf]
  %v156 = vld [vmem:[%s1 + $0x224] sm:$0xf]
  %v157 = vld [vmem:[%s1 + $0x228] sm:$0xf]
  %v158 = vld [vmem:[%s1 + $0x22c] sm:$0xf]
  %v159 = vld [vmem:[%s1 + $0x230] sm:$0xf]
  %v160 = vld [vmem:[%s1 + $0x234] sm:$0xf]
  %v161 = vld [vmem:[%s1 + $0x238] sm:$0xf]
  %v162 = vld [vmem:[%s1 + $0x23c] sm:$0xf]
  %v163 = vld [vmem:[%s1 + $0x240] sm:$0xf]
  %v164 = vld [vmem:[%s1 + $0x244] sm:$0xf]
  %v165 = vld [vmem:[%s1 + $0x248] sm:$0xf]
  %v166 = vld [vmem:[%s1 + $0x24c] sm:$0xf]
  %v167 = vld [vmem:[%s1 + $0x250] sm:$0xf]
  %v168 = vld [vmem:[%s1 + $0x254] sm:$0xf]
  %v169 = vld [vmem:[%s1 + $0x258] sm:$0xf]
  %v170 = vld [vmem:[%s1 + $0x25c] sm:$0xf]
  %v171 = vld [vmem:[%s1 + $0x260] sm:$0xf]
  %v172 = vld [vmem:[%s1 + $0x264] sm:$0xf]
  %v173 = vld [vmem:[%s1 + $0x268] sm:$0xf]
  %v174 = vld [vmem:[%s1 + $0x26c] sm:$0xf]
  %v175 = vld [vmem:[%s1 + $0x270] sm:$0xf]
  %v176 = vld [vmem:[%s1 + $0x274] sm:$0xf]
  %v177 = vld [vmem:[%s1 + $0x278] sm:$0xf]
  %v178 = vld [vmem:[%s1 + $0x27c] sm:$0xf]
  %v179 = vld [vmem:[%s1 + $0x280] sm:$0xf]
  %v180 = vld [vmem:[%s1 + $0x284] sm:$0xf]
  %v181 = vld [vmem:[%s1 + $0x288] sm:$0xf]
  %v182 = vld [vmem:[%s1 + $0x28c] sm:$0xf]
  %v183 = vld [vmem:[%s1 + $0x290] sm:$0xf]
  %v184 = vld [vmem:[%s1 + $0x294] sm:$0xf]
  %v185 = vld [vmem:[%s1 + $0x298] sm:$0xf]
  %v186 = vld [vmem:[%s1 + $0x29c] sm:$0xf]
  %v187 = vld [vmem:[%s1 + $0x2a0] sm:$0xf]
  %v188 = vld [vmem:[%s1 + $0x2a4] sm:$0xf]
  %v189 = vld [vmem:[%s1 + $0x2a8] sm:$0xf]
  %v190 = vld [vmem:[%s1 + $0x2ac] sm:$0xf]
  %v191 = vld [vmem:[%s1 + $0x2b0] sm:$0xf]
  %v192 = vld [vmem:[%s1 + $0x2b4] sm:$0xf]
  %v193 = vld [vmem:[%s1 + $0x2b8] sm:$0xf]
  %v194 = vld [vmem:[%s1 + $0x2bc] sm:$0xf]
  %v195 = vld [vmem:[%s1 + $0x2c0] sm:$0xf]
  %v196 = vld [vmem:[%s1 + $0x2c4] sm:$0xf]
  %v197 = vld [vmem:[%s1 + $0x2c8] sm:$0xf]
  %v198 = vld [vmem:[%s1 + $0x2cc] sm:$0xf]
  %v199 = vld [vmem:[%s1 + $0x2d0] sm:$0xf]
  %v200 = vld [vmem:[%s1 + $0x2d4] sm:$0xf]
  %v201 = vld [vmem:[%s1 + $0x2d8] sm:$0xf]
  %v202 = vld [vmem:[%s1 + $0x2dc] sm:$0xf]
  %v203 = vld [vmem:[%s1 + $0x2e0] sm:$0xf]
  %v204 = vld [vmem:[%s1 + $0x2e4] sm:$0xf]
  %v205 = vld [vmem:[%s1 + $0x2e8] sm:$0xf]
  %v206 = vld [vmem:[%s1 + $0x2ec] sm:$0xf]
  %v207 = vld [vmem:[%s1 + $0x2f0] sm:$0xf]
  %v208 = vld [vmem:[%s1 + $0x2f4] sm:$0xf]
  %v209 = vld [vmem:[%s1 + $0x2f8] sm:$0xf]
  %v210 = vld [vmem:[%s1 + $0x2fc] sm:$0xf]
  %v211 = vld [vmem:[%s1 + $0x300] sm:$0xf]
  %v212 = vld [vmem:[%s1 + $0x304] sm:$0xf]
  %v213 = vld [vmem:[%s1 + $0x308] sm:$0xf]
  %v214 = vld [vmem:[%s1 + $0x30c] sm:$0xf]
  %v215 = vld [vmem:[%s1 + $0x310] sm:$0xf]
  %v216 = vld [vmem:[%s1 + $0x314] sm:$0xf]
  %v217 = vld [vmem:[%s1 + $0x318] sm:$0xf]
  %v218 = vld [vmem:[%s1 + $0x31c] sm:$0xf]
  %v219 = vld [vmem:[%s1 + $0x320] sm:$0xf]
  %v220 = vld [vmem:[%s1 + $0x324] sm:$0xf]
  %v221 = vld [vmem:[%s1 + $0x328] sm:$0xf]
  %v222 = vld [vmem:[%s1 + $0x32c] sm:$0xf]
  %v223 = vld [vmem:[%s1 + $0x330] sm:$0xf]
  %v224 = vld [vmem:[%s1 + $0x334] sm:$0xf]
  %v225 = vld [vmem:[%s1 + $0x338] sm:$0xf]
  %v226 = vld [vmem:[%s1 + $0x33c] sm:$0xf]
  %v227 = vld [vmem:[%s1 + $0x340] sm:$0xf]
  %v228 = vld [vmem:[%s1 + $0x344] sm:$0xf]
  %v229 = vld [vmem:[%s1 + $0x348] sm:$0xf]
  %v230 = vld [vmem:[%s1 + $0x34c] sm:$0xf]
  %v231 = vld [vmem:[%s1 + $0x350] sm:$0xf]
  %v232 = vld [vmem:[%s1 + $0x354] sm:$0xf]
  %v233 = vld [vmem:[%s1 + $0x358] sm:$0xf]
  %v234 = vld [vmem:[%s1 + $0x35c] sm:$0xf]
  %v235 = vld [vmem:[%s1 + $0x360] sm:$0xf]
  %v236 = vld [vmem:[%s1 + $0x364] sm:$0xf]
  %v237 = vld [vmem:[%s1 + $0x368] sm:$0xf]
  %v238 = vld [vmem:[%s1 + $0x36c] sm:$0xf]
  %v239 = vld [vmem:[%s1 + $0x370] sm:$0xf]
  %v240 = vld [vmem:[%s1 + $0x374] sm:$0xf]
  %v241 = vld [vmem:[%s1 + $0x378] sm:$0xf]
  %v242 = vld [vmem:[%s1 + $0x37c] sm:$0xf]
  %v243 = vld [vmem:[%s1 + $0x380] sm:$0xf]
  %v244 = vld [vmem:[%s1 + $0x384] sm:$0xf]
  %v245 = vld [vmem:[%s1 + $0x388] sm:$0xf]
  %v246 = vld [vmem:[%s1 + $0x38c] sm:$0xf]
  %v247 = vld [vmem:[%s1 + $0x390] sm:$0xf]
  %v248 = vld [vmem:[%s1 + $0x394] sm:$0xf]
  %v249 = vld [vmem:[%s1 + $0x398] sm:$0xf]
  %v250 = vld [vmem:[%s1 + $0x39c] sm:$0xf]
  %v251 = vld [vmem:[%s1 + $0x3a0] sm:$0xf]
  %v252 = vld [vmem:[%s1 + $0x3a4] sm:$0xf]
  %v253 = vld [vmem:[%s1 + $0x3a8] sm:$0xf]
  %v254 = vld [vmem:[%s1 + $0x3ac] sm:$0xf]
  %v255 = vld [vmem:[%s1 + $0x3b0] sm:$0xf]
  %v256 = vld [vmem:[%s1 + $0x3b4] sm:$0xf]
  %v257 = vld [vmem:[%s1 + $0x3b8] sm:$0xf]
  %v258 = vld [vmem:[%s1 + $0x3bc] sm:$0xf]
  %v259 = vld [vmem:[%s1 + $0x3c0] sm:$0xf]
  %v260 = vld [vmem:[%s1 + $0x3c4] sm:$0xf]
  %v261 = vld [vmem:[%s1 + $0x3c8] sm:$0xf]
  %v262 = vld [vmem:[%s1 + $0x3cc] sm:$0xf]
  %v263 = vld [vmem:[%s1 + $0x3d0] sm:$0xf]
  %v264 = vld [vmem:[%s1 + $0x3d4] sm:$0xf]
  %v265 = vld [vmem:[%s1 + $0x3d8] sm:$0xf]
  %v266 = vld [vmem:[%s1 + $0x3dc] sm:$0xf]
  %v267 = vld [vmem:[%s1 + $0x3e0] sm:$0xf]
  %v268 = vld [vmem:[%s1 + $0x3e4] sm:$0xf]
  %v269 = vld [vmem:[%s1 + $0x3e8] sm:$0xf]
  %v270 = vld [vmem:[%s1 + $0x3ec] sm:$0xf]
  %v271 = vld [vmem:[%s1 + $0x3f0] sm:$0xf]
  %v272 = vld [vmem:[%s1 + $0x3f4] sm:$0xf]
  %v273 = vld [vmem:[%s1 + $0x3f8] sm:$0xf]
  %v274 = vld [vmem:[%s1 + $0x3fc] sm:$0xf]
  %v275 = vld [vmem:[%s1 + $0x400] sm:$0xf]
  %v276 = vld [vmem:[%s1 + $0x404] sm:$0xf]
  %v277 = vld [vmem:[%s1 + $0x408] sm:$0xf]
  %v278 = vld [vmem:[%s1 + $0x40c] sm:$0xf]
  %v279 = vld [vmem:[%s1 + $0x410] sm:$0xf]
  %v280 = vld [vmem:[%s1 + $0x414] sm:$0xf]
  %v281 = vld [vmem:[%s1 + $0x418] sm:$0xf]
  %v282 = vld [vmem:[%s1 + $0x41c] sm:$0xf]
  %v283 = vld [vmem:[%s1 + $0x420] sm:$0xf]
  %v284 = vld [vmem:[%s1 + $0x424] sm:$0xf]
  %v285 = vld [vmem:[%s1 + $0x428] sm:$0xf]
  %v286 = vld [vmem:[%s1 + $0x42c] sm:$0xf]
  %v287 = vld [vmem:[%s1 + $0x430] sm:$0xf]
  %v288 = vld [vmem:[%s1 + $0x434] sm:$0xf]
  %v289 = vld [vmem:[%s1 + $0x438] sm:$0xf]
  %v290 = vld [vmem:[%s1 + $0x43c] sm:$0xf]
  %v291 = vld [vmem:[%s1 + $0x440] sm:$0xf]
  %v292 = vld [vmem:[%s1 + $0x444] sm:$0xf]
  %v293 = vld [vmem:[%s1 + $0x448] sm:$0xf]
  %v294 = vld [vmem:[%s1 + $0x44c] sm:$0xf]
  %v295 = vld [vmem:[%s1 + $0x450] sm:$0xf]
  %v296 = vld [vmem:[%s1 + $0x454] sm:$0xf]
  %v297 = vld [vmem:[%s1 + $0x458] sm:$0xf]
  %v298 = vld [vmem:[%s1 + $0x45c] sm:$0xf]
  %v299 = vld [vmem:[%s1 + $0x460] sm:$0xf]
  %v300 = vld [vmem:[%s1 + $0x464] sm:$0xf]
  %v301 = vld [vmem:[%s1 + $0x468] sm:$0xf]
  %v302 = vld [vmem:[%s1 + $0x46c] sm:$0xf]
  %v303 = vld [vmem:[%s1 + $0x470] sm:$0xf]
  %v304 = vld [vmem:[%s1 + $0x474] sm:$0xf]
  %v305 = vld [vmem:[%s1 + $0x478] sm:$0xf]
  %v306 = vld [vmem:[%s1 + $0x47c] sm:$0xf]
  %v307 = vld [vmem:[%s1 + $0x480] sm:$0xf]
  %v308 = vld [vmem:[%s1 + $0x484] sm:$0xf]
  %v309 = vld [vmem:[%s1 + $0x488] sm:$0xf]
  %v310 = vld [vmem:[%s1 + $0x48c] sm:$0xf]
  %v311 = vld [vmem:[%s1 + $0x490] sm:$0xf]
  %v312 = vld [vmem:[%s1 + $0x494] sm:$0xf]
  %v313 = vld [vmem:[%s1 + $0x498] sm:$0xf]
  %v314 = vld [vmem:[%s1 + $0x49c] sm:$0xf]
  %v315 = vld [vmem:[%s1 + $0x4a0] sm:$0xf]
  %v316 = vld [vmem:[%s1 + $0x4a4] sm:$0xf]
  %v317 = vld [vmem:[%s1 + $0x4a8] sm:$0xf]
  %v318 = vld [vmem:[%s1 + $0x4ac] sm:$0xf]
  %v319 = vld [vmem:[%s1 + $0x4b0] sm:$0xf]
  %v320 = vld [vmem:[%s1 + $0x4b4] sm:$0xf]
  %v321 = vld [vmem:[%s1 + $0x4b8] sm:$0xf]
  %v322 = vld [vmem:[%s1 + $0x4bc] sm:$0xf]
  %v323 = vld [vmem:[%s1 + $0x4c0] sm:$0xf]
  %v324 = vld [vmem:[%s1 + $0x4c4] sm:$0xf]
  %v325 = vld [vmem:[%s1 + $0x4c8] sm:$0xf]
  %v326 = vld [vmem:[%s1 + $0x4cc] sm:$0xf]
  %v327 = vld [vmem:[%s1 + $0x4d0] sm:$0xf]
  %v328 = vld [vmem:[%s1 + $0x4d4] sm:$0xf]
  %v329 = vld [vmem:[%s1 + $0x4d8] sm:$0xf]
  %v330 = vld [vmem:[%s1 + $0x4dc] sm:$0xf]
  %v331 = vld [vmem:[%s1 + $0x4e0] sm:$0xf]
  %v332 = vld [vmem:[%s1 + $0x4e4] sm:$0xf]
  %v333 = vld [vmem:[%s1 + $0x4e8] sm:$0xf]
  %v334 = vld [vmem:[%s1 + $0x4ec] sm:$0xf]
  %v335 = vld [vmem:[%s1 + $0x4f0] sm:$0xf]
  %v336 = vld [vmem:[%s1 + $0x4f4] sm:$0xf]
  %v337 = vld [vmem:[%s1 + $0x4f8] sm:$0xf]
  %v338 = vld [vmem:[%s1 + $0x4fc] sm:$0xf]
  %v339 = vld [vmem:[%s1 + $0x500] sm:$0xf]
  %v340 = vld [vmem:[%s1 + $0x504] sm:$0xf]
  %v341 = vld [vmem:[%s1 + $0x508] sm:$0xf]
  %v342 = vld [vmem:[%s1 + $0x50c] sm:$0xf]
  %v343 = vld [vmem:[%s1 + $0x510] sm:$0xf]
  %v344 = vld [vmem:[%s1 + $0x514] sm:$0xf]
  %v345 = vld [vmem:[%s1 + $0x518] sm:$0xf]
  %v346 = vld [vmem:[%s1 + $0x51c] sm:$0xf]
  %v347 = vld [vmem:[%s1 + $0x520] sm:$0xf]
  %v348 = vld [vmem:[%s1 + $0x524] sm:$0xf]
  %v349 = vld [vmem:[%s1 + $0x528] sm:$0xf]
  %v350 = vld [vmem:[%s1 + $0x52c] sm:$0xf]
  %v351 = vld [vmem:[%s1 + $0x530] sm:$0xf]
  %v352 = vld [vmem:[%s1 + $0x534] sm:$0xf]
  %v353 = vld [vmem:[%s1 + $0x538] sm:$0xf]
  %v354 = vld [vmem:[%s1 + $0x53c] sm:$0xf]
  %v355 = vld [vmem:[%s1 + $0x540] sm:$0xf]
  %v356 = vld [vmem:[%s1 + $0x544] sm:$0xf]
  %v357 = vld [vmem:[%s1 + $0x548] sm:$0xf]
  %v358 = vld [vmem:[%s1 + $0x54c] sm:$0xf]
  %v359 = vld [vmem:[%s1 + $0x550] sm:$0xf]
  %v360 = vld [vmem:[%s1 + $0x554] sm:$0xf]
  %v361 = vld [vmem:[%s1 + $0x558] sm:$0xf]
  %v362 = vld [vmem:[%s1 + $0x55c] sm:$0xf]
  %v363 = vld [vmem:[%s1 + $0x560] sm:$0xf]
  %v364 = vld [vmem:[%s1 + $0x564] sm:$0xf]
  %v365 = vld [vmem:[%s1 + $0x568] sm:$0xf]
  %v366 = vld [vmem:[%s1 + $0x56c] sm:$0xf]
  %v367 = vld [vmem:[%s1 + $0x570] sm:$0xf]
  %v368 = vld [vmem:[%s1 + $0x574] sm:$0xf]
  %v369 = vld [vmem:[%s1 + $0x578] sm:$0xf]
  %v370 = vld [vmem:[%s1 + $0x57c] sm:$0xf]
  %v371 = vld [vmem:[%s1 + $0x580] sm:$0xf]
  %v372 = vld [vmem:[%s1 + $0x584] sm:$0xf]
  %v373 = vld [vmem:[%s1 + $0x588] sm:$0xf]
  %v374 = vld [vmem:[%s1 + $0x58c] sm:$0xf]
  %v375 = vld [vmem:[%s1 + $0x590] sm:$0xf]
  %v376 = vld [vmem:[%s1 + $0x594] sm:$0xf]
  %v377 = vld [vmem:[%s1 + $0x598] sm:$0xf]
  %v378 = vld [vmem:[%s1 + $0x59c] sm:$0xf]
  %v379 = vld [vmem:[%s1 + $0x5a0] sm:$0xf]
  %v380 = vld [vmem:[%s1 + $0x5a4] sm:$0xf]
  %v381 = vld [vmem:[%s1 + $0x5a8] sm:$0xf]
  %v382 = vld [vmem:[%s1 + $0x5ac] sm:$0xf]
  %v383 = vld [vmem:[%s1 + $0x5b0] sm:$0xf]
  %v384 = vld [vmem:[%s1 + $0x5b4] sm:$0xf]
  %v385 = vld [vmem:[%s1 + $0x5b8] sm:$0xf]
  %v386 = vld [vmem:[%s1 + $0x5bc] sm:$0xf]
  %v387 = vld [vmem:[%s1 + $0x5c0] sm:$0xf]
  %v388 = vld [vmem:[%s1 + $0x5c4] sm:$0xf]
  %v389 = vld [vmem:[%s1 + $0x5c8] sm:$0xf]
  %v390 = vld [vmem:[%s1 + $0x5cc] sm:$0xf]
  %v391 = vld [vmem:[%s1 + $0x5d0] sm:$0xf]
  %v392 = vld [vmem:[%s1 + $0x5d4] sm:$0xf]
  %v393 = vld [vmem:[%s1 + $0x5d8] sm:$0xf]
  %v394 = vld [vmem:[%s1 + $0x5dc] sm:$0xf]
  %v395 = vld [vmem:[%s1 + $0x5e0] sm:$0xf]
  %v396 = vld [vmem:[%s1 + $0x5e4] sm:$0xf]
  %v397 = vld [vmem:[%s1 + $0x5e8] sm:$0xf]
  %v398 = vld [vmem:[%s1 + $0x5ec] sm:$0xf]
  %v399 = vld [vmem:[%s1 + $0x5f0] sm:$0xf]
  %v400 = vld [vmem:[%s1 + $0x5f4] sm:$0xf]
  %v401 = vld [vmem:[%s1 + $0x5f8] sm:$0xf]
  %v402 = vld [vmem:[%s1 + $0x5fc] sm:$0xf]
  %v403 = vld [vmem:[%s1 + $0x600] sm:$0xf]
  %v404 = vld [vmem:[%s1 + $0x604] sm:$0xf]
  %v405 = vld [vmem:[%s1 + $0x608] sm:$0xf]
  %v406 = vld [vmem:[%s1 + $0x60c] sm:$0xf]
  %v407 = vld [vmem:[%s1 + $0x610] sm:$0xf]
  %v408 = vld [vmem:[%s1 + $0x614] sm:$0xf]
  %v409 = vld [vmem:[%s1 + $0x618] sm:$0xf]
  %v410 = vld [vmem:[%s1 + $0x61c] sm:$0xf]
  %v411 = vld [vmem:[%s1 + $0x620] sm:$0xf]
  %v412 = vld [vmem:[%s1 + $0x624] sm:$0xf]
  %v413 = vld [vmem:[%s1 + $0x628] sm:$0xf]
  %v414 = vld [vmem:[%s1 + $0x62c] sm:$0xf]
  %v415 = vld [vmem:[%s1 + $0x630] sm:$0xf]
  %v416 = vld [vmem:[%s1 + $0x634] sm:$0xf]
  %v417 = vld [vmem:[%s1 + $0x638] sm:$0xf]
  %v418 = vld [vmem:[%s1 + $0x63c] sm:$0xf]
  %v419 = vld [vmem:[%s1 + $0x640] sm:$0xf]
  %v420 = vld [vmem:[%s1 + $0x644] sm:$0xf]
  %v421 = vld [vmem:[%s1 + $0x648] sm:$0xf]
  %v422 = vld [vmem:[%s1 + $0x64c] sm:$0xf]
  %v423 = vld [vmem:[%s1 + $0x650] sm:$0xf]
  %v424 = vld [vmem:[%s1 + $0x654] sm:$0xf]
  %v425 = vld [vmem:[%s1 + $0x658] sm:$0xf]
  %v426 = vld [vmem:[%s1 + $0x65c] sm:$0xf]
  %v427 = vld [vmem:[%s1 + $0x660] sm:$0xf]
  %v428 = vld [vmem:[%s1 + $0x664] sm:$0xf]
  %v429 = vld [vmem:[%s1 + $0x668] sm:$0xf]
  %v430 = vld [vmem:[%s1 + $0x66c] sm:$0xf]
  %v431 = vld [vmem:[%s1 + $0x670] sm:$0xf]
  %v432 = vld [vmem:[%s1 + $0x674] sm:$0xf]
  %v433 = vld [vmem:[%s1 + $0x678] sm:$0xf]
  %v434 = vld [vmem:[%s1 + $0x67c] sm:$0xf]
  %v435 = vld [vmem:[%s1 + $0x680] sm:$0xf]
  %v436 = vld [vmem:[%s1 + $0x684] sm:$0xf]
  %v437 = vld [vmem:[%s1 + $0x688] sm:$0xf]
  %v438 = vld [vmem:[%s1 + $0x68c] sm:$0xf]
  %v439 = vld [vmem:[%s1 + $0x690] sm:$0xf]
  %v440 = vld [vmem:[%s1 + $0x694] sm:$0xf]
  %v441 = vld [vmem:[%s1 + $0x698] sm:$0xf]
  %v442 = vld [vmem:[%s1 + $0x69c] sm:$0xf]
  %v443 = vld [vmem:[%s1 + $0x6a0] sm:$0xf]
  %v444 = vld [vmem:[%s1 + $0x6a4] sm:$0xf]
  %v445 = vld [vmem:[%s1 + $0x6a8] sm:$0xf]
  %v446 = vld [vmem:[%s1 + $0x6ac] sm:$0xf]
  %v447 = vld [vmem:[%s1 + $0x6b0] sm:$0xf]
  %v448 = vld [vmem:[%s1 + $0x6b4] sm:$0xf]
  %v449 = vld [vmem:[%s1 + $0x6b8] sm:$0xf]
  %v450 = vld [vmem:[%s1 + $0x6bc] sm:$0xf]
  %v451 = vld [vmem:[%s1 + $0x6c0] sm:$0xf]
  %v452 = vld [vmem:[%s1 + $0x6c4] sm:$0xf]
  %v453 = vld [vmem:[%s1 + $0x6c8] sm:$0xf]
  %v454 = vld [vmem:[%s1 + $0x6cc] sm:$0xf]
  %v455 = vld [vmem:[%s1 + $0x6d0] sm:$0xf]
  %v456 = vld [vmem:[%s1 + $0x6d4] sm:$0xf]
  %v457 = vld [vmem:[%s1 + $0x6d8] sm:$0xf]
  %v458 = vld [vmem:[%s1 + $0x6dc] sm:$0xf]
  %v459 = vld [vmem:[%s1 + $0x6e0] sm:$0xf]
  %v460 = vld [vmem:[%s1 + $0x6e4] sm:$0xf]
  %v461 = vld [vmem:[%s1 + $0x6e8] sm:$0xf]
  %v462 = vld [vmem:[%s1 + $0x6ec] sm:$0xf]
  %v463 = vld [vmem:[%s1 + $0x6f0] sm:$0xf]
  %v464 = vld [vmem:[%s1 + $0x6f4] sm:$0xf]
  %v465 = vld [vmem:[%s1 + $0x6f8] sm:$0xf]
  %v466 = vld [vmem:[%s1 + $0x6fc] sm:$0xf]
  %v467 = vld [vmem:[%s1 + $0x700] sm:$0xf]
  %v468 = vld [vmem:[%s1 + $0x704] sm:$0xf]
  %v469 = vld [vmem:[%s1 + $0x708] sm:$0xf]
  %v470 = vld [vmem:[%s1 + $0x70c] sm:$0xf]
  %v471 = vld [vmem:[%s1 + $0x710] sm:$0xf]
  %v472 = vld [vmem:[%s1 + $0x714] sm:$0xf]
  %v473 = vld [vmem:[%s1 + $0x718] sm:$0xf]
  %v474 = vld [vmem:[%s1 + $0x71c] sm:$0xf]
  %v475 = vld [vmem:[%s1 + $0x720] sm:$0xf]
  %v476 = vld [vmem:[%s1 + $0x724] sm:$0xf]
  %v477 = vld [vmem:[%s1 + $0x728] sm:$0xf]
  %v478 = vld [vmem:[%s1 + $0x72c] sm:$0xf]
  %v479 = vld [vmem:[%s1 + $0x730] sm:$0xf]
  %v480 = vld [vmem:[%s1 + $0x734] sm:$0xf]
  %v481 = vld [vmem:[%s1 + $0x738] sm:$0xf]
  %v482 = vld [vmem:[%s1 + $0x73c] sm:$0xf]
  %v483 = vld [vmem:[%s1 + $0x740] sm:$0xf]
  %v484 = vld [vmem:[%s1 + $0x744] sm:$0xf]
  %v485 = vld [vmem:[%s1 + $0x748] sm:$0xf]
  %v486 = vld [vmem:[%s1 + $0x74c] sm:$0xf]
  %v487 = vld [vmem:[%s1 + $0x750] sm:$0xf]
  %v488 = vld [vmem:[%s1 + $0x754] sm:$0xf]
  %v489 = vld [vmem:[%s1 + $0x758] sm:$0xf]
  %v490 = vld [vmem:[%s1 + $0x75c] sm:$0xf]
  %v491 = vld [vmem:[%s1 + $0x760] sm:$0xf]
  %v492 = vld [vmem:[%s1 + $0x764] sm:$0xf]
  %v493 = vld [vmem:[%s1 + $0x768] sm:$0xf]
  %v494 = vld [vmem:[%s1 + $0x76c] sm:$0xf]
  %v495 = vld [vmem:[%s1 + $0x770] sm:$0xf]
  %v496 = vld [vmem:[%s1 + $0x774] sm:$0xf]
  %v497 = vld [vmem:[%s1 + $0x778] sm:$0xf]
  %v498 = vld [vmem:[%s1 + $0x77c] sm:$0xf]
  %v499 = vld [vmem:[%s1 + $0x780] sm:$0xf]
  %v500 = vld [vmem:[%s1 + $0x784] sm:$0xf]
  %v501 = vld [vmem:[%s1 + $0x788] sm:$0xf]
  %v502 = vld [vmem:[%s1 + $0x78c] sm:$0xf]
  %v503 = vld [vmem:[%s1 + $0x790] sm:$0xf]
  %v504 = vld [vmem:[%s1 + $0x794] sm:$0xf]
  %v505 = vld [vmem:[%s1 + $0x798] sm:$0xf]
  %v506 = vld [vmem:[%s1 + $0x79c] sm:$0xf]
  %v507 = vld [vmem:[%s1 + $0x7a0] sm:$0xf]
  %v508 = vld [vmem:[%s1 + $0x7a4] sm:$0xf]
  %v509 = vld [vmem:[%s1 + $0x7a8] sm:$0xf]
  %v510 = vld [vmem:[%s1 + $0x7ac] sm:$0xf]
  %v511 = vld [vmem:[%s1 + $0x7b0] sm:$0xf]
  %v512 = vld [vmem:[%s1 + $0x7b4] sm:$0xf]
  %v513 = vld [vmem:[%s1 + $0x7b8] sm:$0xf]
  %v514 = vld [vmem:[%s1 + $0x7bc] sm:$0xf]
  %v515 = vld [vmem:[%s1 + $0x7c0] sm:$0xf]
  %v516 = vld [vmem:[%s1 + $0x7c4] sm:$0xf]
  %v517 = vld [vmem:[%s1 + $0x7c8] sm:$0xf]
  %v518 = vld [vmem:[%s1 + $0x7cc] sm:$0xf]
  %v519 = vld [vmem:[%s1 + $0x7d0] sm:$0xf]
  %v520 = vld [vmem:[%s1 + $0x7d4] sm:$0xf]
  %v521 = vld [vmem:[%s1 + $0x7d8] sm:$0xf]
  %v522 = vld [vmem:[%s1 + $0x7dc] sm:$0xf]
  %v523 = vld [vmem:[%s1 + $0x7e0] sm:$0xf]
  %v524 = vld [vmem:[%s1 + $0x7e4] sm:$0xf]
  %v525 = vld [vmem:[%s1 + $0x7e8] sm:$0xf]
  %v526 = vld [vmem:[%s1 + $0x7ec] sm:$0xf]
  %v527 = vld [vmem:[%s1 + $0x7f0] sm:$0xf]
  %v528 = vld [vmem:[%s1 + $0x7f4] sm:$0xf]
  %v529 = vld [vmem:[%s1 + $0x7f8] sm:$0xf]
  %v530 = vld [vmem:[%s1 + $0x7fc] sm:$0xf]
  %v531 = vld [vmem:[%s2] sm:$0x1]
  %v533 = vlaneseq
  %v534 = vshrl.u32 %v533, 7
  %v535 = vsub.s32 0, %v534
  %v536 = vrot.slane %v531, %v535
  %v542 = vcombine.high %v15, %v15
  %v544 = vunpack.c.l.s4 1966171168
  %v545 = vunpack.c.0.s8 %v544
  %v546 = vlaneseq
  %v547 = vshrl.u32 %v546, 7
  %v548 = vsub.s32 %v545, %v547
  %v549 = vrot.slane %v15, %v548
  %v551 = vunpack.c.l.s4 1966171168
  %v552 = vunpack.c.0.s8 %v551
  %v553 = vlaneseq
  %v554 = vshrl.u32 %v553, 7
  %v555 = vsub.s32 %v552, %v554
  %v556 = vrot.slane %v542, %v555
  %v557 = vcombine.high %v549, %v549
  %v558 = vcombine.high %v556, %v556
  %v560 = vunpack.c.l.s4 1966171168
  %v561 = vunpack.c.0.s8 %v560
  %v562 = vlaneseq
  %v563 = vshrl.u32 %v562, 7
  %v564 = vsub.s32 %v561, %v563
  %v565 = vrot.slane %v549, %v564
  %v567 = vunpack.c.l.s4 1966171168
  %v568 = vunpack.c.0.s8 %v567
  %v569 = vlaneseq
  %v570 = vshrl.u32 %v569, 7
  %v571 = vsub.s32 %v568, %v570
  %v572 = vrot.slane %v556, %v571
  %v574 = vunpack.c.l.s4 1966171168
  %v575 = vunpack.c.0.s8 %v574
  %v576 = vlaneseq
  %v577 = vshrl.u32 %v576, 7
  %v578 = vsub.s32 %v575, %v577
  %v579 = vrot.slane %v557, %v578
  %v581 = vunpack.c.l.s4 1966171168
  %v582 = vunpack.c.0.s8 %v581
  %v583 = vlaneseq
  %v584 = vshrl.u32 %v583, 7
  %v585 = vsub.s32 %v582, %v584
  %v586 = vrot.slane %v558, %v585
  %v587 = vcombine.high %v565, %v565
  %v588 = vcombine.high %v572, %v572
  %v589 = vcombine.high %v579, %v579
  %v590 = vcombine.high %v586, %v586
  %v591 = vcombine.high %v16, %v16
  %v593 = vunpack.c.l.s4 1966171168
  %v594 = vunpack.c.0.s8 %v593
  %v595 = vlaneseq
  %v596 = vshrl.u32 %v595, 7
  %v597 = vsub.s32 %v594, %v596
  %v598 = vrot.slane %v16, %v597
  %v600 = vunpack.c.l.s4 1966171168
  %v601 = vunpack.c.0.s8 %v600
  %v602 = vlaneseq
  %v603 = vshrl.u32 %v602, 7
  %v604 = vsub.s32 %v601, %v603
  %v605 = vrot.slane %v591, %v604
  %v606 = vcombine.high %v598, %v598
  %v607 = vcombine.high %v605, %v605
  %v609 = vunpack.c.l.s4 1966171168
  %v610 = vunpack.c.0.s8 %v609
  %v611 = vlaneseq
  %v612 = vshrl.u32 %v611, 7
  %v613 = vsub.s32 %v610, %v612
  %v614 = vrot.slane %v598, %v613
  %v616 = vunpack.c.l.s4 1966171168
  %v617 = vunpack.c.0.s8 %v616
  %v618 = vlaneseq
  %v619 = vshrl.u32 %v618, 7
  %v620 = vsub.s32 %v617, %v619
  %v621 = vrot.slane %v605, %v620
  %v623 = vunpack.c.l.s4 1966171168
  %v624 = vunpack.c.0.s8 %v623
  %v625 = vlaneseq
  %v626 = vshrl.u32 %v625, 7
  %v627 = vsub.s32 %v624, %v626
  %v628 = vrot.slane %v606, %v627
  %v630 = vunpack.c.l.s4 1966171168
  %v631 = vunpack.c.0.s8 %v630
  %v632 = vlaneseq
  %v633 = vshrl.u32 %v632, 7
  %v634 = vsub.s32 %v631, %v633
  %v635 = vrot.slane %v607, %v634
  %v636 = vcombine.high %v614, %v614
  %v637 = vcombine.high %v621, %v621
  %v638 = vcombine.high %v628, %v628
  %v639 = vcombine.high %v635, %v635
  %v640 = vcombine.high %v17, %v17
  %v642 = vunpack.c.l.s4 1966171168
  %v643 = vunpack.c.0.s8 %v642
  %v644 = vlaneseq
  %v645 = vshrl.u32 %v644, 7
  %v646 = vsub.s32 %v643, %v645
  %v647 = vrot.slane %v17, %v646
  %v649 = vunpack.c.l.s4 1966171168
  %v650 = vunpack.c.0.s8 %v649
  %v651 = vlaneseq
  %v652 = vshrl.u32 %v651, 7
  %v653 = vsub.s32 %v650, %v652
  %v654 = vrot.slane %v640, %v653
  %v655 = vcombine.high %v647, %v647
  %v656 = vcombine.high %v654, %v654
  %v658 = vunpack.c.l.s4 1966171168
  %v659 = vunpack.c.0.s8 %v658
  %v660 = vlaneseq
  %v661 = vshrl.u32 %v660, 7
  %v662 = vsub.s32 %v659, %v661
  %v663 = vrot.slane %v647, %v662
  %v665 = vunpack.c.l.s4 1966171168
  %v666 = vunpack.c.0.s8 %v665
  %v667 = vlaneseq
  %v668 = vshrl.u32 %v667, 7
  %v669 = vsub.s32 %v666, %v668
  %v670 = vrot.slane %v654, %v669
  %v672 = vunpack.c.l.s4 1966171168
  %v673 = vunpack.c.0.s8 %v672
  %v674 = vlaneseq
  %v675 = vshrl.u32 %v674, 7
  %v676 = vsub.s32 %v673, %v675
  %v677 = vrot.slane %v655, %v676
  %v679 = vunpack.c.l.s4 1966171168
  %v680 = vunpack.c.0.s8 %v679
  %v681 = vlaneseq
  %v682 = vshrl.u32 %v681, 7
  %v683 = vsub.s32 %v680, %v682
  %v684 = vrot.slane %v656, %v683
  %v685 = vcombine.high %v663, %v663
  %v686 = vcombine.high %v670, %v670
  %v687 = vcombine.high %v677, %v677
  %v688 = vcombine.high %v684, %v684
  %v689 = vcombine.high %v18, %v18
  %v691 = vunpack.c.l.s4 1966171168
  %v692 = vunpack.c.0.s8 %v691
  %v693 = vlaneseq
  %v694 = vshrl.u32 %v693, 7
  %v695 = vsub.s32 %v692, %v694
  %v696 = vrot.slane %v18, %v695
  %v698 = vunpack.c.l.s4 1966171168
  %v699 = vunpack.c.0.s8 %v698
  %v700 = vlaneseq
  %v701 = vshrl.u32 %v700, 7
  %v702 = vsub.s32 %v699, %v701
  %v703 = vrot.slane %v689, %v702
  %v704 = vcombine.high %v696, %v696
  %v705 = vcombine.high %v703, %v703
  %v707 = vunpack.c.l.s4 1966171168
  %v708 = vunpack.c.0.s8 %v707
  %v709 = vlaneseq
  %v710 = vshrl.u32 %v709, 7
  %v711 = vsub.s32 %v708, %v710
  %v712 = vrot.slane %v696, %v711
  %v714 = vunpack.c.l.s4 1966171168
  %v715 = vunpack.c.0.s8 %v714
  %v716 = vlaneseq
  %v717 = vshrl.u32 %v716, 7
  %v718 = vsub.s32 %v715, %v717
  %v719 = vrot.slane %v703, %v718
  %v721 = vunpack.c.l.s4 1966171168
  %v722 = vunpack.c.0.s8 %v721
  %v723 = vlaneseq
  %v724 = vshrl.u32 %v723, 7
  %v725 = vsub.s32 %v722, %v724
  %v726 = vrot.slane %v704, %v725
  %v728 = vunpack.c.l.s4 1966171168
  %v729 = vunpack.c.0.s8 %v728
  %v730 = vlaneseq
  %v731 = vshrl.u32 %v730, 7
  %v732 = vsub.s32 %v729, %v731
  %v733 = vrot.slane %v705, %v732
  %v734 = vcombine.high %v712, %v712
  %v735 = vcombine.high %v719, %v719
  %v736 = vcombine.high %v726, %v726
  %v737 = vcombine.high %v733, %v733
  %v1282 = vunpack.c.l.b16 %v19
  %v1283 = vunpack.c.l.b16 %v20
  %v1284 = vunpack.c.l.b16 %v21
  %v1285 = vunpack.c.l.b16 %v22
  %v1286 = vunpack.c.l.b16 %v23
  %v1287 = vunpack.c.l.b16 %v24
  %v1288 = vunpack.c.l.b16 %v25
  %v1289 = vunpack.c.l.b16 %v26
  %v1290 = vunpack.c.l.b16 %v27
  %v1291 = vunpack.c.l.b16 %v28
  %v1292 = vunpack.c.l.b16 %v29
  %v1293 = vunpack.c.l.b16 %v30
  %v1294 = vunpack.c.l.b16 %v31
  %v1295 = vunpack.c.l.b16 %v32
  %v1296 = vunpack.c.l.b16 %v33
  %v1297 = vunpack.c.l.b16 %v34
  %v1298 = vunpack.c.l.b16 %v35
  %v1299 = vunpack.c.l.b16 %v36
  %v1300 = vunpack.c.l.b16 %v37
  %v1301 = vunpack.c.l.b16 %v38
  %v1302 = vunpack.c.l.b16 %v39
  %v1303 = vunpack.c.l.b16 %v40
  %v1304 = vunpack.c.l.b16 %v41
  %v1305 = vunpack.c.l.b16 %v42
  %v1306 = vunpack.c.l.b16 %v43
  %v1307 = vunpack.c.l.b16 %v44
  %v1308 = vunpack.c.l.b16 %v45
  %v1309 = vunpack.c.l.b16 %v46
  %v1310 = vunpack.c.l.b16 %v47
  %v1311 = vunpack.c.l.b16 %v48
  %v1312 = vunpack.c.l.b16 %v49
  %v1313 = vunpack.c.l.b16 %v50
  %v1314 = vunpack.c.l.b16 %v51
  %v1315 = vunpack.c.l.b16 %v52
  %v1316 = vunpack.c.l.b16 %v53
  %v1317 = vunpack.c.l.b16 %v54
  %v1318 = vunpack.c.l.b16 %v55
  %v1319 = vunpack.c.l.b16 %v56
  %v1320 = vunpack.c.l.b16 %v57
  %v1321 = vunpack.c.l.b16 %v58
  %v1322 = vunpack.c.l.b16 %v59
  %v1323 = vunpack.c.l.b16 %v60
  %v1324 = vunpack.c.l.b16 %v61
  %v1325 = vunpack.c.l.b16 %v62
  %v1326 = vunpack.c.l.b16 %v63
  %v1327 = vunpack.c.l.b16 %v64
  %v1328 = vunpack.c.l.b16 %v65
  %v1329 = vunpack.c.l.b16 %v66
  %v1330 = vunpack.c.l.b16 %v67
  %v1331 = vunpack.c.l.b16 %v68
  %v1332 = vunpack.c.l.b16 %v69
  %v1333 = vunpack.c.l.b16 %v70
  %v1334 = vunpack.c.l.b16 %v71
  %v1335 = vunpack.c.l.b16 %v72
  %v1336 = vunpack.c.l.b16 %v73
  %v1337 = vunpack.c.l.b16 %v74
  %v1338 = vunpack.c.l.b16 %v75
  %v1339 = vunpack.c.l.b16 %v76
  %v1340 = vunpack.c.l.b16 %v77
  %v1341 = vunpack.c.l.b16 %v78
  %v1342 = vunpack.c.l.b16 %v79
  %v1343 = vunpack.c.l.b16 %v80
  %v1344 = vunpack.c.l.b16 %v81
  %v1345 = vunpack.c.l.b16 %v82
  %v1346 = vunpack.c.l.b16 %v83
  %v1347 = vunpack.c.l.b16 %v84
  %v1348 = vunpack.c.l.b16 %v85
  %v1349 = vunpack.c.l.b16 %v86
  %v1350 = vunpack.c.l.b16 %v87
  %v1351 = vunpack.c.l.b16 %v88
  %v1352 = vunpack.c.l.b16 %v89
  %v1353 = vunpack.c.l.b16 %v90
  %v1354 = vunpack.c.l.b16 %v91
  %v1355 = vunpack.c.l.b16 %v92
  %v1356 = vunpack.c.l.b16 %v93
  %v1357 = vunpack.c.l.b16 %v94
  %v1358 = vunpack.c.l.b16 %v95
  %v1359 = vunpack.c.l.b16 %v96
  %v1360 = vunpack.c.l.b16 %v97
  %v1361 = vunpack.c.l.b16 %v98
  %v1362 = vunpack.c.l.b16 %v99
  %v1363 = vunpack.c.l.b16 %v100
  %v1364 = vunpack.c.l.b16 %v101
  %v1365 = vunpack.c.l.b16 %v102
  %v1366 = vunpack.c.l.b16 %v103
  %v1367 = vunpack.c.l.b16 %v104
  %v1368 = vunpack.c.l.b16 %v105
  %v1369 = vunpack.c.l.b16 %v106
  %v1370 = vunpack.c.l.b16 %v107
  %v1371 = vunpack.c.l.b16 %v108
  %v1372 = vunpack.c.l.b16 %v109
  %v1373 = vunpack.c.l.b16 %v110
  %v1374 = vunpack.c.l.b16 %v111
  %v1375 = vunpack.c.l.b16 %v112
  %v1376 = vunpack.c.l.b16 %v113
  %v1377 = vunpack.c.l.b16 %v114
  %v1378 = vunpack.c.l.b16 %v115
  %v1379 = vunpack.c.l.b16 %v116
  %v1380 = vunpack.c.l.b16 %v117
  %v1381 = vunpack.c.l.b16 %v118
  %v1382 = vunpack.c.l.b16 %v119
  %v1383 = vunpack.c.l.b16 %v120
  %v1384 = vunpack.c.l.b16 %v121
  %v1385 = vunpack.c.l.b16 %v122
  %v1386 = vunpack.c.l.b16 %v123
  %v1387 = vunpack.c.l.b16 %v124
  %v1388 = vunpack.c.l.b16 %v125
  %v1389 = vunpack.c.l.b16 %v126
  %v1390 = vunpack.c.l.b16 %v127
  %v1391 = vunpack.c.l.b16 %v128
  %v1392 = vunpack.c.l.b16 %v129
  %v1393 = vunpack.c.l.b16 %v130
  %v1394 = vunpack.c.l.b16 %v131
  %v1395 = vunpack.c.l.b16 %v132
  %v1396 = vunpack.c.l.b16 %v133
  %v1397 = vunpack.c.l.b16 %v134
  %v1398 = vunpack.c.l.b16 %v135
  %v1399 = vunpack.c.l.b16 %v136
  %v1400 = vunpack.c.l.b16 %v137
  %v1401 = vunpack.c.l.b16 %v138
  %v1402 = vunpack.c.l.b16 %v139
  %v1403 = vunpack.c.l.b16 %v140
  %v1404 = vunpack.c.l.b16 %v141
  %v1405 = vunpack.c.l.b16 %v142
  %v1406 = vunpack.c.l.b16 %v143
  %v1407 = vunpack.c.l.b16 %v144
  %v1408 = vunpack.c.l.b16 %v145
  %v1409 = vunpack.c.l.b16 %v146
  %v1410 = vunpack.c.l.b16 %v147
  %v1411 = vunpack.c.l.b16 %v148
  %v1412 = vunpack.c.l.b16 %v149
  %v1413 = vunpack.c.l.b16 %v150
  %v1414 = vunpack.c.l.b16 %v151
  %v1415 = vunpack.c.l.b16 %v152
  %v1416 = vunpack.c.l.b16 %v153
  %v1417 = vunpack.c.l.b16 %v154
  %v1418 = vunpack.c.l.b16 %v155
  %v1419 = vunpack.c.l.b16 %v156
  %v1420 = vunpack.c.l.b16 %v157
  %v1421 = vunpack.c.l.b16 %v158
  %v1422 = vunpack.c.l.b16 %v159
  %v1423 = vunpack.c.l.b16 %v160
  %v1424 = vunpack.c.l.b16 %v161
  %v1425 = vunpack.c.l.b16 %v162
  %v1426 = vunpack.c.l.b16 %v163
  %v1427 = vunpack.c.l.b16 %v164
  %v1428 = vunpack.c.l.b16 %v165
  %v1429 = vunpack.c.l.b16 %v166
  %v1430 = vunpack.c.l.b16 %v167
  %v1431 = vunpack.c.l.b16 %v168
  %v1432 = vunpack.c.l.b16 %v169
  %v1433 = vunpack.c.l.b16 %v170
  %v1434 = vunpack.c.l.b16 %v171
  %v1435 = vunpack.c.l.b16 %v172
  %v1436 = vunpack.c.l.b16 %v173
  %v1437 = vunpack.c.l.b16 %v174
  %v1438 = vunpack.c.l.b16 %v175
  %v1439 = vunpack.c.l.b16 %v176
  %v1440 = vunpack.c.l.b16 %v177
  %v1441 = vunpack.c.l.b16 %v178
  %v1442 = vunpack.c.l.b16 %v179
  %v1443 = vunpack.c.l.b16 %v180
  %v1444 = vunpack.c.l.b16 %v181
  %v1445 = vunpack.c.l.b16 %v182
  %v1446 = vunpack.c.l.b16 %v183
  %v1447 = vunpack.c.l.b16 %v184
  %v1448 = vunpack.c.l.b16 %v185
  %v1449 = vunpack.c.l.b16 %v186
  %v1450 = vunpack.c.l.b16 %v187
  %v1451 = vunpack.c.l.b16 %v188
  %v1452 = vunpack.c.l.b16 %v189
  %v1453 = vunpack.c.l.b16 %v190
  %v1454 = vunpack.c.l.b16 %v191
  %v1455 = vunpack.c.l.b16 %v192
  %v1456 = vunpack.c.l.b16 %v193
  %v1457 = vunpack.c.l.b16 %v194
  %v1458 = vunpack.c.l.b16 %v195
  %v1459 = vunpack.c.l.b16 %v196
  %v1460 = vunpack.c.l.b16 %v197
  %v1461 = vunpack.c.l.b16 %v198
  %v1462 = vunpack.c.l.b16 %v199
  %v1463 = vunpack.c.l.b16 %v200
  %v1464 = vunpack.c.l.b16 %v201
  %v1465 = vunpack.c.l.b16 %v202
  %v1466 = vunpack.c.l.b16 %v203
  %v1467 = vunpack.c.l.b16 %v204
  %v1468 = vunpack.c.l.b16 %v205
  %v1469 = vunpack.c.l.b16 %v206
  %v1470 = vunpack.c.l.b16 %v207
  %v1471 = vunpack.c.l.b16 %v208
  %v1472 = vunpack.c.l.b16 %v209
  %v1473 = vunpack.c.l.b16 %v210
  %v1474 = vunpack.c.l.b16 %v211
  %v1475 = vunpack.c.l.b16 %v212
  %v1476 = vunpack.c.l.b16 %v213
  %v1477 = vunpack.c.l.b16 %v214
  %v1478 = vunpack.c.l.b16 %v215
  %v1479 = vunpack.c.l.b16 %v216
  %v1480 = vunpack.c.l.b16 %v217
  %v1481 = vunpack.c.l.b16 %v218
  %v1482 = vunpack.c.l.b16 %v219
  %v1483 = vunpack.c.l.b16 %v220
  %v1484 = vunpack.c.l.b16 %v221
  %v1485 = vunpack.c.l.b16 %v222
  %v1486 = vunpack.c.l.b16 %v223
  %v1487 = vunpack.c.l.b16 %v224
  %v1488 = vunpack.c.l.b16 %v225
  %v1489 = vunpack.c.l.b16 %v226
  %v1490 = vunpack.c.l.b16 %v227
  %v1491 = vunpack.c.l.b16 %v228
  %v1492 = vunpack.c.l.b16 %v229
  %v1493 = vunpack.c.l.b16 %v230
  %v1494 = vunpack.c.l.b16 %v231
  %v1495 = vunpack.c.l.b16 %v232
  %v1496 = vunpack.c.l.b16 %v233
  %v1497 = vunpack.c.l.b16 %v234
  %v1498 = vunpack.c.l.b16 %v235
  %v1499 = vunpack.c.l.b16 %v236
  %v1500 = vunpack.c.l.b16 %v237
  %v1501 = vunpack.c.l.b16 %v238
  %v1502 = vunpack.c.l.b16 %v239
  %v1503 = vunpack.c.l.b16 %v240
  %v1504 = vunpack.c.l.b16 %v241
  %v1505 = vunpack.c.l.b16 %v242
  %v1506 = vunpack.c.l.b16 %v243
  %v1507 = vunpack.c.l.b16 %v244
  %v1508 = vunpack.c.l.b16 %v245
  %v1509 = vunpack.c.l.b16 %v246
  %v1510 = vunpack.c.l.b16 %v247
  %v1511 = vunpack.c.l.b16 %v248
  %v1512 = vunpack.c.l.b16 %v249
  %v1513 = vunpack.c.l.b16 %v250
  %v1514 = vunpack.c.l.b16 %v251
  %v1515 = vunpack.c.l.b16 %v252
  %v1516 = vunpack.c.l.b16 %v253
  %v1517 = vunpack.c.l.b16 %v254
  %v1518 = vunpack.c.l.b16 %v255
  %v1519 = vunpack.c.l.b16 %v256
  %v1520 = vunpack.c.l.b16 %v257
  %v1521 = vunpack.c.l.b16 %v258
  %v1522 = vunpack.c.l.b16 %v259
  %v1523 = vunpack.c.l.b16 %v260
  %v1524 = vunpack.c.l.b16 %v261
  %v1525 = vunpack.c.l.b16 %v262
  %v1526 = vunpack.c.l.b16 %v263
  %v1527 = vunpack.c.l.b16 %v264
  %v1528 = vunpack.c.l.b16 %v265
  %v1529 = vunpack.c.l.b16 %v266
  %v1530 = vunpack.c.l.b16 %v267
  %v1531 = vunpack.c.l.b16 %v268
  %v1532 = vunpack.c.l.b16 %v269
  %v1533 = vunpack.c.l.b16 %v270
  %v1534 = vunpack.c.l.b16 %v271
  %v1535 = vunpack.c.l.b16 %v272
  %v1536 = vunpack.c.l.b16 %v273
  %v1537 = vunpack.c.l.b16 %v274
  %v1538 = vunpack.c.l.b16 %v275
  %v1539 = vunpack.c.l.b16 %v276
  %v1540 = vunpack.c.l.b16 %v277
  %v1541 = vunpack.c.l.b16 %v278
  %v1542 = vunpack.c.l.b16 %v279
  %v1543 = vunpack.c.l.b16 %v280
  %v1544 = vunpack.c.l.b16 %v281
  %v1545 = vunpack.c.l.b16 %v282
  %v1546 = vunpack.c.l.b16 %v283
  %v1547 = vunpack.c.l.b16 %v284
  %v1548 = vunpack.c.l.b16 %v285
  %v1549 = vunpack.c.l.b16 %v286
  %v1550 = vunpack.c.l.b16 %v287
  %v1551 = vunpack.c.l.b16 %v288
  %v1552 = vunpack.c.l.b16 %v289
  %v1553 = vunpack.c.l.b16 %v290
  %v1554 = vunpack.c.l.b16 %v291
  %v1555 = vunpack.c.l.b16 %v292
  %v1556 = vunpack.c.l.b16 %v293
  %v1557 = vunpack.c.l.b16 %v294
  %v1558 = vunpack.c.l.b16 %v295
  %v1559 = vunpack.c.l.b16 %v296
  %v1560 = vunpack.c.l.b16 %v297
  %v1561 = vunpack.c.l.b16 %v298
  %v1562 = vunpack.c.l.b16 %v299
  %v1563 = vunpack.c.l.b16 %v300
  %v1564 = vunpack.c.l.b16 %v301
  %v1565 = vunpack.c.l.b16 %v302
  %v1566 = vunpack.c.l.b16 %v303
  %v1567 = vunpack.c.l.b16 %v304
  %v1568 = vunpack.c.l.b16 %v305
  %v1569 = vunpack.c.l.b16 %v306
  %v1570 = vunpack.c.l.b16 %v307
  %v1571 = vunpack.c.l.b16 %v308
  %v1572 = vunpack.c.l.b16 %v309
  %v1573 = vunpack.c.l.b16 %v310
  %v1574 = vunpack.c.l.b16 %v311
  %v1575 = vunpack.c.l.b16 %v312
  %v1576 = vunpack.c.l.b16 %v313
  %v1577 = vunpack.c.l.b16 %v314
  %v1578 = vunpack.c.l.b16 %v315
  %v1579 = vunpack.c.l.b16 %v316
  %v1580 = vunpack.c.l.b16 %v317
  %v1581 = vunpack.c.l.b16 %v318
  %v1582 = vunpack.c.l.b16 %v319
  %v1583 = vunpack.c.l.b16 %v320
  %v1584 = vunpack.c.l.b16 %v321
  %v1585 = vunpack.c.l.b16 %v322
  %v1586 = vunpack.c.l.b16 %v323
  %v1587 = vunpack.c.l.b16 %v324
  %v1588 = vunpack.c.l.b16 %v325
  %v1589 = vunpack.c.l.b16 %v326
  %v1590 = vunpack.c.l.b16 %v327
  %v1591 = vunpack.c.l.b16 %v328
  %v1592 = vunpack.c.l.b16 %v329
  %v1593 = vunpack.c.l.b16 %v330
  %v1594 = vunpack.c.l.b16 %v331
  %v1595 = vunpack.c.l.b16 %v332
  %v1596 = vunpack.c.l.b16 %v333
  %v1597 = vunpack.c.l.b16 %v334
  %v1598 = vunpack.c.l.b16 %v335
  %v1599 = vunpack.c.l.b16 %v336
  %v1600 = vunpack.c.l.b16 %v337
  %v1601 = vunpack.c.l.b16 %v338
  %v1602 = vunpack.c.l.b16 %v339
  %v1603 = vunpack.c.l.b16 %v340
  %v1604 = vunpack.c.l.b16 %v341
  %v1605 = vunpack.c.l.b16 %v342
  %v1606 = vunpack.c.l.b16 %v343
  %v1607 = vunpack.c.l.b16 %v344
  %v1608 = vunpack.c.l.b16 %v345
  %v1609 = vunpack.c.l.b16 %v346
  %v1610 = vunpack.c.l.b16 %v347
  %v1611 = vunpack.c.l.b16 %v348
  %v1612 = vunpack.c.l.b16 %v349
  %v1613 = vunpack.c.l.b16 %v350
  %v1614 = vunpack.c.l.b16 %v351
  %v1615 = vunpack.c.l.b16 %v352
  %v1616 = vunpack.c.l.b16 %v353
  %v1617 = vunpack.c.l.b16 %v354
  %v1618 = vunpack.c.l.b16 %v355
  %v1619 = vunpack.c.l.b16 %v356
  %v1620 = vunpack.c.l.b16 %v357
  %v1621 = vunpack.c.l.b16 %v358
  %v1622 = vunpack.c.l.b16 %v359
  %v1623 = vunpack.c.l.b16 %v360
  %v1624 = vunpack.c.l.b16 %v361
  %v1625 = vunpack.c.l.b16 %v362
  %v1626 = vunpack.c.l.b16 %v363
  %v1627 = vunpack.c.l.b16 %v364
  %v1628 = vunpack.c.l.b16 %v365
  %v1629 = vunpack.c.l.b16 %v366
  %v1630 = vunpack.c.l.b16 %v367
  %v1631 = vunpack.c.l.b16 %v368
  %v1632 = vunpack.c.l.b16 %v369
  %v1633 = vunpack.c.l.b16 %v370
  %v1634 = vunpack.c.l.b16 %v371
  %v1635 = vunpack.c.l.b16 %v372
  %v1636 = vunpack.c.l.b16 %v373
  %v1637 = vunpack.c.l.b16 %v374
  %v1638 = vunpack.c.l.b16 %v375
  %v1639 = vunpack.c.l.b16 %v376
  %v1640 = vunpack.c.l.b16 %v377
  %v1641 = vunpack.c.l.b16 %v378
  %v1642 = vunpack.c.l.b16 %v379
  %v1643 = vunpack.c.l.b16 %v380
  %v1644 = vunpack.c.l.b16 %v381
  %v1645 = vunpack.c.l.b16 %v382
  %v1646 = vunpack.c.l.b16 %v383
  %v1647 = vunpack.c.l.b16 %v384
  %v1648 = vunpack.c.l.b16 %v385
  %v1649 = vunpack.c.l.b16 %v386
  %v1650 = vunpack.c.l.b16 %v387
  %v1651 = vunpack.c.l.b16 %v388
  %v1652 = vunpack.c.l.b16 %v389
  %v1653 = vunpack.c.l.b16 %v390
  %v1654 = vunpack.c.l.b16 %v391
  %v1655 = vunpack.c.l.b16 %v392
  %v1656 = vunpack.c.l.b16 %v393
  %v1657 = vunpack.c.l.b16 %v394
  %v1658 = vunpack.c.l.b16 %v395
  %v1659 = vunpack.c.l.b16 %v396
  %v1660 = vunpack.c.l.b16 %v397
  %v1661 = vunpack.c.l.b16 %v398
  %v1662 = vunpack.c.l.b16 %v399
  %v1663 = vunpack.c.l.b16 %v400
  %v1664 = vunpack.c.l.b16 %v401
  %v1665 = vunpack.c.l.b16 %v402
  %v1666 = vunpack.c.l.b16 %v403
  %v1667 = vunpack.c.l.b16 %v404
  %v1668 = vunpack.c.l.b16 %v405
  %v1669 = vunpack.c.l.b16 %v406
  %v1670 = vunpack.c.l.b16 %v407
  %v1671 = vunpack.c.l.b16 %v408
  %v1672 = vunpack.c.l.b16 %v409
  %v1673 = vunpack.c.l.b16 %v410
  %v1674 = vunpack.c.l.b16 %v411
  %v1675 = vunpack.c.l.b16 %v412
  %v1676 = vunpack.c.l.b16 %v413
  %v1677 = vunpack.c.l.b16 %v414
  %v1678 = vunpack.c.l.b16 %v415
  %v1679 = vunpack.c.l.b16 %v416
  %v1680 = vunpack.c.l.b16 %v417
  %v1681 = vunpack.c.l.b16 %v418
  %v1682 = vunpack.c.l.b16 %v419
  %v1683 = vunpack.c.l.b16 %v420
  %v1684 = vunpack.c.l.b16 %v421
  %v1685 = vunpack.c.l.b16 %v422
  %v1686 = vunpack.c.l.b16 %v423
  %v1687 = vunpack.c.l.b16 %v424
  %v1688 = vunpack.c.l.b16 %v425
  %v1689 = vunpack.c.l.b16 %v426
  %v1690 = vunpack.c.l.b16 %v427
  %v1691 = vunpack.c.l.b16 %v428
  %v1692 = vunpack.c.l.b16 %v429
  %v1693 = vunpack.c.l.b16 %v430
  %v1694 = vunpack.c.l.b16 %v431
  %v1695 = vunpack.c.l.b16 %v432
  %v1696 = vunpack.c.l.b16 %v433
  %v1697 = vunpack.c.l.b16 %v434
  %v1698 = vunpack.c.l.b16 %v435
  %v1699 = vunpack.c.l.b16 %v436
  %v1700 = vunpack.c.l.b16 %v437
  %v1701 = vunpack.c.l.b16 %v438
  %v1702 = vunpack.c.l.b16 %v439
  %v1703 = vunpack.c.l.b16 %v440
  %v1704 = vunpack.c.l.b16 %v441
  %v1705 = vunpack.c.l.b16 %v442
  %v1706 = vunpack.c.l.b16 %v443
  %v1707 = vunpack.c.l.b16 %v444
  %v1708 = vunpack.c.l.b16 %v445
  %v1709 = vunpack.c.l.b16 %v446
  %v1710 = vunpack.c.l.b16 %v447
  %v1711 = vunpack.c.l.b16 %v448
  %v1712 = vunpack.c.l.b16 %v449
  %v1713 = vunpack.c.l.b16 %v450
  %v1714 = vunpack.c.l.b16 %v451
  %v1715 = vunpack.c.l.b16 %v452
  %v1716 = vunpack.c.l.b16 %v453
  %v1717 = vunpack.c.l.b16 %v454
  %v1718 = vunpack.c.l.b16 %v455
  %v1719 = vunpack.c.l.b16 %v456
  %v1720 = vunpack.c.l.b16 %v457
  %v1721 = vunpack.c.l.b16 %v458
  %v1722 = vunpack.c.l.b16 %v459
  %v1723 = vunpack.c.l.b16 %v460
  %v1724 = vunpack.c.l.b16 %v461
  %v1725 = vunpack.c.l.b16 %v462
  %v1726 = vunpack.c.l.b16 %v463
  %v1727 = vunpack.c.l.b16 %v464
  %v1728 = vunpack.c.l.b16 %v465
  %v1729 = vunpack.c.l.b16 %v466
  %v1730 = vunpack.c.l.b16 %v467
  %v1731 = vunpack.c.l.b16 %v468
  %v1732 = vunpack.c.l.b16 %v469
  %v1733 = vunpack.c.l.b16 %v470
  %v1734 = vunpack.c.l.b16 %v471
  %v1735 = vunpack.c.l.b16 %v472
  %v1736 = vunpack.c.l.b16 %v473
  %v1737 = vunpack.c.l.b16 %v474
  %v1738 = vunpack.c.l.b16 %v475
  %v1739 = vunpack.c.l.b16 %v476
  %v1740 = vunpack.c.l.b16 %v477
  %v1741 = vunpack.c.l.b16 %v478
  %v1742 = vunpack.c.l.b16 %v479
  %v1743 = vunpack.c.l.b16 %v480
  %v1744 = vunpack.c.l.b16 %v481
  %v1745 = vunpack.c.l.b16 %v482
  %v1746 = vunpack.c.l.b16 %v483
  %v1747 = vunpack.c.l.b16 %v484
  %v1748 = vunpack.c.l.b16 %v485
  %v1749 = vunpack.c.l.b16 %v486
  %v1750 = vunpack.c.l.b16 %v487
  %v1751 = vunpack.c.l.b16 %v488
  %v1752 = vunpack.c.l.b16 %v489
  %v1753 = vunpack.c.l.b16 %v490
  %v1754 = vunpack.c.l.b16 %v491
  %v1755 = vunpack.c.l.b16 %v492
  %v1756 = vunpack.c.l.b16 %v493
  %v1757 = vunpack.c.l.b16 %v494
  %v1758 = vunpack.c.l.b16 %v495
  %v1759 = vunpack.c.l.b16 %v496
  %v1760 = vunpack.c.l.b16 %v497
  %v1761 = vunpack.c.l.b16 %v498
  %v1762 = vunpack.c.l.b16 %v499
  %v1763 = vunpack.c.l.b16 %v500
  %v1764 = vunpack.c.l.b16 %v501
  %v1765 = vunpack.c.l.b16 %v502
  %v1766 = vunpack.c.l.b16 %v503
  %v1767 = vunpack.c.l.b16 %v504
  %v1768 = vunpack.c.l.b16 %v505
  %v1769 = vunpack.c.l.b16 %v506
  %v1770 = vunpack.c.l.b16 %v507
  %v1771 = vunpack.c.l.b16 %v508
  %v1772 = vunpack.c.l.b16 %v509
  %v1773 = vunpack.c.l.b16 %v510
  %v1774 = vunpack.c.l.b16 %v511
  %v1775 = vunpack.c.l.b16 %v512
  %v1776 = vunpack.c.l.b16 %v513
  %v1777 = vunpack.c.l.b16 %v514
  %v1778 = vunpack.c.l.b16 %v515
  %v1779 = vunpack.c.l.b16 %v516
  %v1780 = vunpack.c.l.b16 %v517
  %v1781 = vunpack.c.l.b16 %v518
  %v1782 = vunpack.c.l.b16 %v519
  %v1783 = vunpack.c.l.b16 %v520
  %v1784 = vunpack.c.l.b16 %v521
  %v1785 = vunpack.c.l.b16 %v522
  %v1786 = vunpack.c.l.b16 %v523
  %v1787 = vunpack.c.l.b16 %v524
  %v1788 = vunpack.c.l.b16 %v525
  %v1789 = vunpack.c.l.b16 %v526
  %v1790 = vunpack.c.l.b16 %v527
  %v1791 = vunpack.c.l.b16 %v528
  %v1792 = vunpack.c.l.b16 %v529
  %v1793 = vunpack.c.l.b16 %v530
  %v1794 = vpack.c.b16 %v1283, %v1282
  %v1795 = vpack.c.b16 %v1285, %v1284
  %v1796 = vpack.c.b16 %v1287, %v1286
  %v1797 = vpack.c.b16 %v1289, %v1288
  %v1798 = vpack.c.b16 %v1291, %v1290
  %v1799 = vpack.c.b16 %v1293, %v1292
  %v1800 = vpack.c.b16 %v1295, %v1294
  %v1801 = vpack.c.b16 %v1297, %v1296
  %v1802 = vpack.c.b16 %v1299, %v1298
  %v1803 = vpack.c.b16 %v1301, %v1300
  %v1804 = vpack.c.b16 %v1303, %v1302
  %v1805 = vpack.c.b16 %v1305, %v1304
  %v1806 = vpack.c.b16 %v1307, %v1306
  %v1807 = vpack.c.b16 %v1309, %v1308
  %v1808 = vpack.c.b16 %v1311, %v1310
  %v1809 = vpack.c.b16 %v1313, %v1312
  %v1810 = vpack.c.b16 %v1315, %v1314
  %v1811 = vpack.c.b16 %v1317, %v1316
  %v1812 = vpack.c.b16 %v1319, %v1318
  %v1813 = vpack.c.b16 %v1321, %v1320
  %v1814 = vpack.c.b16 %v1323, %v1322
  %v1815 = vpack.c.b16 %v1325, %v1324
  %v1816 = vpack.c.b16 %v1327, %v1326
  %v1817 = vpack.c.b16 %v1329, %v1328
  %v1818 = vpack.c.b16 %v1331, %v1330
  %v1819 = vpack.c.b16 %v1333, %v1332
  %v1820 = vpack.c.b16 %v1335, %v1334
  %v1821 = vpack.c.b16 %v1337, %v1336
  %v1822 = vpack.c.b16 %v1339, %v1338
  %v1823 = vpack.c.b16 %v1341, %v1340
  %v1824 = vpack.c.b16 %v1343, %v1342
  %v1825 = vpack.c.b16 %v1345, %v1344
  %v1826 = vpack.c.b16 %v1347, %v1346
  %v1827 = vpack.c.b16 %v1349, %v1348
  %v1828 = vpack.c.b16 %v1351, %v1350
  %v1829 = vpack.c.b16 %v1353, %v1352
  %v1830 = vpack.c.b16 %v1355, %v1354
  %v1831 = vpack.c.b16 %v1357, %v1356
  %v1832 = vpack.c.b16 %v1359, %v1358
  %v1833 = vpack.c.b16 %v1361, %v1360
  %v1834 = vpack.c.b16 %v1363, %v1362
  %v1835 = vpack.c.b16 %v1365, %v1364
  %v1836 = vpack.c.b16 %v1367, %v1366
  %v1837 = vpack.c.b16 %v1369, %v1368
  %v1838 = vpack.c.b16 %v1371, %v1370
  %v1839 = vpack.c.b16 %v1373, %v1372
  %v1840 = vpack.c.b16 %v1375, %v1374
  %v1841 = vpack.c.b16 %v1377, %v1376
  %v1842 = vpack.c.b16 %v1379, %v1378
  %v1843 = vpack.c.b16 %v1381, %v1380
  %v1844 = vpack.c.b16 %v1383, %v1382
  %v1845 = vpack.c.b16 %v1385, %v1384
  %v1846 = vpack.c.b16 %v1387, %v1386
  %v1847 = vpack.c.b16 %v1389, %v1388
  %v1848 = vpack.c.b16 %v1391, %v1390
  %v1849 = vpack.c.b16 %v1393, %v1392
  %v1850 = vpack.c.b16 %v1395, %v1394
  %v1851 = vpack.c.b16 %v1397, %v1396
  %v1852 = vpack.c.b16 %v1399, %v1398
  %v1853 = vpack.c.b16 %v1401, %v1400
  %v1854 = vpack.c.b16 %v1403, %v1402
  %v1855 = vpack.c.b16 %v1405, %v1404
  %v1856 = vpack.c.b16 %v1407, %v1406
  %v1857 = vpack.c.b16 %v1409, %v1408
  %v1858 = vpack.c.b16 %v1411, %v1410
  %v1859 = vpack.c.b16 %v1413, %v1412
  %v1860 = vpack.c.b16 %v1415, %v1414
  %v1861 = vpack.c.b16 %v1417, %v1416
  %v1862 = vpack.c.b16 %v1419, %v1418
  %v1863 = vpack.c.b16 %v1421, %v1420
  %v1864 = vpack.c.b16 %v1423, %v1422
  %v1865 = vpack.c.b16 %v1425, %v1424
  %v1866 = vpack.c.b16 %v1427, %v1426
  %v1867 = vpack.c.b16 %v1429, %v1428
  %v1868 = vpack.c.b16 %v1431, %v1430
  %v1869 = vpack.c.b16 %v1433, %v1432
  %v1870 = vpack.c.b16 %v1435, %v1434
  %v1871 = vpack.c.b16 %v1437, %v1436
  %v1872 = vpack.c.b16 %v1439, %v1438
  %v1873 = vpack.c.b16 %v1441, %v1440
  %v1874 = vpack.c.b16 %v1443, %v1442
  %v1875 = vpack.c.b16 %v1445, %v1444
  %v1876 = vpack.c.b16 %v1447, %v1446
  %v1877 = vpack.c.b16 %v1449, %v1448
  %v1878 = vpack.c.b16 %v1451, %v1450
  %v1879 = vpack.c.b16 %v1453, %v1452
  %v1880 = vpack.c.b16 %v1455, %v1454
  %v1881 = vpack.c.b16 %v1457, %v1456
  %v1882 = vpack.c.b16 %v1459, %v1458
  %v1883 = vpack.c.b16 %v1461, %v1460
  %v1884 = vpack.c.b16 %v1463, %v1462
  %v1885 = vpack.c.b16 %v1465, %v1464
  %v1886 = vpack.c.b16 %v1467, %v1466
  %v1887 = vpack.c.b16 %v1469, %v1468
  %v1888 = vpack.c.b16 %v1471, %v1470
  %v1889 = vpack.c.b16 %v1473, %v1472
  %v1890 = vpack.c.b16 %v1475, %v1474
  %v1891 = vpack.c.b16 %v1477, %v1476
  %v1892 = vpack.c.b16 %v1479, %v1478
  %v1893 = vpack.c.b16 %v1481, %v1480
  %v1894 = vpack.c.b16 %v1483, %v1482
  %v1895 = vpack.c.b16 %v1485, %v1484
  %v1896 = vpack.c.b16 %v1487, %v1486
  %v1897 = vpack.c.b16 %v1489, %v1488
  %v1898 = vpack.c.b16 %v1491, %v1490
  %v1899 = vpack.c.b16 %v1493, %v1492
  %v1900 = vpack.c.b16 %v1495, %v1494
  %v1901 = vpack.c.b16 %v1497, %v1496
  %v1902 = vpack.c.b16 %v1499, %v1498
  %v1903 = vpack.c.b16 %v1501, %v1500
  %v1904 = vpack.c.b16 %v1503, %v1502
  %v1905 = vpack.c.b16 %v1505, %v1504
  %v1906 = vpack.c.b16 %v1507, %v1506
  %v1907 = vpack.c.b16 %v1509, %v1508
  %v1908 = vpack.c.b16 %v1511, %v1510
  %v1909 = vpack.c.b16 %v1513, %v1512
  %v1910 = vpack.c.b16 %v1515, %v1514
  %v1911 = vpack.c.b16 %v1517, %v1516
  %v1912 = vpack.c.b16 %v1519, %v1518
  %v1913 = vpack.c.b16 %v1521, %v1520
  %v1914 = vpack.c.b16 %v1523, %v1522
  %v1915 = vpack.c.b16 %v1525, %v1524
  %v1916 = vpack.c.b16 %v1527, %v1526
  %v1917 = vpack.c.b16 %v1529, %v1528
  %v1918 = vpack.c.b16 %v1531, %v1530
  %v1919 = vpack.c.b16 %v1533, %v1532
  %v1920 = vpack.c.b16 %v1535, %v1534
  %v1921 = vpack.c.b16 %v1537, %v1536
  %v1922 = vpack.c.b16 %v1539, %v1538
  %v1923 = vpack.c.b16 %v1541, %v1540
  %v1924 = vpack.c.b16 %v1543, %v1542
  %v1925 = vpack.c.b16 %v1545, %v1544
  %v1926 = vpack.c.b16 %v1547, %v1546
  %v1927 = vpack.c.b16 %v1549, %v1548
  %v1928 = vpack.c.b16 %v1551, %v1550
  %v1929 = vpack.c.b16 %v1553, %v1552
  %v1930 = vpack.c.b16 %v1555, %v1554
  %v1931 = vpack.c.b16 %v1557, %v1556
  %v1932 = vpack.c.b16 %v1559, %v1558
  %v1933 = vpack.c.b16 %v1561, %v1560
  %v1934 = vpack.c.b16 %v1563, %v1562
  %v1935 = vpack.c.b16 %v1565, %v1564
  %v1936 = vpack.c.b16 %v1567, %v1566
  %v1937 = vpack.c.b16 %v1569, %v1568
  %v1938 = vpack.c.b16 %v1571, %v1570
  %v1939 = vpack.c.b16 %v1573, %v1572
  %v1940 = vpack.c.b16 %v1575, %v1574
  %v1941 = vpack.c.b16 %v1577, %v1576
  %v1942 = vpack.c.b16 %v1579, %v1578
  %v1943 = vpack.c.b16 %v1581, %v1580
  %v1944 = vpack.c.b16 %v1583, %v1582
  %v1945 = vpack.c.b16 %v1585, %v1584
  %v1946 = vpack.c.b16 %v1587, %v1586
  %v1947 = vpack.c.b16 %v1589, %v1588
  %v1948 = vpack.c.b16 %v1591, %v1590
  %v1949 = vpack.c.b16 %v1593, %v1592
  %v1950 = vpack.c.b16 %v1595, %v1594
  %v1951 = vpack.c.b16 %v1597, %v1596
  %v1952 = vpack.c.b16 %v1599, %v1598
  %v1953 = vpack.c.b16 %v1601, %v1600
  %v1954 = vpack.c.b16 %v1603, %v1602
  %v1955 = vpack.c.b16 %v1605, %v1604
  %v1956 = vpack.c.b16 %v1607, %v1606
  %v1957 = vpack.c.b16 %v1609, %v1608
  %v1958 = vpack.c.b16 %v1611, %v1610
  %v1959 = vpack.c.b16 %v1613, %v1612
  %v1960 = vpack.c.b16 %v1615, %v1614
  %v1961 = vpack.c.b16 %v1617, %v1616
  %v1962 = vpack.c.b16 %v1619, %v1618
  %v1963 = vpack.c.b16 %v1621, %v1620
  %v1964 = vpack.c.b16 %v1623, %v1622
  %v1965 = vpack.c.b16 %v1625, %v1624
  %v1966 = vpack.c.b16 %v1627, %v1626
  %v1967 = vpack.c.b16 %v1629, %v1628
  %v1968 = vpack.c.b16 %v1631, %v1630
  %v1969 = vpack.c.b16 %v1633, %v1632
  %v1970 = vpack.c.b16 %v1635, %v1634
  %v1971 = vpack.c.b16 %v1637, %v1636
  %v1972 = vpack.c.b16 %v1639, %v1638
  %v1973 = vpack.c.b16 %v1641, %v1640
  %v1974 = vpack.c.b16 %v1643, %v1642
  %v1975 = vpack.c.b16 %v1645, %v1644
  %v1976 = vpack.c.b16 %v1647, %v1646
  %v1977 = vpack.c.b16 %v1649, %v1648
  %v1978 = vpack.c.b16 %v1651, %v1650
  %v1979 = vpack.c.b16 %v1653, %v1652
  %v1980 = vpack.c.b16 %v1655, %v1654
  %v1981 = vpack.c.b16 %v1657, %v1656
  %v1982 = vpack.c.b16 %v1659, %v1658
  %v1983 = vpack.c.b16 %v1661, %v1660
  %v1984 = vpack.c.b16 %v1663, %v1662
  %v1985 = vpack.c.b16 %v1665, %v1664
  %v1986 = vpack.c.b16 %v1667, %v1666
  %v1987 = vpack.c.b16 %v1669, %v1668
  %v1988 = vpack.c.b16 %v1671, %v1670
  %v1989 = vpack.c.b16 %v1673, %v1672
  %v1990 = vpack.c.b16 %v1675, %v1674
  %v1991 = vpack.c.b16 %v1677, %v1676
  %v1992 = vpack.c.b16 %v1679, %v1678
  %v1993 = vpack.c.b16 %v1681, %v1680
  %v1994 = vpack.c.b16 %v1683, %v1682
  %v1995 = vpack.c.b16 %v1685, %v1684
  %v1996 = vpack.c.b16 %v1687, %v1686
  %v1997 = vpack.c.b16 %v1689, %v1688
  %v1998 = vpack.c.b16 %v1691, %v1690
  %v1999 = vpack.c.b16 %v1693, %v1692
  %v2000 = vpack.c.b16 %v1695, %v1694
  %v2001 = vpack.c.b16 %v1697, %v1696
  %v2002 = vpack.c.b16 %v1699, %v1698
  %v2003 = vpack.c.b16 %v1701, %v1700
  %v2004 = vpack.c.b16 %v1703, %v1702
  %v2005 = vpack.c.b16 %v1705, %v1704
  %v2006 = vpack.c.b16 %v1707, %v1706
  %v2007 = vpack.c.b16 %v1709, %v1708
  %v2008 = vpack.c.b16 %v1711, %v1710
  %v2009 = vpack.c.b16 %v1713, %v1712
  %v2010 = vpack.c.b16 %v1715, %v1714
  %v2011 = vpack.c.b16 %v1717, %v1716
  %v2012 = vpack.c.b16 %v1719, %v1718
  %v2013 = vpack.c.b16 %v1721, %v1720
  %v2014 = vpack.c.b16 %v1723, %v1722
  %v2015 = vpack.c.b16 %v1725, %v1724
  %v2016 = vpack.c.b16 %v1727, %v1726
  %v2017 = vpack.c.b16 %v1729, %v1728
  %v2018 = vpack.c.b16 %v1731, %v1730
  %v2019 = vpack.c.b16 %v1733, %v1732
  %v2020 = vpack.c.b16 %v1735, %v1734
  %v2021 = vpack.c.b16 %v1737, %v1736
  %v2022 = vpack.c.b16 %v1739, %v1738
  %v2023 = vpack.c.b16 %v1741, %v1740
  %v2024 = vpack.c.b16 %v1743, %v1742
  %v2025 = vpack.c.b16 %v1745, %v1744
  %v2026 = vpack.c.b16 %v1747, %v1746
  %v2027 = vpack.c.b16 %v1749, %v1748
  %v2028 = vpack.c.b16 %v1751, %v1750
  %v2029 = vpack.c.b16 %v1753, %v1752
  %v2030 = vpack.c.b16 %v1755, %v1754
  %v2031 = vpack.c.b16 %v1757, %v1756
  %v2032 = vpack.c.b16 %v1759, %v1758
  %v2033 = vpack.c.b16 %v1761, %v1760
  %v2034 = vpack.c.b16 %v1763, %v1762
  %v2035 = vpack.c.b16 %v1765, %v1764
  %v2036 = vpack.c.b16 %v1767, %v1766
  %v2037 = vpack.c.b16 %v1769, %v1768
  %v2038 = vpack.c.b16 %v1771, %v1770
  %v2039 = vpack.c.b16 %v1773, %v1772
  %v2040 = vpack.c.b16 %v1775, %v1774
  %v2041 = vpack.c.b16 %v1777, %v1776
  %v2042 = vpack.c.b16 %v1779, %v1778
  %v2043 = vpack.c.b16 %v1781, %v1780
  %v2044 = vpack.c.b16 %v1783, %v1782
  %v2045 = vpack.c.b16 %v1785, %v1784
  %v2046 = vpack.c.b16 %v1787, %v1786
  %v2047 = vpack.c.b16 %v1789, %v1788
  %v2048 = vpack.c.b16 %v1791, %v1790
  %v2049 = vpack.c.b16 %v1793, %v1792
  %2306 = vmatprep.subr.bf16.mxu0 0
  %2307 = vmatpush1.bf16.msra.mxu0 %v1794
  %2308 = vmatprep.subr.bf16.mxu0 0
  %2309 = vmatpush1.bf16.msra.mxu0 %v1795
  %2310 = vmatprep.subr.bf16.mxu0 0
  %2311 = vmatpush1.bf16.msra.mxu0 %v1796
  %2312 = vmatprep.subr.bf16.mxu0 0
  %2313 = vmatpush1.bf16.msra.mxu0 %v1797
  %2314 = vmatprep.subr.bf16.mxu0 0
  %2315 = vmatpush1.bf16.msra.mxu0 %v1798
  %2316 = vmatprep.subr.bf16.mxu0 0
  %2317 = vmatpush1.bf16.msra.mxu0 %v1799
  %2318 = vmatprep.subr.bf16.mxu0 0
  %2319 = vmatpush1.bf16.msra.mxu0 %v1800
  %2320 = vmatprep.subr.bf16.mxu0 0
  %2321 = vmatpush1.bf16.msra.mxu0 %v1801
  %2322 = vmatprep.subr.bf16.mxu0 0
  %2323 = vmatpush1.bf16.msra.mxu0 %v1802
  %2324 = vmatprep.subr.bf16.mxu0 0
  %2325 = vmatpush1.bf16.msra.mxu0 %v1803
  %2326 = vmatprep.subr.bf16.mxu0 0
  %2327 = vmatpush1.bf16.msra.mxu0 %v1804
  %2328 = vmatprep.subr.bf16.mxu0 0
  %2329 = vmatpush1.bf16.msra.mxu0 %v1805
  %2330 = vmatprep.subr.bf16.mxu0 0
  %2331 = vmatpush1.bf16.msra.mxu0 %v1806
  %2332 = vmatprep.subr.bf16.mxu0 0
  %2333 = vmatpush1.bf16.msra.mxu0 %v1807
  %2334 = vmatprep.subr.bf16.mxu0 0
  %2335 = vmatpush1.bf16.msra.mxu0 %v1808
  %2336 = vmatprep.subr.bf16.mxu0 0
  %2337 = vmatpush1.bf16.msra.mxu0 %v1809
  %2338 = vmatprep.mubr.bf16.mxu0 %v579
  %2339 = vmatmul.mubr.bf16.gmra.mrb[0].mxu0 %v565
  %v2340 = vpop.f32.mrb[0].mxu0
  %v2341 = vadd.f32 %v536, %v2340
  %v2342 = vpop.f32.mrb[0].mxu0
  %v2343 = vpop.f32.mrb[0].mxu0
  %v2344 = vpop.f32.mrb[0].mxu0
  %2345 = vdwg.mxu0
  %2346 = vmatprep.subr.bf16.mxu0 0
  %2347 = vmatpush1.bf16.msra.mxu0 %v1810
  %2348 = vmatprep.subr.bf16.mxu0 0
  %2349 = vmatpush1.bf16.msra.mxu0 %v1811
  %2350 = vmatprep.subr.bf16.mxu0 0
  %2351 = vmatpush1.bf16.msra.mxu0 %v1812
  %2352 = vmatprep.subr.bf16.mxu0 0
  %2353 = vmatpush1.bf16.msra.mxu0 %v1813
  %2354 = vmatprep.subr.bf16.mxu0 0
  %2355 = vmatpush1.bf16.msra.mxu0 %v1814
  %2356 = vmatprep.subr.bf16.mxu0 0
  %2357 = vmatpush1.bf16.msra.mxu0 %v1815
  %2358 = vmatprep.subr.bf16.mxu0 0
  %2359 = vmatpush1.bf16.msra.mxu0 %v1816
  %2360 = vmatprep.subr.bf16.mxu0 0
  %2361 = vmatpush1.bf16.msra.mxu0 %v1817
  %2362 = vmatprep.subr.bf16.mxu0 0
  %2363 = vmatpush1.bf16.msra.mxu0 %v1818
  %2364 = vmatprep.subr.bf16.mxu0 0
  %2365 = vmatpush1.bf16.msra.mxu0 %v1819
  %2366 = vmatprep.subr.bf16.mxu0 0
  %2367 = vmatpush1.bf16.msra.mxu0 %v1820
  %2368 = vmatprep.subr.bf16.mxu0 0
  %2369 = vmatpush1.bf16.msra.mxu0 %v1821
  %2370 = vmatprep.subr.bf16.mxu0 0
  %2371 = vmatpush1.bf16.msra.mxu0 %v1822
  %2372 = vmatprep.subr.bf16.mxu0 0
  %2373 = vmatpush1.bf16.msra.mxu0 %v1823
  %2374 = vmatprep.subr.bf16.mxu0 0
  %2375 = vmatpush1.bf16.msra.mxu0 %v1824
  %2376 = vmatprep.subr.bf16.mxu0 0
  %2377 = vmatpush1.bf16.msra.mxu0 %v1825
  %2378 = vmatprep.mubr.bf16.mxu0 %v589
  %2379 = vmatmul.mubr.bf16.gmra.mrb[0].mxu0 %v587
  %v2380 = vpop.f32.mrb[0].mxu0
  %v2381 = vadd.f32 %v2341, %v2380
  %v2382 = vpop.f32.mrb[0].mxu0
  %v2383 = vpop.f32.mrb[0].mxu0
  %v2384 = vpop.f32.mrb[0].mxu0
  %2385 = vdwg.mxu0
  %2386 = vmatprep.subr.bf16.mxu0 0
  %2387 = vmatpush1.bf16.msra.mxu0 %v1826
  %2388 = vmatprep.subr.bf16.mxu0 0
  %2389 = vmatpush1.bf16.msra.mxu0 %v1827
  %2390 = vmatprep.subr.bf16.mxu0 0
  %2391 = vmatpush1.bf16.msra.mxu0 %v1828
  %2392 = vmatprep.subr.bf16.mxu0 0
  %2393 = vmatpush1.bf16.msra.mxu0 %v1829
  %2394 = vmatprep.subr.bf16.mxu0 0
  %2395 = vmatpush1.bf16.msra.mxu0 %v1830
  %2396 = vmatprep.subr.bf16.mxu0 0
  %2397 = vmatpush1.bf16.msra.mxu0 %v1831
  %2398 = vmatprep.subr.bf16.mxu0 0
  %2399 = vmatpush1.bf16.msra.mxu0 %v1832
  %2400 = vmatprep.subr.bf16.mxu0 0
  %2401 = vmatpush1.bf16.msra.mxu0 %v1833
  %2402 = vmatprep.subr.bf16.mxu0 0
  %2403 = vmatpush1.bf16.msra.mxu0 %v1834
  %2404 = vmatprep.subr.bf16.mxu0 0
  %2405 = vmatpush1.bf16.msra.mxu0 %v1835
  %2406 = vmatprep.subr.bf16.mxu0 0
  %2407 = vmatpush1.bf16.msra.mxu0 %v1836
  %2408 = vmatprep.subr.bf16.mxu0 0
  %2409 = vmatpush1.bf16.msra.mxu0 %v1837
  %2410 = vmatprep.subr.bf16.mxu0 0
  %2411 = vmatpush1.bf16.msra.mxu0 %v1838
  %2412 = vmatprep.subr.bf16.mxu0 0
  %2413 = vmatpush1.bf16.msra.mxu0 %v1839
  %2414 = vmatprep.subr.bf16.mxu0 0
  %2415 = vmatpush1.bf16.msra.mxu0 %v1840
  %2416 = vmatprep.subr.bf16.mxu0 0
  %2417 = vmatpush1.bf16.msra.mxu0 %v1841
  %2418 = vmatprep.mubr.bf16.mxu0 %v586
  %2419 = vmatmul.mubr.bf16.gmra.mrb[0].mxu0 %v572
  %v2420 = vpop.f32.mrb[0].mxu0
  %v2421 = vadd.f32 %v2381, %v2420
  %v2422 = vpop.f32.mrb[0].mxu0
  %v2423 = vpop.f32.mrb[0].mxu0
  %v2424 = vpop.f32.mrb[0].mxu0
  %2425 = vdwg.mxu0
  %2426 = vmatprep.subr.bf16.mxu0 0
  %2427 = vmatpush1.bf16.msra.mxu0 %v1842
  %2428 = vmatprep.subr.bf16.mxu0 0
  %2429 = vmatpush1.bf16.msra.mxu0 %v1843
  %2430 = vmatprep.subr.bf16.mxu0 0
  %2431 = vmatpush1.bf16.msra.mxu0 %v1844
  %2432 = vmatprep.subr.bf16.mxu0 0
  %2433 = vmatpush1.bf16.msra.mxu0 %v1845
  %2434 = vmatprep.subr.bf16.mxu0 0
  %2435 = vmatpush1.bf16.msra.mxu0 %v1846
  %2436 = vmatprep.subr.bf16.mxu0 0
  %2437 = vmatpush1.bf16.msra.mxu0 %v1847
  %2438 = vmatprep.subr.bf16.mxu0 0
  %2439 = vmatpush1.bf16.msra.mxu0 %v1848
  %2440 = vmatprep.subr.bf16.mxu0 0
  %2441 = vmatpush1.bf16.msra.mxu0 %v1849
  %2442 = vmatprep.subr.bf16.mxu0 0
  %2443 = vmatpush1.bf16.msra.mxu0 %v1850
  %2444 = vmatprep.subr.bf16.mxu0 0
  %2445 = vmatpush1.bf16.msra.mxu0 %v1851
  %2446 = vmatprep.subr.bf16.mxu0 0
  %2447 = vmatpush1.bf16.msra.mxu0 %v1852
  %2448 = vmatprep.subr.bf16.mxu0 0
  %2449 = vmatpush1.bf16.msra.mxu0 %v1853
  %2450 = vmatprep.subr.bf16.mxu0 0
  %2451 = vmatpush1.bf16.msra.mxu0 %v1854
  %2452 = vmatprep.subr.bf16.mxu0 0
  %2453 = vmatpush1.bf16.msra.mxu0 %v1855
  %2454 = vmatprep.subr.bf16.mxu0 0
  %2455 = vmatpush1.bf16.msra.mxu0 %v1856
  %2456 = vmatprep.subr.bf16.mxu0 0
  %2457 = vmatpush1.bf16.msra.mxu0 %v1857
  %2458 = vmatprep.mubr.bf16.mxu0 %v590
  %2459 = vmatmul.mubr.bf16.gmra.mrb[0].mxu0 %v588
  %v2460 = vpop.f32.mrb[0].mxu0
  %v2461 = vadd.f32 %v2421, %v2460
  %v2462 = vpop.f32.mrb[0].mxu0
  %v2463 = vpop.f32.mrb[0].mxu0
  %v2464 = vpop.f32.mrb[0].mxu0
  %2465 = vdwg.mxu0
  %2466 = vmatprep.subr.bf16.mxu0 0
  %2467 = vmatpush1.bf16.msra.mxu0 %v1858
  %2468 = vmatprep.subr.bf16.mxu0 0
  %2469 = vmatpush1.bf16.msra.mxu0 %v1859
  %2470 = vmatprep.subr.bf16.mxu0 0
  %2471 = vmatpush1.bf16.msra.mxu0 %v1860
  %2472 = vmatprep.subr.bf16.mxu0 0
  %2473 = vmatpush1.bf16.msra.mxu0 %v1861
  %2474 = vmatprep.subr.bf16.mxu0 0
  %2475 = vmatpush1.bf16.msra.mxu0 %v1862
  %2476 = vmatprep.subr.bf16.mxu0 0
  %2477 = vmatpush1.bf16.msra.mxu0 %v1863
  %2478 = vmatprep.subr.bf16.mxu0 0
  %2479 = vmatpush1.bf16.msra.mxu0 %v1864
  %2480 = vmatprep.subr.bf16.mxu0 0
  %2481 = vmatpush1.bf16.msra.mxu0 %v1865
  %2482 = vmatprep.subr.bf16.mxu0 0
  %2483 = vmatpush1.bf16.msra.mxu0 %v1866
  %2484 = vmatprep.subr.bf16.mxu0 0
  %2485 = vmatpush1.bf16.msra.mxu0 %v1867
  %2486 = vmatprep.subr.bf16.mxu0 0
  %2487 = vmatpush1.bf16.msra.mxu0 %v1868
  %2488 = vmatprep.subr.bf16.mxu0 0
  %2489 = vmatpush1.bf16.msra.mxu0 %v1869
  %2490 = vmatprep.subr.bf16.mxu0 0
  %2491 = vmatpush1.bf16.msra.mxu0 %v1870
  %2492 = vmatprep.subr.bf16.mxu0 0
  %2493 = vmatpush1.bf16.msra.mxu0 %v1871
  %2494 = vmatprep.subr.bf16.mxu0 0
  %2495 = vmatpush1.bf16.msra.mxu0 %v1872
  %2496 = vmatprep.subr.bf16.mxu0 0
  %2497 = vmatpush1.bf16.msra.mxu0 %v1873
  %2498 = vmatprep.mubr.bf16.mxu0 %v628
  %2499 = vmatmul.mubr.bf16.gmra.mrb[0].mxu0 %v614
  %v2500 = vpop.f32.mrb[0].mxu0
  %v2501 = vadd.f32 %v2461, %v2500
  %v2502 = vpop.f32.mrb[0].mxu0
  %v2503 = vpop.f32.mrb[0].mxu0
  %v2504 = vpop.f32.mrb[0].mxu0
  %2505 = vdwg.mxu0
  %2506 = vmatprep.subr.bf16.mxu0 0
  %2507 = vmatpush1.bf16.msra.mxu0 %v1874
  %2508 = vmatprep.subr.bf16.mxu0 0
  %2509 = vmatpush1.bf16.msra.mxu0 %v1875
  %2510 = vmatprep.subr.bf16.mxu0 0
  %2511 = vmatpush1.bf16.msra.mxu0 %v1876
  %2512 = vmatprep.subr.bf16.mxu0 0
  %2513 = vmatpush1.bf16.msra.mxu0 %v1877
  %2514 = vmatprep.subr.bf16.mxu0 0
  %2515 = vmatpush1.bf16.msra.mxu0 %v1878
  %2516 = vmatprep.subr.bf16.mxu0 0
  %2517 = vmatpush1.bf16.msra.mxu0 %v1879
  %2518 = vmatprep.subr.bf16.mxu0 0
  %2519 = vmatpush1.bf16.msra.mxu0 %v1880
  %2520 = vmatprep.subr.bf16.mxu0 0
  %2521 = vmatpush1.bf16.msra.mxu0 %v1881
  %2522 = vmatprep.subr.bf16.mxu0 0
  %2523 = vmatpush1.bf16.msra.mxu0 %v1882
  %2524 = vmatprep.subr.bf16.mxu0 0
  %2525 = vmatpush1.bf16.msra.mxu0 %v1883
  %2526 = vmatprep.subr.bf16.mxu0 0
  %2527 = vmatpush1.bf16.msra.mxu0 %v1884
  %2528 = vmatprep.subr.bf16.mxu0 0
  %2529 = vmatpush1.bf16.msra.mxu0 %v1885
  %2530 = vmatprep.subr.bf16.mxu0 0
  %2531 = vmatpush1.bf16.msra.mxu0 %v1886
  %2532 = vmatprep.subr.bf16.mxu0 0
  %2533 = vmatpush1.bf16.msra.mxu0 %v1887
  %2534 = vmatprep.subr.bf16.mxu0 0
  %2535 = vmatpush1.bf16.msra.mxu0 %v1888
  %2536 = vmatprep.subr.bf16.mxu0 0
  %2537 = vmatpush1.bf16.msra.mxu0 %v1889
  %2538 = vmatprep.mubr.bf16.mxu0 %v638
  %2539 = vmatmul.mubr.bf16.gmra.mrb[0].mxu0 %v636
  %v2540 = vpop.f32.mrb[0].mxu0
  %v2541 = vadd.f32 %v2501, %v2540
  %v2542 = vpop.f32.mrb[0].mxu0
  %v2543 = vpop.f32.mrb[0].mxu0
  %v2544 = vpop.f32.mrb[0].mxu0
  %2545 = vdwg.mxu0
  %2546 = vmatprep.subr.bf16.mxu0 0
  %2547 = vmatpush1.bf16.msra.mxu0 %v1890
  %2548 = vmatprep.subr.bf16.mxu0 0
  %2549 = vmatpush1.bf16.msra.mxu0 %v1891
  %2550 = vmatprep.subr.bf16.mxu0 0
  %2551 = vmatpush1.bf16.msra.mxu0 %v1892
  %2552 = vmatprep.subr.bf16.mxu0 0
  %2553 = vmatpush1.bf16.msra.mxu0 %v1893
  %2554 = vmatprep.subr.bf16.mxu0 0
  %2555 = vmatpush1.bf16.msra.mxu0 %v1894
  %2556 = vmatprep.subr.bf16.mxu0 0
  %2557 = vmatpush1.bf16.msra.mxu0 %v1895
  %2558 = vmatprep.subr.bf16.mxu0 0
  %2559 = vmatpush1.bf16.msra.mxu0 %v1896
  %2560 = vmatprep.subr.bf16.mxu0 0
  %2561 = vmatpush1.bf16.msra.mxu0 %v1897
  %2562 = vmatprep.subr.bf16.mxu0 0
  %2563 = vmatpush1.bf16.msra.mxu0 %v1898
  %2564 = vmatprep.subr.bf16.mxu0 0
  %2565 = vmatpush1.bf16.msra.mxu0 %v1899
  %2566 = vmatprep.subr.bf16.mxu0 0
  %2567 = vmatpush1.bf16.msra.mxu0 %v1900
  %2568 = vmatprep.subr.bf16.mxu0 0
  %2569 = vmatpush1.bf16.msra.mxu0 %v1901
  %2570 = vmatprep.subr.bf16.mxu0 0
  %2571 = vmatpush1.bf16.msra.mxu0 %v1902
  %2572 = vmatprep.subr.bf16.mxu0 0
  %2573 = vmatpush1.bf16.msra.mxu0 %v1903
  %2574 = vmatprep.subr.bf16.mxu0 0
  %2575 = vmatpush1.bf16.msra.mxu0 %v1904
  %2576 = vmatprep.subr.bf16.mxu0 0
  %2577 = vmatpush1.bf16.msra.mxu0 %v1905
  %2578 = vmatprep.mubr.bf16.mxu0 %v635
  %2579 = vmatmul.mubr.bf16.gmra.mrb[0].mxu0 %v621
  %v2580 = vpop.f32.mrb[0].mxu0
  %v2581 = vadd.f32 %v2541, %v2580
  %v2582 = vpop.f32.mrb[0].mxu0
  %v2583 = vpop.f32.mrb[0].mxu0
  %v2584 = vpop.f32.mrb[0].mxu0
  %2585 = vdwg.mxu0
  %2586 = vmatprep.subr.bf16.mxu0 0
  %2587 = vmatpush1.bf16.msra.mxu0 %v1906
  %2588 = vmatprep.subr.bf16.mxu0 0
  %2589 = vmatpush1.bf16.msra.mxu0 %v1907
  %2590 = vmatprep.subr.bf16.mxu0 0
  %2591 = vmatpush1.bf16.msra.mxu0 %v1908
  %2592 = vmatprep.subr.bf16.mxu0 0
  %2593 = vmatpush1.bf16.msra.mxu0 %v1909
  %2594 = vmatprep.subr.bf16.mxu0 0
  %2595 = vmatpush1.bf16.msra.mxu0 %v1910
  %2596 = vmatprep.subr.bf16.mxu0 0
  %2597 = vmatpush1.bf16.msra.mxu0 %v1911
  %2598 = vmatprep.subr.bf16.mxu0 0
  %2599 = vmatpush1.bf16.msra.mxu0 %v1912
  %2600 = vmatprep.subr.bf16.mxu0 0
  %2601 = vmatpush1.bf16.msra.mxu0 %v1913
  %2602 = vmatprep.subr.bf16.mxu0 0
  %2603 = vmatpush1.bf16.msra.mxu0 %v1914
  %2604 = vmatprep.subr.bf16.mxu0 0
  %2605 = vmatpush1.bf16.msra.mxu0 %v1915
  %2606 = vmatprep.subr.bf16.mxu0 0
  %2607 = vmatpush1.bf16.msra.mxu0 %v1916
  %2608 = vmatprep.subr.bf16.mxu0 0
  %2609 = vmatpush1.bf16.msra.mxu0 %v1917
  %2610 = vmatprep.subr.bf16.mxu0 0
  %2611 = vmatpush1.bf16.msra.mxu0 %v1918
  %2612 = vmatprep.subr.bf16.mxu0 0
  %2613 = vmatpush1.bf16.msra.mxu0 %v1919
  %2614 = vmatprep.subr.bf16.mxu0 0
  %2615 = vmatpush1.bf16.msra.mxu0 %v1920
  %2616 = vmatprep.subr.bf16.mxu0 0
  %2617 = vmatpush1.bf16.msra.mxu0 %v1921
  %2618 = vmatprep.mubr.bf16.mxu0 %v639
  %2619 = vmatmul.mubr.bf16.gmra.mrb[0].mxu0 %v637
  %v2620 = vpop.f32.mrb[0].mxu0
  %v2621 = vadd.f32 %v2581, %v2620
  %v2622 = vpop.f32.mrb[0].mxu0
  %v2623 = vpop.f32.mrb[0].mxu0
  %v2624 = vpop.f32.mrb[0].mxu0
  %2625 = vdwg.mxu0
  %2626 = vmatprep.subr.bf16.mxu0 0
  %2627 = vmatpush1.bf16.msra.mxu0 %v1922
  %2628 = vmatprep.subr.bf16.mxu0 0
  %2629 = vmatpush1.bf16.msra.mxu0 %v1923
  %2630 = vmatprep.subr.bf16.mxu0 0
  %2631 = vmatpush1.bf16.msra.mxu0 %v1924
  %2632 = vmatprep.subr.bf16.mxu0 0
  %2633 = vmatpush1.bf16.msra.mxu0 %v1925
  %2634 = vmatprep.subr.bf16.mxu0 0
  %2635 = vmatpush1.bf16.msra.mxu0 %v1926
  %2636 = vmatprep.subr.bf16.mxu0 0
  %2637 = vmatpush1.bf16.msra.mxu0 %v1927
  %2638 = vmatprep.subr.bf16.mxu0 0
  %2639 = vmatpush1.bf16.msra.mxu0 %v1928
  %2640 = vmatprep.subr.bf16.mxu0 0
  %2641 = vmatpush1.bf16.msra.mxu0 %v1929
  %2642 = vmatprep.subr.bf16.mxu0 0
  %2643 = vmatpush1.bf16.msra.mxu0 %v1930
  %2644 = vmatprep.subr.bf16.mxu0 0
  %2645 = vmatpush1.bf16.msra.mxu0 %v1931
  %2646 = vmatprep.subr.bf16.mxu0 0
  %2647 = vmatpush1.bf16.msra.mxu0 %v1932
  %2648 = vmatprep.subr.bf16.mxu0 0
  %2649 = vmatpush1.bf16.msra.mxu0 %v1933
  %2650 = vmatprep.subr.bf16.mxu0 0
  %2651 = vmatpush1.bf16.msra.mxu0 %v1934
  %2652 = vmatprep.subr.bf16.mxu0 0
  %2653 = vmatpush1.bf16.msra.mxu0 %v1935
  %2654 = vmatprep.subr.bf16.mxu0 0
  %2655 = vmatpush1.bf16.msra.mxu0 %v1936
  %2656 = vmatprep.subr.bf16.mxu0 0
  %2657 = vmatpush1.bf16.msra.mxu0 %v1937
  %2658 = vmatprep.mubr.bf16.mxu0 %v677
  %2659 = vmatmul.mubr.bf16.gmra.mrb[0].mxu0 %v663
  %v2660 = vpop.f32.mrb[0].mxu0
  %v2661 = vadd.f32 %v2621, %v2660
  %v2662 = vpop.f32.mrb[0].mxu0
  %v2663 = vpop.f32.mrb[0].mxu0
  %v2664 = vpop.f32.mrb[0].mxu0
  %2665 = vdwg.mxu0
  %2666 = vmatprep.subr.bf16.mxu0 0
  %2667 = vmatpush1.bf16.msra.mxu0 %v1938
  %2668 = vmatprep.subr.bf16.mxu0 0
  %2669 = vmatpush1.bf16.msra.mxu0 %v1939
  %2670 = vmatprep.subr.bf16.mxu0 0
  %2671 = vmatpush1.bf16.msra.mxu0 %v1940
  %2672 = vmatprep.subr.bf16.mxu0 0
  %2673 = vmatpush1.bf16.msra.mxu0 %v1941
  %2674 = vmatprep.subr.bf16.mxu0 0
  %2675 = vmatpush1.bf16.msra.mxu0 %v1942
  %2676 = vmatprep.subr.bf16.mxu0 0
  %2677 = vmatpush1.bf16.msra.mxu0 %v1943
  %2678 = vmatprep.subr.bf16.mxu0 0
  %2679 = vmatpush1.bf16.msra.mxu0 %v1944
  %2680 = vmatprep.subr.bf16.mxu0 0
  %2681 = vmatpush1.bf16.msra.mxu0 %v1945
  %2682 = vmatprep.subr.bf16.mxu0 0
  %2683 = vmatpush1.bf16.msra.mxu0 %v1946
  %2684 = vmatprep.subr.bf16.mxu0 0
  %2685 = vmatpush1.bf16.msra.mxu0 %v1947
  %2686 = vmatprep.subr.bf16.mxu0 0
  %2687 = vmatpush1.bf16.msra.mxu0 %v1948
  %2688 = vmatprep.subr.bf16.mxu0 0
  %2689 = vmatpush1.bf16.msra.mxu0 %v1949
  %2690 = vmatprep.subr.bf16.mxu0 0
  %2691 = vmatpush1.bf16.msra.mxu0 %v1950
  %2692 = vmatprep.subr.bf16.mxu0 0
  %2693 = vmatpush1.bf16.msra.mxu0 %v1951
  %2694 = vmatprep.subr.bf16.mxu0 0
  %2695 = vmatpush1.bf16.msra.mxu0 %v1952
  %2696 = vmatprep.subr.bf16.mxu0 0
  %2697 = vmatpush1.bf16.msra.mxu0 %v1953
  %2698 = vmatprep.mubr.bf16.mxu0 %v687
  %2699 = vmatmul.mubr.bf16.gmra.mrb[0].mxu0 %v685
  %v2700 = vpop.f32.mrb[0].mxu0
  %v2701 = vadd.f32 %v2661, %v2700
  %v2702 = vpop.f32.mrb[0].mxu0
  %v2703 = vpop.f32.mrb[0].mxu0
  %v2704 = vpop.f32.mrb[0].mxu0
  %2705 = vdwg.mxu0
  %2706 = vmatprep.subr.bf16.mxu0 0
  %2707 = vmatpush1.bf16.msra.mxu0 %v1954
  %2708 = vmatprep.subr.bf16.mxu0 0
  %2709 = vmatpush1.bf16.msra.mxu0 %v1955
  %2710 = vmatprep.subr.bf16.mxu0 0
  %2711 = vmatpush1.bf16.msra.mxu0 %v1956
  %2712 = vmatprep.subr.bf16.mxu0 0
  %2713 = vmatpush1.bf16.msra.mxu0 %v1957
  %2714 = vmatprep.subr.bf16.mxu0 0
  %2715 = vmatpush1.bf16.msra.mxu0 %v1958
  %2716 = vmatprep.subr.bf16.mxu0 0
  %2717 = vmatpush1.bf16.msra.mxu0 %v1959
  %2718 = vmatprep.subr.bf16.mxu0 0
  %2719 = vmatpush1.bf16.msra.mxu0 %v1960
  %2720 = vmatprep.subr.bf16.mxu0 0
  %2721 = vmatpush1.bf16.msra.mxu0 %v1961
  %2722 = vmatprep.subr.bf16.mxu0 0
  %2723 = vmatpush1.bf16.msra.mxu0 %v1962
  %2724 = vmatprep.subr.bf16.mxu0 0
  %2725 = vmatpush1.bf16.msra.mxu0 %v1963
  %2726 = vmatprep.subr.bf16.mxu0 0
  %2727 = vmatpush1.bf16.msra.mxu0 %v1964
  %2728 = vmatprep.subr.bf16.mxu0 0
  %2729 = vmatpush1.bf16.msra.mxu0 %v1965
  %2730 = vmatprep.subr.bf16.mxu0 0
  %2731 = vmatpush1.bf16.msra.mxu0 %v1966
  %2732 = vmatprep.subr.bf16.mxu0 0
  %2733 = vmatpush1.bf16.msra.mxu0 %v1967
  %2734 = vmatprep.subr.bf16.mxu0 0
  %2735 = vmatpush1.bf16.msra.mxu0 %v1968
  %2736 = vmatprep.subr.bf16.mxu0 0
  %2737 = vmatpush1.bf16.msra.mxu0 %v1969
  %2738 = vmatprep.mubr.bf16.mxu0 %v684
  %2739 = vmatmul.mubr.bf16.gmra.mrb[0].mxu0 %v670
  %v2740 = vpop.f32.mrb[0].mxu0
  %v2741 = vadd.f32 %v2701, %v2740
  %v2742 = vpop.f32.mrb[0].mxu0
  %v2743 = vpop.f32.mrb[0].mxu0
  %v2744 = vpop.f32.mrb[0].mxu0
  %2745 = vdwg.mxu0
  %2746 = vmatprep.subr.bf16.mxu0 0
  %2747 = vmatpush1.bf16.msra.mxu0 %v1970
  %2748 = vmatprep.subr.bf16.mxu0 0
  %2749 = vmatpush1.bf16.msra.mxu0 %v1971
  %2750 = vmatprep.subr.bf16.mxu0 0
  %2751 = vmatpush1.bf16.msra.mxu0 %v1972
  %2752 = vmatprep.subr.bf16.mxu0 0
  %2753 = vmatpush1.bf16.msra.mxu0 %v1973
  %2754 = vmatprep.subr.bf16.mxu0 0
  %2755 = vmatpush1.bf16.msra.mxu0 %v1974
  %2756 = vmatprep.subr.bf16.mxu0 0
  %2757 = vmatpush1.bf16.msra.mxu0 %v1975
  %2758 = vmatprep.subr.bf16.mxu0 0
  %2759 = vmatpush1.bf16.msra.mxu0 %v1976
  %2760 = vmatprep.subr.bf16.mxu0 0
  %2761 = vmatpush1.bf16.msra.mxu0 %v1977
  %2762 = vmatprep.subr.bf16.mxu0 0
  %2763 = vmatpush1.bf16.msra.mxu0 %v1978
  %2764 = vmatprep.subr.bf16.mxu0 0
  %2765 = vmatpush1.bf16.msra.mxu0 %v1979
  %2766 = vmatprep.subr.bf16.mxu0 0
  %2767 = vmatpush1.bf16.msra.mxu0 %v1980
  %2768 = vmatprep.subr.bf16.mxu0 0
  %2769 = vmatpush1.bf16.msra.mxu0 %v1981
  %2770 = vmatprep.subr.bf16.mxu0 0
  %2771 = vmatpush1.bf16.msra.mxu0 %v1982
  %2772 = vmatprep.subr.bf16.mxu0 0
  %2773 = vmatpush1.bf16.msra.mxu0 %v1983
  %2774 = vmatprep.subr.bf16.mxu0 0
  %2775 = vmatpush1.bf16.msra.mxu0 %v1984
  %2776 = vmatprep.subr.bf16.mxu0 0
  %2777 = vmatpush1.bf16.msra.mxu0 %v1985
  %2778 = vmatprep.mubr.bf16.mxu0 %v688
  %2779 = vmatmul.mubr.bf16.gmra.mrb[0].mxu0 %v686
  %v2780 = vpop.f32.mrb[0].mxu0
  %v2781 = vadd.f32 %v2741, %v2780
  %v2782 = vpop.f32.mrb[0].mxu0
  %v2783 = vpop.f32.mrb[0].mxu0
  %v2784 = vpop.f32.mrb[0].mxu0
  %2785 = vdwg.mxu0
  %2786 = vmatprep.subr.bf16.mxu0 0
  %2787 = vmatpush1.bf16.msra.mxu0 %v1986
  %2788 = vmatprep.subr.bf16.mxu0 0
  %2789 = vmatpush1.bf16.msra.mxu0 %v1987
  %2790 = vmatprep.subr.bf16.mxu0 0
  %2791 = vmatpush1.bf16.msra.mxu0 %v1988
  %2792 = vmatprep.subr.bf16.mxu0 0
  %2793 = vmatpush1.bf16.msra.mxu0 %v1989
  %2794 = vmatprep.subr.bf16.mxu0 0
  %2795 = vmatpush1.bf16.msra.mxu0 %v1990
  %2796 = vmatprep.subr.bf16.mxu0 0
  %2797 = vmatpush1.bf16.msra.mxu0 %v1991
  %2798 = vmatprep.subr.bf16.mxu0 0
  %2799 = vmatpush1.bf16.msra.mxu0 %v1992
  %2800 = vmatprep.subr.bf16.mxu0 0
  %2801 = vmatpush1.bf16.msra.mxu0 %v1993
  %2802 = vmatprep.subr.bf16.mxu0 0
  %2803 = vmatpush1.bf16.msra.mxu0 %v1994
  %2804 = vmatprep.subr.bf16.mxu0 0
  %2805 = vmatpush1.bf16.msra.mxu0 %v1995
  %2806 = vmatprep.subr.bf16.mxu0 0
  %2807 = vmatpush1.bf16.msra.mxu0 %v1996
  %2808 = vmatprep.subr.bf16.mxu0 0
  %2809 = vmatpush1.bf16.msra.mxu0 %v1997
  %2810 = vmatprep.subr.bf16.mxu0 0
  %2811 = vmatpush1.bf16.msra.mxu0 %v1998
  %2812 = vmatprep.subr.bf16.mxu0 0
  %2813 = vmatpush1.bf16.msra.mxu0 %v1999
  %2814 = vmatprep.subr.bf16.mxu0 0
  %2815 = vmatpush1.bf16.msra.mxu0 %v2000
  %2816 = vmatprep.subr.bf16.mxu0 0
  %2817 = vmatpush1.bf16.msra.mxu0 %v2001
  %2818 = vmatprep.mubr.bf16.mxu0 %v726
  %2819 = vmatmul.mubr.bf16.gmra.mrb[0].mxu0 %v712
  %v2820 = vpop.f32.mrb[0].mxu0
  %v2821 = vadd.f32 %v2781, %v2820
  %v2822 = vpop.f32.mrb[0].mxu0
  %v2823 = vpop.f32.mrb[0].mxu0
  %v2824 = vpop.f32.mrb[0].mxu0
  %2825 = vdwg.mxu0
  %2826 = vmatprep.subr.bf16.mxu0 0
  %2827 = vmatpush1.bf16.msra.mxu0 %v2002
  %2828 = vmatprep.subr.bf16.mxu0 0
  %2829 = vmatpush1.bf16.msra.mxu0 %v2003
  %2830 = vmatprep.subr.bf16.mxu0 0
  %2831 = vmatpush1.bf16.msra.mxu0 %v2004
  %2832 = vmatprep.subr.bf16.mxu0 0
  %2833 = vmatpush1.bf16.msra.mxu0 %v2005
  %2834 = vmatprep.subr.bf16.mxu0 0
  %2835 = vmatpush1.bf16.msra.mxu0 %v2006
  %2836 = vmatprep.subr.bf16.mxu0 0
  %2837 = vmatpush1.bf16.msra.mxu0 %v2007
  %2838 = vmatprep.subr.bf16.mxu0 0
  %2839 = vmatpush1.bf16.msra.mxu0 %v2008
  %2840 = vmatprep.subr.bf16.mxu0 0
  %2841 = vmatpush1.bf16.msra.mxu0 %v2009
  %2842 = vmatprep.subr.bf16.mxu0 0
  %2843 = vmatpush1.bf16.msra.mxu0 %v2010
  %2844 = vmatprep.subr.bf16.mxu0 0
  %2845 = vmatpush1.bf16.msra.mxu0 %v2011
  %2846 = vmatprep.subr.bf16.mxu0 0
  %2847 = vmatpush1.bf16.msra.mxu0 %v2012
  %2848 = vmatprep.subr.bf16.mxu0 0
  %2849 = vmatpush1.bf16.msra.mxu0 %v2013
  %2850 = vmatprep.subr.bf16.mxu0 0
  %2851 = vmatpush1.bf16.msra.mxu0 %v2014
  %2852 = vmatprep.subr.bf16.mxu0 0
  %2853 = vmatpush1.bf16.msra.mxu0 %v2015
  %2854 = vmatprep.subr.bf16.mxu0 0
  %2855 = vmatpush1.bf16.msra.mxu0 %v2016
  %2856 = vmatprep.subr.bf16.mxu0 0
  %2857 = vmatpush1.bf16.msra.mxu0 %v2017
  %2858 = vmatprep.mubr.bf16.mxu0 %v736
  %2859 = vmatmul.mubr.bf16.gmra.mrb[0].mxu0 %v734
  %v2860 = vpop.f32.mrb[0].mxu0
  %v2861 = vadd.f32 %v2821, %v2860
  %v2862 = vpop.f32.mrb[0].mxu0
  %v2863 = vpop.f32.mrb[0].mxu0
  %v2864 = vpop.f32.mrb[0].mxu0
  %2865 = vdwg.mxu0
  %2866 = vmatprep.subr.bf16.mxu0 0
  %2867 = vmatpush1.bf16.msra.mxu0 %v2018
  %2868 = vmatprep.subr.bf16.mxu0 0
  %2869 = vmatpush1.bf16.msra.mxu0 %v2019
  %2870 = vmatprep.subr.bf16.mxu0 0
  %2871 = vmatpush1.bf16.msra.mxu0 %v2020
  %2872 = vmatprep.subr.bf16.mxu0 0
  %2873 = vmatpush1.bf16.msra.mxu0 %v2021
  %2874 = vmatprep.subr.bf16.mxu0 0
  %2875 = vmatpush1.bf16.msra.mxu0 %v2022
  %2876 = vmatprep.subr.bf16.mxu0 0
  %2877 = vmatpush1.bf16.msra.mxu0 %v2023
  %2878 = vmatprep.subr.bf16.mxu0 0
  %2879 = vmatpush1.bf16.msra.mxu0 %v2024
  %2880 = vmatprep.subr.bf16.mxu0 0
  %2881 = vmatpush1.bf16.msra.mxu0 %v2025
  %2882 = vmatprep.subr.bf16.mxu0 0
  %2883 = vmatpush1.bf16.msra.mxu0 %v2026
  %2884 = vmatprep.subr.bf16.mxu0 0
  %2885 = vmatpush1.bf16.msra.mxu0 %v2027
  %2886 = vmatprep.subr.bf16.mxu0 0
  %2887 = vmatpush1.bf16.msra.mxu0 %v2028
  %2888 = vmatprep.subr.bf16.mxu0 0
  %2889 = vmatpush1.bf16.msra.mxu0 %v2029
  %2890 = vmatprep.subr.bf16.mxu0 0
  %2891 = vmatpush1.bf16.msra.mxu0 %v2030
  %2892 = vmatprep.subr.bf16.mxu0 0
  %2893 = vmatpush1.bf16.msra.mxu0 %v2031
  %2894 = vmatprep.subr.bf16.mxu0 0
  %2895 = vmatpush1.bf16.msra.mxu0 %v2032
  %2896 = vmatprep.subr.bf16.mxu0 0
  %2897 = vmatpush1.bf16.msra.mxu0 %v2033
  %2898 = vmatprep.mubr.bf16.mxu0 %v733
  %2899 = vmatmul.mubr.bf16.gmra.mrb[0].mxu0 %v719
  %v2900 = vpop.f32.mrb[0].mxu0
  %v2901 = vadd.f32 %v2861, %v2900
  %v2902 = vpop.f32.mrb[0].mxu0
  %v2903 = vpop.f32.mrb[0].mxu0
  %v2904 = vpop.f32.mrb[0].mxu0
  %2905 = vdwg.mxu0
  %2906 = vmatprep.subr.bf16.mxu0 0
  %2907 = vmatpush1.bf16.msra.mxu0 %v2034
  %2908 = vmatprep.subr.bf16.mxu0 0
  %2909 = vmatpush1.bf16.msra.mxu0 %v2035
  %2910 = vmatprep.subr.bf16.mxu0 0
  %2911 = vmatpush1.bf16.msra.mxu0 %v2036
  %2912 = vmatprep.subr.bf16.mxu0 0
  %2913 = vmatpush1.bf16.msra.mxu0 %v2037
  %2914 = vmatprep.subr.bf16.mxu0 0
  %2915 = vmatpush1.bf16.msra.mxu0 %v2038
  %2916 = vmatprep.subr.bf16.mxu0 0
  %2917 = vmatpush1.bf16.msra.mxu0 %v2039
  %2918 = vmatprep.subr.bf16.mxu0 0
  %2919 = vmatpush1.bf16.msra.mxu0 %v2040
  %2920 = vmatprep.subr.bf16.mxu0 0
  %2921 = vmatpush1.bf16.msra.mxu0 %v2041
  %2922 = vmatprep.subr.bf16.mxu0 0
  %2923 = vmatpush1.bf16.msra.mxu0 %v2042
  %2924 = vmatprep.subr.bf16.mxu0 0
  %2925 = vmatpush1.bf16.msra.mxu0 %v2043
  %2926 = vmatprep.subr.bf16.mxu0 0
  %2927 = vmatpush1.bf16.msra.mxu0 %v2044
  %2928 = vmatprep.subr.bf16.mxu0 0
  %2929 = vmatpush1.bf16.msra.mxu0 %v2045
  %2930 = vmatprep.subr.bf16.mxu0 0
  %2931 = vmatpush1.bf16.msra.mxu0 %v2046
  %2932 = vmatprep.subr.bf16.mxu0 0
  %2933 = vmatpush1.bf16.msra.mxu0 %v2047
  %2934 = vmatprep.subr.bf16.mxu0 0
  %2935 = vmatpush1.bf16.msra.mxu0 %v2048
  %2936 = vmatprep.subr.bf16.mxu0 0
  %2937 = vmatpush1.bf16.msra.mxu0 %v2049
  %2938 = vmatprep.mubr.bf16.mxu0 %v737
  %2939 = vmatmul.mubr.bf16.gmra.mrb[0].mxu0 %v735
  %v2940 = vpop.f32.mrb[0].mxu0
  %v2941 = vadd.f32 %v2901, %v2940
  %v2942 = vpop.f32.mrb[0].mxu0
  %v2943 = vpop.f32.mrb[0].mxu0
  %v2944 = vpop.f32.mrb[0].mxu0
  %2945 = vdwg.mxu0
  %vm2946 = vcmask 74752
  %2947 = vst.msk [vmem:[%s3] sm:$0x3] %vm2946, %v2941
  // Predicated region
  $region14: #{avalon_generator_forward.11} parent=0 // pred_check
    _
  $region15: #{avalon_generator_forward.11} parent=0 // pred_check_branch
    %2949 = sbr.rel (0) target = $region17
  $region16: #{avalon_generator_forward.11} parent=0 // pred_region
    _
  $region17: #{avalon_generator_forward.11} parent=0 // pred_fallthru
    _
  // Predicated region
  $region18: #{avalon_generator_forward.11} parent=0 // pred_check
    _
  $region19: #{avalon_generator_forward.11} parent=0 // pred_check_branch
    %2951 = sbr.rel (0) target = $region21
  $region20: #{avalon_generator_forward.11} parent=0 // pred_region
    _
  $region21: #{avalon_generator_forward.11} parent=0 // pred_fallthru
    _

// kernel: avalon_generator_forward.12
$region0: #{avalon_generator_forward.12}
  #allocation0 [shape = 'u32[]', space=smem, size = 0x4, offset = 0x4, fixed_abs, tag = 'smem constant byte address 0x4 - core index']
  #allocation1 [shape = 'u32[144,128]{1,0:T(1,128)}', space=vmem, size = 0x12000, scoped, tag = 'internal scratch']
  %s0 = inlined_call_operand.vmem [shape: bf16[2,26], index: 0, kind: input, shape index: {}]
  %s1 = inlined_call_operand.vmem [shape: bf16[26,4096], index: 1, kind: input, shape index: {}]
  %s2 = inlined_call_operand.vmem [shape: f32[1,4096], index: 2, kind: input, shape index: {}]
  %s3 = inlined_call_operand.vmem [shape: bf16[2,4096], index: 3, kind: output, shape index: {}]
  %s4 = sld [smem:[#allocation0]]
  $region22: #{avalon_generator_forward.12} parent=0
    _
  %s6 = ssub.s32 1, %s4
  %s7 = scalar_select 0, %s6, %s4
  // Predicated region
  $region2: #{avalon_generator_forward.12} parent=0 // pred_check
    _
  $region3: #{avalon_generator_forward.12} parent=0 // pred_check_branch
    %9 = sbr.rel (0) target = $region5
  $region4: #{avalon_generator_forward.12} parent=0 // pred_region
    _
  $region5: #{avalon_generator_forward.12} parent=0 // pred_fallthru
    _
  // Predicated region
  $region6: #{avalon_generator_forward.12} parent=0 // pred_check
    _
  $region7: #{avalon_generator_forward.12} parent=0 // pred_check_branch
    %11 = sbr.rel (0) target = $region9
  $region8: #{avalon_generator_forward.12} parent=0 // pred_region
    _
  $region9: #{avalon_generator_forward.12} parent=0 // pred_fallthru
    _
  // Predicated region
  $region10: #{avalon_generator_forward.12} parent=0 // pred_check
    _
  $region11: #{avalon_generator_forward.12} parent=0 // pred_check_branch
    %13 = sbr.rel (0) target = $region13
  $region12: #{avalon_generator_forward.12} parent=0 // pred_region
    _
  $region13: #{avalon_generator_forward.12} parent=0 // pred_fallthru
    _
  %v15 = vld [vmem:[%s0] sm:$0x1]
  %v16 = vld [vmem:[%s1] sm:$0xff]
  %v17 = vld [vmem:[%s1 + $0x8] sm:$0xff]
  %v18 = vld [vmem:[%s1 + $0x10] sm:$0xff]
  %v19 = vld [vmem:[%s1 + $0x18] sm:$0xff]
  %v20 = vld [vmem:[%s1 + $0x20] sm:$0xff]
  %v21 = vld [vmem:[%s1 + $0x28] sm:$0xff]
  %v22 = vld [vmem:[%s1 + $0x30] sm:$0xff]
  %v23 = vld [vmem:[%s1 + $0x38] sm:$0xff]
  %v24 = vld [vmem:[%s1 + $0x40] sm:$0xff]
  %v25 = vld [vmem:[%s1 + $0x48] sm:$0xff]
  %v26 = vld [vmem:[%s1 + $0x50] sm:$0xff]
  %v27 = vld [vmem:[%s1 + $0x58] sm:$0xff]
  %v28 = vld [vmem:[%s1 + $0x60] sm:$0xff]
  %v29 = vld [vmem:[%s1 + $0x68] sm:$0xff]
  %v30 = vld [vmem:[%s1 + $0x70] sm:$0xff]
  %v31 = vld [vmem:[%s1 + $0x78] sm:$0xff]
  %v32 = vld [vmem:[%s1 + $0x80] sm:$0xff]
  %v33 = vld [vmem:[%s1 + $0x88] sm:$0xff]
  %v34 = vld [vmem:[%s1 + $0x90] sm:$0xff]
  %v35 = vld [vmem:[%s1 + $0x98] sm:$0xff]
  %v36 = vld [vmem:[%s1 + $0xa0] sm:$0xff]
  %v37 = vld [vmem:[%s1 + $0xa8] sm:$0xff]
  %v38 = vld [vmem:[%s1 + $0xb0] sm:$0xff]
  %v39 = vld [vmem:[%s1 + $0xb8] sm:$0xff]
  %v40 = vld [vmem:[%s1 + $0xc0] sm:$0xff]
  %v41 = vld [vmem:[%s1 + $0xc8] sm:$0xff]
  %v42 = vld [vmem:[%s1 + $0xd0] sm:$0xff]
  %v43 = vld [vmem:[%s1 + $0xd8] sm:$0xff]
  %v44 = vld [vmem:[%s1 + $0xe0] sm:$0xff]
  %v45 = vld [vmem:[%s1 + $0xe8] sm:$0xff]
  %v46 = vld [vmem:[%s1 + $0xf0] sm:$0xff]
  %v47 = vld [vmem:[%s1 + $0xf8] sm:$0xff]
  %v48 = vld [vmem:[%s1 + $0x100] sm:$0xff]
  %v49 = vld [vmem:[%s1 + $0x108] sm:$0xff]
  %v50 = vld [vmem:[%s1 + $0x110] sm:$0xff]
  %v51 = vld [vmem:[%s1 + $0x118] sm:$0xff]
  %v52 = vld [vmem:[%s1 + $0x120] sm:$0xff]
  %v53 = vld [vmem:[%s1 + $0x128] sm:$0xff]
  %v54 = vld [vmem:[%s1 + $0x130] sm:$0xff]
  %v55 = vld [vmem:[%s1 + $0x138] sm:$0xff]
  %v56 = vld [vmem:[%s1 + $0x140] sm:$0xff]
  %v57 = vld [vmem:[%s1 + $0x148] sm:$0xff]
  %v58 = vld [vmem:[%s1 + $0x150] sm:$0xff]
  %v59 = vld [vmem:[%s1 + $0x158] sm:$0xff]
  %v60 = vld [vmem:[%s1 + $0x160] sm:$0xff]
  %v61 = vld [vmem:[%s1 + $0x168] sm:$0xff]
  %v62 = vld [vmem:[%s1 + $0x170] sm:$0xff]
  %v63 = vld [vmem:[%s1 + $0x178] sm:$0xff]
  %v64 = vld [vmem:[%s1 + $0x180] sm:$0x11]
  %v65 = vld [vmem:[%s1 + $0x188] sm:$0x11]
  %v66 = vld [vmem:[%s1 + $0x190] sm:$0x11]
  %v67 = vld [vmem:[%s1 + $0x198] sm:$0x11]
  %v68 = vld [vmem:[%s1 + $0x1a0] sm:$0x11]
  %v69 = vld [vmem:[%s1 + $0x1a8] sm:$0x11]
  %v70 = vld [vmem:[%s1 + $0x1b0] sm:$0x11]
  %v71 = vld [vmem:[%s1 + $0x1b8] sm:$0x11]
  %v72 = vld [vmem:[%s1 + $0x1c0] sm:$0x11]
  %v73 = vld [vmem:[%s1 + $0x1c8] sm:$0x11]
  %v74 = vld [vmem:[%s1 + $0x1d0] sm:$0x11]
  %v75 = vld [vmem:[%s1 + $0x1d8] sm:$0x11]
  %v76 = vld [vmem:[%s1 + $0x1e0] sm:$0x11]
  %v77 = vld [vmem:[%s1 + $0x1e8] sm:$0x11]
  %v78 = vld [vmem:[%s1 + $0x1f0] sm:$0x11]
  %v79 = vld [vmem:[%s1 + $0x1f8] sm:$0x11]
  %v80 = vld [vmem:[%s2] sm:$0xff]
  %v81 = vld [vmem:[%s2 + $0x8] sm:$0xff]
  %v82 = vld [vmem:[%s2 + $0x10] sm:$0xff]
  %v83 = vld [vmem:[%s2 + $0x18] sm:$0xff]
  %v88 = vlaneseq
  %v89 = vshrl.u32 %v88, 7
  %v90 = vsub.s32 0, %v89
  %v91 = vrot.slane %v80, %v90
  %v92 = vlaneseq
  %v93 = vshrl.u32 %v92, 7
  %v94 = vsub.s32 1, %v93
  %v95 = vrot.slane %v80, %v94
  %v96 = vlaneseq
  %v97 = vshrl.u32 %v96, 7
  %v98 = vsub.s32 2, %v97
  %v99 = vrot.slane %v80, %v98
  %v100 = vlaneseq
  %v101 = vshrl.u32 %v100, 7
  %v102 = vsub.s32 3, %v101
  %v103 = vrot.slane %v80, %v102
  %v104 = vlaneseq
  %v105 = vshrl.u32 %v104, 7
  %v106 = vsub.s32 4, %v105
  %v107 = vrot.slane %v80, %v106
  %v108 = vlaneseq
  %v109 = vshrl.u32 %v108, 7
  %v110 = vsub.s32 5, %v109
  %v111 = vrot.slane %v80, %v110
  %v112 = vlaneseq
  %v113 = vshrl.u32 %v112, 7
  %v114 = vsub.s32 6, %v113
  %v115 = vrot.slane %v80, %v114
  %v116 = vlaneseq
  %v117 = vshrl.u32 %v116, 7
  %v118 = vsub.s32 7, %v117
  %v119 = vrot.slane %v80, %v118
  %v120 = vlaneseq
  %v121 = vshrl.u32 %v120, 7
  %v122 = vsub.s32 0, %v121
  %v123 = vrot.slane %v81, %v122
  %v124 = vlaneseq
  %v125 = vshrl.u32 %v124, 7
  %v126 = vsub.s32 1, %v125
  %v127 = vrot.slane %v81, %v126
  %v128 = vlaneseq
  %v129 = vshrl.u32 %v128, 7
  %v130 = vsub.s32 2, %v129
  %v131 = vrot.slane %v81, %v130
  %v132 = vlaneseq
  %v133 = vshrl.u32 %v132, 7
  %v134 = vsub.s32 3, %v133
  %v135 = vrot.slane %v81, %v134
  %v136 = vlaneseq
  %v137 = vshrl.u32 %v136, 7
  %v138 = vsub.s32 4, %v137
  %v139 = vrot.slane %v81, %v138
  %v140 = vlaneseq
  %v141 = vshrl.u32 %v140, 7
  %v142 = vsub.s32 5, %v141
  %v143 = vrot.slane %v81, %v142
  %v144 = vlaneseq
  %v145 = vshrl.u32 %v144, 7
  %v146 = vsub.s32 6, %v145
  %v147 = vrot.slane %v81, %v146
  %v148 = vlaneseq
  %v149 = vshrl.u32 %v148, 7
  %v150 = vsub.s32 7, %v149
  %v151 = vrot.slane %v81, %v150
  %v152 = vlaneseq
  %v153 = vshrl.u32 %v152, 7
  %v154 = vsub.s32 0, %v153
  %v155 = vrot.slane %v82, %v154
  %v156 = vlaneseq
  %v157 = vshrl.u32 %v156, 7
  %v158 = vsub.s32 1, %v157
  %v159 = vrot.slane %v82, %v158
  %v160 = vlaneseq
  %v161 = vshrl.u32 %v160, 7
  %v162 = vsub.s32 2, %v161
  %v163 = vrot.slane %v82, %v162
  %v164 = vlaneseq
  %v165 = vshrl.u32 %v164, 7
  %v166 = vsub.s32 3, %v165
  %v167 = vrot.slane %v82, %v166
  %v168 = vlaneseq
  %v169 = vshrl.u32 %v168, 7
  %v170 = vsub.s32 4, %v169
  %v171 = vrot.slane %v82, %v170
  %v172 = vlaneseq
  %v173 = vshrl.u32 %v172, 7
  %v174 = vsub.s32 5, %v173
  %v175 = vrot.slane %v82, %v174
  %v176 = vlaneseq
  %v177 = vshrl.u32 %v176, 7
  %v178 = vsub.s32 6, %v177
  %v179 = vrot.slane %v82, %v178
  %v180 = vlaneseq
  %v181 = vshrl.u32 %v180, 7
  %v182 = vsub.s32 7, %v181
  %v183 = vrot.slane %v82, %v182
  %v184 = vlaneseq
  %v185 = vshrl.u32 %v184, 7
  %v186 = vsub.s32 0, %v185
  %v187 = vrot.slane %v83, %v186
  %v188 = vlaneseq
  %v189 = vshrl.u32 %v188, 7
  %v190 = vsub.s32 1, %v189
  %v191 = vrot.slane %v83, %v190
  %v192 = vlaneseq
  %v193 = vshrl.u32 %v192, 7
  %v194 = vsub.s32 2, %v193
  %v195 = vrot.slane %v83, %v194
  %v196 = vlaneseq
  %v197 = vshrl.u32 %v196, 7
  %v198 = vsub.s32 3, %v197
  %v199 = vrot.slane %v83, %v198
  %v200 = vlaneseq
  %v201 = vshrl.u32 %v200, 7
  %v202 = vsub.s32 4, %v201
  %v203 = vrot.slane %v83, %v202
  %v204 = vlaneseq
  %v205 = vshrl.u32 %v204, 7
  %v206 = vsub.s32 5, %v205
  %v207 = vrot.slane %v83, %v206
  %v208 = vlaneseq
  %v209 = vshrl.u32 %v208, 7
  %v210 = vsub.s32 6, %v209
  %v211 = vrot.slane %v83, %v210
  %v212 = vlaneseq
  %v213 = vshrl.u32 %v212, 7
  %v214 = vsub.s32 7, %v213
  %v215 = vrot.slane %v83, %v214
  %v312 = vunpack.c.l.b16 %v16
  %v313 = vunpack.c.h.b16 %v16
  %v314 = vunpack.c.l.b16 %v17
  %v315 = vunpack.c.h.b16 %v17
  %v316 = vunpack.c.l.b16 %v18
  %v317 = vunpack.c.h.b16 %v18
  %v318 = vunpack.c.l.b16 %v19
  %v319 = vunpack.c.h.b16 %v19
  %v320 = vunpack.c.l.b16 %v20
  %v321 = vunpack.c.h.b16 %v20
  %v322 = vunpack.c.l.b16 %v21
  %v323 = vunpack.c.h.b16 %v21
  %v324 = vunpack.c.l.b16 %v22
  %v325 = vunpack.c.h.b16 %v22
  %v326 = vunpack.c.l.b16 %v23
  %v327 = vunpack.c.h.b16 %v23
  %v328 = vunpack.c.l.b16 %v24
  %v329 = vunpack.c.h.b16 %v24
  %v330 = vunpack.c.l.b16 %v25
  %v331 = vunpack.c.h.b16 %v25
  %v332 = vunpack.c.l.b16 %v26
  %v333 = vunpack.c.h.b16 %v26
  %v334 = vunpack.c.l.b16 %v27
  %v335 = vunpack.c.h.b16 %v27
  %v336 = vunpack.c.l.b16 %v28
  %v337 = vunpack.c.h.b16 %v28
  %v338 = vunpack.c.l.b16 %v29
  %v339 = vunpack.c.h.b16 %v29
  %v340 = vunpack.c.l.b16 %v30
  %v341 = vunpack.c.h.b16 %v30
  %v342 = vunpack.c.l.b16 %v31
  %v343 = vunpack.c.h.b16 %v31
  %v344 = vunpack.c.l.b16 %v32
  %v345 = vunpack.c.h.b16 %v32
  %v346 = vunpack.c.l.b16 %v33
  %v347 = vunpack.c.h.b16 %v33
  %v348 = vunpack.c.l.b16 %v34
  %v349 = vunpack.c.h.b16 %v34
  %v350 = vunpack.c.l.b16 %v35
  %v351 = vunpack.c.h.b16 %v35
  %v352 = vunpack.c.l.b16 %v36
  %v353 = vunpack.c.h.b16 %v36
  %v354 = vunpack.c.l.b16 %v37
  %v355 = vunpack.c.h.b16 %v37
  %v356 = vunpack.c.l.b16 %v38
  %v357 = vunpack.c.h.b16 %v38
  %v358 = vunpack.c.l.b16 %v39
  %v359 = vunpack.c.h.b16 %v39
  %v360 = vunpack.c.l.b16 %v40
  %v361 = vunpack.c.h.b16 %v40
  %v362 = vunpack.c.l.b16 %v41
  %v363 = vunpack.c.h.b16 %v41
  %v364 = vunpack.c.l.b16 %v42
  %v365 = vunpack.c.h.b16 %v42
  %v366 = vunpack.c.l.b16 %v43
  %v367 = vunpack.c.h.b16 %v43
  %v368 = vunpack.c.l.b16 %v44
  %v369 = vunpack.c.h.b16 %v44
  %v370 = vunpack.c.l.b16 %v45
  %v371 = vunpack.c.h.b16 %v45
  %v372 = vunpack.c.l.b16 %v46
  %v373 = vunpack.c.h.b16 %v46
  %v374 = vunpack.c.l.b16 %v47
  %v375 = vunpack.c.h.b16 %v47
  %v376 = vunpack.c.l.b16 %v48
  %v377 = vunpack.c.h.b16 %v48
  %v378 = vunpack.c.l.b16 %v49
  %v379 = vunpack.c.h.b16 %v49
  %v380 = vunpack.c.l.b16 %v50
  %v381 = vunpack.c.h.b16 %v50
  %v382 = vunpack.c.l.b16 %v51
  %v383 = vunpack.c.h.b16 %v51
  %v384 = vunpack.c.l.b16 %v52
  %v385 = vunpack.c.h.b16 %v52
  %v386 = vunpack.c.l.b16 %v53
  %v387 = vunpack.c.h.b16 %v53
  %v388 = vunpack.c.l.b16 %v54
  %v389 = vunpack.c.h.b16 %v54
  %v390 = vunpack.c.l.b16 %v55
  %v391 = vunpack.c.h.b16 %v55
  %v392 = vunpack.c.l.b16 %v56
  %v393 = vunpack.c.h.b16 %v56
  %v394 = vunpack.c.l.b16 %v57
  %v395 = vunpack.c.h.b16 %v57
  %v396 = vunpack.c.l.b16 %v58
  %v397 = vunpack.c.h.b16 %v58
  %v398 = vunpack.c.l.b16 %v59
  %v399 = vunpack.c.h.b16 %v59
  %v400 = vunpack.c.l.b16 %v60
  %v401 = vunpack.c.h.b16 %v60
  %v402 = vunpack.c.l.b16 %v61
  %v403 = vunpack.c.h.b16 %v61
  %v404 = vunpack.c.l.b16 %v62
  %v405 = vunpack.c.h.b16 %v62
  %v406 = vunpack.c.l.b16 %v63
  %v407 = vunpack.c.h.b16 %v63
  %v408 = vunpack.c.l.b16 %v64
  %v409 = vunpack.c.h.b16 %v64
  %v410 = vunpack.c.l.b16 %v65
  %v411 = vunpack.c.h.b16 %v65
  %v412 = vunpack.c.l.b16 %v66
  %v413 = vunpack.c.h.b16 %v66
  %v414 = vunpack.c.l.b16 %v67
  %v415 = vunpack.c.h.b16 %v67
  %v416 = vunpack.c.l.b16 %v68
  %v417 = vunpack.c.h.b16 %v68
  %v418 = vunpack.c.l.b16 %v69
  %v419 = vunpack.c.h.b16 %v69
  %v420 = vunpack.c.l.b16 %v70
  %v421 = vunpack.c.h.b16 %v70
  %v422 = vunpack.c.l.b16 %v71
  %v423 = vunpack.c.h.b16 %v71
  %v424 = vunpack.c.l.b16 %v72
  %v425 = vunpack.c.h.b16 %v72
  %v426 = vunpack.c.l.b16 %v73
  %v427 = vunpack.c.h.b16 %v73
  %v428 = vunpack.c.l.b16 %v74
  %v429 = vunpack.c.h.b16 %v74
  %v430 = vunpack.c.l.b16 %v75
  %v431 = vunpack.c.h.b16 %v75
  %v432 = vunpack.c.l.b16 %v76
  %v433 = vunpack.c.h.b16 %v76
  %v434 = vunpack.c.l.b16 %v77
  %v435 = vunpack.c.h.b16 %v77
  %v436 = vunpack.c.l.b16 %v78
  %v437 = vunpack.c.h.b16 %v78
  %v438 = vunpack.c.l.b16 %v79
  %v439 = vunpack.c.h.b16 %v79
  %v440 = vpack.c.b16 %v344, %v312
  %v441 = vpack.c.b16 %v345, %v313
  %v442 = vpack.c.b16 %v346, %v314
  %v443 = vpack.c.b16 %v347, %v315
  %v444 = vpack.c.b16 %v348, %v316
  %v445 = vpack.c.b16 %v349, %v317
  %v446 = vpack.c.b16 %v350, %v318
  %v447 = vpack.c.b16 %v351, %v319
  %v448 = vpack.c.b16 %v352, %v320
  %v449 = vpack.c.b16 %v353, %v321
  %v450 = vpack.c.b16 %v354, %v322
  %v451 = vpack.c.b16 %v355, %v323
  %v452 = vpack.c.b16 %v356, %v324
  %v453 = vpack.c.b16 %v357, %v325
  %v454 = vpack.c.b16 %v358, %v326
  %v455 = vpack.c.b16 %v359, %v327
  %v456 = vpack.c.b16 %v360, %v328
  %v457 = vpack.c.b16 %v361, %v329
  %v458 = vpack.c.b16 %v362, %v330
  %v459 = vpack.c.b16 %v363, %v331
  %v460 = vpack.c.b16 %v364, %v332
  %v461 = vpack.c.b16 %v365, %v333
  %v462 = vpack.c.b16 %v366, %v334
  %v463 = vpack.c.b16 %v367, %v335
  %v464 = vpack.c.b16 %v368, %v336
  %v465 = vpack.c.b16 %v369, %v337
  %v466 = vpack.c.b16 %v370, %v338
  %v467 = vpack.c.b16 %v371, %v339
  %v468 = vpack.c.b16 %v372, %v340
  %v469 = vpack.c.b16 %v373, %v341
  %v470 = vpack.c.b16 %v374, %v342
  %v471 = vpack.c.b16 %v375, %v343
  %v472 = vpack.c.b16 %v408, %v376
  %v473 = vpack.c.b16 %v409, %v377
  %v474 = vpack.c.b16 %v410, %v378
  %v475 = vpack.c.b16 %v411, %v379
  %v476 = vpack.c.b16 %v412, %v380
  %v477 = vpack.c.b16 %v413, %v381
  %v478 = vpack.c.b16 %v414, %v382
  %v479 = vpack.c.b16 %v415, %v383
  %v480 = vpack.c.b16 %v416, %v384
  %v481 = vpack.c.b16 %v417, %v385
  %v482 = vpack.c.b16 %v418, %v386
  %v483 = vpack.c.b16 %v419, %v387
  %v484 = vpack.c.b16 %v420, %v388
  %v485 = vpack.c.b16 %v421, %v389
  %v486 = vpack.c.b16 %v422, %v390
  %v487 = vpack.c.b16 %v423, %v391
  %v488 = vpack.c.b16 %v424, %v392
  %v489 = vpack.c.b16 %v425, %v393
  %v490 = vpack.c.b16 %v426, %v394
  %v491 = vpack.c.b16 %v427, %v395
  %v492 = vpack.c.b16 %v428, %v396
  %v493 = vpack.c.b16 %v429, %v397
  %v494 = vpack.c.b16 %v430, %v398
  %v495 = vpack.c.b16 %v431, %v399
  %v496 = vpack.c.b16 %v432, %v400
  %v497 = vpack.c.b16 %v433, %v401
  %v498 = vpack.c.b16 %v434, %v402
  %v499 = vpack.c.b16 %v435, %v403
  %v500 = vpack.c.b16 %v436, %v404
  %v501 = vpack.c.b16 %v437, %v405
  %v502 = vpack.c.b16 %v438, %v406
  %v503 = vpack.c.b16 %v439, %v407
  %vm536 = vcmask 211968
  %v538 = vsel %vm536, %v15, 0
  %vm540 = vcmask 1044480
  %v542 = vsel %vm540, %v472, 0
  %v545 = vsel %vm540, %v473, 0
  %v548 = vsel %vm540, %v474, 0
  %v551 = vsel %vm540, %v475, 0
  %v554 = vsel %vm540, %v476, 0
  %v557 = vsel %vm540, %v477, 0
  %v560 = vsel %vm540, %v478, 0
  %v563 = vsel %vm540, %v479, 0
  %v566 = vsel %vm540, %v480, 0
  %v569 = vsel %vm540, %v481, 0
  %v572 = vsel %vm540, %v482, 0
  %v575 = vsel %vm540, %v483, 0
  %v578 = vsel %vm540, %v484, 0
  %v581 = vsel %vm540, %v485, 0
  %v584 = vsel %vm540, %v486, 0
  %v587 = vsel %vm540, %v487, 0
  %v590 = vsel %vm540, %v488, 0
  %v593 = vsel %vm540, %v489, 0
  %v596 = vsel %vm540, %v490, 0
  %v599 = vsel %vm540, %v491, 0
  %v602 = vsel %vm540, %v492, 0
  %v605 = vsel %vm540, %v493, 0
  %v608 = vsel %vm540, %v494, 0
  %v611 = vsel %vm540, %v495, 0
  %v614 = vsel %vm540, %v496, 0
  %v617 = vsel %vm540, %v497, 0
  %v620 = vsel %vm540, %v498, 0
  %v623 = vsel %vm540, %v499, 0
  %v626 = vsel %vm540, %v500, 0
  %v629 = vsel %vm540, %v501, 0
  %v632 = vsel %vm540, %v502, 0
  %v635 = vsel %vm540, %v503, 0
  %637 = vmatprep.subr.bf16.mxu0 %v441
  %638 = vmatpush1.bf16.msra.mxu0 %v440
  %639 = vmatprep.subr.bf16.mxu0 %v545
  %640 = vmatpush1.bf16.msra.mxu0 %v542
  %641 = vmatprep.subr.bf16.mxu0 0
  %642 = vmatpush1.bf16.msra.mxu0 0
  %643 = vmatprep.subr.bf16.mxu0 0
  %644 = vmatpush1.bf16.msra.mxu0 0
  %645 = vmatprep.subr.bf16.mxu0 0
  %646 = vmatpush1.bf16.msra.mxu0 0
  %647 = vmatprep.subr.bf16.mxu0 0
  %648 = vmatpush1.bf16.msra.mxu0 0
  %649 = vmatprep.subr.bf16.mxu0 0
  %650 = vmatpush1.bf16.msra.mxu0 0
  %651 = vmatprep.subr.bf16.mxu0 0
  %652 = vmatpush1.bf16.msra.mxu0 0
  %653 = vmatprep.subr.bf16.mxu0 0
  %654 = vmatpush1.bf16.msra.mxu0 0
  %655 = vmatprep.subr.bf16.mxu0 0
  %656 = vmatpush1.bf16.msra.mxu0 0
  %657 = vmatprep.subr.bf16.mxu0 0
  %658 = vmatpush1.bf16.msra.mxu0 0
  %659 = vmatprep.subr.bf16.mxu0 0
  %660 = vmatpush1.bf16.msra.mxu0 0
  %661 = vmatprep.subr.bf16.mxu0 0
  %662 = vmatpush1.bf16.msra.mxu0 0
  %663 = vmatprep.subr.bf16.mxu0 0
  %664 = vmatpush1.bf16.msra.mxu0 0
  %665 = vmatprep.subr.bf16.mxu0 0
  %666 = vmatpush1.bf16.msra.mxu0 0
  %667 = vmatprep.subr.bf16.mxu0 0
  %668 = vmatpush1.bf16.msra.mxu0 0
  %669 = vmatprep.mubr.bf16.mxu0 0
  %670 = vmatmul.mubr.bf16.gmra.mrb[0].mxu0 %v538
  %v671 = vpop.f32.mrb[0].mxu0
  %v672 = vadd.f32 %v91, %v671
  %v673 = vpop.f32.mrb[0].mxu0
  %v674 = vadd.f32 %v95, %v673
  %v675 = vpop.f32.mrb[0].mxu0
  %v676 = vpop.f32.mrb[0].mxu0
  %677 = vdwg.mxu0
  %678 = vmatprep.subr.bf16.mxu0 %v443
  %679 = vmatpush1.bf16.msra.mxu0 %v442
  %680 = vmatprep.subr.bf16.mxu0 %v551
  %681 = vmatpush1.bf16.msra.mxu0 %v548
  %682 = vmatprep.subr.bf16.mxu0 0
  %683 = vmatpush1.bf16.msra.mxu0 0
  %684 = vmatprep.subr.bf16.mxu0 0
  %685 = vmatpush1.bf16.msra.mxu0 0
  %686 = vmatprep.subr.bf16.mxu0 0
  %687 = vmatpush1.bf16.msra.mxu0 0
  %688 = vmatprep.subr.bf16.mxu0 0
  %689 = vmatpush1.bf16.msra.mxu0 0
  %690 = vmatprep.subr.bf16.mxu0 0
  %691 = vmatpush1.bf16.msra.mxu0 0
  %692 = vmatprep.subr.bf16.mxu0 0
  %693 = vmatpush1.bf16.msra.mxu0 0
  %694 = vmatprep.subr.bf16.mxu0 0
  %695 = vmatpush1.bf16.msra.mxu0 0
  %696 = vmatprep.subr.bf16.mxu0 0
  %697 = vmatpush1.bf16.msra.mxu0 0
  %698 = vmatprep.subr.bf16.mxu0 0
  %699 = vmatpush1.bf16.msra.mxu0 0
  %700 = vmatprep.subr.bf16.mxu0 0
  %701 = vmatpush1.bf16.msra.mxu0 0
  %702 = vmatprep.subr.bf16.mxu0 0
  %703 = vmatpush1.bf16.msra.mxu0 0
  %704 = vmatprep.subr.bf16.mxu0 0
  %705 = vmatpush1.bf16.msra.mxu0 0
  %706 = vmatprep.subr.bf16.mxu0 0
  %707 = vmatpush1.bf16.msra.mxu0 0
  %708 = vmatprep.subr.bf16.mxu0 0
  %709 = vmatpush1.bf16.msra.mxu0 0
  %710 = vmatprep.mubr.bf16.mxu0 0
  %711 = vmatmul.mubr.bf16.gmra.mrb[0].mxu0 %v538
  %v712 = vpop.f32.mrb[0].mxu0
  %v713 = vadd.f32 %v99, %v712
  %v714 = vpop.f32.mrb[0].mxu0
  %v715 = vadd.f32 %v103, %v714
  %v716 = vpop.f32.mrb[0].mxu0
  %v717 = vpop.f32.mrb[0].mxu0
  %718 = vdwg.mxu0
  %719 = vmatprep.subr.bf16.mxu0 %v445
  %720 = vmatpush1.bf16.msra.mxu0 %v444
  %721 = vmatprep.subr.bf16.mxu0 %v557
  %722 = vmatpush1.bf16.msra.mxu0 %v554
  %723 = vmatprep.subr.bf16.mxu0 0
  %724 = vmatpush1.bf16.msra.mxu0 0
  %725 = vmatprep.subr.bf16.mxu0 0
  %726 = vmatpush1.bf16.msra.mxu0 0
  %727 = vmatprep.subr.bf16.mxu0 0
  %728 = vmatpush1.bf16.msra.mxu0 0
  %729 = vmatprep.subr.bf16.mxu0 0
  %730 = vmatpush1.bf16.msra.mxu0 0
  %731 = vmatprep.subr.bf16.mxu0 0
  %732 = vmatpush1.bf16.msra.mxu0 0
  %733 = vmatprep.subr.bf16.mxu0 0
  %734 = vmatpush1.bf16.msra.mxu0 0
  %735 = vmatprep.subr.bf16.mxu0 0
  %736 = vmatpush1.bf16.msra.mxu0 0
  %737 = vmatprep.subr.bf16.mxu0 0
  %738 = vmatpush1.bf16.msra.mxu0 0
  %739 = vmatprep.subr.bf16.mxu0 0
  %740 = vmatpush1.bf16.msra.mxu0 0
  %741 = vmatprep.subr.bf16.mxu0 0
  %742 = vmatpush1.bf16.msra.mxu0 0
  %743 = vmatprep.subr.bf16.mxu0 0
  %744 = vmatpush1.bf16.msra.mxu0 0
  %745 = vmatprep.subr.bf16.mxu0 0
  %746 = vmatpush1.bf16.msra.mxu0 0
  %747 = vmatprep.subr.bf16.mxu0 0
  %748 = vmatpush1.bf16.msra.mxu0 0
  %749 = vmatprep.subr.bf16.mxu0 0
  %750 = vmatpush1.bf16.msra.mxu0 0
  %751 = vmatprep.mubr.bf16.mxu0 0
  %752 = vmatmul.mubr.bf16.gmra.mrb[0].mxu0 %v538
  %v753 = vpop.f32.mrb[0].mxu0
  %v754 = vadd.f32 %v107, %v753
  %v755 = vpop.f32.mrb[0].mxu0
  %v756 = vadd.f32 %v111, %v755
  %v757 = vpop.f32.mrb[0].mxu0
  %v758 = vpop.f32.mrb[0].mxu0
  %759 = vdwg.mxu0
  %760 = vmatprep.subr.bf16.mxu0 %v447
  %761 = vmatpush1.bf16.msra.mxu0 %v446
  %762 = vmatprep.subr.bf16.mxu0 %v563
  %763 = vmatpush1.bf16.msra.mxu0 %v560
  %764 = vmatprep.subr.bf16.mxu0 0
  %765 = vmatpush1.bf16.msra.mxu0 0
  %766 = vmatprep.subr.bf16.mxu0 0
  %767 = vmatpush1.bf16.msra.mxu0 0
  %768 = vmatprep.subr.bf16.mxu0 0
  %769 = vmatpush1.bf16.msra.mxu0 0
  %770 = vmatprep.subr.bf16.mxu0 0
  %771 = vmatpush1.bf16.msra.mxu0 0
  %772 = vmatprep.subr.bf16.mxu0 0
  %773 = vmatpush1.bf16.msra.mxu0 0
  %774 = vmatprep.subr.bf16.mxu0 0
  %775 = vmatpush1.bf16.msra.mxu0 0
  %776 = vmatprep.subr.bf16.mxu0 0
  %777 = vmatpush1.bf16.msra.mxu0 0
  %778 = vmatprep.subr.bf16.mxu0 0
  %779 = vmatpush1.bf16.msra.mxu0 0
  %780 = vmatprep.subr.bf16.mxu0 0
  %781 = vmatpush1.bf16.msra.mxu0 0
  %782 = vmatprep.subr.bf16.mxu0 0
  %783 = vmatpush1.bf16.msra.mxu0 0
  %784 = vmatprep.subr.bf16.mxu0 0
  %785 = vmatpush1.bf16.msra.mxu0 0
  %786 = vmatprep.subr.bf16.mxu0 0
  %787 = vmatpush1.bf16.msra.mxu0 0
  %788 = vmatprep.subr.bf16.mxu0 0
  %789 = vmatpush1.bf16.msra.mxu0 0
  %790 = vmatprep.subr.bf16.mxu0 0
  %791 = vmatpush1.bf16.msra.mxu0 0
  %792 = vmatprep.mubr.bf16.mxu0 0
  %793 = vmatmul.mubr.bf16.gmra.mrb[0].mxu0 %v538
  %v794 = vpop.f32.mrb[0].mxu0
  %v795 = vadd.f32 %v115, %v794
  %v796 = vpop.f32.mrb[0].mxu0
  %v797 = vadd.f32 %v119, %v796
  %v798 = vpop.f32.mrb[0].mxu0
  %v799 = vpop.f32.mrb[0].mxu0
  %800 = vdwg.mxu0
  %801 = vmatprep.subr.bf16.mxu0 %v449
  %802 = vmatpush1.bf16.msra.mxu0 %v448
  %803 = vmatprep.subr.bf16.mxu0 %v569
  %804 = vmatpush1.bf16.msra.mxu0 %v566
  %805 = vmatprep.subr.bf16.mxu0 0
  %806 = vmatpush1.bf16.msra.mxu0 0
  %807 = vmatprep.subr.bf16.mxu0 0
  %808 = vmatpush1.bf16.msra.mxu0 0
  %809 = vmatprep.subr.bf16.mxu0 0
  %810 = vmatpush1.bf16.msra.mxu0 0
  %811 = vmatprep.subr.bf16.mxu0 0
  %812 = vmatpush1.bf16.msra.mxu0 0
  %813 = vmatprep.subr.bf16.mxu0 0
  %814 = vmatpush1.bf16.msra.mxu0 0
  %815 = vmatprep.subr.bf16.mxu0 0
  %816 = vmatpush1.bf16.msra.mxu0 0
  %817 = vmatprep.subr.bf16.mxu0 0
  %818 = vmatpush1.bf16.msra.mxu0 0
  %819 = vmatprep.subr.bf16.mxu0 0
  %820 = vmatpush1.bf16.msra.mxu0 0
  %821 = vmatprep.subr.bf16.mxu0 0
  %822 = vmatpush1.bf16.msra.mxu0 0
  %823 = vmatprep.subr.bf16.mxu0 0
  %824 = vmatpush1.bf16.msra.mxu0 0
  %825 = vmatprep.subr.bf16.mxu0 0
  %826 = vmatpush1.bf16.msra.mxu0 0
  %827 = vmatprep.subr.bf16.mxu0 0
  %828 = vmatpush1.bf16.msra.mxu0 0
  %829 = vmatprep.subr.bf16.mxu0 0
  %830 = vmatpush1.bf16.msra.mxu0 0
  %831 = vmatprep.subr.bf16.mxu0 0
  %832 = vmatpush1.bf16.msra.mxu0 0
  %833 = vmatprep.mubr.bf16.mxu0 0
  %834 = vmatmul.mubr.bf16.gmra.mrb[0].mxu0 %v538
  %v835 = vpop.f32.mrb[0].mxu0
  %v836 = vadd.f32 %v123, %v835
  %v837 = vpop.f32.mrb[0].mxu0
  %v838 = vadd.f32 %v127, %v837
  %v839 = vpop.f32.mrb[0].mxu0
  %v840 = vpop.f32.mrb[0].mxu0
  %841 = vdwg.mxu0
  %842 = vmatprep.subr.bf16.mxu0 %v451
  %843 = vmatpush1.bf16.msra.mxu0 %v450
  %844 = vmatprep.subr.bf16.mxu0 %v575
  %845 = vmatpush1.bf16.msra.mxu0 %v572
  %846 = vmatprep.subr.bf16.mxu0 0
  %847 = vmatpush1.bf16.msra.mxu0 0
  %848 = vmatprep.subr.bf16.mxu0 0
  %849 = vmatpush1.bf16.msra.mxu0 0
  %850 = vmatprep.subr.bf16.mxu0 0
  %851 = vmatpush1.bf16.msra.mxu0 0
  %852 = vmatprep.subr.bf16.mxu0 0
  %853 = vmatpush1.bf16.msra.mxu0 0
  %854 = vmatprep.subr.bf16.mxu0 0
  %855 = vmatpush1.bf16.msra.mxu0 0
  %856 = vmatprep.subr.bf16.mxu0 0
  %857 = vmatpush1.bf16.msra.mxu0 0
  %858 = vmatprep.subr.bf16.mxu0 0
  %859 = vmatpush1.bf16.msra.mxu0 0
  %860 = vmatprep.subr.bf16.mxu0 0
  %861 = vmatpush1.bf16.msra.mxu0 0
  %862 = vmatprep.subr.bf16.mxu0 0
  %863 = vmatpush1.bf16.msra.mxu0 0
  %864 = vmatprep.subr.bf16.mxu0 0
  %865 = vmatpush1.bf16.msra.mxu0 0
  %866 = vmatprep.subr.bf16.mxu0 0
  %867 = vmatpush1.bf16.msra.mxu0 0
  %868 = vmatprep.subr.bf16.mxu0 0
  %869 = vmatpush1.bf16.msra.mxu0 0
  %870 = vmatprep.subr.bf16.mxu0 0
  %871 = vmatpush1.bf16.msra.mxu0 0
  %872 = vmatprep.subr.bf16.mxu0 0
  %873 = vmatpush1.bf16.msra.mxu0 0
  %874 = vmatprep.mubr.bf16.mxu0 0
  %875 = vmatmul.mubr.bf16.gmra.mrb[0].mxu0 %v538
  %v876 = vpop.f32.mrb[0].mxu0
  %v877 = vadd.f32 %v131, %v876
  %v878 = vpop.f32.mrb[0].mxu0
  %v879 = vadd.f32 %v135, %v878
  %v880 = vpop.f32.mrb[0].mxu0
  %v881 = vpop.f32.mrb[0].mxu0
  %882 = vdwg.mxu0
  %883 = vmatprep.subr.bf16.mxu0 %v453
  %884 = vmatpush1.bf16.msra.mxu0 %v452
  %885 = vmatprep.subr.bf16.mxu0 %v581
  %886 = vmatpush1.bf16.msra.mxu0 %v578
  %887 = vmatprep.subr.bf16.mxu0 0
  %888 = vmatpush1.bf16.msra.mxu0 0
  %889 = vmatprep.subr.bf16.mxu0 0
  %890 = vmatpush1.bf16.msra.mxu0 0
  %891 = vmatprep.subr.bf16.mxu0 0
  %892 = vmatpush1.bf16.msra.mxu0 0
  %893 = vmatprep.subr.bf16.mxu0 0
  %894 = vmatpush1.bf16.msra.mxu0 0
  %895 = vmatprep.subr.bf16.mxu0 0
  %896 = vmatpush1.bf16.msra.mxu0 0
  %897 = vmatprep.subr.bf16.mxu0 0
  %898 = vmatpush1.bf16.msra.mxu0 0
  %899 = vmatprep.subr.bf16.mxu0 0
  %900 = vmatpush1.bf16.msra.mxu0 0
  %901 = vmatprep.subr.bf16.mxu0 0
  %902 = vmatpush1.bf16.msra.mxu0 0
  %903 = vmatprep.subr.bf16.mxu0 0
  %904 = vmatpush1.bf16.msra.mxu0 0
  %905 = vmatprep.subr.bf16.mxu0 0
  %906 = vmatpush1.bf16.msra.mxu0 0
  %907 = vmatprep.subr.bf16.mxu0 0
  %908 = vmatpush1.bf16.msra.mxu0 0
  %909 = vmatprep.subr.bf16.mxu0 0
  %910 = vmatpush1.bf16.msra.mxu0 0
  %911 = vmatprep.subr.bf16.mxu0 0
  %912 = vmatpush1.bf16.msra.mxu0 0
  %913 = vmatprep.subr.bf16.mxu0 0
  %914 = vmatpush1.bf16.msra.mxu0 0
  %915 = vmatprep.mubr.bf16.mxu0 0
  %916 = vmatmul.mubr.bf16.gmra.mrb[0].mxu0 %v538
  %v917 = vpop.f32.mrb[0].mxu0
  %v918 = vadd.f32 %v139, %v917
  %v919 = vpop.f32.mrb[0].mxu0
  %v920 = vadd.f32 %v143, %v919
  %v921 = vpop.f32.mrb[0].mxu0
  %v922 = vpop.f32.mrb[0].mxu0
  %923 = vdwg.mxu0
  %924 = vmatprep.subr.bf16.mxu0 %v455
  %925 = vmatpush1.bf16.msra.mxu0 %v454
  %926 = vmatprep.subr.bf16.mxu0 %v587
  %927 = vmatpush1.bf16.msra.mxu0 %v584
  %928 = vmatprep.subr.bf16.mxu0 0
  %929 = vmatpush1.bf16.msra.mxu0 0
  %930 = vmatprep.subr.bf16.mxu0 0
  %931 = vmatpush1.bf16.msra.mxu0 0
  %932 = vmatprep.subr.bf16.mxu0 0
  %933 = vmatpush1.bf16.msra.mxu0 0
  %934 = vmatprep.subr.bf16.mxu0 0
  %935 = vmatpush1.bf16.msra.mxu0 0
  %936 = vmatprep.subr.bf16.mxu0 0
  %937 = vmatpush1.bf16.msra.mxu0 0
  %938 = vmatprep.subr.bf16.mxu0 0
  %939 = vmatpush1.bf16.msra.mxu0 0
  %940 = vmatprep.subr.bf16.mxu0 0
  %941 = vmatpush1.bf16.msra.mxu0 0
  %942 = vmatprep.subr.bf16.mxu0 0
  %943 = vmatpush1.bf16.msra.mxu0 0
  %944 = vmatprep.subr.bf16.mxu0 0
  %945 = vmatpush1.bf16.msra.mxu0 0
  %946 = vmatprep.subr.bf16.mxu0 0
  %947 = vmatpush1.bf16.msra.mxu0 0
  %948 = vmatprep.subr.bf16.mxu0 0
  %949 = vmatpush1.bf16.msra.mxu0 0
  %950 = vmatprep.subr.bf16.mxu0 0
  %951 = vmatpush1.bf16.msra.mxu0 0
  %952 = vmatprep.subr.bf16.mxu0 0
  %953 = vmatpush1.bf16.msra.mxu0 0
  %954 = vmatprep.subr.bf16.mxu0 0
  %955 = vmatpush1.bf16.msra.mxu0 0
  %956 = vmatprep.mubr.bf16.mxu0 0
  %957 = vmatmul.mubr.bf16.gmra.mrb[0].mxu0 %v538
  %v958 = vpop.f32.mrb[0].mxu0
  %v959 = vadd.f32 %v147, %v958
  %v960 = vpop.f32.mrb[0].mxu0
  %v961 = vadd.f32 %v151, %v960
  %v962 = vpop.f32.mrb[0].mxu0
  %v963 = vpop.f32.mrb[0].mxu0
  %964 = vdwg.mxu0
  %965 = vmatprep.subr.bf16.mxu0 %v457
  %966 = vmatpush1.bf16.msra.mxu0 %v456
  %967 = vmatprep.subr.bf16.mxu0 %v593
  %968 = vmatpush1.bf16.msra.mxu0 %v590
  %969 = vmatprep.subr.bf16.mxu0 0
  %970 = vmatpush1.bf16.msra.mxu0 0
  %971 = vmatprep.subr.bf16.mxu0 0
  %972 = vmatpush1.bf16.msra.mxu0 0
  %973 = vmatprep.subr.bf16.mxu0 0
  %974 = vmatpush1.bf16.msra.mxu0 0
  %975 = vmatprep.subr.bf16.mxu0 0
  %976 = vmatpush1.bf16.msra.mxu0 0
  %977 = vmatprep.subr.bf16.mxu0 0
  %978 = vmatpush1.bf16.msra.mxu0 0
  %979 = vmatprep.subr.bf16.mxu0 0
  %980 = vmatpush1.bf16.msra.mxu0 0
  %981 = vmatprep.subr.bf16.mxu0 0
  %982 = vmatpush1.bf16.msra.mxu0 0
  %983 = vmatprep.subr.bf16.mxu0 0
  %984 = vmatpush1.bf16.msra.mxu0 0
  %985 = vmatprep.subr.bf16.mxu0 0
  %986 = vmatpush1.bf16.msra.mxu0 0
  %987 = vmatprep.subr.bf16.mxu0 0
  %988 = vmatpush1.bf16.msra.mxu0 0
  %989 = vmatprep.subr.bf16.mxu0 0
  %990 = vmatpush1.bf16.msra.mxu0 0
  %991 = vmatprep.subr.bf16.mxu0 0
  %992 = vmatpush1.bf16.msra.mxu0 0
  %993 = vmatprep.subr.bf16.mxu0 0
  %994 = vmatpush1.bf16.msra.mxu0 0
  %995 = vmatprep.subr.bf16.mxu0 0
  %996 = vmatpush1.bf16.msra.mxu0 0
  %997 = vmatprep.mubr.bf16.mxu0 0
  %998 = vmatmul.mubr.bf16.gmra.mrb[0].mxu0 %v538
  %v999 = vpop.f32.mrb[0].mxu0
  %v1000 = vadd.f32 %v155, %v999
  %v1001 = vpop.f32.mrb[0].mxu0
  %v1002 = vadd.f32 %v159, %v1001
  %v1003 = vpop.f32.mrb[0].mxu0
  %v1004 = vpop.f32.mrb[0].mxu0
  %1005 = vdwg.mxu0
  %1006 = vmatprep.subr.bf16.mxu0 %v459
  %1007 = vmatpush1.bf16.msra.mxu0 %v458
  %1008 = vmatprep.subr.bf16.mxu0 %v599
  %1009 = vmatpush1.bf16.msra.mxu0 %v596
  %1010 = vmatprep.subr.bf16.mxu0 0
  %1011 = vmatpush1.bf16.msra.mxu0 0
  %1012 = vmatprep.subr.bf16.mxu0 0
  %1013 = vmatpush1.bf16.msra.mxu0 0
  %1014 = vmatprep.subr.bf16.mxu0 0
  %1015 = vmatpush1.bf16.msra.mxu0 0
  %1016 = vmatprep.subr.bf16.mxu0 0
  %1017 = vmatpush1.bf16.msra.mxu0 0
  %1018 = vmatprep.subr.bf16.mxu0 0
  %1019 = vmatpush1.bf16.msra.mxu0 0
  %1020 = vmatprep.subr.bf16.mxu0 0
  %1021 = vmatpush1.bf16.msra.mxu0 0
  %1022 = vmatprep.subr.bf16.mxu0 0
  %1023 = vmatpush1.bf16.msra.mxu0 0
  %1024 = vmatprep.subr.bf16.mxu0 0
  %1025 = vmatpush1.bf16.msra.mxu0 0
  %1026 = vmatprep.subr.bf16.mxu0 0
  %1027 = vmatpush1.bf16.msra.mxu0 0
  %1028 = vmatprep.subr.bf16.mxu0 0
  %1029 = vmatpush1.bf16.msra.mxu0 0
  %1030 = vmatprep.subr.bf16.mxu0 0
  %1031 = vmatpush1.bf16.msra.mxu0 0
  %1032 = vmatprep.subr.bf16.mxu0 0
  %1033 = vmatpush1.bf16.msra.mxu0 0
  %1034 = vmatprep.subr.bf16.mxu0 0
  %1035 = vmatpush1.bf16.msra.mxu0 0
  %1036 = vmatprep.subr.bf16.mxu0 0
  %1037 = vmatpush1.bf16.msra.mxu0 0
  %1038 = vmatprep.mubr.bf16.mxu0 0
  %1039 = vmatmul.mubr.bf16.gmra.mrb[0].mxu0 %v538
  %v1040 = vpop.f32.mrb[0].mxu0
  %v1041 = vadd.f32 %v163, %v1040
  %v1042 = vpop.f32.mrb[0].mxu0
  %v1043 = vadd.f32 %v167, %v1042
  %v1044 = vpop.f32.mrb[0].mxu0
  %v1045 = vpop.f32.mrb[0].mxu0
  %1046 = vdwg.mxu0
  %1047 = vmatprep.subr.bf16.mxu0 %v461
  %1048 = vmatpush1.bf16.msra.mxu0 %v460
  %1049 = vmatprep.subr.bf16.mxu0 %v605
  %1050 = vmatpush1.bf16.msra.mxu0 %v602
  %1051 = vmatprep.subr.bf16.mxu0 0
  %1052 = vmatpush1.bf16.msra.mxu0 0
  %1053 = vmatprep.subr.bf16.mxu0 0
  %1054 = vmatpush1.bf16.msra.mxu0 0
  %1055 = vmatprep.subr.bf16.mxu0 0
  %1056 = vmatpush1.bf16.msra.mxu0 0
  %1057 = vmatprep.subr.bf16.mxu0 0
  %1058 = vmatpush1.bf16.msra.mxu0 0
  %1059 = vmatprep.subr.bf16.mxu0 0
  %1060 = vmatpush1.bf16.msra.mxu0 0
  %1061 = vmatprep.subr.bf16.mxu0 0
  %1062 = vmatpush1.bf16.msra.mxu0 0
  %1063 = vmatprep.subr.bf16.mxu0 0
  %1064 = vmatpush1.bf16.msra.mxu0 0
  %1065 = vmatprep.subr.bf16.mxu0 0
  %1066 = vmatpush1.bf16.msra.mxu0 0
  %1067 = vmatprep.subr.bf16.mxu0 0
  %1068 = vmatpush1.bf16.msra.mxu0 0
  %1069 = vmatprep.subr.bf16.mxu0 0
  %1070 = vmatpush1.bf16.msra.mxu0 0
  %1071 = vmatprep.subr.bf16.mxu0 0
  %1072 = vmatpush1.bf16.msra.mxu0 0
  %1073 = vmatprep.subr.bf16.mxu0 0
  %1074 = vmatpush1.bf16.msra.mxu0 0
  %1075 = vmatprep.subr.bf16.mxu0 0
  %1076 = vmatpush1.bf16.msra.mxu0 0
  %1077 = vmatprep.subr.bf16.mxu0 0
  %1078 = vmatpush1.bf16.msra.mxu0 0
  %1079 = vmatprep.mubr.bf16.mxu0 0
  %1080 = vmatmul.mubr.bf16.gmra.mrb[0].mxu0 %v538
  %v1081 = vpop.f32.mrb[0].mxu0
  %v1082 = vadd.f32 %v171, %v1081
  %v1083 = vpop.f32.mrb[0].mxu0
  %v1084 = vadd.f32 %v175, %v1083
  %v1085 = vpop.f32.mrb[0].mxu0
  %v1086 = vpop.f32.mrb[0].mxu0
  %1087 = vdwg.mxu0
  %1088 = vmatprep.subr.bf16.mxu0 %v463
  %1089 = vmatpush1.bf16.msra.mxu0 %v462
  %1090 = vmatprep.subr.bf16.mxu0 %v611
  %1091 = vmatpush1.bf16.msra.mxu0 %v608
  %1092 = vmatprep.subr.bf16.mxu0 0
  %1093 = vmatpush1.bf16.msra.mxu0 0
  %1094 = vmatprep.subr.bf16.mxu0 0
  %1095 = vmatpush1.bf16.msra.mxu0 0
  %1096 = vmatprep.subr.bf16.mxu0 0
  %1097 = vmatpush1.bf16.msra.mxu0 0
  %1098 = vmatprep.subr.bf16.mxu0 0
  %1099 = vmatpush1.bf16.msra.mxu0 0
  %1100 = vmatprep.subr.bf16.mxu0 0
  %1101 = vmatpush1.bf16.msra.mxu0 0
  %1102 = vmatprep.subr.bf16.mxu0 0
  %1103 = vmatpush1.bf16.msra.mxu0 0
  %1104 = vmatprep.subr.bf16.mxu0 0
  %1105 = vmatpush1.bf16.msra.mxu0 0
  %1106 = vmatprep.subr.bf16.mxu0 0
  %1107 = vmatpush1.bf16.msra.mxu0 0
  %1108 = vmatprep.subr.bf16.mxu0 0
  %1109 = vmatpush1.bf16.msra.mxu0 0
  %1110 = vmatprep.subr.bf16.mxu0 0
  %1111 = vmatpush1.bf16.msra.mxu0 0
  %1112 = vmatprep.subr.bf16.mxu0 0
  %1113 = vmatpush1.bf16.msra.mxu0 0
  %1114 = vmatprep.subr.bf16.mxu0 0
  %1115 = vmatpush1.bf16.msra.mxu0 0
  %1116 = vmatprep.subr.bf16.mxu0 0
  %1117 = vmatpush1.bf16.msra.mxu0 0
  %1118 = vmatprep.subr.bf16.mxu0 0
  %1119 = vmatpush1.bf16.msra.mxu0 0
  %1120 = vmatprep.mubr.bf16.mxu0 0
  %1121 = vmatmul.mubr.bf16.gmra.mrb[0].mxu0 %v538
  %v1122 = vpop.f32.mrb[0].mxu0
  %v1123 = vadd.f32 %v179, %v1122
  %v1124 = vpop.f32.mrb[0].mxu0
  %v1125 = vadd.f32 %v183, %v1124
  %v1126 = vpop.f32.mrb[0].mxu0
  %v1127 = vpop.f32.mrb[0].mxu0
  %1128 = vdwg.mxu0
  %1129 = vmatprep.subr.bf16.mxu0 %v465
  %1130 = vmatpush1.bf16.msra.mxu0 %v464
  %1131 = vmatprep.subr.bf16.mxu0 %v617
  %1132 = vmatpush1.bf16.msra.mxu0 %v614
  %1133 = vmatprep.subr.bf16.mxu0 0
  %1134 = vmatpush1.bf16.msra.mxu0 0
  %1135 = vmatprep.subr.bf16.mxu0 0
  %1136 = vmatpush1.bf16.msra.mxu0 0
  %1137 = vmatprep.subr.bf16.mxu0 0
  %1138 = vmatpush1.bf16.msra.mxu0 0
  %1139 = vmatprep.subr.bf16.mxu0 0
  %1140 = vmatpush1.bf16.msra.mxu0 0
  %1141 = vmatprep.subr.bf16.mxu0 0
  %1142 = vmatpush1.bf16.msra.mxu0 0
  %1143 = vmatprep.subr.bf16.mxu0 0
  %1144 = vmatpush1.bf16.msra.mxu0 0
  %1145 = vmatprep.subr.bf16.mxu0 0
  %1146 = vmatpush1.bf16.msra.mxu0 0
  %1147 = vmatprep.subr.bf16.mxu0 0
  %1148 = vmatpush1.bf16.msra.mxu0 0
  %1149 = vmatprep.subr.bf16.mxu0 0
  %1150 = vmatpush1.bf16.msra.mxu0 0
  %1151 = vmatprep.subr.bf16.mxu0 0
  %1152 = vmatpush1.bf16.msra.mxu0 0
  %1153 = vmatprep.subr.bf16.mxu0 0
  %1154 = vmatpush1.bf16.msra.mxu0 0
  %1155 = vmatprep.subr.bf16.mxu0 0
  %1156 = vmatpush1.bf16.msra.mxu0 0
  %1157 = vmatprep.subr.bf16.mxu0 0
  %1158 = vmatpush1.bf16.msra.mxu0 0
  %1159 = vmatprep.subr.bf16.mxu0 0
  %1160 = vmatpush1.bf16.msra.mxu0 0
  %1161 = vmatprep.mubr.bf16.mxu0 0
  %1162 = vmatmul.mubr.bf16.gmra.mrb[0].mxu0 %v538
  %v1163 = vpop.f32.mrb[0].mxu0
  %v1164 = vadd.f32 %v187, %v1163
  %v1165 = vpop.f32.mrb[0].mxu0
  %v1166 = vadd.f32 %v191, %v1165
  %v1167 = vpop.f32.mrb[0].mxu0
  %v1168 = vpop.f32.mrb[0].mxu0
  %1169 = vdwg.mxu0
  %1170 = vmatprep.subr.bf16.mxu0 %v467
  %1171 = vmatpush1.bf16.msra.mxu0 %v466
  %1172 = vmatprep.subr.bf16.mxu0 %v623
  %1173 = vmatpush1.bf16.msra.mxu0 %v620
  %1174 = vmatprep.subr.bf16.mxu0 0
  %1175 = vmatpush1.bf16.msra.mxu0 0
  %1176 = vmatprep.subr.bf16.mxu0 0
  %1177 = vmatpush1.bf16.msra.mxu0 0
  %1178 = vmatprep.subr.bf16.mxu0 0
  %1179 = vmatpush1.bf16.msra.mxu0 0
  %1180 = vmatprep.subr.bf16.mxu0 0
  %1181 = vmatpush1.bf16.msra.mxu0 0
  %1182 = vmatprep.subr.bf16.mxu0 0
  %1183 = vmatpush1.bf16.msra.mxu0 0
  %1184 = vmatprep.subr.bf16.mxu0 0
  %1185 = vmatpush1.bf16.msra.mxu0 0
  %1186 = vmatprep.subr.bf16.mxu0 0
  %1187 = vmatpush1.bf16.msra.mxu0 0
  %1188 = vmatprep.subr.bf16.mxu0 0
  %1189 = vmatpush1.bf16.msra.mxu0 0
  %1190 = vmatprep.subr.bf16.mxu0 0
  %1191 = vmatpush1.bf16.msra.mxu0 0
  %1192 = vmatprep.subr.bf16.mxu0 0
  %1193 = vmatpush1.bf16.msra.mxu0 0
  %1194 = vmatprep.subr.bf16.mxu0 0
  %1195 = vmatpush1.bf16.msra.mxu0 0
  %1196 = vmatprep.subr.bf16.mxu0 0
  %1197 = vmatpush1.bf16.msra.mxu0 0
  %1198 = vmatprep.subr.bf16.mxu0 0
  %1199 = vmatpush1.bf16.msra.mxu0 0
  %1200 = vmatprep.subr.bf16.mxu0 0
  %1201 = vmatpush1.bf16.msra.mxu0 0
  %1202 = vmatprep.mubr.bf16.mxu0 0
  %1203 = vmatmul.mubr.bf16.gmra.mrb[0].mxu0 %v538
  %v1204 = vpop.f32.mrb[0].mxu0
  %v1205 = vadd.f32 %v195, %v1204
  %v1206 = vpop.f32.mrb[0].mxu0
  %v1207 = vadd.f32 %v199, %v1206
  %v1208 = vpop.f32.mrb[0].mxu0
  %v1209 = vpop.f32.mrb[0].mxu0
  %1210 = vdwg.mxu0
  %1211 = vmatprep.subr.bf16.mxu0 %v469
  %1212 = vmatpush1.bf16.msra.mxu0 %v468
  %1213 = vmatprep.subr.bf16.mxu0 %v629
  %1214 = vmatpush1.bf16.msra.mxu0 %v626
  %1215 = vmatprep.subr.bf16.mxu0 0
  %1216 = vmatpush1.bf16.msra.mxu0 0
  %1217 = vmatprep.subr.bf16.mxu0 0
  %1218 = vmatpush1.bf16.msra.mxu0 0
  %1219 = vmatprep.subr.bf16.mxu0 0
  %1220 = vmatpush1.bf16.msra.mxu0 0
  %1221 = vmatprep.subr.bf16.mxu0 0
  %1222 = vmatpush1.bf16.msra.mxu0 0
  %1223 = vmatprep.subr.bf16.mxu0 0
  %1224 = vmatpush1.bf16.msra.mxu0 0
  %1225 = vmatprep.subr.bf16.mxu0 0
  %1226 = vmatpush1.bf16.msra.mxu0 0
  %1227 = vmatprep.subr.bf16.mxu0 0
  %1228 = vmatpush1.bf16.msra.mxu0 0
  %1229 = vmatprep.subr.bf16.mxu0 0
  %1230 = vmatpush1.bf16.msra.mxu0 0
  %1231 = vmatprep.subr.bf16.mxu0 0
  %1232 = vmatpush1.bf16.msra.mxu0 0
  %1233 = vmatprep.subr.bf16.mxu0 0
  %1234 = vmatpush1.bf16.msra.mxu0 0
  %1235 = vmatprep.subr.bf16.mxu0 0
  %1236 = vmatpush1.bf16.msra.mxu0 0
  %1237 = vmatprep.subr.bf16.mxu0 0
  %1238 = vmatpush1.bf16.msra.mxu0 0
  %1239 = vmatprep.subr.bf16.mxu0 0
  %1240 = vmatpush1.bf16.msra.mxu0 0
  %1241 = vmatprep.subr.bf16.mxu0 0
  %1242 = vmatpush1.bf16.msra.mxu0 0
  %1243 = vmatprep.mubr.bf16.mxu0 0
  %1244 = vmatmul.mubr.bf16.gmra.mrb[0].mxu0 %v538
  %v1245 = vpop.f32.mrb[0].mxu0
  %v1246 = vadd.f32 %v203, %v1245
  %v1247 = vpop.f32.mrb[0].mxu0
  %v1248 = vadd.f32 %v207, %v1247
  %v1249 = vpop.f32.mrb[0].mxu0
  %v1250 = vpop.f32.mrb[0].mxu0
  %1251 = vdwg.mxu0
  %1252 = vmatprep.subr.bf16.mxu0 %v471
  %1253 = vmatpush1.bf16.msra.mxu0 %v470
  %1254 = vmatprep.subr.bf16.mxu0 %v635
  %1255 = vmatpush1.bf16.msra.mxu0 %v632
  %1256 = vmatprep.subr.bf16.mxu0 0
  %1257 = vmatpush1.bf16.msra.mxu0 0
  %1258 = vmatprep.subr.bf16.mxu0 0
  %1259 = vmatpush1.bf16.msra.mxu0 0
  %1260 = vmatprep.subr.bf16.mxu0 0
  %1261 = vmatpush1.bf16.msra.mxu0 0
  %1262 = vmatprep.subr.bf16.mxu0 0
  %1263 = vmatpush1.bf16.msra.mxu0 0
  %1264 = vmatprep.subr.bf16.mxu0 0
  %1265 = vmatpush1.bf16.msra.mxu0 0
  %1266 = vmatprep.subr.bf16.mxu0 0
  %1267 = vmatpush1.bf16.msra.mxu0 0
  %1268 = vmatprep.subr.bf16.mxu0 0
  %1269 = vmatpush1.bf16.msra.mxu0 0
  %1270 = vmatprep.subr.bf16.mxu0 0
  %1271 = vmatpush1.bf16.msra.mxu0 0
  %1272 = vmatprep.subr.bf16.mxu0 0
  %1273 = vmatpush1.bf16.msra.mxu0 0
  %1274 = vmatprep.subr.bf16.mxu0 0
  %1275 = vmatpush1.bf16.msra.mxu0 0
  %1276 = vmatprep.subr.bf16.mxu0 0
  %1277 = vmatpush1.bf16.msra.mxu0 0
  %1278 = vmatprep.subr.bf16.mxu0 0
  %1279 = vmatpush1.bf16.msra.mxu0 0
  %1280 = vmatprep.subr.bf16.mxu0 0
  %1281 = vmatpush1.bf16.msra.mxu0 0
  %1282 = vmatprep.subr.bf16.mxu0 0
  %1283 = vmatpush1.bf16.msra.mxu0 0
  %1284 = vmatprep.mubr.bf16.mxu0 0
  %1285 = vmatmul.mubr.bf16.gmra.mrb[0].mxu0 %v538
  %v1286 = vpop.f32.mrb[0].mxu0
  %v1287 = vadd.f32 %v211, %v1286
  %v1288 = vpop.f32.mrb[0].mxu0
  %v1289 = vadd.f32 %v215, %v1288
  %v1290 = vpop.f32.mrb[0].mxu0
  %v1291 = vpop.f32.mrb[0].mxu0
  %1292 = vdwg.mxu0
  %v1293 = vmax.f32 %v672, 0.0
  %v1294 = vmax.f32 %v674, 0.0
  %v1295 = vmax.f32 %v713, 0.0
  %v1296 = vmax.f32 %v715, 0.0
  %v1297 = vmax.f32 %v754, 0.0
  %v1298 = vmax.f32 %v756, 0.0
  %v1299 = vmax.f32 %v795, 0.0
  %v1300 = vmax.f32 %v797, 0.0
  %v1301 = vmax.f32 %v836, 0.0
  %v1302 = vmax.f32 %v838, 0.0
  %v1303 = vmax.f32 %v877, 0.0
  %v1304 = vmax.f32 %v879, 0.0
  %v1305 = vmax.f32 %v918, 0.0
  %v1306 = vmax.f32 %v920, 0.0
  %v1307 = vmax.f32 %v959, 0.0
  %v1308 = vmax.f32 %v961, 0.0
  %v1309 = vmax.f32 %v1000, 0.0
  %v1310 = vmax.f32 %v1002, 0.0
  %v1311 = vmax.f32 %v1041, 0.0
  %v1312 = vmax.f32 %v1043, 0.0
  %v1313 = vmax.f32 %v1082, 0.0
  %v1314 = vmax.f32 %v1084, 0.0
  %v1315 = vmax.f32 %v1123, 0.0
  %v1316 = vmax.f32 %v1125, 0.0
  %v1317 = vmax.f32 %v1164, 0.0
  %v1318 = vmax.f32 %v1166, 0.0
  %v1319 = vmax.f32 %v1205, 0.0
  %v1320 = vmax.f32 %v1207, 0.0
  %v1321 = vmax.f32 %v1246, 0.0
  %v1322 = vmax.f32 %v1248, 0.0
  %v1323 = vmax.f32 %v1287, 0.0
  %v1324 = vmax.f32 %v1289, 0.0
  %v1325 = vpack.c.bf16 %v1293, %v1293
  %v1326 = vpack.c.bf16 %v1294, %v1294
  %v1327 = vpack.c.bf16 %v1295, %v1295
  %v1328 = vpack.c.bf16 %v1296, %v1296
  %v1329 = vpack.c.bf16 %v1297, %v1297
  %v1330 = vpack.c.bf16 %v1298, %v1298
  %v1331 = vpack.c.bf16 %v1299, %v1299
  %v1332 = vpack.c.bf16 %v1300, %v1300
  %v1333 = vpack.c.bf16 %v1301, %v1301
  %v1334 = vpack.c.bf16 %v1302, %v1302
  %v1335 = vpack.c.bf16 %v1303, %v1303
  %v1336 = vpack.c.bf16 %v1304, %v1304
  %v1337 = vpack.c.bf16 %v1305, %v1305
  %v1338 = vpack.c.bf16 %v1306, %v1306
  %v1339 = vpack.c.bf16 %v1307, %v1307
  %v1340 = vpack.c.bf16 %v1308, %v1308
  %v1341 = vpack.c.bf16 %v1309, %v1309
  %v1342 = vpack.c.bf16 %v1310, %v1310
  %v1343 = vpack.c.bf16 %v1311, %v1311
  %v1344 = vpack.c.bf16 %v1312, %v1312
  %v1345 = vpack.c.bf16 %v1313, %v1313
  %v1346 = vpack.c.bf16 %v1314, %v1314
  %v1347 = vpack.c.bf16 %v1315, %v1315
  %v1348 = vpack.c.bf16 %v1316, %v1316
  %v1349 = vpack.c.bf16 %v1317, %v1317
  %v1350 = vpack.c.bf16 %v1318, %v1318
  %v1351 = vpack.c.bf16 %v1319, %v1319
  %v1352 = vpack.c.bf16 %v1320, %v1320
  %v1353 = vpack.c.bf16 %v1321, %v1321
  %v1354 = vpack.c.bf16 %v1322, %v1322
  %v1355 = vpack.c.bf16 %v1323, %v1323
  %v1356 = vpack.c.bf16 %v1324, %v1324
  %v1389 = vcombine.low %v1325, %v1326
  %v1390 = vcombine.low %v1327, %v1328
  %v1391 = vcombine.low %v1329, %v1330
  %v1392 = vcombine.low %v1331, %v1332
  %v1394 = vunpack.c.l.s4 1966171168
  %v1395 = vunpack.c.0.s8 %v1394
  %v1396 = vlaneseq
  %v1397 = vshrl.u32 %v1396, 7
  %v1398 = vsub.s32 %v1395, %v1397
  %v1399 = vrot.slane %v1389, %v1398
  %v1401 = vunpack.c.l.s4 1966171168
  %v1402 = vunpack.c.0.s8 %v1401
  %v1403 = vlaneseq
  %v1404 = vshrl.u32 %v1403, 7
  %v1405 = vsub.s32 %v1402, %v1404
  %v1406 = vrot.slane %v1390, %v1405
  %v1408 = vunpack.c.l.s4 1966171168
  %v1409 = vunpack.c.0.s8 %v1408
  %v1410 = vlaneseq
  %v1411 = vshrl.u32 %v1410, 7
  %v1412 = vsub.s32 %v1409, %v1411
  %v1413 = vrot.slane %v1391, %v1412
  %v1415 = vunpack.c.l.s4 1966171168
  %v1416 = vunpack.c.0.s8 %v1415
  %v1417 = vlaneseq
  %v1418 = vshrl.u32 %v1417, 7
  %v1419 = vsub.s32 %v1416, %v1418
  %v1420 = vrot.slane %v1392, %v1419
  %v1421 = vcombine.low %v1399, %v1406
  %v1422 = vcombine.low %v1413, %v1420
  %v1424 = vunpack.c.l.s4 1966171168
  %v1425 = vunpack.c.0.s8 %v1424
  %v1426 = vlaneseq
  %v1427 = vshrl.u32 %v1426, 7
  %v1428 = vsub.s32 %v1425, %v1427
  %v1429 = vrot.slane %v1421, %v1428
  %v1431 = vunpack.c.l.s4 1966171168
  %v1432 = vunpack.c.0.s8 %v1431
  %v1433 = vlaneseq
  %v1434 = vshrl.u32 %v1433, 7
  %v1435 = vsub.s32 %v1432, %v1434
  %v1436 = vrot.slane %v1422, %v1435
  %v1437 = vcombine.low %v1429, %v1436
  %v1438 = vcombine.low %v1333, %v1334
  %v1439 = vcombine.low %v1335, %v1336
  %v1440 = vcombine.low %v1337, %v1338
  %v1441 = vcombine.low %v1339, %v1340
  %v1443 = vunpack.c.l.s4 1966171168
  %v1444 = vunpack.c.0.s8 %v1443
  %v1445 = vlaneseq
  %v1446 = vshrl.u32 %v1445, 7
  %v1447 = vsub.s32 %v1444, %v1446
  %v1448 = vrot.slane %v1438, %v1447
  %v1450 = vunpack.c.l.s4 1966171168
  %v1451 = vunpack.c.0.s8 %v1450
  %v1452 = vlaneseq
  %v1453 = vshrl.u32 %v1452, 7
  %v1454 = vsub.s32 %v1451, %v1453
  %v1455 = vrot.slane %v1439, %v1454
  %v1457 = vunpack.c.l.s4 1966171168
  %v1458 = vunpack.c.0.s8 %v1457
  %v1459 = vlaneseq
  %v1460 = vshrl.u32 %v1459, 7
  %v1461 = vsub.s32 %v1458, %v1460
  %v1462 = vrot.slane %v1440, %v1461
  %v1464 = vunpack.c.l.s4 1966171168
  %v1465 = vunpack.c.0.s8 %v1464
  %v1466 = vlaneseq
  %v1467 = vshrl.u32 %v1466, 7
  %v1468 = vsub.s32 %v1465, %v1467
  %v1469 = vrot.slane %v1441, %v1468
  %v1470 = vcombine.low %v1448, %v1455
  %v1471 = vcombine.low %v1462, %v1469
  %v1473 = vunpack.c.l.s4 1966171168
  %v1474 = vunpack.c.0.s8 %v1473
  %v1475 = vlaneseq
  %v1476 = vshrl.u32 %v1475, 7
  %v1477 = vsub.s32 %v1474, %v1476
  %v1478 = vrot.slane %v1470, %v1477
  %v1480 = vunpack.c.l.s4 1966171168
  %v1481 = vunpack.c.0.s8 %v1480
  %v1482 = vlaneseq
  %v1483 = vshrl.u32 %v1482, 7
  %v1484 = vsub.s32 %v1481, %v1483
  %v1485 = vrot.slane %v1471, %v1484
  %v1486 = vcombine.low %v1478, %v1485
  %v1487 = vcombine.low %v1341, %v1342
  %v1488 = vcombine.low %v1343, %v1344
  %v1489 = vcombine.low %v1345, %v1346
  %v1490 = vcombine.low %v1347, %v1348
  %v1492 = vunpack.c.l.s4 1966171168
  %v1493 = vunpack.c.0.s8 %v1492
  %v1494 = vlaneseq
  %v1495 = vshrl.u32 %v1494, 7
  %v1496 = vsub.s32 %v1493, %v1495
  %v1497 = vrot.slane %v1487, %v1496
  %v1499 = vunpack.c.l.s4 1966171168
  %v1500 = vunpack.c.0.s8 %v1499
  %v1501 = vlaneseq
  %v1502 = vshrl.u32 %v1501, 7
  %v1503 = vsub.s32 %v1500, %v1502
  %v1504 = vrot.slane %v1488, %v1503
  %v1506 = vunpack.c.l.s4 1966171168
  %v1507 = vunpack.c.0.s8 %v1506
  %v1508 = vlaneseq
  %v1509 = vshrl.u32 %v1508, 7
  %v1510 = vsub.s32 %v1507, %v1509
  %v1511 = vrot.slane %v1489, %v1510
  %v1513 = vunpack.c.l.s4 1966171168
  %v1514 = vunpack.c.0.s8 %v1513
  %v1515 = vlaneseq
  %v1516 = vshrl.u32 %v1515, 7
  %v1517 = vsub.s32 %v1514, %v1516
  %v1518 = vrot.slane %v1490, %v1517
  %v1519 = vcombine.low %v1497, %v1504
  %v1520 = vcombine.low %v1511, %v1518
  %v1522 = vunpack.c.l.s4 1966171168
  %v1523 = vunpack.c.0.s8 %v1522
  %v1524 = vlaneseq
  %v1525 = vshrl.u32 %v1524, 7
  %v1526 = vsub.s32 %v1523, %v1525
  %v1527 = vrot.slane %v1519, %v1526
  %v1529 = vunpack.c.l.s4 1966171168
  %v1530 = vunpack.c.0.s8 %v1529
  %v1531 = vlaneseq
  %v1532 = vshrl.u32 %v1531, 7
  %v1533 = vsub.s32 %v1530, %v1532
  %v1534 = vrot.slane %v1520, %v1533
  %v1535 = vcombine.low %v1527, %v1534
  %v1536 = vcombine.low %v1349, %v1350
  %v1537 = vcombine.low %v1351, %v1352
  %v1538 = vcombine.low %v1353, %v1354
  %v1539 = vcombine.low %v1355, %v1356
  %v1541 = vunpack.c.l.s4 1966171168
  %v1542 = vunpack.c.0.s8 %v1541
  %v1543 = vlaneseq
  %v1544 = vshrl.u32 %v1543, 7
  %v1545 = vsub.s32 %v1542, %v1544
  %v1546 = vrot.slane %v1536, %v1545
  %v1548 = vunpack.c.l.s4 1966171168
  %v1549 = vunpack.c.0.s8 %v1548
  %v1550 = vlaneseq
  %v1551 = vshrl.u32 %v1550, 7
  %v1552 = vsub.s32 %v1549, %v1551
  %v1553 = vrot.slane %v1537, %v1552
  %v1555 = vunpack.c.l.s4 1966171168
  %v1556 = vunpack.c.0.s8 %v1555
  %v1557 = vlaneseq
  %v1558 = vshrl.u32 %v1557, 7
  %v1559 = vsub.s32 %v1556, %v1558
  %v1560 = vrot.slane %v1538, %v1559
  %v1562 = vunpack.c.l.s4 1966171168
  %v1563 = vunpack.c.0.s8 %v1562
  %v1564 = vlaneseq
  %v1565 = vshrl.u32 %v1564, 7
  %v1566 = vsub.s32 %v1563, %v1565
  %v1567 = vrot.slane %v1539, %v1566
  %v1568 = vcombine.low %v1546, %v1553
  %v1569 = vcombine.low %v1560, %v1567
  %v1571 = vunpack.c.l.s4 1966171168
  %v1572 = vunpack.c.0.s8 %v1571
  %v1573 = vlaneseq
  %v1574 = vshrl.u32 %v1573, 7
  %v1575 = vsub.s32 %v1572, %v1574
  %v1576 = vrot.slane %v1568, %v1575
  %v1578 = vunpack.c.l.s4 1966171168
  %v1579 = vunpack.c.0.s8 %v1578
  %v1580 = vlaneseq
  %v1581 = vshrl.u32 %v1580, 7
  %v1582 = vsub.s32 %v1579, %v1581
  %v1583 = vrot.slane %v1569, %v1582
  %v1584 = vcombine.low %v1576, %v1583
  %1589 = vst [vmem:[%s3] sm:$0xff] %v1437
  %1590 = vst [vmem:[%s3 + $0x8] sm:$0xff] %v1486
  %1591 = vst [vmem:[%s3 + $0x10] sm:$0xff] %v1535
  %1592 = vst [vmem:[%s3 + $0x18] sm:$0xff] %v1584
  // Predicated region
  $region14: #{avalon_generator_forward.12} parent=0 // pred_check
    _
  $region15: #{avalon_generator_forward.12} parent=0 // pred_check_branch
    %1594 = sbr.rel (0) target = $region17
  $region16: #{avalon_generator_forward.12} parent=0 // pred_region
    _
  $region17: #{avalon_generator_forward.12} parent=0 // pred_fallthru
    _
  // Predicated region
  $region18: #{avalon_generator_forward.12} parent=0 // pred_check
    _
  $region19: #{avalon_generator_forward.12} parent=0 // pred_check_branch
    %1596 = sbr.rel (0) target = $region21
  $region20: #{avalon_generator_forward.12} parent=0 // pred_region
    _
  $region21: #{avalon_generator_forward.12} parent=0 // pred_fallthru
    _

// kernel: avalon_generator_forward.13
$region0: #{avalon_generator_forward.13}
  #allocation0 [shape = 'u32[]', space=smem, size = 0x4, offset = 0x4, fixed_abs, tag = 'smem constant byte address 0x4 - core index']
  #allocation1 [shape = 'u32[144,128]{1,0:T(1,128)}', space=vmem, size = 0x12000, scoped, tag = 'internal scratch']
  %s0 = inlined_call_operand.vmem [shape: bf16[128,256], index: 0, kind: input, shape index: {}]
  %s1 = inlined_call_operand.vmem [shape: bf16[256,128], index: 1, kind: input, shape index: {}]
  %s2 = inlined_call_operand.vmem [shape: f32[1,128], index: 2, kind: input, shape index: {}]
  %s3 = inlined_call_operand.vmem [shape: bf16[128,128], index: 3, kind: output, shape index: {}]
  %s4 = sld [smem:[#allocation0]]
  $region22: #{avalon_generator_forward.13} parent=0
    _
  %s6 = ssub.s32 1, %s4
  %s7 = scalar_select 0, %s6, %s4
  // Predicated region
  $region2: #{avalon_generator_forward.13} parent=0 // pred_check
    _
  $region3: #{avalon_generator_forward.13} parent=0 // pred_check_branch
    %9 = sbr.rel (0) target = $region5
  $region4: #{avalon_generator_forward.13} parent=0 // pred_region
    _
  $region5: #{avalon_generator_forward.13} parent=0 // pred_fallthru
    _
  // Predicated region
  $region6: #{avalon_generator_forward.13} parent=0 // pred_check
    _
  $region7: #{avalon_generator_forward.13} parent=0 // pred_check_branch
    %11 = sbr.rel (0) target = $region9
  $region8: #{avalon_generator_forward.13} parent=0 // pred_region
    _
  $region9: #{avalon_generator_forward.13} parent=0 // pred_fallthru
    _
  // Predicated region
  $region10: #{avalon_generator_forward.13} parent=0 // pred_check
    _
  $region11: #{avalon_generator_forward.13} parent=0 // pred_check_branch
    %13 = sbr.rel (0) target = $region13
  $region12: #{avalon_generator_forward.13} parent=0 // pred_region
    _
  $region13: #{avalon_generator_forward.13} parent=0 // pred_fallthru
    _
  %v15 = vld [vmem:[%s0] sm:$0xff]
  %v16 = vld [vmem:[%s0 + $0x8] sm:$0xff]
  %v17 = vld [vmem:[%s0 + $0x10] sm:$0xff]
  %v18 = vld [vmem:[%s0 + $0x18] sm:$0xff]
  %v19 = vld [vmem:[%s0 + $0x20] sm:$0xff]
  %v20 = vld [vmem:[%s0 + $0x28] sm:$0xff]
  %v21 = vld [vmem:[%s0 + $0x30] sm:$0xff]
  %v22 = vld [vmem:[%s0 + $0x38] sm:$0xff]
  %v23 = vld [vmem:[%s0 + $0x40] sm:$0xff]
  %v24 = vld [vmem:[%s0 + $0x48] sm:$0xff]
  %v25 = vld [vmem:[%s0 + $0x50] sm:$0xff]
  %v26 = vld [vmem:[%s0 + $0x58] sm:$0xff]
  %v27 = vld [vmem:[%s0 + $0x60] sm:$0xff]
  %v28 = vld [vmem:[%s0 + $0x68] sm:$0xff]
  %v29 = vld [vmem:[%s0 + $0x70] sm:$0xff]
  %v30 = vld [vmem:[%s0 + $0x78] sm:$0xff]
  %v31 = vld [vmem:[%s1] sm:$0xf]
  %v32 = vld [vmem:[%s1 + $0x4] sm:$0xf]
  %v33 = vld [vmem:[%s1 + $0x8] sm:$0xf]
  %v34 = vld [vmem:[%s1 + $0xc] sm:$0xf]
  %v35 = vld [vmem:[%s1 + $0x10] sm:$0xf]
  %v36 = vld [vmem:[%s1 + $0x14] sm:$0xf]
  %v37 = vld [vmem:[%s1 + $0x18] sm:$0xf]
  %v38 = vld [vmem:[%s1 + $0x1c] sm:$0xf]
  %v39 = vld [vmem:[%s1 + $0x20] sm:$0xf]
  %v40 = vld [vmem:[%s1 + $0x24] sm:$0xf]
  %v41 = vld [vmem:[%s1 + $0x28] sm:$0xf]
  %v42 = vld [vmem:[%s1 + $0x2c] sm:$0xf]
  %v43 = vld [vmem:[%s1 + $0x30] sm:$0xf]
  %v44 = vld [vmem:[%s1 + $0x34] sm:$0xf]
  %v45 = vld [vmem:[%s1 + $0x38] sm:$0xf]
  %v46 = vld [vmem:[%s1 + $0x3c] sm:$0xf]
  %v47 = vld [vmem:[%s1 + $0x40] sm:$0xf]
  %v48 = vld [vmem:[%s1 + $0x44] sm:$0xf]
  %v49 = vld [vmem:[%s1 + $0x48] sm:$0xf]
  %v50 = vld [vmem:[%s1 + $0x4c] sm:$0xf]
  %v51 = vld [vmem:[%s1 + $0x50] sm:$0xf]
  %v52 = vld [vmem:[%s1 + $0x54] sm:$0xf]
  %v53 = vld [vmem:[%s1 + $0x58] sm:$0xf]
  %v54 = vld [vmem:[%s1 + $0x5c] sm:$0xf]
  %v55 = vld [vmem:[%s1 + $0x60] sm:$0xf]
  %v56 = vld [vmem:[%s1 + $0x64] sm:$0xf]
  %v57 = vld [vmem:[%s1 + $0x68] sm:$0xf]
  %v58 = vld [vmem:[%s1 + $0x6c] sm:$0xf]
  %v59 = vld [vmem:[%s1 + $0x70] sm:$0xf]
  %v60 = vld [vmem:[%s1 + $0x74] sm:$0xf]
  %v61 = vld [vmem:[%s1 + $0x78] sm:$0xf]
  %v62 = vld [vmem:[%s1 + $0x7c] sm:$0xf]
  %v63 = vld [vmem:[%s2] sm:$0x1]
  %v65 = vlaneseq
  %v66 = vshrl.u32 %v65, 7
  %v67 = vsub.s32 0, %v66
  %v68 = vrot.slane %v63, %v67
  %v86 = vunpack.c.l.b16 %v15
  %v87 = vunpack.c.h.b16 %v15
  %v88 = vunpack.c.l.b16 %v16
  %v89 = vunpack.c.h.b16 %v16
  %v90 = vunpack.c.l.b16 %v17
  %v91 = vunpack.c.h.b16 %v17
  %v92 = vunpack.c.l.b16 %v18
  %v93 = vunpack.c.h.b16 %v18
  %v94 = vunpack.c.l.b16 %v19
  %v95 = vunpack.c.h.b16 %v19
  %v96 = vunpack.c.l.b16 %v20
  %v97 = vunpack.c.h.b16 %v20
  %v98 = vunpack.c.l.b16 %v21
  %v99 = vunpack.c.h.b16 %v21
  %v100 = vunpack.c.l.b16 %v22
  %v101 = vunpack.c.h.b16 %v22
  %v102 = vunpack.c.l.b16 %v23
  %v103 = vunpack.c.h.b16 %v23
  %v104 = vunpack.c.l.b16 %v24
  %v105 = vunpack.c.h.b16 %v24
  %v106 = vunpack.c.l.b16 %v25
  %v107 = vunpack.c.h.b16 %v25
  %v108 = vunpack.c.l.b16 %v26
  %v109 = vunpack.c.h.b16 %v26
  %v110 = vunpack.c.l.b16 %v27
  %v111 = vunpack.c.h.b16 %v27
  %v112 = vunpack.c.l.b16 %v28
  %v113 = vunpack.c.h.b16 %v28
  %v114 = vunpack.c.l.b16 %v29
  %v115 = vunpack.c.h.b16 %v29
  %v116 = vunpack.c.l.b16 %v30
  %v117 = vunpack.c.h.b16 %v30
  %v118 = vpack.c.b16 %v88, %v86
  %v119 = vpack.c.b16 %v89, %v87
  %v120 = vpack.c.b16 %v92, %v90
  %v121 = vpack.c.b16 %v93, %v91
  %v122 = vpack.c.b16 %v96, %v94
  %v123 = vpack.c.b16 %v97, %v95
  %v124 = vpack.c.b16 %v100, %v98
  %v125 = vpack.c.b16 %v101, %v99
  %v126 = vpack.c.b16 %v104, %v102
  %v127 = vpack.c.b16 %v105, %v103
  %v128 = vpack.c.b16 %v108, %v106
  %v129 = vpack.c.b16 %v109, %v107
  %v130 = vpack.c.b16 %v112, %v110
  %v131 = vpack.c.b16 %v113, %v111
  %v132 = vpack.c.b16 %v116, %v114
  %v133 = vpack.c.b16 %v117, %v115
  %v182 = vunpack.c.l.b16 %v31
  %v183 = vunpack.c.l.b16 %v32
  %v184 = vunpack.c.l.b16 %v33
  %v185 = vunpack.c.l.b16 %v34
  %v186 = vunpack.c.l.b16 %v35
  %v187 = vunpack.c.l.b16 %v36
  %v188 = vunpack.c.l.b16 %v37
  %v189 = vunpack.c.l.b16 %v38
  %v190 = vunpack.c.l.b16 %v39
  %v191 = vunpack.c.l.b16 %v40
  %v192 = vunpack.c.l.b16 %v41
  %v193 = vunpack.c.l.b16 %v42
  %v194 = vunpack.c.l.b16 %v43
  %v195 = vunpack.c.l.b16 %v44
  %v196 = vunpack.c.l.b16 %v45
  %v197 = vunpack.c.l.b16 %v46
  %v198 = vunpack.c.l.b16 %v47
  %v199 = vunpack.c.l.b16 %v48
  %v200 = vunpack.c.l.b16 %v49
  %v201 = vunpack.c.l.b16 %v50
  %v202 = vunpack.c.l.b16 %v51
  %v203 = vunpack.c.l.b16 %v52
  %v204 = vunpack.c.l.b16 %v53
  %v205 = vunpack.c.l.b16 %v54
  %v206 = vunpack.c.l.b16 %v55
  %v207 = vunpack.c.l.b16 %v56
  %v208 = vunpack.c.l.b16 %v57
  %v209 = vunpack.c.l.b16 %v58
  %v210 = vunpack.c.l.b16 %v59
  %v211 = vunpack.c.l.b16 %v60
  %v212 = vunpack.c.l.b16 %v61
  %v213 = vunpack.c.l.b16 %v62
  %v214 = vpack.c.b16 %v183, %v182
  %v215 = vpack.c.b16 %v185, %v184
  %v216 = vpack.c.b16 %v187, %v186
  %v217 = vpack.c.b16 %v189, %v188
  %v218 = vpack.c.b16 %v191, %v190
  %v219 = vpack.c.b16 %v193, %v192
  %v220 = vpack.c.b16 %v195, %v194
  %v221 = vpack.c.b16 %v197, %v196
  %v222 = vpack.c.b16 %v199, %v198
  %v223 = vpack.c.b16 %v201, %v200
  %v224 = vpack.c.b16 %v203, %v202
  %v225 = vpack.c.b16 %v205, %v204
  %v226 = vpack.c.b16 %v207, %v206
  %v227 = vpack.c.b16 %v209, %v208
  %v228 = vpack.c.b16 %v211, %v210
  %v229 = vpack.c.b16 %v213, %v212
  %246 = vmatprep.subr.bf16.mxu0 0
  %247 = vmatpush1.bf16.msra.mxu0 %v214
  %248 = vmatprep.subr.bf16.mxu0 0
  %249 = vmatpush1.bf16.msra.mxu0 %v215
  %250 = vmatprep.subr.bf16.mxu0 0
  %251 = vmatpush1.bf16.msra.mxu0 %v216
  %252 = vmatprep.subr.bf16.mxu0 0
  %253 = vmatpush1.bf16.msra.mxu0 %v217
  %254 = vmatprep.subr.bf16.mxu0 0
  %255 = vmatpush1.bf16.msra.mxu0 %v218
  %256 = vmatprep.subr.bf16.mxu0 0
  %257 = vmatpush1.bf16.msra.mxu0 %v219
  %258 = vmatprep.subr.bf16.mxu0 0
  %259 = vmatpush1.bf16.msra.mxu0 %v220
  %260 = vmatprep.subr.bf16.mxu0 0
  %261 = vmatpush1.bf16.msra.mxu0 %v221
  %262 = vmatprep.subr.bf16.mxu0 0
  %263 = vmatpush1.bf16.msra.mxu0 %v222
  %264 = vmatprep.subr.bf16.mxu0 0
  %265 = vmatpush1.bf16.msra.mxu0 %v223
  %266 = vmatprep.subr.bf16.mxu0 0
  %267 = vmatpush1.bf16.msra.mxu0 %v224
  %268 = vmatprep.subr.bf16.mxu0 0
  %269 = vmatpush1.bf16.msra.mxu0 %v225
  %270 = vmatprep.subr.bf16.mxu0 0
  %271 = vmatpush1.bf16.msra.mxu0 %v226
  %272 = vmatprep.subr.bf16.mxu0 0
  %273 = vmatpush1.bf16.msra.mxu0 %v227
  %274 = vmatprep.subr.bf16.mxu0 0
  %275 = vmatpush1.bf16.msra.mxu0 %v228
  %276 = vmatprep.subr.bf16.mxu0 0
  %277 = vmatpush1.bf16.msra.mxu0 %v229
  %278 = vmatprep.mubr.bf16.mxu0 %v119
  %279 = vmatmul.mubr.bf16.gmra.mrb[0].mxu0 %v118
  %v280 = vpop.f32.mrb[0].mxu0
  %v281 = vadd.f32 %v68, %v280
  %v282 = vpop.f32.mrb[0].mxu0
  %v283 = vpop.f32.mrb[0].mxu0
  %v284 = vadd.f32 %v68, %v283
  %v285 = vpop.f32.mrb[0].mxu0
  %286 = vmatprep.mubr.bf16.mxu0 %v121
  %287 = vmatmul.mubr.bf16.gmra.mrb[0].mxu0 %v120
  %v288 = vpop.f32.mrb[0].mxu0
  %v289 = vadd.f32 %v68, %v288
  %v290 = vpop.f32.mrb[0].mxu0
  %v291 = vpop.f32.mrb[0].mxu0
  %v292 = vadd.f32 %v68, %v291
  %v293 = vpop.f32.mrb[0].mxu0
  %294 = vmatprep.mubr.bf16.mxu0 %v123
  %295 = vmatmul.mubr.bf16.gmra.mrb[0].mxu0 %v122
  %v296 = vpop.f32.mrb[0].mxu0
  %v297 = vadd.f32 %v68, %v296
  %v298 = vpop.f32.mrb[0].mxu0
  %v299 = vpop.f32.mrb[0].mxu0
  %v300 = vadd.f32 %v68, %v299
  %v301 = vpop.f32.mrb[0].mxu0
  %302 = vmatprep.mubr.bf16.mxu0 %v125
  %303 = vmatmul.mubr.bf16.gmra.mrb[0].mxu0 %v124
  %v304 = vpop.f32.mrb[0].mxu0
  %v305 = vadd.f32 %v68, %v304
  %v306 = vpop.f32.mrb[0].mxu0
  %v307 = vpop.f32.mrb[0].mxu0
  %v308 = vadd.f32 %v68, %v307
  %v309 = vpop.f32.mrb[0].mxu0
  %310 = vmatprep.mubr.bf16.mxu0 %v127
  %311 = vmatmul.mubr.bf16.gmra.mrb[0].mxu0 %v126
  %v312 = vpop.f32.mrb[0].mxu0
  %v313 = vadd.f32 %v68, %v312
  %v314 = vpop.f32.mrb[0].mxu0
  %v315 = vpop.f32.mrb[0].mxu0
  %v316 = vadd.f32 %v68, %v315
  %v317 = vpop.f32.mrb[0].mxu0
  %318 = vmatprep.mubr.bf16.mxu0 %v129
  %319 = vmatmul.mubr.bf16.gmra.mrb[0].mxu0 %v128
  %v320 = vpop.f32.mrb[0].mxu0
  %v321 = vadd.f32 %v68, %v320
  %v322 = vpop.f32.mrb[0].mxu0
  %v323 = vpop.f32.mrb[0].mxu0
  %v324 = vadd.f32 %v68, %v323
  %v325 = vpop.f32.mrb[0].mxu0
  %326 = vmatprep.mubr.bf16.mxu0 %v131
  %327 = vmatmul.mubr.bf16.gmra.mrb[0].mxu0 %v130
  %v328 = vpop.f32.mrb[0].mxu0
  %v329 = vadd.f32 %v68, %v328
  %v330 = vpop.f32.mrb[0].mxu0
  %v331 = vpop.f32.mrb[0].mxu0
  %v332 = vadd.f32 %v68, %v331
  %v333 = vpop.f32.mrb[0].mxu0
  %334 = vmatprep.mubr.bf16.mxu0 %v133
  %335 = vmatmul.mubr.bf16.gmra.mrb[0].mxu0 %v132
  %v336 = vpop.f32.mrb[0].mxu0
  %v337 = vadd.f32 %v68, %v336
  %v338 = vpop.f32.mrb[0].mxu0
  %v339 = vpop.f32.mrb[0].mxu0
  %v340 = vadd.f32 %v68, %v339
  %v341 = vpop.f32.mrb[0].mxu0
  %342 = vdwg.mxu0
  %v343 = vmax.f32 %v281, 0.0
  %v344 = vmax.f32 %v284, 0.0
  %v345 = vmax.f32 %v289, 0.0
  %v346 = vmax.f32 %v292, 0.0
  %v347 = vmax.f32 %v297, 0.0
  %v348 = vmax.f32 %v300, 0.0
  %v349 = vmax.f32 %v305, 0.0
  %v350 = vmax.f32 %v308, 0.0
  %v351 = vmax.f32 %v313, 0.0
  %v352 = vmax.f32 %v316, 0.0
  %v353 = vmax.f32 %v321, 0.0
  %v354 = vmax.f32 %v324, 0.0
  %v355 = vmax.f32 %v329, 0.0
  %v356 = vmax.f32 %v332, 0.0
  %v357 = vmax.f32 %v337, 0.0
  %v358 = vmax.f32 %v340, 0.0
  %v359 = vpack.c.bf16 %v344, %v343
  %v360 = vpack.c.bf16 %v346, %v345
  %v361 = vpack.c.bf16 %v348, %v347
  %v362 = vpack.c.bf16 %v350, %v349
  %v363 = vpack.c.bf16 %v352, %v351
  %v364 = vpack.c.bf16 %v354, %v353
  %v365 = vpack.c.bf16 %v356, %v355
  %v366 = vpack.c.bf16 %v358, %v357
  %v375 = vunpack.c.l.b16 %v359
  %v376 = vunpack.c.h.b16 %v359
  %v377 = vunpack.c.l.b16 %v360
  %v378 = vunpack.c.h.b16 %v360
  %v379 = vunpack.c.l.b16 %v361
  %v380 = vunpack.c.h.b16 %v361
  %v381 = vunpack.c.l.b16 %v362
  %v382 = vunpack.c.h.b16 %v362
  %v383 = vunpack.c.l.b16 %v363
  %v384 = vunpack.c.h.b16 %v363
  %v385 = vunpack.c.l.b16 %v364
  %v386 = vunpack.c.h.b16 %v364
  %v387 = vunpack.c.l.b16 %v365
  %v388 = vunpack.c.h.b16 %v365
  %v389 = vunpack.c.l.b16 %v366
  %v390 = vunpack.c.h.b16 %v366
  %v391 = vpack.c.b16 %v375, %v375
  %v392 = vpack.c.b16 %v376, %v376
  %v393 = vpack.c.b16 %v377, %v377
  %v394 = vpack.c.b16 %v378, %v378
  %v395 = vpack.c.b16 %v379, %v379
  %v396 = vpack.c.b16 %v380, %v380
  %v397 = vpack.c.b16 %v381, %v381
  %v398 = vpack.c.b16 %v382, %v382
  %v399 = vpack.c.b16 %v383, %v383
  %v400 = vpack.c.b16 %v384, %v384
  %v401 = vpack.c.b16 %v385, %v385
  %v402 = vpack.c.b16 %v386, %v386
  %v403 = vpack.c.b16 %v387, %v387
  %v404 = vpack.c.b16 %v388, %v388
  %v405 = vpack.c.b16 %v389, %v389
  %v406 = vpack.c.b16 %v390, %v390
  %423 = vst [vmem:[%s3] sm:$0xf] %v391
  %424 = vst [vmem:[%s3 + $0x4] sm:$0xf] %v392
  %425 = vst [vmem:[%s3 + $0x8] sm:$0xf] %v393
  %426 = vst [vmem:[%s3 + $0xc] sm:$0xf] %v394
  %427 = vst [vmem:[%s3 + $0x10] sm:$0xf] %v395
  %428 = vst [vmem:[%s3 + $0x14] sm:$0xf] %v396
  %429 = vst [vmem:[%s3 + $0x18] sm:$0xf] %v397
  %430 = vst [vmem:[%s3 + $0x1c] sm:$0xf] %v398
  %431 = vst [vmem:[%s3 + $0x20] sm:$0xf] %v399
  %432 = vst [vmem:[%s3 + $0x24] sm:$0xf] %v400
  %433 = vst [vmem:[%s3 + $0x28] sm:$0xf] %v401
  %434 = vst [vmem:[%s3 + $0x2c] sm:$0xf] %v402
  %435 = vst [vmem:[%s3 + $0x30] sm:$0xf] %v403
  %436 = vst [vmem:[%s3 + $0x34] sm:$0xf] %v404
  %437 = vst [vmem:[%s3 + $0x38] sm:$0xf] %v405
  %438 = vst [vmem:[%s3 + $0x3c] sm:$0xf] %v406
  // Predicated region
  $region14: #{avalon_generator_forward.13} parent=0 // pred_check
    _
  $region15: #{avalon_generator_forward.13} parent=0 // pred_check_branch
    %440 = sbr.rel (0) target = $region17
  $region16: #{avalon_generator_forward.13} parent=0 // pred_region
    _
  $region17: #{avalon_generator_forward.13} parent=0 // pred_fallthru
    _
  // Predicated region
  $region18: #{avalon_generator_forward.13} parent=0 // pred_check
    _
  $region19: #{avalon_generator_forward.13} parent=0 // pred_check_branch
    %442 = sbr.rel (0) target = $region21
  $region20: #{avalon_generator_forward.13} parent=0 // pred_region
    _
  $region21: #{avalon_generator_forward.13} parent=0 // pred_fallthru
    _

// kernel: avalon_generator_forward.14
$region0: #{avalon_generator_forward.14}
  #allocation0 [shape = 'u32[]', space=smem, size = 0x4, offset = 0x4, fixed_abs, tag = 'smem constant byte address 0x4 - core index']
  #allocation1 [shape = 'u32[144,128]{1,0:T(1,128)}', space=vmem, size = 0x12000, scoped, tag = 'internal scratch']
  %s0 = inlined_call_operand.vmem [shape: bf16[512,128], index: 0, kind: input, shape index: {}]
  %s1 = inlined_call_operand.vmem [shape: bf16[128,64], index: 1, kind: input, shape index: {}]
  %s2 = inlined_call_operand.vmem [shape: f32[1,64], index: 2, kind: input, shape index: {}]
  %s3 = inlined_call_operand.vmem [shape: bf16[512,64], index: 3, kind: output, shape index: {}]
  %s4 = sld [smem:[#allocation0]]
  $region22: #{avalon_generator_forward.14} parent=0
    _
  %s6 = ssub.s32 1, %s4
  %s7 = scalar_select 0, %s6, %s4
  // Predicated region
  $region2: #{avalon_generator_forward.14} parent=0 // pred_check
    _
  $region3: #{avalon_generator_forward.14} parent=0 // pred_check_branch
    %9 = sbr.rel (0) target = $region5
  $region4: #{avalon_generator_forward.14} parent=0 // pred_region
    _
  $region5: #{avalon_generator_forward.14} parent=0 // pred_fallthru
    _
  // Predicated region
  $region6: #{avalon_generator_forward.14} parent=0 // pred_check
    _
  $region7: #{avalon_generator_forward.14} parent=0 // pred_check_branch
    %11 = sbr.rel (0) target = $region9
  $region8: #{avalon_generator_forward.14} parent=0 // pred_region
    _
  $region9: #{avalon_generator_forward.14} parent=0 // pred_fallthru
    _
  // Predicated region
  $region10: #{avalon_generator_forward.14} parent=0 // pred_check
    _
  $region11: #{avalon_generator_forward.14} parent=0 // pred_check_branch
    %13 = sbr.rel (0) target = $region13
  $region12: #{avalon_generator_forward.14} parent=0 // pred_region
    _
  $region13: #{avalon_generator_forward.14} parent=0 // pred_fallthru
    _
  %v15 = vld [vmem:[%s0] sm:$0xf]
  %v16 = vld [vmem:[%s0 + $0x4] sm:$0xf]
  %v17 = vld [vmem:[%s0 + $0x8] sm:$0xf]
  %v18 = vld [vmem:[%s0 + $0xc] sm:$0xf]
  %v19 = vld [vmem:[%s0 + $0x10] sm:$0xf]
  %v20 = vld [vmem:[%s0 + $0x14] sm:$0xf]
  %v21 = vld [vmem:[%s0 + $0x18] sm:$0xf]
  %v22 = vld [vmem:[%s0 + $0x1c] sm:$0xf]
  %v23 = vld [vmem:[%s0 + $0x20] sm:$0xf]
  %v24 = vld [vmem:[%s0 + $0x24] sm:$0xf]
  %v25 = vld [vmem:[%s0 + $0x28] sm:$0xf]
  %v26 = vld [vmem:[%s0 + $0x2c] sm:$0xf]
  %v27 = vld [vmem:[%s0 + $0x30] sm:$0xf]
  %v28 = vld [vmem:[%s0 + $0x34] sm:$0xf]
  %v29 = vld [vmem:[%s0 + $0x38] sm:$0xf]
  %v30 = vld [vmem:[%s0 + $0x3c] sm:$0xf]
  %v31 = vld [vmem:[%s0 + $0x40] sm:$0xf]
  %v32 = vld [vmem:[%s0 + $0x44] sm:$0xf]
  %v33 = vld [vmem:[%s0 + $0x48] sm:$0xf]
  %v34 = vld [vmem:[%s0 + $0x4c] sm:$0xf]
  %v35 = vld [vmem:[%s0 + $0x50] sm:$0xf]
  %v36 = vld [vmem:[%s0 + $0x54] sm:$0xf]
  %v37 = vld [vmem:[%s0 + $0x58] sm:$0xf]
  %v38 = vld [vmem:[%s0 + $0x5c] sm:$0xf]
  %v39 = vld [vmem:[%s0 + $0x60] sm:$0xf]
  %v40 = vld [vmem:[%s0 + $0x64] sm:$0xf]
  %v41 = vld [vmem:[%s0 + $0x68] sm:$0xf]
  %v42 = vld [vmem:[%s0 + $0x6c] sm:$0xf]
  %v43 = vld [vmem:[%s0 + $0x70] sm:$0xf]
  %v44 = vld [vmem:[%s0 + $0x74] sm:$0xf]
  %v45 = vld [vmem:[%s0 + $0x78] sm:$0xf]
  %v46 = vld [vmem:[%s0 + $0x7c] sm:$0xf]
  %v47 = vld [vmem:[%s0 + $0x80] sm:$0xf]
  %v48 = vld [vmem:[%s0 + $0x84] sm:$0xf]
  %v49 = vld [vmem:[%s0 + $0x88] sm:$0xf]
  %v50 = vld [vmem:[%s0 + $0x8c] sm:$0xf]
  %v51 = vld [vmem:[%s0 + $0x90] sm:$0xf]
  %v52 = vld [vmem:[%s0 + $0x94] sm:$0xf]
  %v53 = vld [vmem:[%s0 + $0x98] sm:$0xf]
  %v54 = vld [vmem:[%s0 + $0x9c] sm:$0xf]
  %v55 = vld [vmem:[%s0 + $0xa0] sm:$0xf]
  %v56 = vld [vmem:[%s0 + $0xa4] sm:$0xf]
  %v57 = vld [vmem:[%s0 + $0xa8] sm:$0xf]
  %v58 = vld [vmem:[%s0 + $0xac] sm:$0xf]
  %v59 = vld [vmem:[%s0 + $0xb0] sm:$0xf]
  %v60 = vld [vmem:[%s0 + $0xb4] sm:$0xf]
  %v61 = vld [vmem:[%s0 + $0xb8] sm:$0xf]
  %v62 = vld [vmem:[%s0 + $0xbc] sm:$0xf]
  %v63 = vld [vmem:[%s0 + $0xc0] sm:$0xf]
  %v64 = vld [vmem:[%s0 + $0xc4] sm:$0xf]
  %v65 = vld [vmem:[%s0 + $0xc8] sm:$0xf]
  %v66 = vld [vmem:[%s0 + $0xcc] sm:$0xf]
  %v67 = vld [vmem:[%s0 + $0xd0] sm:$0xf]
  %v68 = vld [vmem:[%s0 + $0xd4] sm:$0xf]
  %v69 = vld [vmem:[%s0 + $0xd8] sm:$0xf]
  %v70 = vld [vmem:[%s0 + $0xdc] sm:$0xf]
  %v71 = vld [vmem:[%s0 + $0xe0] sm:$0xf]
  %v72 = vld [vmem:[%s0 + $0xe4] sm:$0xf]
  %v73 = vld [vmem:[%s0 + $0xe8] sm:$0xf]
  %v74 = vld [vmem:[%s0 + $0xec] sm:$0xf]
  %v75 = vld [vmem:[%s0 + $0xf0] sm:$0xf]
  %v76 = vld [vmem:[%s0 + $0xf4] sm:$0xf]
  %v77 = vld [vmem:[%s0 + $0xf8] sm:$0xf]
  %v78 = vld [vmem:[%s0 + $0xfc] sm:$0xf]
  %v79 = vld [vmem:[%s1] sm:$0xf]
  %v80 = vld [vmem:[%s1 + $0x4] sm:$0xf]
  %v81 = vld [vmem:[%s1 + $0x8] sm:$0xf]
  %v82 = vld [vmem:[%s1 + $0xc] sm:$0xf]
  %v83 = vld [vmem:[%s1 + $0x10] sm:$0xf]
  %v84 = vld [vmem:[%s1 + $0x14] sm:$0xf]
  %v85 = vld [vmem:[%s1 + $0x18] sm:$0xf]
  %v86 = vld [vmem:[%s1 + $0x1c] sm:$0xf]
  %v87 = vld [vmem:[%s1 + $0x20] sm:$0xf]
  %v88 = vld [vmem:[%s1 + $0x24] sm:$0xf]
  %v89 = vld [vmem:[%s1 + $0x28] sm:$0xf]
  %v90 = vld [vmem:[%s1 + $0x2c] sm:$0xf]
  %v91 = vld [vmem:[%s1 + $0x30] sm:$0xf]
  %v92 = vld [vmem:[%s1 + $0x34] sm:$0xf]
  %v93 = vld [vmem:[%s1 + $0x38] sm:$0xf]
  %v94 = vld [vmem:[%s1 + $0x3c] sm:$0xf]
  %v95 = vld [vmem:[%s2] sm:$0x1]
  %v97 = vlaneseq
  %v98 = vshrl.u32 %v97, 7
  %v99 = vsub.s32 0, %v98
  %v100 = vrot.slane %v95, %v99
  %v166 = vunpack.c.l.b16 %v15
  %v167 = vunpack.c.l.b16 %v16
  %v168 = vunpack.c.l.b16 %v17
  %v169 = vunpack.c.l.b16 %v18
  %v170 = vunpack.c.l.b16 %v19
  %v171 = vunpack.c.l.b16 %v20
  %v172 = vunpack.c.l.b16 %v21
  %v173 = vunpack.c.l.b16 %v22
  %v174 = vunpack.c.l.b16 %v23
  %v175 = vunpack.c.l.b16 %v24
  %v176 = vunpack.c.l.b16 %v25
  %v177 = vunpack.c.l.b16 %v26
  %v178 = vunpack.c.l.b16 %v27
  %v179 = vunpack.c.l.b16 %v28
  %v180 = vunpack.c.l.b16 %v29
  %v181 = vunpack.c.l.b16 %v30
  %v182 = vunpack.c.l.b16 %v31
  %v183 = vunpack.c.l.b16 %v32
  %v184 = vunpack.c.l.b16 %v33
  %v185 = vunpack.c.l.b16 %v34
  %v186 = vunpack.c.l.b16 %v35
  %v187 = vunpack.c.l.b16 %v36
  %v188 = vunpack.c.l.b16 %v37
  %v189 = vunpack.c.l.b16 %v38
  %v190 = vunpack.c.l.b16 %v39
  %v191 = vunpack.c.l.b16 %v40
  %v192 = vunpack.c.l.b16 %v41
  %v193 = vunpack.c.l.b16 %v42
  %v194 = vunpack.c.l.b16 %v43
  %v195 = vunpack.c.l.b16 %v44
  %v196 = vunpack.c.l.b16 %v45
  %v197 = vunpack.c.l.b16 %v46
  %v198 = vunpack.c.l.b16 %v47
  %v199 = vunpack.c.l.b16 %v48
  %v200 = vunpack.c.l.b16 %v49
  %v201 = vunpack.c.l.b16 %v50
  %v202 = vunpack.c.l.b16 %v51
  %v203 = vunpack.c.l.b16 %v52
  %v204 = vunpack.c.l.b16 %v53
  %v205 = vunpack.c.l.b16 %v54
  %v206 = vunpack.c.l.b16 %v55
  %v207 = vunpack.c.l.b16 %v56
  %v208 = vunpack.c.l.b16 %v57
  %v209 = vunpack.c.l.b16 %v58
  %v210 = vunpack.c.l.b16 %v59
  %v211 = vunpack.c.l.b16 %v60
  %v212 = vunpack.c.l.b16 %v61
  %v213 = vunpack.c.l.b16 %v62
  %v214 = vunpack.c.l.b16 %v63
  %v215 = vunpack.c.l.b16 %v64
  %v216 = vunpack.c.l.b16 %v65
  %v217 = vunpack.c.l.b16 %v66
  %v218 = vunpack.c.l.b16 %v67
  %v219 = vunpack.c.l.b16 %v68
  %v220 = vunpack.c.l.b16 %v69
  %v221 = vunpack.c.l.b16 %v70
  %v222 = vunpack.c.l.b16 %v71
  %v223 = vunpack.c.l.b16 %v72
  %v224 = vunpack.c.l.b16 %v73
  %v225 = vunpack.c.l.b16 %v74
  %v226 = vunpack.c.l.b16 %v75
  %v227 = vunpack.c.l.b16 %v76
  %v228 = vunpack.c.l.b16 %v77
  %v229 = vunpack.c.l.b16 %v78
  %v230 = vpack.c.b16 %v167, %v166
  %v231 = vpack.c.b16 %v169, %v168
  %v232 = vpack.c.b16 %v171, %v170
  %v233 = vpack.c.b16 %v173, %v172
  %v234 = vpack.c.b16 %v175, %v174
  %v235 = vpack.c.b16 %v177, %v176
  %v236 = vpack.c.b16 %v179, %v178
  %v237 = vpack.c.b16 %v181, %v180
  %v238 = vpack.c.b16 %v183, %v182
  %v239 = vpack.c.b16 %v185, %v184
  %v240 = vpack.c.b16 %v187, %v186
  %v241 = vpack.c.b16 %v189, %v188
  %v242 = vpack.c.b16 %v191, %v190
  %v243 = vpack.c.b16 %v193, %v192
  %v244 = vpack.c.b16 %v195, %v194
  %v245 = vpack.c.b16 %v197, %v196
  %v246 = vpack.c.b16 %v199, %v198
  %v247 = vpack.c.b16 %v201, %v200
  %v248 = vpack.c.b16 %v203, %v202
  %v249 = vpack.c.b16 %v205, %v204
  %v250 = vpack.c.b16 %v207, %v206
  %v251 = vpack.c.b16 %v209, %v208
  %v252 = vpack.c.b16 %v211, %v210
  %v253 = vpack.c.b16 %v213, %v212
  %v254 = vpack.c.b16 %v215, %v214
  %v255 = vpack.c.b16 %v217, %v216
  %v256 = vpack.c.b16 %v219, %v218
  %v257 = vpack.c.b16 %v221, %v220
  %v258 = vpack.c.b16 %v223, %v222
  %v259 = vpack.c.b16 %v225, %v224
  %v260 = vpack.c.b16 %v227, %v226
  %v261 = vpack.c.b16 %v229, %v228
  %v310 = vunpack.c.l.b16 %v79
  %v311 = vunpack.c.l.b16 %v80
  %v312 = vunpack.c.l.b16 %v81
  %v313 = vunpack.c.l.b16 %v82
  %v314 = vunpack.c.l.b16 %v83
  %v315 = vunpack.c.l.b16 %v84
  %v316 = vunpack.c.l.b16 %v85
  %v317 = vunpack.c.l.b16 %v86
  %v318 = vunpack.c.l.b16 %v87
  %v319 = vunpack.c.l.b16 %v88
  %v320 = vunpack.c.l.b16 %v89
  %v321 = vunpack.c.l.b16 %v90
  %v322 = vunpack.c.l.b16 %v91
  %v323 = vunpack.c.l.b16 %v92
  %v324 = vunpack.c.l.b16 %v93
  %v325 = vunpack.c.l.b16 %v94
  %v326 = vpack.c.b16 %v311, %v310
  %v327 = vpack.c.b16 %v313, %v312
  %v328 = vpack.c.b16 %v315, %v314
  %v329 = vpack.c.b16 %v317, %v316
  %v330 = vpack.c.b16 %v319, %v318
  %v331 = vpack.c.b16 %v321, %v320
  %v332 = vpack.c.b16 %v323, %v322
  %v333 = vpack.c.b16 %v325, %v324
  %342 = vmatprep.subr.bf16.mxu0 0
  %343 = vmatpush1.bf16.msra.mxu0 %v326
  %344 = vmatprep.subr.bf16.mxu0 0
  %345 = vmatpush1.bf16.msra.mxu0 %v327
  %346 = vmatprep.subr.bf16.mxu0 0
  %347 = vmatpush1.bf16.msra.mxu0 %v328
  %348 = vmatprep.subr.bf16.mxu0 0
  %349 = vmatpush1.bf16.msra.mxu0 %v329
  %350 = vmatprep.subr.bf16.mxu0 0
  %351 = vmatpush1.bf16.msra.mxu0 %v330
  %352 = vmatprep.subr.bf16.mxu0 0
  %353 = vmatpush1.bf16.msra.mxu0 %v331
  %354 = vmatprep.subr.bf16.mxu0 0
  %355 = vmatpush1.bf16.msra.mxu0 %v332
  %356 = vmatprep.subr.bf16.mxu0 0
  %357 = vmatpush1.bf16.msra.mxu0 %v333
  %358 = vmatprep.subr.bf16.mxu0 0
  %359 = vmatpush1.bf16.msra.mxu0 0
  %360 = vmatprep.subr.bf16.mxu0 0
  %361 = vmatpush1.bf16.msra.mxu0 0
  %362 = vmatprep.subr.bf16.mxu0 0
  %363 = vmatpush1.bf16.msra.mxu0 0
  %364 = vmatprep.subr.bf16.mxu0 0
  %365 = vmatpush1.bf16.msra.mxu0 0
  %366 = vmatprep.subr.bf16.mxu0 0
  %367 = vmatpush1.bf16.msra.mxu0 0
  %368 = vmatprep.subr.bf16.mxu0 0
  %369 = vmatpush1.bf16.msra.mxu0 0
  %370 = vmatprep.subr.bf16.mxu0 0
  %371 = vmatpush1.bf16.msra.mxu0 0
  %372 = vmatprep.subr.bf16.mxu0 0
  %373 = vmatpush1.bf16.msra.mxu0 0
  %374 = vmatprep.mubr.bf16.mxu0 0
  %375 = vmatmul.mubr.bf16.gmra.mrb[0].mxu0 %v230
  %v376 = vpop.f32.mrb[0].mxu0
  %v377 = vadd.f32 %v100, %v376
  %v378 = vpop.f32.mrb[0].mxu0
  %v379 = vpop.f32.mrb[0].mxu0
  %v380 = vadd.f32 %v100, %v379
  %v381 = vpop.f32.mrb[0].mxu0
  %382 = vmatprep.mubr.bf16.mxu0 0
  %383 = vmatmul.mubr.bf16.gmra.mrb[0].mxu0 %v231
  %v384 = vpop.f32.mrb[0].mxu0
  %v385 = vadd.f32 %v100, %v384
  %v386 = vpop.f32.mrb[0].mxu0
  %v387 = vpop.f32.mrb[0].mxu0
  %v388 = vadd.f32 %v100, %v387
  %v389 = vpop.f32.mrb[0].mxu0
  %390 = vmatprep.mubr.bf16.mxu0 0
  %391 = vmatmul.mubr.bf16.gmra.mrb[0].mxu0 %v232
  %v392 = vpop.f32.mrb[0].mxu0
  %v393 = vadd.f32 %v100, %v392
  %v394 = vpop.f32.mrb[0].mxu0
  %v395 = vpop.f32.mrb[0].mxu0
  %v396 = vadd.f32 %v100, %v395
  %v397 = vpop.f32.mrb[0].mxu0
  %398 = vmatprep.mubr.bf16.mxu0 0
  %399 = vmatmul.mubr.bf16.gmra.mrb[0].mxu0 %v233
  %v400 = vpop.f32.mrb[0].mxu0
  %v401 = vadd.f32 %v100, %v400
  %v402 = vpop.f32.mrb[0].mxu0
  %v403 = vpop.f32.mrb[0].mxu0
  %v404 = vadd.f32 %v100, %v403
  %v405 = vpop.f32.mrb[0].mxu0
  %406 = vmatprep.mubr.bf16.mxu0 0
  %407 = vmatmul.mubr.bf16.gmra.mrb[0].mxu0 %v234
  %v408 = vpop.f32.mrb[0].mxu0
  %v409 = vadd.f32 %v100, %v408
  %v410 = vpop.f32.mrb[0].mxu0
  %v411 = vpop.f32.mrb[0].mxu0
  %v412 = vadd.f32 %v100, %v411
  %v413 = vpop.f32.mrb[0].mxu0
  %414 = vmatprep.mubr.bf16.mxu0 0
  %415 = vmatmul.mubr.bf16.gmra.mrb[0].mxu0 %v235
  %v416 = vpop.f32.mrb[0].mxu0
  %v417 = vadd.f32 %v100, %v416
  %v418 = vpop.f32.mrb[0].mxu0
  %v419 = vpop.f32.mrb[0].mxu0
  %v420 = vadd.f32 %v100, %v419
  %v421 = vpop.f32.mrb[0].mxu0
  %422 = vmatprep.mubr.bf16.mxu0 0
  %423 = vmatmul.mubr.bf16.gmra.mrb[0].mxu0 %v236
  %v424 = vpop.f32.mrb[0].mxu0
  %v425 = vadd.f32 %v100, %v424
  %v426 = vpop.f32.mrb[0].mxu0
  %v427 = vpop.f32.mrb[0].mxu0
  %v428 = vadd.f32 %v100, %v427
  %v429 = vpop.f32.mrb[0].mxu0
  %430 = vmatprep.mubr.bf16.mxu0 0
  %431 = vmatmul.mubr.bf16.gmra.mrb[0].mxu0 %v237
  %v432 = vpop.f32.mrb[0].mxu0
  %v433 = vadd.f32 %v100, %v432
  %v434 = vpop.f32.mrb[0].mxu0
  %v435 = vpop.f32.mrb[0].mxu0
  %v436 = vadd.f32 %v100, %v435
  %v437 = vpop.f32.mrb[0].mxu0
  %438 = vmatprep.mubr.bf16.mxu0 0
  %439 = vmatmul.mubr.bf16.gmra.mrb[0].mxu0 %v238
  %v440 = vpop.f32.mrb[0].mxu0
  %v441 = vadd.f32 %v100, %v440
  %v442 = vpop.f32.mrb[0].mxu0
  %v443 = vpop.f32.mrb[0].mxu0
  %v444 = vadd.f32 %v100, %v443
  %v445 = vpop.f32.mrb[0].mxu0
  %446 = vmatprep.mubr.bf16.mxu0 0
  %447 = vmatmul.mubr.bf16.gmra.mrb[0].mxu0 %v239
  %v448 = vpop.f32.mrb[0].mxu0
  %v449 = vadd.f32 %v100, %v448
  %v450 = vpop.f32.mrb[0].mxu0
  %v451 = vpop.f32.mrb[0].mxu0
  %v452 = vadd.f32 %v100, %v451
  %v453 = vpop.f32.mrb[0].mxu0
  %454 = vmatprep.mubr.bf16.mxu0 0
  %455 = vmatmul.mubr.bf16.gmra.mrb[0].mxu0 %v240
  %v456 = vpop.f32.mrb[0].mxu0
  %v457 = vadd.f32 %v100, %v456
  %v458 = vpop.f32.mrb[0].mxu0
  %v459 = vpop.f32.mrb[0].mxu0
  %v460 = vadd.f32 %v100, %v459
  %v461 = vpop.f32.mrb[0].mxu0
  %462 = vmatprep.mubr.bf16.mxu0 0
  %463 = vmatmul.mubr.bf16.gmra.mrb[0].mxu0 %v241
  %v464 = vpop.f32.mrb[0].mxu0
  %v465 = vadd.f32 %v100, %v464
  %v466 = vpop.f32.mrb[0].mxu0
  %v467 = vpop.f32.mrb[0].mxu0
  %v468 = vadd.f32 %v100, %v467
  %v469 = vpop.f32.mrb[0].mxu0
  %470 = vmatprep.mubr.bf16.mxu0 0
  %471 = vmatmul.mubr.bf16.gmra.mrb[0].mxu0 %v242
  %v472 = vpop.f32.mrb[0].mxu0
  %v473 = vadd.f32 %v100, %v472
  %v474 = vpop.f32.mrb[0].mxu0
  %v475 = vpop.f32.mrb[0].mxu0
  %v476 = vadd.f32 %v100, %v475
  %v477 = vpop.f32.mrb[0].mxu0
  %478 = vmatprep.mubr.bf16.mxu0 0
  %479 = vmatmul.mubr.bf16.gmra.mrb[0].mxu0 %v243
  %v480 = vpop.f32.mrb[0].mxu0
  %v481 = vadd.f32 %v100, %v480
  %v482 = vpop.f32.mrb[0].mxu0
  %v483 = vpop.f32.mrb[0].mxu0
  %v484 = vadd.f32 %v100, %v483
  %v485 = vpop.f32.mrb[0].mxu0
  %486 = vmatprep.mubr.bf16.mxu0 0
  %487 = vmatmul.mubr.bf16.gmra.mrb[0].mxu0 %v244
  %v488 = vpop.f32.mrb[0].mxu0
  %v489 = vadd.f32 %v100, %v488
  %v490 = vpop.f32.mrb[0].mxu0
  %v491 = vpop.f32.mrb[0].mxu0
  %v492 = vadd.f32 %v100, %v491
  %v493 = vpop.f32.mrb[0].mxu0
  %494 = vmatprep.mubr.bf16.mxu0 0
  %495 = vmatmul.mubr.bf16.gmra.mrb[0].mxu0 %v245
  %v496 = vpop.f32.mrb[0].mxu0
  %v497 = vadd.f32 %v100, %v496
  %v498 = vpop.f32.mrb[0].mxu0
  %v499 = vpop.f32.mrb[0].mxu0
  %v500 = vadd.f32 %v100, %v499
  %v501 = vpop.f32.mrb[0].mxu0
  %502 = vmatprep.mubr.bf16.mxu0 0
  %503 = vmatmul.mubr.bf16.gmra.mrb[0].mxu0 %v246
  %v504 = vpop.f32.mrb[0].mxu0
  %v505 = vadd.f32 %v100, %v504
  %v506 = vpop.f32.mrb[0].mxu0
  %v507 = vpop.f32.mrb[0].mxu0
  %v508 = vadd.f32 %v100, %v507
  %v509 = vpop.f32.mrb[0].mxu0
  %510 = vmatprep.mubr.bf16.mxu0 0
  %511 = vmatmul.mubr.bf16.gmra.mrb[0].mxu0 %v247
  %v512 = vpop.f32.mrb[0].mxu0
  %v513 = vadd.f32 %v100, %v512
  %v514 = vpop.f32.mrb[0].mxu0
  %v515 = vpop.f32.mrb[0].mxu0
  %v516 = vadd.f32 %v100, %v515
  %v517 = vpop.f32.mrb[0].mxu0
  %518 = vmatprep.mubr.bf16.mxu0 0
  %519 = vmatmul.mubr.bf16.gmra.mrb[0].mxu0 %v248
  %v520 = vpop.f32.mrb[0].mxu0
  %v521 = vadd.f32 %v100, %v520
  %v522 = vpop.f32.mrb[0].mxu0
  %v523 = vpop.f32.mrb[0].mxu0
  %v524 = vadd.f32 %v100, %v523
  %v525 = vpop.f32.mrb[0].mxu0
  %526 = vmatprep.mubr.bf16.mxu0 0
  %527 = vmatmul.mubr.bf16.gmra.mrb[0].mxu0 %v249
  %v528 = vpop.f32.mrb[0].mxu0
  %v529 = vadd.f32 %v100, %v528
  %v530 = vpop.f32.mrb[0].mxu0
  %v531 = vpop.f32.mrb[0].mxu0
  %v532 = vadd.f32 %v100, %v531
  %v533 = vpop.f32.mrb[0].mxu0
  %534 = vmatprep.mubr.bf16.mxu0 0
  %535 = vmatmul.mubr.bf16.gmra.mrb[0].mxu0 %v250
  %v536 = vpop.f32.mrb[0].mxu0
  %v537 = vadd.f32 %v100, %v536
  %v538 = vpop.f32.mrb[0].mxu0
  %v539 = vpop.f32.mrb[0].mxu0
  %v540 = vadd.f32 %v100, %v539
  %v541 = vpop.f32.mrb[0].mxu0
  %542 = vmatprep.mubr.bf16.mxu0 0
  %543 = vmatmul.mubr.bf16.gmra.mrb[0].mxu0 %v251
  %v544 = vpop.f32.mrb[0].mxu0
  %v545 = vadd.f32 %v100, %v544
  %v546 = vpop.f32.mrb[0].mxu0
  %v547 = vpop.f32.mrb[0].mxu0
  %v548 = vadd.f32 %v100, %v547
  %v549 = vpop.f32.mrb[0].mxu0
  %550 = vmatprep.mubr.bf16.mxu0 0
  %551 = vmatmul.mubr.bf16.gmra.mrb[0].mxu0 %v252
  %v552 = vpop.f32.mrb[0].mxu0
  %v553 = vadd.f32 %v100, %v552
  %v554 = vpop.f32.mrb[0].mxu0
  %v555 = vpop.f32.mrb[0].mxu0
  %v556 = vadd.f32 %v100, %v555
  %v557 = vpop.f32.mrb[0].mxu0
  %558 = vmatprep.mubr.bf16.mxu0 0
  %559 = vmatmul.mubr.bf16.gmra.mrb[0].mxu0 %v253
  %v560 = vpop.f32.mrb[0].mxu0
  %v561 = vadd.f32 %v100, %v560
  %v562 = vpop.f32.mrb[0].mxu0
  %v563 = vpop.f32.mrb[0].mxu0
  %v564 = vadd.f32 %v100, %v563
  %v565 = vpop.f32.mrb[0].mxu0
  %566 = vmatprep.mubr.bf16.mxu0 0
  %567 = vmatmul.mubr.bf16.gmra.mrb[0].mxu0 %v254
  %v568 = vpop.f32.mrb[0].mxu0
  %v569 = vadd.f32 %v100, %v568
  %v570 = vpop.f32.mrb[0].mxu0
  %v571 = vpop.f32.mrb[0].mxu0
  %v572 = vadd.f32 %v100, %v571
  %v573 = vpop.f32.mrb[0].mxu0
  %574 = vmatprep.mubr.bf16.mxu0 0
  %575 = vmatmul.mubr.bf16.gmra.mrb[0].mxu0 %v255
  %v576 = vpop.f32.mrb[0].mxu0
  %v577 = vadd.f32 %v100, %v576
  %v578 = vpop.f32.mrb[0].mxu0
  %v579 = vpop.f32.mrb[0].mxu0
  %v580 = vadd.f32 %v100, %v579
  %v581 = vpop.f32.mrb[0].mxu0
  %582 = vmatprep.mubr.bf16.mxu0 0
  %583 = vmatmul.mubr.bf16.gmra.mrb[0].mxu0 %v256
  %v584 = vpop.f32.mrb[0].mxu0
  %v585 = vadd.f32 %v100, %v584
  %v586 = vpop.f32.mrb[0].mxu0
  %v587 = vpop.f32.mrb[0].mxu0
  %v588 = vadd.f32 %v100, %v587
  %v589 = vpop.f32.mrb[0].mxu0
  %590 = vmatprep.mubr.bf16.mxu0 0
  %591 = vmatmul.mubr.bf16.gmra.mrb[0].mxu0 %v257
  %v592 = vpop.f32.mrb[0].mxu0
  %v593 = vadd.f32 %v100, %v592
  %v594 = vpop.f32.mrb[0].mxu0
  %v595 = vpop.f32.mrb[0].mxu0
  %v596 = vadd.f32 %v100, %v595
  %v597 = vpop.f32.mrb[0].mxu0
  %598 = vmatprep.mubr.bf16.mxu0 0
  %599 = vmatmul.mubr.bf16.gmra.mrb[0].mxu0 %v258
  %v600 = vpop.f32.mrb[0].mxu0
  %v601 = vadd.f32 %v100, %v600
  %v602 = vpop.f32.mrb[0].mxu0
  %v603 = vpop.f32.mrb[0].mxu0
  %v604 = vadd.f32 %v100, %v603
  %v605 = vpop.f32.mrb[0].mxu0
  %606 = vmatprep.mubr.bf16.mxu0 0
  %607 = vmatmul.mubr.bf16.gmra.mrb[0].mxu0 %v259
  %v608 = vpop.f32.mrb[0].mxu0
  %v609 = vadd.f32 %v100, %v608
  %v610 = vpop.f32.mrb[0].mxu0
  %v611 = vpop.f32.mrb[0].mxu0
  %v612 = vadd.f32 %v100, %v611
  %v613 = vpop.f32.mrb[0].mxu0
  %614 = vmatprep.mubr.bf16.mxu0 0
  %615 = vmatmul.mubr.bf16.gmra.mrb[0].mxu0 %v260
  %v616 = vpop.f32.mrb[0].mxu0
  %v617 = vadd.f32 %v100, %v616
  %v618 = vpop.f32.mrb[0].mxu0
  %v619 = vpop.f32.mrb[0].mxu0
  %v620 = vadd.f32 %v100, %v619
  %v621 = vpop.f32.mrb[0].mxu0
  %622 = vmatprep.mubr.bf16.mxu0 0
  %623 = vmatmul.mubr.bf16.gmra.mrb[0].mxu0 %v261
  %v624 = vpop.f32.mrb[0].mxu0
  %v625 = vadd.f32 %v100, %v624
  %v626 = vpop.f32.mrb[0].mxu0
  %v627 = vpop.f32.mrb[0].mxu0
  %v628 = vadd.f32 %v100, %v627
  %v629 = vpop.f32.mrb[0].mxu0
  %630 = vdwg.mxu0
  %v631 = vmax.f32 %v377, 0.0
  %v632 = vmax.f32 %v380, 0.0
  %v633 = vmax.f32 %v385, 0.0
  %v634 = vmax.f32 %v388, 0.0
  %v635 = vmax.f32 %v393, 0.0
  %v636 = vmax.f32 %v396, 0.0
  %v637 = vmax.f32 %v401, 0.0
  %v638 = vmax.f32 %v404, 0.0
  %v639 = vmax.f32 %v409, 0.0
  %v640 = vmax.f32 %v412, 0.0
  %v641 = vmax.f32 %v417, 0.0
  %v642 = vmax.f32 %v420, 0.0
  %v643 = vmax.f32 %v425, 0.0
  %v644 = vmax.f32 %v428, 0.0
  %v645 = vmax.f32 %v433, 0.0
  %v646 = vmax.f32 %v436, 0.0
  %v647 = vmax.f32 %v441, 0.0
  %v648 = vmax.f32 %v444, 0.0
  %v649 = vmax.f32 %v449, 0.0
  %v650 = vmax.f32 %v452, 0.0
  %v651 = vmax.f32 %v457, 0.0
  %v652 = vmax.f32 %v460, 0.0
  %v653 = vmax.f32 %v465, 0.0
  %v654 = vmax.f32 %v468, 0.0
  %v655 = vmax.f32 %v473, 0.0
  %v656 = vmax.f32 %v476, 0.0
  %v657 = vmax.f32 %v481, 0.0
  %v658 = vmax.f32 %v484, 0.0
  %v659 = vmax.f32 %v489, 0.0
  %v660 = vmax.f32 %v492, 0.0
  %v661 = vmax.f32 %v497, 0.0
  %v662 = vmax.f32 %v500, 0.0
  %v663 = vmax.f32 %v505, 0.0
  %v664 = vmax.f32 %v508, 0.0
  %v665 = vmax.f32 %v513, 0.0
  %v666 = vmax.f32 %v516, 0.0
  %v667 = vmax.f32 %v521, 0.0
  %v668 = vmax.f32 %v524, 0.0
  %v669 = vmax.f32 %v529, 0.0
  %v670 = vmax.f32 %v532, 0.0
  %v671 = vmax.f32 %v537, 0.0
  %v672 = vmax.f32 %v540, 0.0
  %v673 = vmax.f32 %v545, 0.0
  %v674 = vmax.f32 %v548, 0.0
  %v675 = vmax.f32 %v553, 0.0
  %v676 = vmax.f32 %v556, 0.0
  %v677 = vmax.f32 %v561, 0.0
  %v678 = vmax.f32 %v564, 0.0
  %v679 = vmax.f32 %v569, 0.0
  %v680 = vmax.f32 %v572, 0.0
  %v681 = vmax.f32 %v577, 0.0
  %v682 = vmax.f32 %v580, 0.0
  %v683 = vmax.f32 %v585, 0.0
  %v684 = vmax.f32 %v588, 0.0
  %v685 = vmax.f32 %v593, 0.0
  %v686 = vmax.f32 %v596, 0.0
  %v687 = vmax.f32 %v601, 0.0
  %v688 = vmax.f32 %v604, 0.0
  %v689 = vmax.f32 %v609, 0.0
  %v690 = vmax.f32 %v612, 0.0
  %v691 = vmax.f32 %v617, 0.0
  %v692 = vmax.f32 %v620, 0.0
  %v693 = vmax.f32 %v625, 0.0
  %v694 = vmax.f32 %v628, 0.0
  %v695 = vpack.c.bf16 %v632, %v631
  %v696 = vpack.c.bf16 %v634, %v633
  %v697 = vpack.c.bf16 %v636, %v635
  %v698 = vpack.c.bf16 %v638, %v637
  %v699 = vpack.c.bf16 %v640, %v639
  %v700 = vpack.c.bf16 %v642, %v641
  %v701 = vpack.c.bf16 %v644, %v643
  %v702 = vpack.c.bf16 %v646, %v645
  %v703 = vpack.c.bf16 %v648, %v647
  %v704 = vpack.c.bf16 %v650, %v649
  %v705 = vpack.c.bf16 %v652, %v651
  %v706 = vpack.c.bf16 %v654, %v653
  %v707 = vpack.c.bf16 %v656, %v655
  %v708 = vpack.c.bf16 %v658, %v657
  %v709 = vpack.c.bf16 %v660, %v659
  %v710 = vpack.c.bf16 %v662, %v661
  %v711 = vpack.c.bf16 %v664, %v663
  %v712 = vpack.c.bf16 %v666, %v665
  %v713 = vpack.c.bf16 %v668, %v667
  %v714 = vpack.c.bf16 %v670, %v669
  %v715 = vpack.c.bf16 %v672, %v671
  %v716 = vpack.c.bf16 %v674, %v673
  %v717 = vpack.c.bf16 %v676, %v675
  %v718 = vpack.c.bf16 %v678, %v677
  %v719 = vpack.c.bf16 %v680, %v679
  %v720 = vpack.c.bf16 %v682, %v681
  %v721 = vpack.c.bf16 %v684, %v683
  %v722 = vpack.c.bf16 %v686, %v685
  %v723 = vpack.c.bf16 %v688, %v687
  %v724 = vpack.c.bf16 %v690, %v689
  %v725 = vpack.c.bf16 %v692, %v691
  %v726 = vpack.c.bf16 %v694, %v693
  %v759 = vunpack.c.l.b16 %v695
  %v760 = vunpack.c.h.b16 %v695
  %v761 = vunpack.c.l.b16 %v696
  %v762 = vunpack.c.h.b16 %v696
  %v763 = vunpack.c.l.b16 %v697
  %v764 = vunpack.c.h.b16 %v697
  %v765 = vunpack.c.l.b16 %v698
  %v766 = vunpack.c.h.b16 %v698
  %v767 = vunpack.c.l.b16 %v699
  %v768 = vunpack.c.h.b16 %v699
  %v769 = vunpack.c.l.b16 %v700
  %v770 = vunpack.c.h.b16 %v700
  %v771 = vunpack.c.l.b16 %v701
  %v772 = vunpack.c.h.b16 %v701
  %v773 = vunpack.c.l.b16 %v702
  %v774 = vunpack.c.h.b16 %v702
  %v775 = vunpack.c.l.b16 %v703
  %v776 = vunpack.c.h.b16 %v703
  %v777 = vunpack.c.l.b16 %v704
  %v778 = vunpack.c.h.b16 %v704
  %v779 = vunpack.c.l.b16 %v705
  %v780 = vunpack.c.h.b16 %v705
  %v781 = vunpack.c.l.b16 %v706
  %v782 = vunpack.c.h.b16 %v706
  %v783 = vunpack.c.l.b16 %v707
  %v784 = vunpack.c.h.b16 %v707
  %v785 = vunpack.c.l.b16 %v708
  %v786 = vunpack.c.h.b16 %v708
  %v787 = vunpack.c.l.b16 %v709
  %v788 = vunpack.c.h.b16 %v709
  %v789 = vunpack.c.l.b16 %v710
  %v790 = vunpack.c.h.b16 %v710
  %v791 = vunpack.c.l.b16 %v711
  %v792 = vunpack.c.h.b16 %v711
  %v793 = vunpack.c.l.b16 %v712
  %v794 = vunpack.c.h.b16 %v712
  %v795 = vunpack.c.l.b16 %v713
  %v796 = vunpack.c.h.b16 %v713
  %v797 = vunpack.c.l.b16 %v714
  %v798 = vunpack.c.h.b16 %v714
  %v799 = vunpack.c.l.b16 %v715
  %v800 = vunpack.c.h.b16 %v715
  %v801 = vunpack.c.l.b16 %v716
  %v802 = vunpack.c.h.b16 %v716
  %v803 = vunpack.c.l.b16 %v717
  %v804 = vunpack.c.h.b16 %v717
  %v805 = vunpack.c.l.b16 %v718
  %v806 = vunpack.c.h.b16 %v718
  %v807 = vunpack.c.l.b16 %v719
  %v808 = vunpack.c.h.b16 %v719
  %v809 = vunpack.c.l.b16 %v720
  %v810 = vunpack.c.h.b16 %v720
  %v811 = vunpack.c.l.b16 %v721
  %v812 = vunpack.c.h.b16 %v721
  %v813 = vunpack.c.l.b16 %v722
  %v814 = vunpack.c.h.b16 %v722
  %v815 = vunpack.c.l.b16 %v723
  %v816 = vunpack.c.h.b16 %v723
  %v817 = vunpack.c.l.b16 %v724
  %v818 = vunpack.c.h.b16 %v724
  %v819 = vunpack.c.l.b16 %v725
  %v820 = vunpack.c.h.b16 %v725
  %v821 = vunpack.c.l.b16 %v726
  %v822 = vunpack.c.h.b16 %v726
  %v823 = vpack.c.b16 %v759, %v759
  %v824 = vpack.c.b16 %v760, %v760
  %v825 = vpack.c.b16 %v761, %v761
  %v826 = vpack.c.b16 %v762, %v762
  %v827 = vpack.c.b16 %v763, %v763
  %v828 = vpack.c.b16 %v764, %v764
  %v829 = vpack.c.b16 %v765, %v765
  %v830 = vpack.c.b16 %v766, %v766
  %v831 = vpack.c.b16 %v767, %v767
  %v832 = vpack.c.b16 %v768, %v768
  %v833 = vpack.c.b16 %v769, %v769
  %v834 = vpack.c.b16 %v770, %v770
  %v835 = vpack.c.b16 %v771, %v771
  %v836 = vpack.c.b16 %v772, %v772
  %v837 = vpack.c.b16 %v773, %v773
  %v838 = vpack.c.b16 %v774, %v774
  %v839 = vpack.c.b16 %v775, %v775
  %v840 = vpack.c.b16 %v776, %v776
  %v841 = vpack.c.b16 %v777, %v777
  %v842 = vpack.c.b16 %v778, %v778
  %v843 = vpack.c.b16 %v779, %v779
  %v844 = vpack.c.b16 %v780, %v780
  %v845 = vpack.c.b16 %v781, %v781
  %v846 = vpack.c.b16 %v782, %v782
  %v847 = vpack.c.b16 %v783, %v783
  %v848 = vpack.c.b16 %v784, %v784
  %v849 = vpack.c.b16 %v785, %v785
  %v850 = vpack.c.b16 %v786, %v786
  %v851 = vpack.c.b16 %v787, %v787
  %v852 = vpack.c.b16 %v788, %v788
  %v853 = vpack.c.b16 %v789, %v789
  %v854 = vpack.c.b16 %v790, %v790
  %v855 = vpack.c.b16 %v791, %v791
  %v856 = vpack.c.b16 %v792, %v792
  %v857 = vpack.c.b16 %v793, %v793
  %v858 = vpack.c.b16 %v794, %v794
  %v859 = vpack.c.b16 %v795, %v795
  %v860 = vpack.c.b16 %v796, %v796
  %v861 = vpack.c.b16 %v797, %v797
  %v862 = vpack.c.b16 %v798, %v798
  %v863 = vpack.c.b16 %v799, %v799
  %v864 = vpack.c.b16 %v800, %v800
  %v865 = vpack.c.b16 %v801, %v801
  %v866 = vpack.c.b16 %v802, %v802
  %v867 = vpack.c.b16 %v803, %v803
  %v868 = vpack.c.b16 %v804, %v804
  %v869 = vpack.c.b16 %v805, %v805
  %v870 = vpack.c.b16 %v806, %v806
  %v871 = vpack.c.b16 %v807, %v807
  %v872 = vpack.c.b16 %v808, %v808
  %v873 = vpack.c.b16 %v809, %v809
  %v874 = vpack.c.b16 %v810, %v810
  %v875 = vpack.c.b16 %v811, %v811
  %v876 = vpack.c.b16 %v812, %v812
  %v877 = vpack.c.b16 %v813, %v813
  %v878 = vpack.c.b16 %v814, %v814
  %v879 = vpack.c.b16 %v815, %v815
  %v880 = vpack.c.b16 %v816, %v816
  %v881 = vpack.c.b16 %v817, %v817
  %v882 = vpack.c.b16 %v818, %v818
  %v883 = vpack.c.b16 %v819, %v819
  %v884 = vpack.c.b16 %v820, %v820
  %v885 = vpack.c.b16 %v821, %v821
  %v886 = vpack.c.b16 %v822, %v822
  %vm951 = vcmask 519168
  %952 = vst.msk [vmem:[%s3] sm:$0xf] %vm951, %v823
  %953 = vst.msk [vmem:[%s3 + $0x4] sm:$0xf] %vm951, %v824
  %954 = vst.msk [vmem:[%s3 + $0x8] sm:$0xf] %vm951, %v825
  %955 = vst.msk [vmem:[%s3 + $0xc] sm:$0xf] %vm951, %v826
  %956 = vst.msk [vmem:[%s3 + $0x10] sm:$0xf] %vm951, %v827
  %957 = vst.msk [vmem:[%s3 + $0x14] sm:$0xf] %vm951, %v828
  %958 = vst.msk [vmem:[%s3 + $0x18] sm:$0xf] %vm951, %v829
  %959 = vst.msk [vmem:[%s3 + $0x1c] sm:$0xf] %vm951, %v830
  %960 = vst.msk [vmem:[%s3 + $0x20] sm:$0xf] %vm951, %v831
  %961 = vst.msk [vmem:[%s3 + $0x24] sm:$0xf] %vm951, %v832
  %962 = vst.msk [vmem:[%s3 + $0x28] sm:$0xf] %vm951, %v833
  %963 = vst.msk [vmem:[%s3 + $0x2c] sm:$0xf] %vm951, %v834
  %964 = vst.msk [vmem:[%s3 + $0x30] sm:$0xf] %vm951, %v835
  %965 = vst.msk [vmem:[%s3 + $0x34] sm:$0xf] %vm951, %v836
  %966 = vst.msk [vmem:[%s3 + $0x38] sm:$0xf] %vm951, %v837
  %967 = vst.msk [vmem:[%s3 + $0x3c] sm:$0xf] %vm951, %v838
  %968 = vst.msk [vmem:[%s3 + $0x40] sm:$0xf] %vm951, %v839
  %969 = vst.msk [vmem:[%s3 + $0x44] sm:$0xf] %vm951, %v840
  %970 = vst.msk [vmem:[%s3 + $0x48] sm:$0xf] %vm951, %v841
  %971 = vst.msk [vmem:[%s3 + $0x4c] sm:$0xf] %vm951, %v842
  %972 = vst.msk [vmem:[%s3 + $0x50] sm:$0xf] %vm951, %v843
  %973 = vst.msk [vmem:[%s3 + $0x54] sm:$0xf] %vm951, %v844
  %974 = vst.msk [vmem:[%s3 + $0x58] sm:$0xf] %vm951, %v845
  %975 = vst.msk [vmem:[%s3 + $0x5c] sm:$0xf] %vm951, %v846
  %976 = vst.msk [vmem:[%s3 + $0x60] sm:$0xf] %vm951, %v847
  %977 = vst.msk [vmem:[%s3 + $0x64] sm:$0xf] %vm951, %v848
  %978 = vst.msk [vmem:[%s3 + $0x68] sm:$0xf] %vm951, %v849
  %979 = vst.msk [vmem:[%s3 + $0x6c] sm:$0xf] %vm951, %v850
  %980 = vst.msk [vmem:[%s3 + $0x70] sm:$0xf] %vm951, %v851
  %981 = vst.msk [vmem:[%s3 + $0x74] sm:$0xf] %vm951, %v852
  %982 = vst.msk [vmem:[%s3 + $0x78] sm:$0xf] %vm951, %v853
  %983 = vst.msk [vmem:[%s3 + $0x7c] sm:$0xf] %vm951, %v854
  %984 = vst.msk [vmem:[%s3 + $0x80] sm:$0xf] %vm951, %v855
  %985 = vst.msk [vmem:[%s3 + $0x84] sm:$0xf] %vm951, %v856
  %986 = vst.msk [vmem:[%s3 + $0x88] sm:$0xf] %vm951, %v857
  %987 = vst.msk [vmem:[%s3 + $0x8c] sm:$0xf] %vm951, %v858
  %988 = vst.msk [vmem:[%s3 + $0x90] sm:$0xf] %vm951, %v859
  %989 = vst.msk [vmem:[%s3 + $0x94] sm:$0xf] %vm951, %v860
  %990 = vst.msk [vmem:[%s3 + $0x98] sm:$0xf] %vm951, %v861
  %991 = vst.msk [vmem:[%s3 + $0x9c] sm:$0xf] %vm951, %v862
  %992 = vst.msk [vmem:[%s3 + $0xa0] sm:$0xf] %vm951, %v863
  %993 = vst.msk [vmem:[%s3 + $0xa4] sm:$0xf] %vm951, %v864
  %994 = vst.msk [vmem:[%s3 + $0xa8] sm:$0xf] %vm951, %v865
  %995 = vst.msk [vmem:[%s3 + $0xac] sm:$0xf] %vm951, %v866
  %996 = vst.msk [vmem:[%s3 + $0xb0] sm:$0xf] %vm951, %v867
  %997 = vst.msk [vmem:[%s3 + $0xb4] sm:$0xf] %vm951, %v868
  %998 = vst.msk [vmem:[%s3 + $0xb8] sm:$0xf] %vm951, %v869
  %999 = vst.msk [vmem:[%s3 + $0xbc] sm:$0xf] %vm951, %v870
  %1000 = vst.msk [vmem:[%s3 + $0xc0] sm:$0xf] %vm951, %v871
  %1001 = vst.msk [vmem:[%s3 + $0xc4] sm:$0xf] %vm951, %v872
  %1002 = vst.msk [vmem:[%s3 + $0xc8] sm:$0xf] %vm951, %v873
  %1003 = vst.msk [vmem:[%s3 + $0xcc] sm:$0xf] %vm951, %v874
  %1004 = vst.msk [vmem:[%s3 + $0xd0] sm:$0xf] %vm951, %v875
  %1005 = vst.msk [vmem:[%s3 + $0xd4] sm:$0xf] %vm951, %v876
  %1006 = vst.msk [vmem:[%s3 + $0xd8] sm:$0xf] %vm951, %v877
  %1007 = vst.msk [vmem:[%s3 + $0xdc] sm:$0xf] %vm951, %v878
  %1008 = vst.msk [vmem:[%s3 + $0xe0] sm:$0xf] %vm951, %v879
  %1009 = vst.msk [vmem:[%s3 + $0xe4] sm:$0xf] %vm951, %v880
  %1010 = vst.msk [vmem:[%s3 + $0xe8] sm:$0xf] %vm951, %v881
  %1011 = vst.msk [vmem:[%s3 + $0xec] sm:$0xf] %vm951, %v882
  %1012 = vst.msk [vmem:[%s3 + $0xf0] sm:$0xf] %vm951, %v883
  %1013 = vst.msk [vmem:[%s3 + $0xf4] sm:$0xf] %vm951, %v884
  %1014 = vst.msk [vmem:[%s3 + $0xf8] sm:$0xf] %vm951, %v885
  %1015 = vst.msk [vmem:[%s3 + $0xfc] sm:$0xf] %vm951, %v886
  // Predicated region
  $region14: #{avalon_generator_forward.14} parent=0 // pred_check
    _
  $region15: #{avalon_generator_forward.14} parent=0 // pred_check_branch
    %1017 = sbr.rel (0) target = $region17
  $region16: #{avalon_generator_forward.14} parent=0 // pred_region
    _
  $region17: #{avalon_generator_forward.14} parent=0 // pred_fallthru
    _
  // Predicated region
  $region18: #{avalon_generator_forward.14} parent=0 // pred_check
    _
  $region19: #{avalon_generator_forward.14} parent=0 // pred_check_branch
    %1019 = sbr.rel (0) target = $region21
  $region20: #{avalon_generator_forward.14} parent=0 // pred_region
    _
  $region21: #{avalon_generator_forward.14} parent=0 // pred_fallthru
    _

// kernel: avalon_generator_forward.15
$region0: #{avalon_generator_forward.15}
  #allocation0 [shape = 'u32[]', space=smem, size = 0x4, offset = 0x4, fixed_abs, tag = 'smem constant byte address 0x4 - core index']
  #allocation1 [shape = 'u32[144,128]{1,0:T(1,128)}', space=vmem, size = 0x12000, scoped, tag = 'internal scratch']
  #allocation2 [shape = 'f32[1,1]{1,0:T(1,128)S(1)}', space=vmem, size = 0x200, scoped, tag = 'scoped memory for avalon_generator_forward.15']
  %s0 = inlined_call_operand.vmem [shape: bf16[1,144], index: 0, kind: input, shape index: {}]
  %s1 = inlined_call_operand.vmem [shape: bf16[144,2048], index: 1, kind: input, shape index: {}]
  %s2 = inlined_call_operand.<no memory space> [shape: f32[1,1], index: 2, kind: input, shape index: {}]
  %s3 = inlined_call_operand.vmem [shape: f32[1,2048], index: 3, kind: output, shape index: {}]
  %s4 = sld [smem:[#allocation0]]
  $region22: #{avalon_generator_forward.15} parent=0
    _
  %s6 = ssub.s32 1, %s4
  %s7 = scalar_select 0, %s6, %s4
  %v8 = vstv %s2
  %9 = vst [vmem:[#allocation2] sm:$0x1] %v8
  // Predicated region
  $region2: #{avalon_generator_forward.15} parent=0 // pred_check
    _
  $region3: #{avalon_generator_forward.15} parent=0 // pred_check_branch
    %11 = sbr.rel (0) target = $region5
  $region4: #{avalon_generator_forward.15} parent=0 // pred_region
    _
  $region5: #{avalon_generator_forward.15} parent=0 // pred_fallthru
    _
  // Predicated region
  $region6: #{avalon_generator_forward.15} parent=0 // pred_check
    _
  $region7: #{avalon_generator_forward.15} parent=0 // pred_check_branch
    %13 = sbr.rel (0) target = $region9
  $region8: #{avalon_generator_forward.15} parent=0 // pred_region
    _
  $region9: #{avalon_generator_forward.15} parent=0 // pred_fallthru
    _
  // Predicated region
  $region10: #{avalon_generator_forward.15} parent=0 // pred_check
    _
  $region11: #{avalon_generator_forward.15} parent=0 // pred_check_branch
    %15 = sbr.rel (0) target = $region13
  $region12: #{avalon_generator_forward.15} parent=0 // pred_region
    _
  $region13: #{avalon_generator_forward.15} parent=0 // pred_fallthru
    _
  %v17 = vld [vmem:[%s0] sm:$0x3]
  %v18 = vld [vmem:[%s1] sm:$0xff]
  %v19 = vld [vmem:[%s1 + $0x8] sm:$0xff]
  %v20 = vld [vmem:[%s1 + $0x10] sm:$0xff]
  %v21 = vld [vmem:[%s1 + $0x18] sm:$0xff]
  %v22 = vld [vmem:[%s1 + $0x20] sm:$0xff]
  %v23 = vld [vmem:[%s1 + $0x28] sm:$0xff]
  %v24 = vld [vmem:[%s1 + $0x30] sm:$0xff]
  %v25 = vld [vmem:[%s1 + $0x38] sm:$0xff]
  %v26 = vld [vmem:[%s1 + $0x40] sm:$0xff]
  %v27 = vld [vmem:[%s1 + $0x48] sm:$0xff]
  %v28 = vld [vmem:[%s1 + $0x50] sm:$0xff]
  %v29 = vld [vmem:[%s1 + $0x58] sm:$0xff]
  %v30 = vld [vmem:[%s1 + $0x60] sm:$0xff]
  %v31 = vld [vmem:[%s1 + $0x68] sm:$0xff]
  %v32 = vld [vmem:[%s1 + $0x70] sm:$0xff]
  %v33 = vld [vmem:[%s1 + $0x78] sm:$0xff]
  %v34 = vld [vmem:[%s1 + $0x80] sm:$0xff]
  %v35 = vld [vmem:[%s1 + $0x88] sm:$0xff]
  %v36 = vld [vmem:[%s1 + $0x90] sm:$0xff]
  %v37 = vld [vmem:[%s1 + $0x98] sm:$0xff]
  %v38 = vld [vmem:[%s1 + $0xa0] sm:$0xff]
  %v39 = vld [vmem:[%s1 + $0xa8] sm:$0xff]
  %v40 = vld [vmem:[%s1 + $0xb0] sm:$0xff]
  %v41 = vld [vmem:[%s1 + $0xb8] sm:$0xff]
  %v42 = vld [vmem:[%s1 + $0xc0] sm:$0xff]
  %v43 = vld [vmem:[%s1 + $0xc8] sm:$0xff]
  %v44 = vld [vmem:[%s1 + $0xd0] sm:$0xff]
  %v45 = vld [vmem:[%s1 + $0xd8] sm:$0xff]
  %v46 = vld [vmem:[%s1 + $0xe0] sm:$0xff]
  %v47 = vld [vmem:[%s1 + $0xe8] sm:$0xff]
  %v48 = vld [vmem:[%s1 + $0xf0] sm:$0xff]
  %v49 = vld [vmem:[%s1 + $0xf8] sm:$0xff]
  %v50 = vld [vmem:[%s1 + $0x100] sm:$0xff]
  %v51 = vld [vmem:[%s1 + $0x108] sm:$0xff]
  %v52 = vld [vmem:[%s1 + $0x110] sm:$0xff]
  %v53 = vld [vmem:[%s1 + $0x118] sm:$0xff]
  %v54 = vld [vmem:[%s1 + $0x120] sm:$0xff]
  %v55 = vld [vmem:[%s1 + $0x128] sm:$0xff]
  %v56 = vld [vmem:[%s1 + $0x130] sm:$0xff]
  %v57 = vld [vmem:[%s1 + $0x138] sm:$0xff]
  %v58 = vld [vmem:[%s1 + $0x140] sm:$0xff]
  %v59 = vld [vmem:[%s1 + $0x148] sm:$0xff]
  %v60 = vld [vmem:[%s1 + $0x150] sm:$0xff]
  %v61 = vld [vmem:[%s1 + $0x158] sm:$0xff]
  %v62 = vld [vmem:[%s1 + $0x160] sm:$0xff]
  %v63 = vld [vmem:[%s1 + $0x168] sm:$0xff]
  %v64 = vld [vmem:[%s1 + $0x170] sm:$0xff]
  %v65 = vld [vmem:[%s1 + $0x178] sm:$0xff]
  %v66 = vld [vmem:[%s1 + $0x180] sm:$0xff]
  %v67 = vld [vmem:[%s1 + $0x188] sm:$0xff]
  %v68 = vld [vmem:[%s1 + $0x190] sm:$0xff]
  %v69 = vld [vmem:[%s1 + $0x198] sm:$0xff]
  %v70 = vld [vmem:[%s1 + $0x1a0] sm:$0xff]
  %v71 = vld [vmem:[%s1 + $0x1a8] sm:$0xff]
  %v72 = vld [vmem:[%s1 + $0x1b0] sm:$0xff]
  %v73 = vld [vmem:[%s1 + $0x1b8] sm:$0xff]
  %v74 = vld [vmem:[%s1 + $0x1c0] sm:$0xff]
  %v75 = vld [vmem:[%s1 + $0x1c8] sm:$0xff]
  %v76 = vld [vmem:[%s1 + $0x1d0] sm:$0xff]
  %v77 = vld [vmem:[%s1 + $0x1d8] sm:$0xff]
  %v78 = vld [vmem:[%s1 + $0x1e0] sm:$0xff]
  %v79 = vld [vmem:[%s1 + $0x1e8] sm:$0xff]
  %v80 = vld [vmem:[%s1 + $0x1f0] sm:$0xff]
  %v81 = vld [vmem:[%s1 + $0x1f8] sm:$0xff]
  %v82 = vld [vmem:[%s1 + $0x200] sm:$0xff]
  %v83 = vld [vmem:[%s1 + $0x208] sm:$0xff]
  %v84 = vld [vmem:[%s1 + $0x210] sm:$0xff]
  %v85 = vld [vmem:[%s1 + $0x218] sm:$0xff]
  %v86 = vld [vmem:[%s1 + $0x220] sm:$0xff]
  %v87 = vld [vmem:[%s1 + $0x228] sm:$0xff]
  %v88 = vld [vmem:[%s1 + $0x230] sm:$0xff]
  %v89 = vld [vmem:[%s1 + $0x238] sm:$0xff]
  %v90 = vld [vmem:[%s1 + $0x240] sm:$0xff]
  %v91 = vld [vmem:[%s1 + $0x248] sm:$0xff]
  %v92 = vld [vmem:[%s1 + $0x250] sm:$0xff]
  %v93 = vld [vmem:[%s1 + $0x258] sm:$0xff]
  %v94 = vld [vmem:[%s1 + $0x260] sm:$0xff]
  %v95 = vld [vmem:[%s1 + $0x268] sm:$0xff]
  %v96 = vld [vmem:[%s1 + $0x270] sm:$0xff]
  %v97 = vld [vmem:[%s1 + $0x278] sm:$0xff]
  %v98 = vld [vmem:[%s1 + $0x280] sm:$0xff]
  %v99 = vld [vmem:[%s1 + $0x288] sm:$0xff]
  %v100 = vld [vmem:[%s1 + $0x290] sm:$0xff]
  %v101 = vld [vmem:[%s1 + $0x298] sm:$0xff]
  %v102 = vld [vmem:[%s1 + $0x2a0] sm:$0xff]
  %v103 = vld [vmem:[%s1 + $0x2a8] sm:$0xff]
  %v104 = vld [vmem:[%s1 + $0x2b0] sm:$0xff]
  %v105 = vld [vmem:[%s1 + $0x2b8] sm:$0xff]
  %v106 = vld [vmem:[%s1 + $0x2c0] sm:$0xff]
  %v107 = vld [vmem:[%s1 + $0x2c8] sm:$0xff]
  %v108 = vld [vmem:[%s1 + $0x2d0] sm:$0xff]
  %v109 = vld [vmem:[%s1 + $0x2d8] sm:$0xff]
  %v110 = vld [vmem:[%s1 + $0x2e0] sm:$0xff]
  %v111 = vld [vmem:[%s1 + $0x2e8] sm:$0xff]
  %v112 = vld [vmem:[%s1 + $0x2f0] sm:$0xff]
  %v113 = vld [vmem:[%s1 + $0x2f8] sm:$0xff]
  %v114 = vld [vmem:[%s1 + $0x300] sm:$0xff]
  %v115 = vld [vmem:[%s1 + $0x308] sm:$0xff]
  %v116 = vld [vmem:[%s1 + $0x310] sm:$0xff]
  %v117 = vld [vmem:[%s1 + $0x318] sm:$0xff]
  %v118 = vld [vmem:[%s1 + $0x320] sm:$0xff]
  %v119 = vld [vmem:[%s1 + $0x328] sm:$0xff]
  %v120 = vld [vmem:[%s1 + $0x330] sm:$0xff]
  %v121 = vld [vmem:[%s1 + $0x338] sm:$0xff]
  %v122 = vld [vmem:[%s1 + $0x340] sm:$0xff]
  %v123 = vld [vmem:[%s1 + $0x348] sm:$0xff]
  %v124 = vld [vmem:[%s1 + $0x350] sm:$0xff]
  %v125 = vld [vmem:[%s1 + $0x358] sm:$0xff]
  %v126 = vld [vmem:[%s1 + $0x360] sm:$0xff]
  %v127 = vld [vmem:[%s1 + $0x368] sm:$0xff]
  %v128 = vld [vmem:[%s1 + $0x370] sm:$0xff]
  %v129 = vld [vmem:[%s1 + $0x378] sm:$0xff]
  %v130 = vld [vmem:[%s1 + $0x380] sm:$0xff]
  %v131 = vld [vmem:[%s1 + $0x388] sm:$0xff]
  %v132 = vld [vmem:[%s1 + $0x390] sm:$0xff]
  %v133 = vld [vmem:[%s1 + $0x398] sm:$0xff]
  %v134 = vld [vmem:[%s1 + $0x3a0] sm:$0xff]
  %v135 = vld [vmem:[%s1 + $0x3a8] sm:$0xff]
  %v136 = vld [vmem:[%s1 + $0x3b0] sm:$0xff]
  %v137 = vld [vmem:[%s1 + $0x3b8] sm:$0xff]
  %v138 = vld [vmem:[%s1 + $0x3c0] sm:$0xff]
  %v139 = vld [vmem:[%s1 + $0x3c8] sm:$0xff]
  %v140 = vld [vmem:[%s1 + $0x3d0] sm:$0xff]
  %v141 = vld [vmem:[%s1 + $0x3d8] sm:$0xff]
  %v142 = vld [vmem:[%s1 + $0x3e0] sm:$0xff]
  %v143 = vld [vmem:[%s1 + $0x3e8] sm:$0xff]
  %v144 = vld [vmem:[%s1 + $0x3f0] sm:$0xff]
  %v145 = vld [vmem:[%s1 + $0x3f8] sm:$0xff]
  %v146 = vld [vmem:[%s1 + $0x400] sm:$0xff]
  %v147 = vld [vmem:[%s1 + $0x408] sm:$0xff]
  %v148 = vld [vmem:[%s1 + $0x410] sm:$0xff]
  %v149 = vld [vmem:[%s1 + $0x418] sm:$0xff]
  %v150 = vld [vmem:[%s1 + $0x420] sm:$0xff]
  %v151 = vld [vmem:[%s1 + $0x428] sm:$0xff]
  %v152 = vld [vmem:[%s1 + $0x430] sm:$0xff]
  %v153 = vld [vmem:[%s1 + $0x438] sm:$0xff]
  %v154 = vld [vmem:[%s1 + $0x440] sm:$0xff]
  %v155 = vld [vmem:[%s1 + $0x448] sm:$0xff]
  %v156 = vld [vmem:[%s1 + $0x450] sm:$0xff]
  %v157 = vld [vmem:[%s1 + $0x458] sm:$0xff]
  %v158 = vld [vmem:[%s1 + $0x460] sm:$0xff]
  %v159 = vld [vmem:[%s1 + $0x468] sm:$0xff]
  %v160 = vld [vmem:[%s1 + $0x470] sm:$0xff]
  %v161 = vld [vmem:[%s1 + $0x478] sm:$0xff]
  %v162 = vld [vmem:[#allocation2] sm:$0x1]
  %164 = vset.pattern.permute.xlu0 0
  %165 = vperm.xlu0 %164, %v162
  %v166 = vpop.permute.xlu0 %165
  %v168 = vlaneseq
  %v169 = vshrl.u32 %v168, 7
  %v170 = vsub.s32 0, %v169
  %v171 = vrot.slane %v166, %v170
  %v174 = vunpack.c.l.s4 1966171168
  %v175 = vunpack.c.0.s8 %v174
  %v176 = vlaneseq
  %v177 = vshrl.u32 %v176, 7
  %v178 = vsub.s32 %v175, %v177
  %v179 = vrot.slane %v17, %v178
  %v180 = vcombine.high %v179, %v179
  %v182 = vunpack.c.l.s4 1966171168
  %v183 = vunpack.c.0.s8 %v182
  %v184 = vlaneseq
  %v185 = vshrl.u32 %v184, 7
  %v186 = vsub.s32 %v183, %v185
  %v187 = vrot.slane %v179, %v186
  %v189 = vunpack.c.l.s4 1966171168
  %v190 = vunpack.c.0.s8 %v189
  %v191 = vlaneseq
  %v192 = vshrl.u32 %v191, 7
  %v193 = vsub.s32 %v190, %v192
  %v194 = vrot.slane %v180, %v193
  %v340 = vunpack.c.l.b16 %v18
  %v341 = vunpack.c.h.b16 %v18
  %v342 = vunpack.c.l.b16 %v19
  %v343 = vunpack.c.h.b16 %v19
  %v344 = vunpack.c.l.b16 %v20
  %v345 = vunpack.c.h.b16 %v20
  %v346 = vunpack.c.l.b16 %v21
  %v347 = vunpack.c.h.b16 %v21
  %v348 = vunpack.c.l.b16 %v22
  %v349 = vunpack.c.h.b16 %v22
  %v350 = vunpack.c.l.b16 %v23
  %v351 = vunpack.c.h.b16 %v23
  %v352 = vunpack.c.l.b16 %v24
  %v353 = vunpack.c.h.b16 %v24
  %v354 = vunpack.c.l.b16 %v25
  %v355 = vunpack.c.h.b16 %v25
  %v356 = vunpack.c.l.b16 %v26
  %v357 = vunpack.c.h.b16 %v26
  %v358 = vunpack.c.l.b16 %v27
  %v359 = vunpack.c.h.b16 %v27
  %v360 = vunpack.c.l.b16 %v28
  %v361 = vunpack.c.h.b16 %v28
  %v362 = vunpack.c.l.b16 %v29
  %v363 = vunpack.c.h.b16 %v29
  %v364 = vunpack.c.l.b16 %v30
  %v365 = vunpack.c.h.b16 %v30
  %v366 = vunpack.c.l.b16 %v31
  %v367 = vunpack.c.h.b16 %v31
  %v368 = vunpack.c.l.b16 %v32
  %v369 = vunpack.c.h.b16 %v32
  %v370 = vunpack.c.l.b16 %v33
  %v371 = vunpack.c.h.b16 %v33
  %v372 = vunpack.c.l.b16 %v34
  %v373 = vunpack.c.h.b16 %v34
  %v374 = vunpack.c.l.b16 %v35
  %v375 = vunpack.c.h.b16 %v35
  %v376 = vunpack.c.l.b16 %v36
  %v377 = vunpack.c.h.b16 %v36
  %v378 = vunpack.c.l.b16 %v37
  %v379 = vunpack.c.h.b16 %v37
  %v380 = vunpack.c.l.b16 %v38
  %v381 = vunpack.c.h.b16 %v38
  %v382 = vunpack.c.l.b16 %v39
  %v383 = vunpack.c.h.b16 %v39
  %v384 = vunpack.c.l.b16 %v40
  %v385 = vunpack.c.h.b16 %v40
  %v386 = vunpack.c.l.b16 %v41
  %v387 = vunpack.c.h.b16 %v41
  %v388 = vunpack.c.l.b16 %v42
  %v389 = vunpack.c.h.b16 %v42
  %v390 = vunpack.c.l.b16 %v43
  %v391 = vunpack.c.h.b16 %v43
  %v392 = vunpack.c.l.b16 %v44
  %v393 = vunpack.c.h.b16 %v44
  %v394 = vunpack.c.l.b16 %v45
  %v395 = vunpack.c.h.b16 %v45
  %v396 = vunpack.c.l.b16 %v46
  %v397 = vunpack.c.h.b16 %v46
  %v398 = vunpack.c.l.b16 %v47
  %v399 = vunpack.c.h.b16 %v47
  %v400 = vunpack.c.l.b16 %v48
  %v401 = vunpack.c.h.b16 %v48
  %v402 = vunpack.c.l.b16 %v49
  %v403 = vunpack.c.h.b16 %v49
  %v404 = vunpack.c.l.b16 %v50
  %v405 = vunpack.c.h.b16 %v50
  %v406 = vunpack.c.l.b16 %v51
  %v407 = vunpack.c.h.b16 %v51
  %v408 = vunpack.c.l.b16 %v52
  %v409 = vunpack.c.h.b16 %v52
  %v410 = vunpack.c.l.b16 %v53
  %v411 = vunpack.c.h.b16 %v53
  %v412 = vunpack.c.l.b16 %v54
  %v413 = vunpack.c.h.b16 %v54
  %v414 = vunpack.c.l.b16 %v55
  %v415 = vunpack.c.h.b16 %v55
  %v416 = vunpack.c.l.b16 %v56
  %v417 = vunpack.c.h.b16 %v56
  %v418 = vunpack.c.l.b16 %v57
  %v419 = vunpack.c.h.b16 %v57
  %v420 = vunpack.c.l.b16 %v58
  %v421 = vunpack.c.h.b16 %v58
  %v422 = vunpack.c.l.b16 %v59
  %v423 = vunpack.c.h.b16 %v59
  %v424 = vunpack.c.l.b16 %v60
  %v425 = vunpack.c.h.b16 %v60
  %v426 = vunpack.c.l.b16 %v61
  %v427 = vunpack.c.h.b16 %v61
  %v428 = vunpack.c.l.b16 %v62
  %v429 = vunpack.c.h.b16 %v62
  %v430 = vunpack.c.l.b16 %v63
  %v431 = vunpack.c.h.b16 %v63
  %v432 = vunpack.c.l.b16 %v64
  %v433 = vunpack.c.h.b16 %v64
  %v434 = vunpack.c.l.b16 %v65
  %v435 = vunpack.c.h.b16 %v65
  %v436 = vunpack.c.l.b16 %v66
  %v437 = vunpack.c.h.b16 %v66
  %v438 = vunpack.c.l.b16 %v67
  %v439 = vunpack.c.h.b16 %v67
  %v440 = vunpack.c.l.b16 %v68
  %v441 = vunpack.c.h.b16 %v68
  %v442 = vunpack.c.l.b16 %v69
  %v443 = vunpack.c.h.b16 %v69
  %v444 = vunpack.c.l.b16 %v70
  %v445 = vunpack.c.h.b16 %v70
  %v446 = vunpack.c.l.b16 %v71
  %v447 = vunpack.c.h.b16 %v71
  %v448 = vunpack.c.l.b16 %v72
  %v449 = vunpack.c.h.b16 %v72
  %v450 = vunpack.c.l.b16 %v73
  %v451 = vunpack.c.h.b16 %v73
  %v452 = vunpack.c.l.b16 %v74
  %v453 = vunpack.c.h.b16 %v74
  %v454 = vunpack.c.l.b16 %v75
  %v455 = vunpack.c.h.b16 %v75
  %v456 = vunpack.c.l.b16 %v76
  %v457 = vunpack.c.h.b16 %v76
  %v458 = vunpack.c.l.b16 %v77
  %v459 = vunpack.c.h.b16 %v77
  %v460 = vunpack.c.l.b16 %v78
  %v461 = vunpack.c.h.b16 %v78
  %v462 = vunpack.c.l.b16 %v79
  %v463 = vunpack.c.h.b16 %v79
  %v464 = vunpack.c.l.b16 %v80
  %v465 = vunpack.c.h.b16 %v80
  %v466 = vunpack.c.l.b16 %v81
  %v467 = vunpack.c.h.b16 %v81
  %v468 = vunpack.c.l.b16 %v82
  %v469 = vunpack.c.h.b16 %v82
  %v470 = vunpack.c.l.b16 %v83
  %v471 = vunpack.c.h.b16 %v83
  %v472 = vunpack.c.l.b16 %v84
  %v473 = vunpack.c.h.b16 %v84
  %v474 = vunpack.c.l.b16 %v85
  %v475 = vunpack.c.h.b16 %v85
  %v476 = vunpack.c.l.b16 %v86
  %v477 = vunpack.c.h.b16 %v86
  %v478 = vunpack.c.l.b16 %v87
  %v479 = vunpack.c.h.b16 %v87
  %v480 = vunpack.c.l.b16 %v88
  %v481 = vunpack.c.h.b16 %v88
  %v482 = vunpack.c.l.b16 %v89
  %v483 = vunpack.c.h.b16 %v89
  %v484 = vunpack.c.l.b16 %v90
  %v485 = vunpack.c.h.b16 %v90
  %v486 = vunpack.c.l.b16 %v91
  %v487 = vunpack.c.h.b16 %v91
  %v488 = vunpack.c.l.b16 %v92
  %v489 = vunpack.c.h.b16 %v92
  %v490 = vunpack.c.l.b16 %v93
  %v491 = vunpack.c.h.b16 %v93
  %v492 = vunpack.c.l.b16 %v94
  %v493 = vunpack.c.h.b16 %v94
  %v494 = vunpack.c.l.b16 %v95
  %v495 = vunpack.c.h.b16 %v95
  %v496 = vunpack.c.l.b16 %v96
  %v497 = vunpack.c.h.b16 %v96
  %v498 = vunpack.c.l.b16 %v97
  %v499 = vunpack.c.h.b16 %v97
  %v500 = vunpack.c.l.b16 %v98
  %v501 = vunpack.c.h.b16 %v98
  %v502 = vunpack.c.l.b16 %v99
  %v503 = vunpack.c.h.b16 %v99
  %v504 = vunpack.c.l.b16 %v100
  %v505 = vunpack.c.h.b16 %v100
  %v506 = vunpack.c.l.b16 %v101
  %v507 = vunpack.c.h.b16 %v101
  %v508 = vunpack.c.l.b16 %v102
  %v509 = vunpack.c.h.b16 %v102
  %v510 = vunpack.c.l.b16 %v103
  %v511 = vunpack.c.h.b16 %v103
  %v512 = vunpack.c.l.b16 %v104
  %v513 = vunpack.c.h.b16 %v104
  %v514 = vunpack.c.l.b16 %v105
  %v515 = vunpack.c.h.b16 %v105
  %v516 = vunpack.c.l.b16 %v106
  %v517 = vunpack.c.h.b16 %v106
  %v518 = vunpack.c.l.b16 %v107
  %v519 = vunpack.c.h.b16 %v107
  %v520 = vunpack.c.l.b16 %v108
  %v521 = vunpack.c.h.b16 %v108
  %v522 = vunpack.c.l.b16 %v109
  %v523 = vunpack.c.h.b16 %v109
  %v524 = vunpack.c.l.b16 %v110
  %v525 = vunpack.c.h.b16 %v110
  %v526 = vunpack.c.l.b16 %v111
  %v527 = vunpack.c.h.b16 %v111
  %v528 = vunpack.c.l.b16 %v112
  %v529 = vunpack.c.h.b16 %v112
  %v530 = vunpack.c.l.b16 %v113
  %v531 = vunpack.c.h.b16 %v113
  %v532 = vunpack.c.l.b16 %v114
  %v533 = vunpack.c.h.b16 %v114
  %v534 = vunpack.c.l.b16 %v115
  %v535 = vunpack.c.h.b16 %v115
  %v536 = vunpack.c.l.b16 %v116
  %v537 = vunpack.c.h.b16 %v116
  %v538 = vunpack.c.l.b16 %v117
  %v539 = vunpack.c.h.b16 %v117
  %v540 = vunpack.c.l.b16 %v118
  %v541 = vunpack.c.h.b16 %v118
  %v542 = vunpack.c.l.b16 %v119
  %v543 = vunpack.c.h.b16 %v119
  %v544 = vunpack.c.l.b16 %v120
  %v545 = vunpack.c.h.b16 %v120
  %v546 = vunpack.c.l.b16 %v121
  %v547 = vunpack.c.h.b16 %v121
  %v548 = vunpack.c.l.b16 %v122
  %v549 = vunpack.c.h.b16 %v122
  %v550 = vunpack.c.l.b16 %v123
  %v551 = vunpack.c.h.b16 %v123
  %v552 = vunpack.c.l.b16 %v124
  %v553 = vunpack.c.h.b16 %v124
  %v554 = vunpack.c.l.b16 %v125
  %v555 = vunpack.c.h.b16 %v125
  %v556 = vunpack.c.l.b16 %v126
  %v557 = vunpack.c.h.b16 %v126
  %v558 = vunpack.c.l.b16 %v127
  %v559 = vunpack.c.h.b16 %v127
  %v560 = vunpack.c.l.b16 %v128
  %v561 = vunpack.c.h.b16 %v128
  %v562 = vunpack.c.l.b16 %v129
  %v563 = vunpack.c.h.b16 %v129
  %v564 = vunpack.c.l.b16 %v130
  %v565 = vunpack.c.h.b16 %v130
  %v566 = vunpack.c.l.b16 %v131
  %v567 = vunpack.c.h.b16 %v131
  %v568 = vunpack.c.l.b16 %v132
  %v569 = vunpack.c.h.b16 %v132
  %v570 = vunpack.c.l.b16 %v133
  %v571 = vunpack.c.h.b16 %v133
  %v572 = vunpack.c.l.b16 %v134
  %v573 = vunpack.c.h.b16 %v134
  %v574 = vunpack.c.l.b16 %v135
  %v575 = vunpack.c.h.b16 %v135
  %v576 = vunpack.c.l.b16 %v136
  %v577 = vunpack.c.h.b16 %v136
  %v578 = vunpack.c.l.b16 %v137
  %v579 = vunpack.c.h.b16 %v137
  %v580 = vunpack.c.l.b16 %v138
  %v581 = vunpack.c.h.b16 %v138
  %v582 = vunpack.c.l.b16 %v139
  %v583 = vunpack.c.h.b16 %v139
  %v584 = vunpack.c.l.b16 %v140
  %v585 = vunpack.c.h.b16 %v140
  %v586 = vunpack.c.l.b16 %v141
  %v587 = vunpack.c.h.b16 %v141
  %v588 = vunpack.c.l.b16 %v142
  %v589 = vunpack.c.h.b16 %v142
  %v590 = vunpack.c.l.b16 %v143
  %v591 = vunpack.c.h.b16 %v143
  %v592 = vunpack.c.l.b16 %v144
  %v593 = vunpack.c.h.b16 %v144
  %v594 = vunpack.c.l.b16 %v145
  %v595 = vunpack.c.h.b16 %v145
  %v596 = vunpack.c.l.b16 %v146
  %v597 = vunpack.c.h.b16 %v146
  %v598 = vunpack.c.l.b16 %v147
  %v599 = vunpack.c.h.b16 %v147
  %v600 = vunpack.c.l.b16 %v148
  %v601 = vunpack.c.h.b16 %v148
  %v602 = vunpack.c.l.b16 %v149
  %v603 = vunpack.c.h.b16 %v149
  %v604 = vunpack.c.l.b16 %v150
  %v605 = vunpack.c.h.b16 %v150
  %v606 = vunpack.c.l.b16 %v151
  %v607 = vunpack.c.h.b16 %v151
  %v608 = vunpack.c.l.b16 %v152
  %v609 = vunpack.c.h.b16 %v152
  %v610 = vunpack.c.l.b16 %v153
  %v611 = vunpack.c.h.b16 %v153
  %v612 = vunpack.c.l.b16 %v154
  %v613 = vunpack.c.h.b16 %v154
  %v614 = vunpack.c.l.b16 %v155
  %v615 = vunpack.c.h.b16 %v155
  %v616 = vunpack.c.l.b16 %v156
  %v617 = vunpack.c.h.b16 %v156
  %v618 = vunpack.c.l.b16 %v157
  %v619 = vunpack.c.h.b16 %v157
  %v620 = vunpack.c.l.b16 %v158
  %v621 = vunpack.c.h.b16 %v158
  %v622 = vunpack.c.l.b16 %v159
  %v623 = vunpack.c.h.b16 %v159
  %v624 = vunpack.c.l.b16 %v160
  %v625 = vunpack.c.h.b16 %v160
  %v626 = vunpack.c.l.b16 %v161
  %v627 = vunpack.c.h.b16 %v161
  %v628 = vpack.c.b16 %v356, %v340
  %v629 = vpack.c.b16 %v357, %v341
  %v630 = vpack.c.b16 %v358, %v342
  %v631 = vpack.c.b16 %v359, %v343
  %v632 = vpack.c.b16 %v360, %v344
  %v633 = vpack.c.b16 %v361, %v345
  %v634 = vpack.c.b16 %v362, %v346
  %v635 = vpack.c.b16 %v363, %v347
  %v636 = vpack.c.b16 %v364, %v348
  %v637 = vpack.c.b16 %v365, %v349
  %v638 = vpack.c.b16 %v366, %v350
  %v639 = vpack.c.b16 %v367, %v351
  %v640 = vpack.c.b16 %v368, %v352
  %v641 = vpack.c.b16 %v369, %v353
  %v642 = vpack.c.b16 %v370, %v354
  %v643 = vpack.c.b16 %v371, %v355
  %v644 = vpack.c.b16 %v388, %v372
  %v645 = vpack.c.b16 %v389, %v373
  %v646 = vpack.c.b16 %v390, %v374
  %v647 = vpack.c.b16 %v391, %v375
  %v648 = vpack.c.b16 %v392, %v376
  %v649 = vpack.c.b16 %v393, %v377
  %v650 = vpack.c.b16 %v394, %v378
  %v651 = vpack.c.b16 %v395, %v379
  %v652 = vpack.c.b16 %v396, %v380
  %v653 = vpack.c.b16 %v397, %v381
  %v654 = vpack.c.b16 %v398, %v382
  %v655 = vpack.c.b16 %v399, %v383
  %v656 = vpack.c.b16 %v400, %v384
  %v657 = vpack.c.b16 %v401, %v385
  %v658 = vpack.c.b16 %v402, %v386
  %v659 = vpack.c.b16 %v403, %v387
  %v660 = vpack.c.b16 %v420, %v404
  %v661 = vpack.c.b16 %v421, %v405
  %v662 = vpack.c.b16 %v422, %v406
  %v663 = vpack.c.b16 %v423, %v407
  %v664 = vpack.c.b16 %v424, %v408
  %v665 = vpack.c.b16 %v425, %v409
  %v666 = vpack.c.b16 %v426, %v410
  %v667 = vpack.c.b16 %v427, %v411
  %v668 = vpack.c.b16 %v428, %v412
  %v669 = vpack.c.b16 %v429, %v413
  %v670 = vpack.c.b16 %v430, %v414
  %v671 = vpack.c.b16 %v431, %v415
  %v672 = vpack.c.b16 %v432, %v416
  %v673 = vpack.c.b16 %v433, %v417
  %v674 = vpack.c.b16 %v434, %v418
  %v675 = vpack.c.b16 %v435, %v419
  %v676 = vpack.c.b16 %v452, %v436
  %v677 = vpack.c.b16 %v453, %v437
  %v678 = vpack.c.b16 %v454, %v438
  %v679 = vpack.c.b16 %v455, %v439
  %v680 = vpack.c.b16 %v456, %v440
  %v681 = vpack.c.b16 %v457, %v441
  %v682 = vpack.c.b16 %v458, %v442
  %v683 = vpack.c.b16 %v459, %v443
  %v684 = vpack.c.b16 %v460, %v444
  %v685 = vpack.c.b16 %v461, %v445
  %v686 = vpack.c.b16 %v462, %v446
  %v687 = vpack.c.b16 %v463, %v447
  %v688 = vpack.c.b16 %v464, %v448
  %v689 = vpack.c.b16 %v465, %v449
  %v690 = vpack.c.b16 %v466, %v450
  %v691 = vpack.c.b16 %v467, %v451
  %v692 = vpack.c.b16 %v484, %v468
  %v693 = vpack.c.b16 %v485, %v469
  %v694 = vpack.c.b16 %v486, %v470
  %v695 = vpack.c.b16 %v487, %v471
  %v696 = vpack.c.b16 %v488, %v472
  %v697 = vpack.c.b16 %v489, %v473
  %v698 = vpack.c.b16 %v490, %v474
  %v699 = vpack.c.b16 %v491, %v475
  %v700 = vpack.c.b16 %v492, %v476
  %v701 = vpack.c.b16 %v493, %v477
  %v702 = vpack.c.b16 %v494, %v478
  %v703 = vpack.c.b16 %v495, %v479
  %v704 = vpack.c.b16 %v496, %v480
  %v705 = vpack.c.b16 %v497, %v481
  %v706 = vpack.c.b16 %v498, %v482
  %v707 = vpack.c.b16 %v499, %v483
  %v708 = vpack.c.b16 %v516, %v500
  %v709 = vpack.c.b16 %v517, %v501
  %v710 = vpack.c.b16 %v518, %v502
  %v711 = vpack.c.b16 %v519, %v503
  %v712 = vpack.c.b16 %v520, %v504
  %v713 = vpack.c.b16 %v521, %v505
  %v714 = vpack.c.b16 %v522, %v506
  %v715 = vpack.c.b16 %v523, %v507
  %v716 = vpack.c.b16 %v524, %v508
  %v717 = vpack.c.b16 %v525, %v509
  %v718 = vpack.c.b16 %v526, %v510
  %v719 = vpack.c.b16 %v527, %v511
  %v720 = vpack.c.b16 %v528, %v512
  %v721 = vpack.c.b16 %v529, %v513
  %v722 = vpack.c.b16 %v530, %v514
  %v723 = vpack.c.b16 %v531, %v515
  %v724 = vpack.c.b16 %v548, %v532
  %v725 = vpack.c.b16 %v549, %v533
  %v726 = vpack.c.b16 %v550, %v534
  %v727 = vpack.c.b16 %v551, %v535
  %v728 = vpack.c.b16 %v552, %v536
  %v729 = vpack.c.b16 %v553, %v537
  %v730 = vpack.c.b16 %v554, %v538
  %v731 = vpack.c.b16 %v555, %v539
  %v732 = vpack.c.b16 %v556, %v540
  %v733 = vpack.c.b16 %v557, %v541
  %v734 = vpack.c.b16 %v558, %v542
  %v735 = vpack.c.b16 %v559, %v543
  %v736 = vpack.c.b16 %v560, %v544
  %v737 = vpack.c.b16 %v561, %v545
  %v738 = vpack.c.b16 %v562, %v546
  %v739 = vpack.c.b16 %v563, %v547
  %v740 = vpack.c.b16 %v580, %v564
  %v741 = vpack.c.b16 %v581, %v565
  %v742 = vpack.c.b16 %v582, %v566
  %v743 = vpack.c.b16 %v583, %v567
  %v744 = vpack.c.b16 %v584, %v568
  %v745 = vpack.c.b16 %v585, %v569
  %v746 = vpack.c.b16 %v586, %v570
  %v747 = vpack.c.b16 %v587, %v571
  %v748 = vpack.c.b16 %v588, %v572
  %v749 = vpack.c.b16 %v589, %v573
  %v750 = vpack.c.b16 %v590, %v574
  %v751 = vpack.c.b16 %v591, %v575
  %v752 = vpack.c.b16 %v592, %v576
  %v753 = vpack.c.b16 %v593, %v577
  %v754 = vpack.c.b16 %v594, %v578
  %v755 = vpack.c.b16 %v595, %v579
  %v756 = vpack.c.b16 %v612, %v596
  %v757 = vpack.c.b16 %v613, %v597
  %v758 = vpack.c.b16 %v614, %v598
  %v759 = vpack.c.b16 %v615, %v599
  %v760 = vpack.c.b16 %v616, %v600
  %v761 = vpack.c.b16 %v617, %v601
  %v762 = vpack.c.b16 %v618, %v602
  %v763 = vpack.c.b16 %v619, %v603
  %v764 = vpack.c.b16 %v620, %v604
  %v765 = vpack.c.b16 %v621, %v605
  %v766 = vpack.c.b16 %v622, %v606
  %v767 = vpack.c.b16 %v623, %v607
  %v768 = vpack.c.b16 %v624, %v608
  %v769 = vpack.c.b16 %v625, %v609
  %v770 = vpack.c.b16 %v626, %v610
  %v771 = vpack.c.b16 %v627, %v611
  %vm916 = vcmask 130048
  %v918 = vsel %vm916, %v194, 0
  %920 = vmatprep.subr.bf16.mxu0 %v629
  %921 = vmatpush1.bf16.msra.mxu0 %v628
  %922 = vmatprep.subr.bf16.mxu0 %v645
  %923 = vmatpush1.bf16.msra.mxu0 %v644
  %924 = vmatprep.subr.bf16.mxu0 %v661
  %925 = vmatpush1.bf16.msra.mxu0 %v660
  %926 = vmatprep.subr.bf16.mxu0 %v677
  %927 = vmatpush1.bf16.msra.mxu0 %v676
  %928 = vmatprep.subr.bf16.mxu0 %v693
  %929 = vmatpush1.bf16.msra.mxu0 %v692
  %930 = vmatprep.subr.bf16.mxu0 %v709
  %931 = vmatpush1.bf16.msra.mxu0 %v708
  %932 = vmatprep.subr.bf16.mxu0 %v725
  %933 = vmatpush1.bf16.msra.mxu0 %v724
  %934 = vmatprep.subr.bf16.mxu0 %v741
  %935 = vmatpush1.bf16.msra.mxu0 %v740
  %936 = vmatprep.subr.bf16.mxu0 %v757
  %937 = vmatpush1.bf16.msra.mxu0 %v756
  %938 = vmatprep.subr.bf16.mxu0 0
  %939 = vmatpush1.bf16.msra.mxu0 0
  %940 = vmatprep.subr.bf16.mxu0 0
  %941 = vmatpush1.bf16.msra.mxu0 0
  %942 = vmatprep.subr.bf16.mxu0 0
  %943 = vmatpush1.bf16.msra.mxu0 0
  %944 = vmatprep.subr.bf16.mxu0 0
  %945 = vmatpush1.bf16.msra.mxu0 0
  %946 = vmatprep.subr.bf16.mxu0 0
  %947 = vmatpush1.bf16.msra.mxu0 0
  %948 = vmatprep.subr.bf16.mxu0 0
  %949 = vmatpush1.bf16.msra.mxu0 0
  %950 = vmatprep.subr.bf16.mxu0 0
  %951 = vmatpush1.bf16.msra.mxu0 0
  %952 = vmatprep.mubr.bf16.mxu0 %v918
  %953 = vmatmul.mubr.bf16.gmra.mrb[0].mxu0 %v187
  %v954 = vpop.f32.mrb[0].mxu0
  %v955 = vadd.f32 %v171, %v954
  %v956 = vpop.f32.mrb[0].mxu0
  %v957 = vadd.f32 %v171, %v956
  %v958 = vpop.f32.mrb[0].mxu0
  %v959 = vpop.f32.mrb[0].mxu0
  %960 = vdwg.mxu0
  %961 = vmatprep.subr.bf16.mxu0 %v631
  %962 = vmatpush1.bf16.msra.mxu0 %v630
  %963 = vmatprep.subr.bf16.mxu0 %v647
  %964 = vmatpush1.bf16.msra.mxu0 %v646
  %965 = vmatprep.subr.bf16.mxu0 %v663
  %966 = vmatpush1.bf16.msra.mxu0 %v662
  %967 = vmatprep.subr.bf16.mxu0 %v679
  %968 = vmatpush1.bf16.msra.mxu0 %v678
  %969 = vmatprep.subr.bf16.mxu0 %v695
  %970 = vmatpush1.bf16.msra.mxu0 %v694
  %971 = vmatprep.subr.bf16.mxu0 %v711
  %972 = vmatpush1.bf16.msra.mxu0 %v710
  %973 = vmatprep.subr.bf16.mxu0 %v727
  %974 = vmatpush1.bf16.msra.mxu0 %v726
  %975 = vmatprep.subr.bf16.mxu0 %v743
  %976 = vmatpush1.bf16.msra.mxu0 %v742
  %977 = vmatprep.subr.bf16.mxu0 %v759
  %978 = vmatpush1.bf16.msra.mxu0 %v758
  %979 = vmatprep.subr.bf16.mxu0 0
  %980 = vmatpush1.bf16.msra.mxu0 0
  %981 = vmatprep.subr.bf16.mxu0 0
  %982 = vmatpush1.bf16.msra.mxu0 0
  %983 = vmatprep.subr.bf16.mxu0 0
  %984 = vmatpush1.bf16.msra.mxu0 0
  %985 = vmatprep.subr.bf16.mxu0 0
  %986 = vmatpush1.bf16.msra.mxu0 0
  %987 = vmatprep.subr.bf16.mxu0 0
  %988 = vmatpush1.bf16.msra.mxu0 0
  %989 = vmatprep.subr.bf16.mxu0 0
  %990 = vmatpush1.bf16.msra.mxu0 0
  %991 = vmatprep.subr.bf16.mxu0 0
  %992 = vmatpush1.bf16.msra.mxu0 0
  %993 = vmatprep.mubr.bf16.mxu0 %v918
  %994 = vmatmul.mubr.bf16.gmra.mrb[0].mxu0 %v187
  %v995 = vpop.f32.mrb[0].mxu0
  %v996 = vadd.f32 %v171, %v995
  %v997 = vpop.f32.mrb[0].mxu0
  %v998 = vadd.f32 %v171, %v997
  %v999 = vpop.f32.mrb[0].mxu0
  %v1000 = vpop.f32.mrb[0].mxu0
  %1001 = vdwg.mxu0
  %1002 = vmatprep.subr.bf16.mxu0 %v633
  %1003 = vmatpush1.bf16.msra.mxu0 %v632
  %1004 = vmatprep.subr.bf16.mxu0 %v649
  %1005 = vmatpush1.bf16.msra.mxu0 %v648
  %1006 = vmatprep.subr.bf16.mxu0 %v665
  %1007 = vmatpush1.bf16.msra.mxu0 %v664
  %1008 = vmatprep.subr.bf16.mxu0 %v681
  %1009 = vmatpush1.bf16.msra.mxu0 %v680
  %1010 = vmatprep.subr.bf16.mxu0 %v697
  %1011 = vmatpush1.bf16.msra.mxu0 %v696
  %1012 = vmatprep.subr.bf16.mxu0 %v713
  %1013 = vmatpush1.bf16.msra.mxu0 %v712
  %1014 = vmatprep.subr.bf16.mxu0 %v729
  %1015 = vmatpush1.bf16.msra.mxu0 %v728
  %1016 = vmatprep.subr.bf16.mxu0 %v745
  %1017 = vmatpush1.bf16.msra.mxu0 %v744
  %1018 = vmatprep.subr.bf16.mxu0 %v761
  %1019 = vmatpush1.bf16.msra.mxu0 %v760
  %1020 = vmatprep.subr.bf16.mxu0 0
  %1021 = vmatpush1.bf16.msra.mxu0 0
  %1022 = vmatprep.subr.bf16.mxu0 0
  %1023 = vmatpush1.bf16.msra.mxu0 0
  %1024 = vmatprep.subr.bf16.mxu0 0
  %1025 = vmatpush1.bf16.msra.mxu0 0
  %1026 = vmatprep.subr.bf16.mxu0 0
  %1027 = vmatpush1.bf16.msra.mxu0 0
  %1028 = vmatprep.subr.bf16.mxu0 0
  %1029 = vmatpush1.bf16.msra.mxu0 0
  %1030 = vmatprep.subr.bf16.mxu0 0
  %1031 = vmatpush1.bf16.msra.mxu0 0
  %1032 = vmatprep.subr.bf16.mxu0 0
  %1033 = vmatpush1.bf16.msra.mxu0 0
  %1034 = vmatprep.mubr.bf16.mxu0 %v918
  %1035 = vmatmul.mubr.bf16.gmra.mrb[0].mxu0 %v187
  %v1036 = vpop.f32.mrb[0].mxu0
  %v1037 = vadd.f32 %v171, %v1036
  %v1038 = vpop.f32.mrb[0].mxu0
  %v1039 = vadd.f32 %v171, %v1038
  %v1040 = vpop.f32.mrb[0].mxu0
  %v1041 = vpop.f32.mrb[0].mxu0
  %1042 = vdwg.mxu0
  %1043 = vmatprep.subr.bf16.mxu0 %v635
  %1044 = vmatpush1.bf16.msra.mxu0 %v634
  %1045 = vmatprep.subr.bf16.mxu0 %v651
  %1046 = vmatpush1.bf16.msra.mxu0 %v650
  %1047 = vmatprep.subr.bf16.mxu0 %v667
  %1048 = vmatpush1.bf16.msra.mxu0 %v666
  %1049 = vmatprep.subr.bf16.mxu0 %v683
  %1050 = vmatpush1.bf16.msra.mxu0 %v682
  %1051 = vmatprep.subr.bf16.mxu0 %v699
  %1052 = vmatpush1.bf16.msra.mxu0 %v698
  %1053 = vmatprep.subr.bf16.mxu0 %v715
  %1054 = vmatpush1.bf16.msra.mxu0 %v714
  %1055 = vmatprep.subr.bf16.mxu0 %v731
  %1056 = vmatpush1.bf16.msra.mxu0 %v730
  %1057 = vmatprep.subr.bf16.mxu0 %v747
  %1058 = vmatpush1.bf16.msra.mxu0 %v746
  %1059 = vmatprep.subr.bf16.mxu0 %v763
  %1060 = vmatpush1.bf16.msra.mxu0 %v762
  %1061 = vmatprep.subr.bf16.mxu0 0
  %1062 = vmatpush1.bf16.msra.mxu0 0
  %1063 = vmatprep.subr.bf16.mxu0 0
  %1064 = vmatpush1.bf16.msra.mxu0 0
  %1065 = vmatprep.subr.bf16.mxu0 0
  %1066 = vmatpush1.bf16.msra.mxu0 0
  %1067 = vmatprep.subr.bf16.mxu0 0
  %1068 = vmatpush1.bf16.msra.mxu0 0
  %1069 = vmatprep.subr.bf16.mxu0 0
  %1070 = vmatpush1.bf16.msra.mxu0 0
  %1071 = vmatprep.subr.bf16.mxu0 0
  %1072 = vmatpush1.bf16.msra.mxu0 0
  %1073 = vmatprep.subr.bf16.mxu0 0
  %1074 = vmatpush1.bf16.msra.mxu0 0
  %1075 = vmatprep.mubr.bf16.mxu0 %v918
  %1076 = vmatmul.mubr.bf16.gmra.mrb[0].mxu0 %v187
  %v1077 = vpop.f32.mrb[0].mxu0
  %v1078 = vadd.f32 %v171, %v1077
  %v1079 = vpop.f32.mrb[0].mxu0
  %v1080 = vadd.f32 %v171, %v1079
  %v1081 = vpop.f32.mrb[0].mxu0
  %v1082 = vpop.f32.mrb[0].mxu0
  %1083 = vdwg.mxu0
  %1084 = vmatprep.subr.bf16.mxu0 %v637
  %1085 = vmatpush1.bf16.msra.mxu0 %v636
  %1086 = vmatprep.subr.bf16.mxu0 %v653
  %1087 = vmatpush1.bf16.msra.mxu0 %v652
  %1088 = vmatprep.subr.bf16.mxu0 %v669
  %1089 = vmatpush1.bf16.msra.mxu0 %v668
  %1090 = vmatprep.subr.bf16.mxu0 %v685
  %1091 = vmatpush1.bf16.msra.mxu0 %v684
  %1092 = vmatprep.subr.bf16.mxu0 %v701
  %1093 = vmatpush1.bf16.msra.mxu0 %v700
  %1094 = vmatprep.subr.bf16.mxu0 %v717
  %1095 = vmatpush1.bf16.msra.mxu0 %v716
  %1096 = vmatprep.subr.bf16.mxu0 %v733
  %1097 = vmatpush1.bf16.msra.mxu0 %v732
  %1098 = vmatprep.subr.bf16.mxu0 %v749
  %1099 = vmatpush1.bf16.msra.mxu0 %v748
  %1100 = vmatprep.subr.bf16.mxu0 %v765
  %1101 = vmatpush1.bf16.msra.mxu0 %v764
  %1102 = vmatprep.subr.bf16.mxu0 0
  %1103 = vmatpush1.bf16.msra.mxu0 0
  %1104 = vmatprep.subr.bf16.mxu0 0
  %1105 = vmatpush1.bf16.msra.mxu0 0
  %1106 = vmatprep.subr.bf16.mxu0 0
  %1107 = vmatpush1.bf16.msra.mxu0 0
  %1108 = vmatprep.subr.bf16.mxu0 0
  %1109 = vmatpush1.bf16.msra.mxu0 0
  %1110 = vmatprep.subr.bf16.mxu0 0
  %1111 = vmatpush1.bf16.msra.mxu0 0
  %1112 = vmatprep.subr.bf16.mxu0 0
  %1113 = vmatpush1.bf16.msra.mxu0 0
  %1114 = vmatprep.subr.bf16.mxu0 0
  %1115 = vmatpush1.bf16.msra.mxu0 0
  %1116 = vmatprep.mubr.bf16.mxu0 %v918
  %1117 = vmatmul.mubr.bf16.gmra.mrb[0].mxu0 %v187
  %v1118 = vpop.f32.mrb[0].mxu0
  %v1119 = vadd.f32 %v171, %v1118
  %v1120 = vpop.f32.mrb[0].mxu0
  %v1121 = vadd.f32 %v171, %v1120
  %v1122 = vpop.f32.mrb[0].mxu0
  %v1123 = vpop.f32.mrb[0].mxu0
  %1124 = vdwg.mxu0
  %1125 = vmatprep.subr.bf16.mxu0 %v639
  %1126 = vmatpush1.bf16.msra.mxu0 %v638
  %1127 = vmatprep.subr.bf16.mxu0 %v655
  %1128 = vmatpush1.bf16.msra.mxu0 %v654
  %1129 = vmatprep.subr.bf16.mxu0 %v671
  %1130 = vmatpush1.bf16.msra.mxu0 %v670
  %1131 = vmatprep.subr.bf16.mxu0 %v687
  %1132 = vmatpush1.bf16.msra.mxu0 %v686
  %1133 = vmatprep.subr.bf16.mxu0 %v703
  %1134 = vmatpush1.bf16.msra.mxu0 %v702
  %1135 = vmatprep.subr.bf16.mxu0 %v719
  %1136 = vmatpush1.bf16.msra.mxu0 %v718
  %1137 = vmatprep.subr.bf16.mxu0 %v735
  %1138 = vmatpush1.bf16.msra.mxu0 %v734
  %1139 = vmatprep.subr.bf16.mxu0 %v751
  %1140 = vmatpush1.bf16.msra.mxu0 %v750
  %1141 = vmatprep.subr.bf16.mxu0 %v767
  %1142 = vmatpush1.bf16.msra.mxu0 %v766
  %1143 = vmatprep.subr.bf16.mxu0 0
  %1144 = vmatpush1.bf16.msra.mxu0 0
  %1145 = vmatprep.subr.bf16.mxu0 0
  %1146 = vmatpush1.bf16.msra.mxu0 0
  %1147 = vmatprep.subr.bf16.mxu0 0
  %1148 = vmatpush1.bf16.msra.mxu0 0
  %1149 = vmatprep.subr.bf16.mxu0 0
  %1150 = vmatpush1.bf16.msra.mxu0 0
  %1151 = vmatprep.subr.bf16.mxu0 0
  %1152 = vmatpush1.bf16.msra.mxu0 0
  %1153 = vmatprep.subr.bf16.mxu0 0
  %1154 = vmatpush1.bf16.msra.mxu0 0
  %1155 = vmatprep.subr.bf16.mxu0 0
  %1156 = vmatpush1.bf16.msra.mxu0 0
  %1157 = vmatprep.mubr.bf16.mxu0 %v918
  %1158 = vmatmul.mubr.bf16.gmra.mrb[0].mxu0 %v187
  %v1159 = vpop.f32.mrb[0].mxu0
  %v1160 = vadd.f32 %v171, %v1159
  %v1161 = vpop.f32.mrb[0].mxu0
  %v1162 = vadd.f32 %v171, %v1161
  %v1163 = vpop.f32.mrb[0].mxu0
  %v1164 = vpop.f32.mrb[0].mxu0
  %1165 = vdwg.mxu0
  %1166 = vmatprep.subr.bf16.mxu0 %v641
  %1167 = vmatpush1.bf16.msra.mxu0 %v640
  %1168 = vmatprep.subr.bf16.mxu0 %v657
  %1169 = vmatpush1.bf16.msra.mxu0 %v656
  %1170 = vmatprep.subr.bf16.mxu0 %v673
  %1171 = vmatpush1.bf16.msra.mxu0 %v672
  %1172 = vmatprep.subr.bf16.mxu0 %v689
  %1173 = vmatpush1.bf16.msra.mxu0 %v688
  %1174 = vmatprep.subr.bf16.mxu0 %v705
  %1175 = vmatpush1.bf16.msra.mxu0 %v704
  %1176 = vmatprep.subr.bf16.mxu0 %v721
  %1177 = vmatpush1.bf16.msra.mxu0 %v720
  %1178 = vmatprep.subr.bf16.mxu0 %v737
  %1179 = vmatpush1.bf16.msra.mxu0 %v736
  %1180 = vmatprep.subr.bf16.mxu0 %v753
  %1181 = vmatpush1.bf16.msra.mxu0 %v752
  %1182 = vmatprep.subr.bf16.mxu0 %v769
  %1183 = vmatpush1.bf16.msra.mxu0 %v768
  %1184 = vmatprep.subr.bf16.mxu0 0
  %1185 = vmatpush1.bf16.msra.mxu0 0
  %1186 = vmatprep.subr.bf16.mxu0 0
  %1187 = vmatpush1.bf16.msra.mxu0 0
  %1188 = vmatprep.subr.bf16.mxu0 0
  %1189 = vmatpush1.bf16.msra.mxu0 0
  %1190 = vmatprep.subr.bf16.mxu0 0
  %1191 = vmatpush1.bf16.msra.mxu0 0
  %1192 = vmatprep.subr.bf16.mxu0 0
  %1193 = vmatpush1.bf16.msra.mxu0 0
  %1194 = vmatprep.subr.bf16.mxu0 0
  %1195 = vmatpush1.bf16.msra.mxu0 0
  %1196 = vmatprep.subr.bf16.mxu0 0
  %1197 = vmatpush1.bf16.msra.mxu0 0
  %1198 = vmatprep.mubr.bf16.mxu0 %v918
  %1199 = vmatmul.mubr.bf16.gmra.mrb[0].mxu0 %v187
  %v1200 = vpop.f32.mrb[0].mxu0
  %v1201 = vadd.f32 %v171, %v1200
  %v1202 = vpop.f32.mrb[0].mxu0
  %v1203 = vadd.f32 %v171, %v1202
  %v1204 = vpop.f32.mrb[0].mxu0
  %v1205 = vpop.f32.mrb[0].mxu0
  %1206 = vdwg.mxu0
  %1207 = vmatprep.subr.bf16.mxu0 %v643
  %1208 = vmatpush1.bf16.msra.mxu0 %v642
  %1209 = vmatprep.subr.bf16.mxu0 %v659
  %1210 = vmatpush1.bf16.msra.mxu0 %v658
  %1211 = vmatprep.subr.bf16.mxu0 %v675
  %1212 = vmatpush1.bf16.msra.mxu0 %v674
  %1213 = vmatprep.subr.bf16.mxu0 %v691
  %1214 = vmatpush1.bf16.msra.mxu0 %v690
  %1215 = vmatprep.subr.bf16.mxu0 %v707
  %1216 = vmatpush1.bf16.msra.mxu0 %v706
  %1217 = vmatprep.subr.bf16.mxu0 %v723
  %1218 = vmatpush1.bf16.msra.mxu0 %v722
  %1219 = vmatprep.subr.bf16.mxu0 %v739
  %1220 = vmatpush1.bf16.msra.mxu0 %v738
  %1221 = vmatprep.subr.bf16.mxu0 %v755
  %1222 = vmatpush1.bf16.msra.mxu0 %v754
  %1223 = vmatprep.subr.bf16.mxu0 %v771
  %1224 = vmatpush1.bf16.msra.mxu0 %v770
  %1225 = vmatprep.subr.bf16.mxu0 0
  %1226 = vmatpush1.bf16.msra.mxu0 0
  %1227 = vmatprep.subr.bf16.mxu0 0
  %1228 = vmatpush1.bf16.msra.mxu0 0
  %1229 = vmatprep.subr.bf16.mxu0 0
  %1230 = vmatpush1.bf16.msra.mxu0 0
  %1231 = vmatprep.subr.bf16.mxu0 0
  %1232 = vmatpush1.bf16.msra.mxu0 0
  %1233 = vmatprep.subr.bf16.mxu0 0
  %1234 = vmatpush1.bf16.msra.mxu0 0
  %1235 = vmatprep.subr.bf16.mxu0 0
  %1236 = vmatpush1.bf16.msra.mxu0 0
  %1237 = vmatprep.subr.bf16.mxu0 0
  %1238 = vmatpush1.bf16.msra.mxu0 0
  %1239 = vmatprep.mubr.bf16.mxu0 %v918
  %1240 = vmatmul.mubr.bf16.gmra.mrb[0].mxu0 %v187
  %v1241 = vpop.f32.mrb[0].mxu0
  %v1242 = vadd.f32 %v171, %v1241
  %v1243 = vpop.f32.mrb[0].mxu0
  %v1244 = vadd.f32 %v171, %v1243
  %v1245 = vpop.f32.mrb[0].mxu0
  %v1246 = vpop.f32.mrb[0].mxu0
  %1247 = vdwg.mxu0
  %v1264 = vcombine.low %v955, %v957
  %v1265 = vcombine.low %v996, %v998
  %v1266 = vcombine.low %v1037, %v1039
  %v1267 = vcombine.low %v1078, %v1080
  %v1269 = vunpack.c.l.s4 1966171168
  %v1270 = vunpack.c.0.s8 %v1269
  %v1271 = vlaneseq
  %v1272 = vshrl.u32 %v1271, 7
  %v1273 = vsub.s32 %v1270, %v1272
  %v1274 = vrot.slane %v1264, %v1273
  %v1276 = vunpack.c.l.s4 1966171168
  %v1277 = vunpack.c.0.s8 %v1276
  %v1278 = vlaneseq
  %v1279 = vshrl.u32 %v1278, 7
  %v1280 = vsub.s32 %v1277, %v1279
  %v1281 = vrot.slane %v1265, %v1280
  %v1283 = vunpack.c.l.s4 1966171168
  %v1284 = vunpack.c.0.s8 %v1283
  %v1285 = vlaneseq
  %v1286 = vshrl.u32 %v1285, 7
  %v1287 = vsub.s32 %v1284, %v1286
  %v1288 = vrot.slane %v1266, %v1287
  %v1290 = vunpack.c.l.s4 1966171168
  %v1291 = vunpack.c.0.s8 %v1290
  %v1292 = vlaneseq
  %v1293 = vshrl.u32 %v1292, 7
  %v1294 = vsub.s32 %v1291, %v1293
  %v1295 = vrot.slane %v1267, %v1294
  %v1296 = vcombine.low %v1274, %v1281
  %v1297 = vcombine.low %v1288, %v1295
  %v1299 = vunpack.c.l.s4 1966171168
  %v1300 = vunpack.c.0.s8 %v1299
  %v1301 = vlaneseq
  %v1302 = vshrl.u32 %v1301, 7
  %v1303 = vsub.s32 %v1300, %v1302
  %v1304 = vrot.slane %v1296, %v1303
  %v1306 = vunpack.c.l.s4 1966171168
  %v1307 = vunpack.c.0.s8 %v1306
  %v1308 = vlaneseq
  %v1309 = vshrl.u32 %v1308, 7
  %v1310 = vsub.s32 %v1307, %v1309
  %v1311 = vrot.slane %v1297, %v1310
  %v1312 = vcombine.low %v1304, %v1311
  %v1313 = vcombine.low %v1119, %v1121
  %v1314 = vcombine.low %v1160, %v1162
  %v1315 = vcombine.low %v1201, %v1203
  %v1316 = vcombine.low %v1242, %v1244
  %v1318 = vunpack.c.l.s4 1966171168
  %v1319 = vunpack.c.0.s8 %v1318
  %v1320 = vlaneseq
  %v1321 = vshrl.u32 %v1320, 7
  %v1322 = vsub.s32 %v1319, %v1321
  %v1323 = vrot.slane %v1313, %v1322
  %v1325 = vunpack.c.l.s4 1966171168
  %v1326 = vunpack.c.0.s8 %v1325
  %v1327 = vlaneseq
  %v1328 = vshrl.u32 %v1327, 7
  %v1329 = vsub.s32 %v1326, %v1328
  %v1330 = vrot.slane %v1314, %v1329
  %v1332 = vunpack.c.l.s4 1966171168
  %v1333 = vunpack.c.0.s8 %v1332
  %v1334 = vlaneseq
  %v1335 = vshrl.u32 %v1334, 7
  %v1336 = vsub.s32 %v1333, %v1335
  %v1337 = vrot.slane %v1315, %v1336
  %v1339 = vunpack.c.l.s4 1966171168
  %v1340 = vunpack.c.0.s8 %v1339
  %v1341 = vlaneseq
  %v1342 = vshrl.u32 %v1341, 7
  %v1343 = vsub.s32 %v1340, %v1342
  %v1344 = vrot.slane %v1316, %v1343
  %v1345 = vcombine.low %v1323, %v1330
  %v1346 = vcombine.low %v1337, %v1344
  %v1348 = vunpack.c.l.s4 1966171168
  %v1349 = vunpack.c.0.s8 %v1348
  %v1350 = vlaneseq
  %v1351 = vshrl.u32 %v1350, 7
  %v1352 = vsub.s32 %v1349, %v1351
  %v1353 = vrot.slane %v1345, %v1352
  %v1355 = vunpack.c.l.s4 1966171168
  %v1356 = vunpack.c.0.s8 %v1355
  %v1357 = vlaneseq
  %v1358 = vshrl.u32 %v1357, 7
  %v1359 = vsub.s32 %v1356, %v1358
  %v1360 = vrot.slane %v1346, %v1359
  %v1361 = vcombine.low %v1353, %v1360
  %1364 = vst [vmem:[%s3] sm:$0xff] %v1312
  %1365 = vst [vmem:[%s3 + $0x8] sm:$0xff] %v1361
  // Predicated region
  $region14: #{avalon_generator_forward.15} parent=0 // pred_check
    _
  $region15: #{avalon_generator_forward.15} parent=0 // pred_check_branch
    %1367 = sbr.rel (0) target = $region17
  $region16: #{avalon_generator_forward.15} parent=0 // pred_region
    _
  $region17: #{avalon_generator_forward.15} parent=0 // pred_fallthru
    _
  // Predicated region
  $region18: #{avalon_generator_forward.15} parent=0 // pred_check
    _
  $region19: #{avalon_generator_forward.15} parent=0 // pred_check_branch
    %1369 = sbr.rel (0) target = $region21
  $region20: #{avalon_generator_forward.15} parent=0 // pred_region
    _
  $region21: #{avalon_generator_forward.15} parent=0 // pred_fallthru
    _

</llo_original>
